<compile_context>
chip_gen: v7x
topology: tpu7x:2x2x1
jax: 0.10.0
libtpu: 0.0.40
codegen_flags: <defaults>
</compile_context>

<pallas_src>
import functools

import jax
import jax.numpy as jnp
from jax.experimental import pallas as pl
from jax.experimental.pallas import tpu as pltpu

EPS = 1e-5                      # PyTorch BatchNorm2d default eps
LANE = 128                      # channel padding target (TPU lane width)
ROW_TILE_CAP = 512              # max rows per 1x1-GEMM / elementwise tile
H_ROW_CAP = 256                 # max (th * Wo) rows per conv2 output tile
VMEM_LIMIT = 48 * 1024 * 1024   # explicit scoped-VMEM limit (safe v5e/v6e/v7x)
COMPUTE_DT = jnp.bfloat16       # storage / MXU-operand dtype for activations+weights


# ---------------------------------------------------------------------------
# helpers
# ---------------------------------------------------------------------------
def _pad_to(n, m):
    return ((n + m - 1) // m) * m


def _row_tile(m, cap=ROW_TILE_CAP):
    """Pick a row tile (multiple of 8, <= cap).  Returns (tile, padded_rows).

    Prefer an exact divisor in (cap/2, cap]; otherwise pad m up to a multiple
    of cap so the pipeline keeps uniform large blocks (never one giant block).
    """
    if m <= cap:
        t = _pad_to(max(m, 8), 8)
        return t, t
    for t in range(cap - cap % 8, cap // 2, -8):
        if m % t == 0:
            return t, m
    return cap, _pad_to(m, cap)


def _h_tile(ho, wo, cap=H_ROW_CAP):
    """Largest divisor th of ho with th*wo <= cap and (th*wo) % 8 == 0."""
    for t in range(ho, 0, -1):
        if ho % t == 0 and t * wo <= cap and (t * wo) % 8 == 0:
            return t
    return ho


def _pad2d(a, rows, cols, dtype=None):
    out = jnp.pad(a, ((0, rows - a.shape[0]), (0, cols - a.shape[1])))
    return out if dtype is None else out.astype(dtype)


def _scale_shift(stats, gamma, beta, count):
    """Fold one-pass batch stats + affine params into per-channel scale/shift."""
    mean = stats[0:1, :] / count
    var = jnp.maximum(stats[1:2, :] / count - mean * mean, 0.0)
    scale = gamma * jax.lax.rsqrt(var + EPS)
    shift = beta - mean * scale
    return scale, shift          # each (1, C) f32


# ---------------------------------------------------------------------------
# Pallas kernels
# ---------------------------------------------------------------------------
def gemm_stats_kernel(x_ref, w_ref, y_ref, stats_ref):
    """y = x @ w (bf16 in, f32 acc, bf16 out); accumulate per-channel sum/sumsq."""
    @pl.when(pl.program_id(0) == 0)
    def _():
        stats_ref[...] = jnp.zeros_like(stats_ref)

    y = jnp.dot(x_ref[...], w_ref[...], preferred_element_type=jnp.float32)
    y_ref[...] = y.astype(y_ref.dtype)
    stats_ref[0:1, :] += jnp.sum(y, axis=0, keepdims=True)
    stats_ref[1:2, :] += jnp.sum(y * y, axis=0, keepdims=True)


def bn1_relu_pad_kernel(y_ref, sc_ref, sh_ref, o_ref, *, h, w):
    """o[b, 1:h+1, 1:w+1, :] = relu(y*scale+shift); zero border = conv2 halo."""
    o_ref[...] = jnp.zeros_like(o_ref)
    act = jnp.maximum(
        y_ref[...].astype(jnp.float32) * sc_ref[...] + sh_ref[...], 0.0)
    o_ref[0, 1:h + 1, 1:w + 1, :] = act.reshape(h, w, -1).astype(o_ref.dtype)


def conv3x3_stats_kernel(hpad_ref, w2_ref, y_ref, stats_ref, acc_ref,
                         *, th, wo, stride):
    """3x3 conv as nine shifted 1x1 GEMM taps.

    One full-width row band is loaded per dy and reused for the three dx
    shifts; per-dy partial sums are folded into an f32 VMEM accumulator.
    hpad_ref : (1, Hp, Wp, C)   zero-bordered post-bn1 image (one batch elem)
    w2_ref   : (3, 3, C, Cout)  resident bf16 weights
    y_ref    : (th*wo, Cout)    pre-BN conv2 output rows (bf16)
    stats_ref: (8, Cout)        resident f32 sum / sum-of-squares accumulator
    acc_ref  : (th*wo, Cout)    f32 VMEM scratch accumulator
    """
    t = pl.program_id(1)

    @pl.when((pl.program_id(0) == 0) & (t == 0))
    def _():
        stats_ref[...] = jnp.zeros_like(stats_ref)

    c = hpad_ref.shape[3]
    row0 = t * th * stride
    for dy in range(3):
        if stride == 1:
            band = hpad_ref[0, pl.ds(row0 + dy, th), :, :]      # (th, Wp, C)
        else:  # TODO(synk): stride>1 tap path implemented but not exercised below
            band = hpad_ref[0, pl.ds(row0 + dy, th, stride=stride), :, :]
        part = None
        for dx in range(3):
            if stride == 1:
                win = band[:, dx:dx + wo, :]
            else:
                win = jax.lax.slice_in_dim(
                    band, dx, dx + (wo - 1) * stride + 1, stride=stride, axis=1)
            d = jnp.dot(win.reshape(th * wo, c), w2_ref[dy, dx],
                        preferred_element_type=jnp.float32)
            part = d if part is None else part + d
        if dy == 0:
            acc_ref[...] = part
        else:
            acc_ref[...] += part
    acc = acc_ref[...]
    y_ref[...] = acc.astype(y_ref.dtype)
    stats_ref[0:1, :] += jnp.sum(acc, axis=0, keepdims=True)
    stats_ref[1:2, :] += jnp.sum(acc * acc, axis=0, keepdims=True)


def conv3_proj_stats_kernel(y2_ref, sc2_ref, sh2_ref, w3_ref, xs_ref, ws_ref,
                            y3_ref, ys_ref, s3_ref, ss_ref, *, tm, valid_rows):
    """Fused: h2 = relu(bn2(y2)); y3 = h2 @ w3; ys = xs @ ws; accumulate stats."""
    @pl.when(pl.program_id(0) == 0)
    def _():
        s3_ref[...] = jnp.zeros_like(s3_ref)
        ss_ref[...] = jnp.zeros_like(ss_ref)

    h2 = jnp.maximum(
        y2_ref[...].astype(jnp.float32) * sc2_ref[...] + sh2_ref[...], 0.0)
    if valid_rows is not None:   # mask uninitialized tail rows of padded y2
        rows = pl.program_id(0) * tm + jax.lax.broadcasted_iota(
            jnp.int32, (tm, 1), 0)
        h2 = jnp.where(rows < valid_rows, h2, 0.0)
    y3 = jnp.dot(h2.astype(w3_ref.dtype), w3_ref[...],
                 preferred_element_type=jnp.float32)
    ys = jnp.dot(xs_ref[...], ws_ref[...], preferred_element_type=jnp.float32)
    y3_ref[...] = y3.astype(y3_ref.dtype)
    ys_ref[...] = ys.astype(ys_ref.dtype)
    s3_ref[0:1, :] += jnp.sum(y3, axis=0, keepdims=True)
    s3_ref[1:2, :] += jnp.sum(y3 * y3, axis=0, keepdims=True)
    ss_ref[0:1, :] += jnp.sum(ys, axis=0, keepdims=True)
    ss_ref[1:2, :] += jnp.sum(ys * ys, axis=0, keepdims=True)


def conv3_id_stats_kernel(y2_ref, sc2_ref, sh2_ref, w3_ref, y3_ref, s3_ref,
                          *, tm, valid_rows):
    """Fused: h2 = relu(bn2(y2)); y3 = h2 @ w3; accumulate stats."""
    @pl.when(pl.program_id(0) == 0)
    def _():
        s3_ref[...] = jnp.zeros_like(s3_ref)

    h2 = jnp.maximum(
        y2_ref[...].astype(jnp.float32) * sc2_ref[...] + sh2_ref[...], 0.0)
    if valid_rows is not None:
        rows = pl.program_id(0) * tm + jax.lax.broadcasted_iota(
            jnp.int32, (tm, 1), 0)
        h2 = jnp.where(rows < valid_rows, h2, 0.0)
    y3 = jnp.dot(h2.astype(w3_ref.dtype), w3_ref[...],
                 preferred_element_type=jnp.float32)
    y3_ref[...] = y3.astype(y3_ref.dtype)
    s3_ref[0:1, :] += jnp.sum(y3, axis=0, keepdims=True)
    s3_ref[1:2, :] += jnp.sum(y3 * y3, axis=0, keepdims=True)


def residual_proj_kernel(y3_ref, sc3_ref, sh3_ref, ys_ref, scs_ref, shs_ref,
                         o_ref):
    """out = relu(bn3(y3) + bn_s(ys)); BNs folded into scale/shift (f32)."""
    o_ref[...] = jnp.maximum(
        y3_ref[...].astype(jnp.float32) * sc3_ref[...] + sh3_ref[...]
        + ys_ref[...].astype(jnp.float32) * scs_ref[...] + shs_ref[...], 0.0)


def residual_id_kernel(y3_ref, sc3_ref, sh3_ref, xs_ref, o_ref):
    """out = relu(bn3(y3) + identity_shortcut)."""
    o_ref[...] = jnp.maximum(
        y3_ref[...].astype(jnp.float32) * sc3_ref[...] + sh3_ref[...]
        + xs_ref[...].astype(jnp.float32), 0.0)


# ---------------------------------------------------------------------------
# Bottleneck forward (Pallas)
# ---------------------------------------------------------------------------
def bottleneck_forward(x_nchw, p, stride=1):
    x = jnp.transpose(x_nchw, (0, 2, 3, 1)).astype(jnp.float32)     # NHWC
    n, h, w, cin = x.shape
    cmid = p['w1'].shape[1]
    cout = p['w3'].shape[1]
    cin_p = _pad_to(cin, LANE)
    cmid_p = _pad_to(cmid, LANE)
    cout_p = _pad_to(cout, LANE)
    ho = (h - 1) // stride + 1
    wo = (w - 1) // stride + 1
    m1, m2 = n * h * w, n * ho * wo

    def cparams(sem):
        return pltpu.CompilerParams(dimension_semantics=sem,
                                    vmem_limit_bytes=VMEM_LIMIT)

    # lane-dense (channel padded) bf16 weights, f32 BN params
    w1 = _pad2d(p['w1'], cin_p, cmid_p, COMPUTE_DT)
    w2 = jnp.pad(p['w2'], ((0, 0), (0, 0), (0, cmid_p - cmid),
                           (0, cmid_p - cmid))).astype(COMPUTE_DT)
    w3 = _pad2d(p['w3'], cmid_p, cout_p, COMPUTE_DT)
    g1 = _pad2d(p['g1'], 1, cmid_p); b1 = _pad2d(p['b1'], 1, cmid_p)
    g2 = _pad2d(p['g2'], 1, cmid_p); b2 = _pad2d(p['b2'], 1, cmid_p)
    g3 = _pad2d(p['g3'], 1, cout_p); b3 = _pad2d(p['b3'], 1, cout_p)

    x_bf = x.astype(COMPUTE_DT)

    # ---- stage 1: conv1 (1x1) GEMM + bn1 batch statistics ------------------
    tm1, m1_pad = _row_tile(m1)
    gm1 = m1_pad // tm1
    x2d = _pad2d(x_bf.reshape(m1, cin), m1_pad, cin_p)   # zero rows: stats-safe
    y1, st1 = pl.pallas_call(
        gemm_stats_kernel,
        out_shape=(jax.ShapeDtypeStruct((m1_pad, cmid_p), COMPUTE_DT),
                   jax.ShapeDtypeStruct((8, cmid_p), jnp.float32)),
        grid=(gm1,),
        in_specs=[pl.BlockSpec((tm1, cin_p), lambda i: (i, 0)),
                  pl.BlockSpec((cin_p, cmid_p), lambda i: (0, 0))],
        out_specs=(pl.BlockSpec((tm1, cmid_p), lambda i: (i, 0)),
                   pl.BlockSpec((8, cmid_p), lambda i: (0, 0))),
        compiler_params=cparams(("arbitrary",)),
    )(x2d, w1)
    sc1, sh1 = _scale_shift(st1, g1, b1, float(m1))

    # ---- stage 2: bn1 + ReLU fused with conv2 halo padding (one pass) ------
    hp, wp = h + 2, w + 2
    hpad = pl.pallas_call(
        functools.partial(bn1_relu_pad_kernel, h=h, w=w),
        out_shape=jax.ShapeDtypeStruct((n, hp, wp, cmid_p), COMPUTE_DT),
        grid=(n,),
        in_specs=[pl.BlockSpec((h * w, cmid_p), lambda b: (b, 0)),
                  pl.BlockSpec((1, cmid_p), lambda b: (0, 0)),
                  pl.BlockSpec((1, cmid_p), lambda b: (0, 0))],
        out_specs=pl.BlockSpec((1, hp, wp, cmid_p), lambda b: (b, 0, 0, 0)),
        compiler_params=cparams(("parallel",)),
    )(y1, sc1, sh1)

    # ---- stage 3: conv2 (3x3, pad=1, stride) + bn2 batch statistics --------
    th = _h_tile(ho, wo)
    n_ht = ho // th
    tm2, m2_pad = _row_tile(m2)
    gm2 = m2_pad // tm2
    y2, st2 = pl.pallas_call(
        functools.partial(conv3x3_stats_kernel, th=th, wo=wo, stride=stride),
        out_shape=(jax.ShapeDtypeStruct((m2_pad, cmid_p), COMPUTE_DT),
                   jax.ShapeDtypeStruct((8, cmid_p), jnp.float32)),
        grid=(n, n_ht),
        in_specs=[pl.BlockSpec((1, hp, wp, cmid_p), lambda b, t: (b, 0, 0, 0)),
                  pl.BlockSpec((3, 3, cmid_p, cmid_p),
                               lambda b, t: (0, 0, 0, 0))],
        out_specs=(pl.BlockSpec((th * wo, cmid_p),
                                lambda b, t: (b * n_ht + t, 0)),
                   pl.BlockSpec((8, cmid_p), lambda b, t: (0, 0))),
        scratch_shapes=[pltpu.VMEM((th * wo, cmid_p), jnp.float32)],
        compiler_params=cparams(("arbitrary", "arbitrary")),
    )(hpad, w2)
    sc2, sh2 = _scale_shift(st2, g2, b2, float(m2))

    # ---- stage 4: bn2+relu fused into conv3 GEMM (+ shortcut GEMM) ---------
    xs = x_bf[:, ::stride, ::stride, :].reshape(m2, cin)
    valid = m2 if m2_pad > m2 else None      # mask y2's uninitialized tail rows
    if 'ws' in p:                                      # projection shortcut
        ws = _pad2d(p['ws'], cin_p, cout_p, COMPUTE_DT)
        gs = _pad2d(p['gs'], 1, cout_p); bs = _pad2d(p['bs'], 1, cout_p)
        xs_p = _pad2d(xs, m2_pad, cin_p)
        y3, ys, st3, sts = pl.pallas_call(
            functools.partial(conv3_proj_stats_kernel, tm=tm2, valid_rows=valid),
            out_shape=(jax.ShapeDtypeStruct((m2_pad, cout_p), COMPUTE_DT),
                       jax.ShapeDtypeStruct((m2_pad, cout_p), COMPUTE_DT),
                       jax.ShapeDtypeStruct((8, cout_p), jnp.float32),
                       jax.ShapeDtypeStruct((8, cout_p), jnp.float32)),
            grid=(gm2,),
            in_specs=[pl.BlockSpec((tm2, cmid_p), lambda i: (i, 0)),
                      pl.BlockSpec((1, cmid_p), lambda i: (0, 0)),
                      pl.BlockSpec((1, cmid_p), lambda i: (0, 0)),
                      pl.BlockSpec((cmid_p, cout_p), lambda i: (0, 0)),
                      pl.BlockSpec((tm2, cin_p), lambda i: (i, 0)),
                      pl.BlockSpec((cin_p, cout_p), lambda i: (0, 0))],
            out_specs=(pl.BlockSpec((tm2, cout_p), lambda i: (i, 0)),
                       pl.BlockSpec((tm2, cout_p), lambda i: (i, 0)),
                       pl.BlockSpec((8, cout_p), lambda i: (0, 0)),
                       pl.BlockSpec((8, cout_p), lambda i: (0, 0))),
            compiler_params=cparams(("arbitrary",)),
        )(y2, sc2, sh2, w3, xs_p, ws)
        sc3, sh3 = _scale_shift(st3, g3, b3, float(m2))
        scs, shs = _scale_shift(sts, gs, bs, float(m2))
        out2d = pl.pallas_call(
            residual_proj_kernel,
            out_shape=jax.ShapeDtypeStruct((m2_pad, cout_p), jnp.float32),
            grid=(gm2,),
            in_specs=[pl.BlockSpec((tm2, cout_p), lambda i: (i, 0)),
                      pl.BlockSpec((1, cout_p), lambda i: (0, 0)),
                      pl.BlockSpec((1, cout_p), lambda i: (0, 0)),
                      pl.BlockSpec((tm2, cout_p), lambda i: (i, 0)),
                      pl.BlockSpec((1, cout_p), lambda i: (0, 0)),
                      pl.BlockSpec((1, cout_p), lambda i: (0, 0))],
            out_specs=pl.BlockSpec((tm2, cout_p), lambda i: (i, 0)),
            compiler_params=cparams(("parallel",)),
        )(y3, sc3, sh3, ys, scs, shs)
    else:                                              # identity shortcut
        xs_p = _pad2d(xs, m2_pad, cout_p)              # cin == cout here
        y3, st3 = pl.pallas_call(
            functools.partial(conv3_id_stats_kernel, tm=tm2, valid_rows=valid),
            out_shape=(jax.ShapeDtypeStruct((m2_pad, cout_p), COMPUTE_DT),
                       jax.ShapeDtypeStruct((8, cout_p), jnp.float32)),
            grid=(gm2,),
            in_specs=[pl.BlockSpec((tm2, cmid_p), lambda i: (i, 0)),
                      pl.BlockSpec((1, cmid_p), lambda i: (0, 0)),
                      pl.BlockSpec((1, cmid_p), lambda i: (0, 0)),
                      pl.BlockSpec((cmid_p, cout_p), lambda i: (0, 0))],
            out_specs=(pl.BlockSpec((tm2, cout_p), lambda i: (i, 0)),
                       pl.BlockSpec((8, cout_p), lambda i: (0, 0))),
            compiler_params=cparams(("arbitrary",)),
        )(y2, sc2, sh2, w3)
        sc3, sh3 = _scale_shift(st3, g3, b3, float(m2))
        out2d = pl.pallas_call(
            residual_id_kernel,
            out_shape=jax.ShapeDtypeStruct((m2_pad, cout_p), jnp.float32),
            grid=(gm2,),
            in_specs=[pl.BlockSpec((tm2, cout_p), lambda i: (i, 0)),
                      pl.BlockSpec((1, cout_p), lambda i: (0, 0)),
                      pl.BlockSpec((1, cout_p), lambda i: (0, 0)),
                      pl.BlockSpec((tm2, cout_p), lambda i: (i, 0))],
            out_specs=pl.BlockSpec((tm2, cout_p), lambda i: (i, 0)),
            compiler_params=cparams(("parallel",)),
        )(y3, sc3, sh3, xs_p)

    out = out2d[:m2, :cout].reshape(n, ho, wo, cout)
    return jnp.transpose(out, (0, 3, 1, 2))                        # back to NCHW


# ---------------------------------------------------------------------------
# Deterministic parameter init (shapes from Bottleneck.__init__)
# ---------------------------------------------------------------------------
def init_params(key, in_planes, planes, stride=1, expansion=4):
    out_planes = expansion * planes
    ks = jax.random.split(key, 16)

    def wini(k, shape, fan_in):
        return jax.random.normal(k, shape, jnp.float32) / jnp.sqrt(float(fan_in))

    def bn_init(kg, kb, c):
        g = jax.random.uniform(kg, (1, c), jnp.float32, 0.5, 1.5)
        b = 0.1 * jax.random.normal(kb, (1, c), jnp.float32)
        return g, b

    p = {}
    p['w1'] = wini(ks[0], (in_planes, planes), in_planes)            # conv1 1x1
    p['g1'], p['b1'] = bn_init(ks[1], ks[2], planes)
    p['w2'] = wini(ks[3], (3, 3, planes, planes), 9 * planes)        # conv2 3x3 HWIO
    p['g2'], p['b2'] = bn_init(ks[4], ks[5], planes)
    p['w3'] = wini(ks[6], (planes, out_planes), planes)              # conv3 1x1
    p['g3'], p['b3'] = bn_init(ks[7], ks[8], out_planes)
    if stride != 1 or in_planes != out_planes:
        p['ws'] = wini(ks[9], (in_planes, out_planes), in_planes)    # shortcut 1x1
        p['gs'], p['bs'] = bn_init(ks[10], ks[11], out_planes)
    return p


# ---------------------------------------------------------------------------
# Pure-JAX reference (same math, f32 XLA convs) for verification
# ---------------------------------------------------------------------------
def _bn_ref(y, g, b):  # y: (N,H,W,C)
    mean = jnp.mean(y, axis=(0, 1, 2), keepdims=True)
    var = jnp.mean(jnp.square(y - mean), axis=(0, 1, 2), keepdims=True)
    return (y - mean) * jax.lax.rsqrt(var + EPS) * g.reshape(1, 1, 1, -1) \
        + b.reshape(1, 1, 1, -1)


def bottleneck_reference(x_nchw, p, stride=1):
    x = jnp.transpose(x_nchw, (0, 2, 3, 1)).astype(jnp.float32)

    def conv(inp, w_hwio, s, pad):
        return jax.lax.conv_general_dilated(
            inp, w_hwio, (s, s), pad,
            dimension_numbers=('NHWC', 'HWIO', 'NHWC'),
            precision=jax.lax.Precision.HIGHEST)

    cin, planes = p['w1'].shape
    cout = p['w3'].shape[1]
    h = jax.nn.relu(_bn_ref(conv(x, p['w1'].reshape(1, 1, cin, planes), 1, 'VALID'),
                            p['g1'], p['b1']))
    h = jax.nn.relu(_bn_ref(conv(h, p['w2'], stride, [(1, 1), (1, 1)]),
                            p['g2'], p['b2']))
    y = _bn_ref(conv(h, p['w3'].reshape(1, 1, planes, cout), 1, 'VALID'),
                p['g3'], p['b3'])
    if 'ws' in p:
        s = _bn_ref(conv(x, p['ws'].reshape(1, 1, cin, cout), stride, 'VALID'),
                    p['gs'], p['bs'])
    else:
        s = x
    out = jax.nn.relu(y + s)
    return jnp.transpose(out, (0, 3, 1, 2))


# ---------------------------------------------------------------------------
if __name__ == "__main__":
    key = jax.random.PRNGKey(0)
    k1, k2, k3, k4 = jax.random.split(key, 4)

    fwd = jax.jit(lambda xx, pp: bottleneck_forward(xx, pp, stride=1))

    # bf16 activation/weight storage -> looser tolerance than the f32 reference
    RTOL, ATOL = 5e-2, 7e-2

    # --- test 1: projection shortcut (in_planes != expansion*planes) --------
    in_planes, planes = 4, 4
    x = jax.random.normal(k1, (2, in_planes, 16, 16), jnp.float32)
    params = init_params(k2, in_planes, planes, stride=1)
    out = jax.block_until_ready(fwd(x, params))
    assert out.shape == (2, 4 * planes, 16, 16), out.shape
    ref = bottleneck_reference(x, params, stride=1)
    err = float(jnp.max(jnp.abs(out - ref)))
    assert jnp.allclose(out, ref, rtol=RTOL, atol=ATOL), f"proj max abs err {err}"

    # --- test 2: identity shortcut, larger spatial (multi h-tile grid) ------
    in_planes2, planes2 = 16, 4
    x2 = jax.random.normal(k3, (2, in_planes2, 32, 32), jnp.float32)
    params2 = init_params(k4, in_planes2, planes2, stride=1)
    out2 = jax.block_until_ready(fwd(x2, params2))
    assert out2.shape == (2, 4 * planes2, 32, 32), out2.shape
    ref2 = bottleneck_reference(x2, params2, stride=1)
    err2 = float(jnp.max(jnp.abs(out2 - ref2)))
    assert jnp.allclose(out2, ref2, rtol=RTOL, atol=ATOL), f"id max abs err {err2}"

    # TODO(synk): PyTorch running-stat (running_mean/var) updates are not modeled;
    # the stride>1 conv2 tap path is implemented but not exercised by this demo.
    print("KERNEL_OK")
</pallas_src>

<mosaic_0001>
module attributes {stable_mosaic.version = 11 : i64} {
  func.func @gemm_stats_kernel(%arg0: i32, %arg1: memref<512x128xbf16, #tpu.memory_space<vmem>>, %arg2: memref<128x128xbf16, #tpu.memory_space<vmem>>, %arg3: memref<512x128xbf16, #tpu.memory_space<vmem>>, %arg4: memref<8x128xf32, #tpu.memory_space<vmem>>) attributes {dimension_semantics = [#tpu.dimension_semantics<arbitrary>], iteration_bounds = array<i64: 1>, scalar_prefetch = 0 : i64, scratch_operands = 0 : i64, tpu.core_type = #tpu.core_type<tc>, window_params = [{transform_indices = @transform_0, window_bounds = array<i64: 512, 128>}, {pipeline_mode = #tpu.pipeline_mode<synchronous>, transform_indices = @transform_1, window_bounds = array<i64: 128, 128>}, {transform_indices = @transform_2, window_bounds = array<i64: 512, 128>}, {pipeline_mode = #tpu.pipeline_mode<synchronous>, transform_indices = @transform_3, window_bounds = array<i64: 8, 128>}]} {
    %c0_i32 = arith.constant 0 : i32
    %0 = arith.cmpi eq, %arg0, %c0_i32 : i32
    %1 = arith.extui %0 : i1 to i32
    %c0_i32_0 = arith.constant 0 : i32
    %2 = arith.cmpi ne, %1, %c0_i32_0 : i32
    scf.if %2 {
      %cst_15 = arith.constant 0.000000e+00 : f32
      %19 = vector.broadcast %cst_15 : f32 to vector<8x128xf32>
      %c0_16 = arith.constant 0 : index
      %c0_17 = arith.constant 0 : index
      %20 = vector.load %arg4[%c0_16, %c0_17] : memref<8x128xf32, #tpu.memory_space<vmem>>, vector<8x128xf32>
      tpu.vector_store %arg4[%c0_16, %c0_17], %19 {strides = array<i32>} : memref<8x128xf32, #tpu.memory_space<vmem>>, vector<8x128xf32>,
    } else {
    }
    %c0 = arith.constant 0 : index
    %c0_1 = arith.constant 0 : index
    %3 = vector.load %arg1[%c0, %c0_1] : memref<512x128xbf16, #tpu.memory_space<vmem>>, vector<512x128xbf16>
    %c0_2 = arith.constant 0 : index
    %c0_3 = arith.constant 0 : index
    %4 = vector.load %arg2[%c0_2, %c0_3] : memref<128x128xbf16, #tpu.memory_space<vmem>>, vector<128x128xbf16>
    %cst = arith.constant dense<0.000000e+00> : vector<512x128xf32>
    %5 = tpu.matmul %3, %4, %cst {dimension_numbers = #tpu.dot_dimension_numbers<[1], [0], [0], [1], [0, 0, 1, 1], [], []>} : vector<512x128xbf16>, vector<128x128xbf16>, vector<512x128xf32> -> vector<512x128xf32>
    %6 = arith.truncf %5 : vector<512x128xf32> to vector<512x128xbf16>
    %c0_4 = arith.constant 0 : index
    %c0_5 = arith.constant 0 : index
    %7 = vector.load %arg3[%c0_4, %c0_5] : memref<512x128xbf16, #tpu.memory_space<vmem>>, vector<512x128xbf16>
    tpu.vector_store %arg3[%c0_4, %c0_5], %6 {strides = array<i32>} : memref<512x128xbf16, #tpu.memory_space<vmem>>, vector<512x128xbf16>,
    %c0_6 = arith.constant 0 : index
    %c0_7 = arith.constant 0 : index
    %8 = vector.load %arg4[%c0_6, %c0_7] : memref<8x128xf32, #tpu.memory_space<vmem>>, vector<1x128xf32>
    %cst_8 = arith.constant dense<0.000000e+00> : vector<128xf32>
    %9 = vector.multi_reduction <add>, %5, %cst_8 [0] : vector<512x128xf32> to vector<128xf32>
    %10 = vector.shape_cast %9 : vector<128xf32> to vector<1x128xf32>
    %11 = arith.addf %8, %10 : vector<1x128xf32>
    %c0_9 = arith.constant 0 : index
    %c0_10 = arith.constant 0 : index
    %12 = vector.load %arg4[%c0_9, %c0_10] : memref<8x128xf32, #tpu.memory_space<vmem>>, vector<1x128xf32>
    tpu.vector_store %arg4[%c0_9, %c0_10], %11 {strides = array<i32>} : memref<8x128xf32, #tpu.memory_space<vmem>>, vector<1x128xf32>,
    %c1 = arith.constant 1 : index
    %c0_11 = arith.constant 0 : index
    %13 = vector.load %arg4[%c1, %c0_11] : memref<8x128xf32, #tpu.memory_space<vmem>>, vector<1x128xf32>
    %14 = arith.mulf %5, %5 : vector<512x128xf32>
    %cst_12 = arith.constant dense<0.000000e+00> : vector<128xf32>
    %15 = vector.multi_reduction <add>, %14, %cst_12 [0] : vector<512x128xf32> to vector<128xf32>
    %16 = vector.shape_cast %15 : vector<128xf32> to vector<1x128xf32>
    %17 = arith.addf %13, %16 : vector<1x128xf32>
    %c1_13 = arith.constant 1 : index
    %c0_14 = arith.constant 0 : index
    %18 = vector.load %arg4[%c1_13, %c0_14] : memref<8x128xf32, #tpu.memory_space<vmem>>, vector<1x128xf32>
    tpu.vector_store %arg4[%c1_13, %c0_14], %17 {strides = array<i32>} : memref<8x128xf32, #tpu.memory_space<vmem>>, vector<1x128xf32>,
    return
  }
  func.func @transform_0(%arg0: i32) -> (i32, i32) {
    %c0_i32 = arith.constant 0 : i32
    %c0_i32_0 = arith.constant 0 : i32
    return %arg0, %c0_i32 : i32, i32
  }
  func.func @transform_1(%arg0: i32) -> (i32, i32) {
    %c0_i32 = arith.constant 0 : i32
    %c0_i32_0 = arith.constant 0 : i32
    %c0_i32_1 = arith.constant 0 : i32
    return %c0_i32, %c0_i32_0 : i32, i32
  }
  func.func @transform_2(%arg0: i32) -> (i32, i32) {
    %c0_i32 = arith.constant 0 : i32
    %c0_i32_0 = arith.constant 0 : i32
    return %arg0, %c0_i32 : i32, i32
  }
  func.func @transform_3(%arg0: i32) -> (i32, i32) {
    %c0_i32 = arith.constant 0 : i32
    %c0_i32_0 = arith.constant 0 : i32
    %c0_i32_1 = arith.constant 0 : i32
    return %c0_i32, %c0_i32_0 : i32, i32
  }
}

module attributes {stable_mosaic.version = 11 : i64} {
  func.func @bn1_relu_pad_kernel(%arg0: i32, %arg1: memref<256x128xbf16, #tpu.memory_space<vmem>>, %arg2: memref<1x128xf32, #tpu.memory_space<vmem>>, %arg3: memref<1x128xf32, #tpu.memory_space<vmem>>, %arg4: memref<1x18x18x128xbf16, #tpu.memory_space<vmem>>) attributes {dimension_semantics = [#tpu.dimension_semantics<parallel>], iteration_bounds = array<i64: 2>, scalar_prefetch = 0 : i64, scratch_operands = 0 : i64, tpu.core_type = #tpu.core_type<tc>, window_params = [{transform_indices = @transform_0, window_bounds = array<i64: 256, 128>}, {pipeline_mode = #tpu.pipeline_mode<synchronous>, transform_indices = @transform_1, window_bounds = array<i64: 1, 128>}, {pipeline_mode = #tpu.pipeline_mode<synchronous>, transform_indices = @transform_2, window_bounds = array<i64: 1, 128>}, {transform_indices = @transform_3, window_bounds = array<i64: 1, 18, 18, 128>}]} {
    %cst = arith.constant 0.000000e+00 : bf16
    %0 = vector.broadcast %cst : bf16 to vector<1x18x18x128xbf16>
    %c0 = arith.constant 0 : index
    %c0_0 = arith.constant 0 : index
    %c0_1 = arith.constant 0 : index
    %c0_2 = arith.constant 0 : index
    %1 = vector.load %arg4[%c0, %c0_0, %c0_1, %c0_2] : memref<1x18x18x128xbf16, #tpu.memory_space<vmem>>, vector<1x18x18x128xbf16>
    tpu.vector_store %arg4[%c0, %c0_0, %c0_1, %c0_2], %0 {strides = array<i32>} : memref<1x18x18x128xbf16, #tpu.memory_space<vmem>>, vector<1x18x18x128xbf16>,
    %c0_3 = arith.constant 0 : index
    %c0_4 = arith.constant 0 : index
    %2 = vector.load %arg1[%c0_3, %c0_4] : memref<256x128xbf16, #tpu.memory_space<vmem>>, vector<256x128xbf16>
    %3 = arith.extf %2 : vector<256x128xbf16> to vector<256x128xf32>
    %c0_5 = arith.constant 0 : index
    %c0_6 = arith.constant 0 : index
    %4 = vector.load %arg2[%c0_5, %c0_6] : memref<1x128xf32, #tpu.memory_space<vmem>>, vector<1x128xf32>
    %5 = vector.broadcast %4 : vector<1x128xf32> to vector<256x128xf32>
    %6 = arith.mulf %3, %5 : vector<256x128xf32>
    %c0_7 = arith.constant 0 : index
    %c0_8 = arith.constant 0 : index
    %7 = vector.load %arg3[%c0_7, %c0_8] : memref<1x128xf32, #tpu.memory_space<vmem>>, vector<1x128xf32>
    %8 = vector.broadcast %7 : vector<1x128xf32> to vector<256x128xf32>
    %9 = arith.addf %6, %8 : vector<256x128xf32>
    %cst_9 = arith.constant 0.000000e+00 : f32
    %10 = vector.broadcast %cst_9 : f32 to vector<256x128xf32>
    %11 = arith.maximumf %9, %10 : vector<256x128xf32>
    %12 = vector.shape_cast %11 : vector<256x128xf32> to vector<16x16x128xf32>
    %13 = arith.truncf %12 : vector<16x16x128xf32> to vector<16x16x128xbf16>
    %c0_10 = arith.constant 0 : index
    %c1 = arith.constant 1 : index
    %c1_11 = arith.constant 1 : index
    %c0_12 = arith.constant 0 : index
    %14 = vector.load %arg4[%c0_10, %c1, %c1_11, %c0_12] : memref<1x18x18x128xbf16, #tpu.memory_space<vmem>>, vector<1x16x16x128xbf16>
    %15 = vector.shape_cast %14 : vector<1x16x16x128xbf16> to vector<16x16x128xbf16>
    %16 = vector.shape_cast %13 : vector<16x16x128xbf16> to vector<1x16x16x128xbf16>
    tpu.vector_store %arg4[%c0_10, %c1, %c1_11, %c0_12], %16 {strides = array<i32>} : memref<1x18x18x128xbf16, #tpu.memory_space<vmem>>, vector<1x16x16x128xbf16>,
    return
  }
  func.func @transform_0(%arg0: i32) -> (i32, i32) {
    %c0_i32 = arith.constant 0 : i32
    %c0_i32_0 = arith.constant 0 : i32
    return %arg0, %c0_i32 : i32, i32
  }
  func.func @transform_1(%arg0: i32) -> (i32, i32) {
    %c0_i32 = arith.constant 0 : i32
    %c0_i32_0 = arith.constant 0 : i32
    %c0_i32_1 = arith.constant 0 : i32
    return %c0_i32, %c0_i32_0 : i32, i32
  }
  func.func @transform_2(%arg0: i32) -> (i32, i32) {
    %c0_i32 = arith.constant 0 : i32
    %c0_i32_0 = arith.constant 0 : i32
    %c0_i32_1 = arith.constant 0 : i32
    return %c0_i32, %c0_i32_0 : i32, i32
  }
  func.func @transform_3(%arg0: i32) -> (i32, i32, i32, i32) {
    %c0_i32 = arith.constant 0 : i32
    %c0_i32_0 = arith.constant 0 : i32
    %c0_i32_1 = arith.constant 0 : i32
    %c0_i32_2 = arith.constant 0 : i32
    return %arg0, %c0_i32, %c0_i32_0, %c0_i32_1 : i32, i32, i32, i32
  }
}

module attributes {stable_mosaic.version = 11 : i64} {
  func.func @conv3x3_stats_kernel(%arg0: i32, %arg1: i32, %arg2: memref<1x18x18x128xbf16, #tpu.memory_space<vmem>>, %arg3: memref<3x3x128x128xbf16, #tpu.memory_space<vmem>>, %arg4: memref<256x128xbf16, #tpu.memory_space<vmem>>, %arg5: memref<8x128xf32, #tpu.memory_space<vmem>>, %arg6: memref<256x128xf32, #tpu.memory_space<vmem>>) attributes {dimension_semantics = [#tpu.dimension_semantics<arbitrary>, #tpu.dimension_semantics<arbitrary>], iteration_bounds = array<i64: 2, 1>, scalar_prefetch = 0 : i64, scratch_operands = 1 : i64, tpu.core_type = #tpu.core_type<tc>, window_params = [{transform_indices = @transform_0, window_bounds = array<i64: 1, 18, 18, 128>}, {pipeline_mode = #tpu.pipeline_mode<synchronous>, transform_indices = @transform_1, window_bounds = array<i64: 3, 3, 128, 128>}, {transform_indices = @transform_2, window_bounds = array<i64: 256, 128>}, {pipeline_mode = #tpu.pipeline_mode<synchronous>, transform_indices = @transform_3, window_bounds = array<i64: 8, 128>}]} {
    %c0_i32 = arith.constant 0 : i32
    %0 = arith.cmpi eq, %arg0, %c0_i32 : i32
    %c0_i32_0 = arith.constant 0 : i32
    %1 = arith.cmpi eq, %arg1, %c0_i32_0 : i32
    %2 = arith.andi %0, %1 : i1
    %3 = arith.extui %2 : i1 to i32
    %c0_i32_1 = arith.constant 0 : i32
    %4 = arith.cmpi ne, %3, %c0_i32_1 : i32
    scf.if %4 {
      %cst_78 = arith.constant 0.000000e+00 : f32
      %91 = vector.broadcast %cst_78 : f32 to vector<8x128xf32>
      %c0_79 = arith.constant 0 : index
      %c0_80 = arith.constant 0 : index
      %92 = vector.load %arg5[%c0_79, %c0_80] : memref<8x128xf32, #tpu.memory_space<vmem>>, vector<8x128xf32>
      tpu.vector_store %arg5[%c0_79, %c0_80], %91 {strides = array<i32>} : memref<8x128xf32, #tpu.memory_space<vmem>>, vector<8x128xf32>,
    } else {
    }
    %c16_i32 = arith.constant 16 : i32
    %5 = arith.muli %arg1, %c16_i32 : i32
    %c1_i32 = arith.constant 1 : i32
    %6 = arith.muli %5, %c1_i32 : i32
    %c0_i32_2 = arith.constant 0 : i32
    %7 = arith.addi %6, %c0_i32_2 : i32
    %c0 = arith.constant 0 : index
    %8 = arith.index_cast %7 : i32 to index
    %c0_3 = arith.constant 0 : index
    %c0_4 = arith.constant 0 : index
    %9 = vector.load %arg2[%c0, %8, %c0_3, %c0_4] : memref<1x18x18x128xbf16, #tpu.memory_space<vmem>>, vector<1x16x18x128xbf16>
    %10 = vector.shape_cast %9 : vector<1x16x18x128xbf16> to vector<16x18x128xbf16>
    %11 = vector.extract_strided_slice %10 {offsets = [0, 0, 0], sizes = [16, 16, 128], strides = [1, 1, 1]} : vector<16x18x128xbf16> to vector<16x16x128xbf16>
    %12 = vector.shape_cast %11 : vector<16x16x128xbf16> to vector<256x128xbf16>
    %c0_5 = arith.constant 0 : index
    %c0_6 = arith.constant 0 : index
    %c0_7 = arith.constant 0 : index
    %c0_8 = arith.constant 0 : index
    %13 = vector.load %arg3[%c0_5, %c0_6, %c0_7, %c0_8] : memref<3x3x128x128xbf16, #tpu.memory_space<vmem>>, vector<1x1x128x128xbf16>
    %14 = vector.shape_cast %13 : vector<1x1x128x128xbf16> to vector<128x128xbf16>
    %cst = arith.constant dense<0.000000e+00> : vector<256x128xf32>
    %15 = tpu.matmul %12, %14, %cst {dimension_numbers = #tpu.dot_dimension_numbers<[1], [0], [0], [1], [0, 0, 1, 1], [], []>} : vector<256x128xbf16>, vector<128x128xbf16>, vector<256x128xf32> -> vector<256x128xf32>
    %16 = vector.extract_strided_slice %10 {offsets = [0, 1, 0], sizes = [16, 16, 128], strides = [1, 1, 1]} : vector<16x18x128xbf16> to vector<16x16x128xbf16>
    %17 = vector.shape_cast %16 : vector<16x16x128xbf16> to vector<256x128xbf16>
    %c0_9 = arith.constant 0 : index
    %c1 = arith.constant 1 : index
    %c0_10 = arith.constant 0 : index
    %c0_11 = arith.constant 0 : index
    %18 = vector.load %arg3[%c0_9, %c1, %c0_10, %c0_11] : memref<3x3x128x128xbf16, #tpu.memory_space<vmem>>, vector<1x1x128x128xbf16>
    %19 = vector.shape_cast %18 : vector<1x1x128x128xbf16> to vector<128x128xbf16>
    %cst_12 = arith.constant dense<0.000000e+00> : vector<256x128xf32>
    %20 = tpu.matmul %17, %19, %cst_12 {dimension_numbers = #tpu.dot_dimension_numbers<[1], [0], [0], [1], [0, 0, 1, 1], [], []>} : vector<256x128xbf16>, vector<128x128xbf16>, vector<256x128xf32> -> vector<256x128xf32>
    %21 = arith.addf %15, %20 : vector<256x128xf32>
    %22 = vector.extract_strided_slice %10 {offsets = [0, 2, 0], sizes = [16, 16, 128], strides = [1, 1, 1]} : vector<16x18x128xbf16> to vector<16x16x128xbf16>
    %23 = vector.shape_cast %22 : vector<16x16x128xbf16> to vector<256x128xbf16>
    %c0_13 = arith.constant 0 : index
    %c2 = arith.constant 2 : index
    %c0_14 = arith.constant 0 : index
    %c0_15 = arith.constant 0 : index
    %24 = vector.load %arg3[%c0_13, %c2, %c0_14, %c0_15] : memref<3x3x128x128xbf16, #tpu.memory_space<vmem>>, vector<1x1x128x128xbf16>
    %25 = vector.shape_cast %24 : vector<1x1x128x128xbf16> to vector<128x128xbf16>
    %cst_16 = arith.constant dense<0.000000e+00> : vector<256x128xf32>
    %26 = tpu.matmul %23, %25, %cst_16 {dimension_numbers = #tpu.dot_dimension_numbers<[1], [0], [0], [1], [0, 0, 1, 1], [], []>} : vector<256x128xbf16>, vector<128x128xbf16>, vector<256x128xf32> -> vector<256x128xf32>
    %27 = arith.addf %21, %26 : vector<256x128xf32>
    %c0_17 = arith.constant 0 : index
    %c0_18 = arith.constant 0 : index
    %28 = vector.load %arg6[%c0_17, %c0_18] : memref<256x128xf32, #tpu.memory_space<vmem>>, vector<256x128xf32>
    tpu.vector_store %arg6[%c0_17, %c0_18], %27 {strides = array<i32>} : memref<256x128xf32, #tpu.memory_space<vmem>>, vector<256x128xf32>,
    %c1_i32_19 = arith.constant 1 : i32
    %29 = arith.addi %6, %c1_i32_19 : i32
    %c0_20 = arith.constant 0 : index
    %30 = arith.index_cast %29 : i32 to index
    %c0_21 = arith.constant 0 : index
    %c0_22 = arith.constant 0 : index
    %31 = vector.load %arg2[%c0_20, %30, %c0_21, %c0_22] : memref<1x18x18x128xbf16, #tpu.memory_space<vmem>>, vector<1x16x18x128xbf16>
    %32 = vector.shape_cast %31 : vector<1x16x18x128xbf16> to vector<16x18x128xbf16>
    %33 = vector.extract_strided_slice %32 {offsets = [0, 0, 0], sizes = [16, 16, 128], strides = [1, 1, 1]} : vector<16x18x128xbf16> to vector<16x16x128xbf16>
    %34 = vector.shape_cast %33 : vector<16x16x128xbf16> to vector<256x128xbf16>
    %c1_23 = arith.constant 1 : index
    %c0_24 = arith.constant 0 : index
    %c0_25 = arith.constant 0 : index
    %c0_26 = arith.constant 0 : index
    %35 = vector.load %arg3[%c1_23, %c0_24, %c0_25, %c0_26] : memref<3x3x128x128xbf16, #tpu.memory_space<vmem>>, vector<1x1x128x128xbf16>
    %36 = vector.shape_cast %35 : vector<1x1x128x128xbf16> to vector<128x128xbf16>
    %cst_27 = arith.constant dense<0.000000e+00> : vector<256x128xf32>
    %37 = tpu.matmul %34, %36, %cst_27 {dimension_numbers = #tpu.dot_dimension_numbers<[1], [0], [0], [1], [0, 0, 1, 1], [], []>} : vector<256x128xbf16>, vector<128x128xbf16>, vector<256x128xf32> -> vector<256x128xf32>
    %38 = vector.extract_strided_slice %32 {offsets = [0, 1, 0], sizes = [16, 16, 128], strides = [1, 1, 1]} : vector<16x18x128xbf16> to vector<16x16x128xbf16>
    %39 = vector.shape_cast %38 : vector<16x16x128xbf16> to vector<256x128xbf16>
    %c1_28 = arith.constant 1 : index
    %c1_29 = arith.constant 1 : index
    %c0_30 = arith.constant 0 : index
    %c0_31 = arith.constant 0 : index
    %40 = vector.load %arg3[%c1_28, %c1_29, %c0_30, %c0_31] : memref<3x3x128x128xbf16, #tpu.memory_space<vmem>>, vector<1x1x128x128xbf16>
    %41 = vector.shape_cast %40 : vector<1x1x128x128xbf16> to vector<128x128xbf16>
    %cst_32 = arith.constant dense<0.000000e+00> : vector<256x128xf32>
    %42 = tpu.matmul %39, %41, %cst_32 {dimension_numbers = #tpu.dot_dimension_numbers<[1], [0], [0], [1], [0, 0, 1, 1], [], []>} : vector<256x128xbf16>, vector<128x128xbf16>, vector<256x128xf32> -> vector<256x128xf32>
    %43 = arith.addf %37, %42 : vector<256x128xf32>
    %44 = vector.extract_strided_slice %32 {offsets = [0, 2, 0], sizes = [16, 16, 128], strides = [1, 1, 1]} : vector<16x18x128xbf16> to vector<16x16x128xbf16>
    %45 = vector.shape_cast %44 : vector<16x16x128xbf16> to vector<256x128xbf16>
    %c1_33 = arith.constant 1 : index
    %c2_34 = arith.constant 2 : index
    %c0_35 = arith.constant 0 : index
    %c0_36 = arith.constant 0 : index
    %46 = vector.load %arg3[%c1_33, %c2_34, %c0_35, %c0_36] : memref<3x3x128x128xbf16, #tpu.memory_space<vmem>>, vector<1x1x128x128xbf16>
    %47 = vector.shape_cast %46 : vector<1x1x128x128xbf16> to vector<128x128xbf16>
    %cst_37 = arith.constant dense<0.000000e+00> : vector<256x128xf32>
    %48 = tpu.matmul %45, %47, %cst_37 {dimension_numbers = #tpu.dot_dimension_numbers<[1], [0], [0], [1], [0, 0, 1, 1], [], []>} : vector<256x128xbf16>, vector<128x128xbf16>, vector<256x128xf32> -> vector<256x128xf32>
    %49 = arith.addf %43, %48 : vector<256x128xf32>
    %c0_38 = arith.constant 0 : index
    %c0_39 = arith.constant 0 : index
    %50 = vector.load %arg6[%c0_38, %c0_39] : memref<256x128xf32, #tpu.memory_space<vmem>>, vector<256x128xf32>
    %51 = arith.addf %50, %49 : vector<256x128xf32>
    %c0_40 = arith.constant 0 : index
    %c0_41 = arith.constant 0 : index
    %52 = vector.load %arg6[%c0_40, %c0_41] : memref<256x128xf32, #tpu.memory_space<vmem>>, vector<256x128xf32>
    tpu.vector_store %arg6[%c0_40, %c0_41], %51 {strides = array<i32>} : memref<256x128xf32, #tpu.memory_space<vmem>>, vector<256x128xf32>,
    %c2_i32 = arith.constant 2 : i32
    %53 = arith.addi %6, %c2_i32 : i32
    %c0_42 = arith.constant 0 : index
    %54 = arith.index_cast %53 : i32 to index
    %c0_43 = arith.constant 0 : index
    %c0_44 = arith.constant 0 : index
    %55 = vector.load %arg2[%c0_42, %54, %c0_43, %c0_44] : memref<1x18x18x128xbf16, #tpu.memory_space<vmem>>, vector<1x16x18x128xbf16>
    %56 = vector.shape_cast %55 : vector<1x16x18x128xbf16> to vector<16x18x128xbf16>
    %57 = vector.extract_strided_slice %56 {offsets = [0, 0, 0], sizes = [16, 16, 128], strides = [1, 1, 1]} : vector<16x18x128xbf16> to vector<16x16x128xbf16>
    %58 = vector.shape_cast %57 : vector<16x16x128xbf16> to vector<256x128xbf16>
    %c2_45 = arith.constant 2 : index
    %c0_46 = arith.constant 0 : index
    %c0_47 = arith.constant 0 : index
    %c0_48 = arith.constant 0 : index
    %59 = vector.load %arg3[%c2_45, %c0_46, %c0_47, %c0_48] : memref<3x3x128x128xbf16, #tpu.memory_space<vmem>>, vector<1x1x128x128xbf16>
    %60 = vector.shape_cast %59 : vector<1x1x128x128xbf16> to vector<128x128xbf16>
    %cst_49 = arith.constant dense<0.000000e+00> : vector<256x128xf32>
    %61 = tpu.matmul %58, %60, %cst_49 {dimension_numbers = #tpu.dot_dimension_numbers<[1], [0], [0], [1], [0, 0, 1, 1], [], []>} : vector<256x128xbf16>, vector<128x128xbf16>, vector<256x128xf32> -> vector<256x128xf32>
    %62 = vector.extract_strided_slice %56 {offsets = [0, 1, 0], sizes = [16, 16, 128], strides = [1, 1, 1]} : vector<16x18x128xbf16> to vector<16x16x128xbf16>
    %63 = vector.shape_cast %62 : vector<16x16x128xbf16> to vector<256x128xbf16>
    %c2_50 = arith.constant 2 : index
    %c1_51 = arith.constant 1 : index
    %c0_52 = arith.constant 0 : index
    %c0_53 = arith.constant 0 : index
    %64 = vector.load %arg3[%c2_50, %c1_51, %c0_52, %c0_53] : memref<3x3x128x128xbf16, #tpu.memory_space<vmem>>, vector<1x1x128x128xbf16>
    %65 = vector.shape_cast %64 : vector<1x1x128x128xbf16> to vector<128x128xbf16>
    %cst_54 = arith.constant dense<0.000000e+00> : vector<256x128xf32>
    %66 = tpu.matmul %63, %65, %cst_54 {dimension_numbers = #tpu.dot_dimension_numbers<[1], [0], [0], [1], [0, 0, 1, 1], [], []>} : vector<256x128xbf16>, vector<128x128xbf16>, vector<256x128xf32> -> vector<256x128xf32>
    %67 = arith.addf %61, %66 : vector<256x128xf32>
    %68 = vector.extract_strided_slice %56 {offsets = [0, 2, 0], sizes = [16, 16, 128], strides = [1, 1, 1]} : vector<16x18x128xbf16> to vector<16x16x128xbf16>
    %69 = vector.shape_cast %68 : vector<16x16x128xbf16> to vector<256x128xbf16>
    %c2_55 = arith.constant 2 : index
    %c2_56 = arith.constant 2 : index
    %c0_57 = arith.constant 0 : index
    %c0_58 = arith.constant 0 : index
    %70 = vector.load %arg3[%c2_55, %c2_56, %c0_57, %c0_58] : memref<3x3x128x128xbf16, #tpu.memory_space<vmem>>, vector<1x1x128x128xbf16>
    %71 = vector.shape_cast %70 : vector<1x1x128x128xbf16> to vector<128x128xbf16>
    %cst_59 = arith.constant dense<0.000000e+00> : vector<256x128xf32>
    %72 = tpu.matmul %69, %71, %cst_59 {dimension_numbers = #tpu.dot_dimension_numbers<[1], [0], [0], [1], [0, 0, 1, 1], [], []>} : vector<256x128xbf16>, vector<128x128xbf16>, vector<256x128xf32> -> vector<256x128xf32>
    %73 = arith.addf %67, %72 : vector<256x128xf32>
    %c0_60 = arith.constant 0 : index
    %c0_61 = arith.constant 0 : index
    %74 = vector.load %arg6[%c0_60, %c0_61] : memref<256x128xf32, #tpu.memory_space<vmem>>, vector<256x128xf32>
    %75 = arith.addf %74, %73 : vector<256x128xf32>
    %c0_62 = arith.constant 0 : index
    %c0_63 = arith.constant 0 : index
    %76 = vector.load %arg6[%c0_62, %c0_63] : memref<256x128xf32, #tpu.memory_space<vmem>>, vector<256x128xf32>
    tpu.vector_store %arg6[%c0_62, %c0_63], %75 {strides = array<i32>} : memref<256x128xf32, #tpu.memory_space<vmem>>, vector<256x128xf32>,
    %c0_64 = arith.constant 0 : index
    %c0_65 = arith.constant 0 : index
    %77 = vector.load %arg6[%c0_64, %c0_65] : memref<256x128xf32, #tpu.memory_space<vmem>>, vector<256x128xf32>
    %78 = arith.truncf %77 : vector<256x128xf32> to vector<256x128xbf16>
    %c0_66 = arith.constant 0 : index
    %c0_67 = arith.constant 0 : index
    %79 = vector.load %arg4[%c0_66, %c0_67] : memref<256x128xbf16, #tpu.memory_space<vmem>>, vector<256x128xbf16>
    tpu.vector_store %arg4[%c0_66, %c0_67], %78 {strides = array<i32>} : memref<256x128xbf16, #tpu.memory_space<vmem>>, vector<256x128xbf16>,
    %c0_68 = arith.constant 0 : index
    %c0_69 = arith.constant 0 : index
    %80 = vector.load %arg5[%c0_68, %c0_69] : memref<8x128xf32, #tpu.memory_space<vmem>>, vector<1x128xf32>
    %cst_70 = arith.constant dense<0.000000e+00> : vector<128xf32>
    %81 = vector.multi_reduction <add>, %77, %cst_70 [0] : vector<256x128xf32> to vector<128xf32>
    %82 = vector.shape_cast %81 : vector<128xf32> to vector<1x128xf32>
    %83 = arith.addf %80, %82 : vector<1x128xf32>
    %c0_71 = arith.constant 0 : index
    %c0_72 = arith.constant 0 : index
    %84 = vector.load %arg5[%c0_71, %c0_72] : memref<8x128xf32, #tpu.memory_space<vmem>>, vector<1x128xf32>
    tpu.vector_store %arg5[%c0_71, %c0_72], %83 {strides = array<i32>} : memref<8x128xf32, #tpu.memory_space<vmem>>, vector<1x128xf32>,
    %c1_73 = arith.constant 1 : index
    %c0_74 = arith.constant 0 : index
    %85 = vector.load %arg5[%c1_73, %c0_74] : memref<8x128xf32, #tpu.memory_space<vmem>>, vector<1x128xf32>
    %86 = arith.mulf %77, %77 : vector<256x128xf32>
    %cst_75 = arith.constant dense<0.000000e+00> : vector<128xf32>
    %87 = vector.multi_reduction <add>, %86, %cst_75 [0] : vector<256x128xf32> to vector<128xf32>
    %88 = vector.shape_cast %87 : vector<128xf32> to vector<1x128xf32>
    %89 = arith.addf %85, %88 : vector<1x128xf32>
    %c1_76 = arith.constant 1 : index
    %c0_77 = arith.constant 0 : index
    %90 = vector.load %arg5[%c1_76, %c0_77] : memref<8x128xf32, #tpu.memory_space<vmem>>, vector<1x128xf32>
    tpu.vector_store %arg5[%c1_76, %c0_77], %89 {strides = array<i32>} : memref<8x128xf32, #tpu.memory_space<vmem>>, vector<1x128xf32>,
    return
  }
  func.func @transform_0(%arg0: i32, %arg1: i32) -> (i32, i32, i32, i32) {
    %c0_i32 = arith.constant 0 : i32
    %c0_i32_0 = arith.constant 0 : i32
    %c0_i32_1 = arith.constant 0 : i32
    %c0_i32_2 = arith.constant 0 : i32
    return %arg0, %c0_i32, %c0_i32_0, %c0_i32_1 : i32, i32, i32, i32
  }
  func.func @transform_1(%arg0: i32, %arg1: i32) -> (i32, i32, i32, i32) {
    %c0_i32 = arith.constant 0 : i32
    %c0_i32_0 = arith.constant 0 : i32
    %c0_i32_1 = arith.constant 0 : i32
    %c0_i32_2 = arith.constant 0 : i32
    %c0_i32_3 = arith.constant 0 : i32
    return %c0_i32, %c0_i32_0, %c0_i32_1, %c0_i32_2 : i32, i32, i32, i32
  }
  func.func @transform_2(%arg0: i32, %arg1: i32) -> (i32, i32) {
    %c1_i32 = arith.constant 1 : i32
    %0 = arith.muli %arg0, %c1_i32 : i32
    %1 = arith.addi %0, %arg1 : i32
    %c0_i32 = arith.constant 0 : i32
    %c0_i32_0 = arith.constant 0 : i32
    return %1, %c0_i32 : i32, i32
  }
  func.func @transform_3(%arg0: i32, %arg1: i32) -> (i32, i32) {
    %c0_i32 = arith.constant 0 : i32
    %c0_i32_0 = arith.constant 0 : i32
    %c0_i32_1 = arith.constant 0 : i32
    return %c0_i32, %c0_i32_0 : i32, i32
  }
}

module attributes {stable_mosaic.version = 11 : i64} {
  func.func @conv3_proj_stats_kernel(%arg0: i32, %arg1: memref<512x128xbf16, #tpu.memory_space<vmem>>, %arg2: memref<1x128xf32, #tpu.memory_space<vmem>>, %arg3: memref<1x128xf32, #tpu.memory_space<vmem>>, %arg4: memref<128x128xbf16, #tpu.memory_space<vmem>>, %arg5: memref<512x128xbf16, #tpu.memory_space<vmem>>, %arg6: memref<128x128xbf16, #tpu.memory_space<vmem>>, %arg7: memref<512x128xbf16, #tpu.memory_space<vmem>>, %arg8: memref<512x128xbf16, #tpu.memory_space<vmem>>, %arg9: memref<8x128xf32, #tpu.memory_space<vmem>>, %arg10: memref<8x128xf32, #tpu.memory_space<vmem>>) attributes {dimension_semantics = [#tpu.dimension_semantics<arbitrary>], iteration_bounds = array<i64: 1>, scalar_prefetch = 0 : i64, scratch_operands = 0 : i64, tpu.core_type = #tpu.core_type<tc>, window_params = [{transform_indices = @transform_0, window_bounds = array<i64: 512, 128>}, {pipeline_mode = #tpu.pipeline_mode<synchronous>, transform_indices = @transform_1, window_bounds = array<i64: 1, 128>}, {pipeline_mode = #tpu.pipeline_mode<synchronous>, transform_indices = @transform_2, window_bounds = array<i64: 1, 128>}, {pipeline_mode = #tpu.pipeline_mode<synchronous>, transform_indices = @transform_3, window_bounds = array<i64: 128, 128>}, {transform_indices = @transform_4, window_bounds = array<i64: 512, 128>}, {pipeline_mode = #tpu.pipeline_mode<synchronous>, transform_indices = @transform_5, window_bounds = array<i64: 128, 128>}, {transform_indices = @transform_6, window_bounds = array<i64: 512, 128>}, {transform_indices = @transform_7, window_bounds = array<i64: 512, 128>}, {pipeline_mode = #tpu.pipeline_mode<synchronous>, transform_indices = @transform_8, window_bounds = array<i64: 8, 128>}, {pipeline_mode = #tpu.pipeline_mode<synchronous>, transform_indices = @transform_9, window_bounds = array<i64: 8, 128>}]} {
    %c0_i32 = arith.constant 0 : i32
    %0 = arith.cmpi eq, %arg0, %c0_i32 : i32
    %1 = arith.extui %0 : i1 to i32
    %c0_i32_0 = arith.constant 0 : i32
    %2 = arith.cmpi ne, %1, %c0_i32_0 : i32
    scf.if %2 {
      %cst_37 = arith.constant 0.000000e+00 : f32
      %45 = vector.broadcast %cst_37 : f32 to vector<8x128xf32>
      %c0_38 = arith.constant 0 : index
      %c0_39 = arith.constant 0 : index
      %46 = vector.load %arg9[%c0_38, %c0_39] : memref<8x128xf32, #tpu.memory_space<vmem>>, vector<8x128xf32>
      tpu.vector_store %arg9[%c0_38, %c0_39], %45 {strides = array<i32>} : memref<8x128xf32, #tpu.memory_space<vmem>>, vector<8x128xf32>,
      %cst_40 = arith.constant 0.000000e+00 : f32
      %47 = vector.broadcast %cst_40 : f32 to vector<8x128xf32>
      %c0_41 = arith.constant 0 : index
      %c0_42 = arith.constant 0 : index
      %48 = vector.load %arg10[%c0_41, %c0_42] : memref<8x128xf32, #tpu.memory_space<vmem>>, vector<8x128xf32>
      tpu.vector_store %arg10[%c0_41, %c0_42], %47 {strides = array<i32>} : memref<8x128xf32, #tpu.memory_space<vmem>>, vector<8x128xf32>,
    } else {
    }
    %c0 = arith.constant 0 : index
    %c0_1 = arith.constant 0 : index
    %3 = vector.load %arg1[%c0, %c0_1] : memref<512x128xbf16, #tpu.memory_space<vmem>>, vector<512x128xbf16>
    %4 = arith.extf %3 : vector<512x128xbf16> to vector<512x128xf32>
    %c0_2 = arith.constant 0 : index
    %c0_3 = arith.constant 0 : index
    %5 = vector.load %arg2[%c0_2, %c0_3] : memref<1x128xf32, #tpu.memory_space<vmem>>, vector<1x128xf32>
    %6 = vector.broadcast %5 : vector<1x128xf32> to vector<512x128xf32>
    %7 = arith.mulf %4, %6 : vector<512x128xf32>
    %c0_4 = arith.constant 0 : index
    %c0_5 = arith.constant 0 : index
    %8 = vector.load %arg3[%c0_4, %c0_5] : memref<1x128xf32, #tpu.memory_space<vmem>>, vector<1x128xf32>
    %9 = vector.broadcast %8 : vector<1x128xf32> to vector<512x128xf32>
    %10 = arith.addf %7, %9 : vector<512x128xf32>
    %cst = arith.constant 0.000000e+00 : f32
    %11 = vector.broadcast %cst : f32 to vector<512x128xf32>
    %12 = arith.maximumf %10, %11 : vector<512x128xf32>
    %13 = arith.truncf %12 : vector<512x128xf32> to vector<512x128xbf16>
    %c0_6 = arith.constant 0 : index
    %c0_7 = arith.constant 0 : index
    %14 = vector.load %arg4[%c0_6, %c0_7] : memref<128x128xbf16, #tpu.memory_space<vmem>>, vector<128x128xbf16>
    %cst_8 = arith.constant dense<0.000000e+00> : vector<512x128xf32>
    %15 = tpu.matmul %13, %14, %cst_8 {dimension_numbers = #tpu.dot_dimension_numbers<[1], [0], [0], [1], [0, 0, 1, 1], [], []>} : vector<512x128xbf16>, vector<128x128xbf16>, vector<512x128xf32> -> vector<512x128xf32>
    %c0_9 = arith.constant 0 : index
    %c0_10 = arith.constant 0 : index
    %16 = vector.load %arg5[%c0_9, %c0_10] : memref<512x128xbf16, #tpu.memory_space<vmem>>, vector<512x128xbf16>
    %c0_11 = arith.constant 0 : index
    %c0_12 = arith.constant 0 : index
    %17 = vector.load %arg6[%c0_11, %c0_12] : memref<128x128xbf16, #tpu.memory_space<vmem>>, vector<128x128xbf16>
    %cst_13 = arith.constant dense<0.000000e+00> : vector<512x128xf32>
    %18 = tpu.matmul %16, %17, %cst_13 {dimension_numbers = #tpu.dot_dimension_numbers<[1], [0], [0], [1], [0, 0, 1, 1], [], []>} : vector<512x128xbf16>, vector<128x128xbf16>, vector<512x128xf32> -> vector<512x128xf32>
    %19 = arith.truncf %15 : vector<512x128xf32> to vector<512x128xbf16>
    %c0_14 = arith.constant 0 : index
    %c0_15 = arith.constant 0 : index
    %20 = vector.load %arg7[%c0_14, %c0_15] : memref<512x128xbf16, #tpu.memory_space<vmem>>, vector<512x128xbf16>
    tpu.vector_store %arg7[%c0_14, %c0_15], %19 {strides = array<i32>} : memref<512x128xbf16, #tpu.memory_space<vmem>>, vector<512x128xbf16>,
    %21 = arith.truncf %18 : vector<512x128xf32> to vector<512x128xbf16>
    %c0_16 = arith.constant 0 : index
    %c0_17 = arith.constant 0 : index
    %22 = vector.load %arg8[%c0_16, %c0_17] : memref<512x128xbf16, #tpu.memory_space<vmem>>, vector<512x128xbf16>
    tpu.vector_store %arg8[%c0_16, %c0_17], %21 {strides = array<i32>} : memref<512x128xbf16, #tpu.memory_space<vmem>>, vector<512x128xbf16>,
    %c0_18 = arith.constant 0 : index
    %c0_19 = arith.constant 0 : index
    %23 = vector.load %arg9[%c0_18, %c0_19] : memref<8x128xf32, #tpu.memory_space<vmem>>, vector<1x128xf32>
    %cst_20 = arith.constant dense<0.000000e+00> : vector<128xf32>
    %24 = vector.multi_reduction <add>, %15, %cst_20 [0] : vector<512x128xf32> to vector<128xf32>
    %25 = vector.shape_cast %24 : vector<128xf32> to vector<1x128xf32>
    %26 = arith.addf %23, %25 : vector<1x128xf32>
    %c0_21 = arith.constant 0 : index
    %c0_22 = arith.constant 0 : index
    %27 = vector.load %arg9[%c0_21, %c0_22] : memref<8x128xf32, #tpu.memory_space<vmem>>, vector<1x128xf32>
    tpu.vector_store %arg9[%c0_21, %c0_22], %26 {strides = array<i32>} : memref<8x128xf32, #tpu.memory_space<vmem>>, vector<1x128xf32>,
    %c1 = arith.constant 1 : index
    %c0_23 = arith.constant 0 : index
    %28 = vector.load %arg9[%c1, %c0_23] : memref<8x128xf32, #tpu.memory_space<vmem>>, vector<1x128xf32>
    %29 = arith.mulf %15, %15 : vector<512x128xf32>
    %cst_24 = arith.constant dense<0.000000e+00> : vector<128xf32>
    %30 = vector.multi_reduction <add>, %29, %cst_24 [0] : vector<512x128xf32> to vector<128xf32>
    %31 = vector.shape_cast %30 : vector<128xf32> to vector<1x128xf32>
    %32 = arith.addf %28, %31 : vector<1x128xf32>
    %c1_25 = arith.constant 1 : index
    %c0_26 = arith.constant 0 : index
    %33 = vector.load %arg9[%c1_25, %c0_26] : memref<8x128xf32, #tpu.memory_space<vmem>>, vector<1x128xf32>
    tpu.vector_store %arg9[%c1_25, %c0_26], %32 {strides = array<i32>} : memref<8x128xf32, #tpu.memory_space<vmem>>, vector<1x128xf32>,
    %c0_27 = arith.constant 0 : index
    %c0_28 = arith.constant 0 : index
    %34 = vector.load %arg10[%c0_27, %c0_28] : memref<8x128xf32, #tpu.memory_space<vmem>>, vector<1x128xf32>
    %cst_29 = arith.constant dense<0.000000e+00> : vector<128xf32>
    %35 = vector.multi_reduction <add>, %18, %cst_29 [0] : vector<512x128xf32> to vector<128xf32>
    %36 = vector.shape_cast %35 : vector<128xf32> to vector<1x128xf32>
    %37 = arith.addf %34, %36 : vector<1x128xf32>
    %c0_30 = arith.constant 0 : index
    %c0_31 = arith.constant 0 : index
    %38 = vector.load %arg10[%c0_30, %c0_31] : memref<8x128xf32, #tpu.memory_space<vmem>>, vector<1x128xf32>
    tpu.vector_store %arg10[%c0_30, %c0_31], %37 {strides = array<i32>} : memref<8x128xf32, #tpu.memory_space<vmem>>, vector<1x128xf32>,
    %c1_32 = arith.constant 1 : index
    %c0_33 = arith.constant 0 : index
    %39 = vector.load %arg10[%c1_32, %c0_33] : memref<8x128xf32, #tpu.memory_space<vmem>>, vector<1x128xf32>
    %40 = arith.mulf %18, %18 : vector<512x128xf32>
    %cst_34 = arith.constant dense<0.000000e+00> : vector<128xf32>
    %41 = vector.multi_reduction <add>, %40, %cst_34 [0] : vector<512x128xf32> to vector<128xf32>
    %42 = vector.shape_cast %41 : vector<128xf32> to vector<1x128xf32>
    %43 = arith.addf %39, %42 : vector<1x128xf32>
    %c1_35 = arith.constant 1 : index
    %c0_36 = arith.constant 0 : index
    %44 = vector.load %arg10[%c1_35, %c0_36] : memref<8x128xf32, #tpu.memory_space<vmem>>, vector<1x128xf32>
    tpu.vector_store %arg10[%c1_35, %c0_36], %43 {strides = array<i32>} : memref<8x128xf32, #tpu.memory_space<vmem>>, vector<1x128xf32>,
    return
  }
  func.func @transform_0(%arg0: i32) -> (i32, i32) {
    %c0_i32 = arith.constant 0 : i32
    %c0_i32_0 = arith.constant 0 : i32
    return %arg0, %c0_i32 : i32, i32
  }
  func.func @transform_1(%arg0: i32) -> (i32, i32) {
    %c0_i32 = arith.constant 0 : i32
    %c0_i32_0 = arith.constant 0 : i32
    %c0_i32_1 = arith.constant 0 : i32
    return %c0_i32, %c0_i32_0 : i32, i32
  }
  func.func @transform_2(%arg0: i32) -> (i32, i32) {
    %c0_i32 = arith.constant 0 : i32
    %c0_i32_0 = arith.constant 0 : i32
    %c0_i32_1 = arith.constant 0 : i32
    return %c0_i32, %c0_i32_0 : i32, i32
  }
  func.func @transform_3(%arg0: i32) -> (i32, i32) {
    %c0_i32 = arith.constant 0 : i32
    %c0_i32_0 = arith.constant 0 : i32
    %c0_i32_1 = arith.constant 0 : i32
    return %c0_i32, %c0_i32_0 : i32, i32
  }
  func.func @transform_4(%arg0: i32) -> (i32, i32) {
    %c0_i32 = arith.constant 0 : i32
    %c0_i32_0 = arith.constant 0 : i32
    return %arg0, %c0_i32 : i32, i32
  }
  func.func @transform_5(%arg0: i32) -> (i32, i32) {
    %c0_i32 = arith.constant 0 : i32
    %c0_i32_0 = arith.constant 0 : i32
    %c0_i32_1 = arith.constant 0 : i32
    return %c0_i32, %c0_i32_0 : i32, i32
  }
  func.func @transform_6(%arg0: i32) -> (i32, i32) {
    %c0_i32 = arith.constant 0 : i32
    %c0_i32_0 = arith.constant 0 : i32
    return %arg0, %c0_i32 : i32, i32
  }
  func.func @transform_7(%arg0: i32) -> (i32, i32) {
    %c0_i32 = arith.constant 0 : i32
    %c0_i32_0 = arith.constant 0 : i32
    return %arg0, %c0_i32 : i32, i32
  }
  func.func @transform_8(%arg0: i32) -> (i32, i32) {
    %c0_i32 = arith.constant 0 : i32
    %c0_i32_0 = arith.constant 0 : i32
    %c0_i32_1 = arith.constant 0 : i32
    return %c0_i32, %c0_i32_0 : i32, i32
  }
  func.func @transform_9(%arg0: i32) -> (i32, i32) {
    %c0_i32 = arith.constant 0 : i32
    %c0_i32_0 = arith.constant 0 : i32
    %c0_i32_1 = arith.constant 0 : i32
    return %c0_i32, %c0_i32_0 : i32, i32
  }
}

module attributes {stable_mosaic.version = 11 : i64} {
  func.func @residual_proj_kernel(%arg0: i32, %arg1: memref<512x128xbf16, #tpu.memory_space<vmem>>, %arg2: memref<1x128xf32, #tpu.memory_space<vmem>>, %arg3: memref<1x128xf32, #tpu.memory_space<vmem>>, %arg4: memref<512x128xbf16, #tpu.memory_space<vmem>>, %arg5: memref<1x128xf32, #tpu.memory_space<vmem>>, %arg6: memref<1x128xf32, #tpu.memory_space<vmem>>, %arg7: memref<512x128xf32, #tpu.memory_space<vmem>>) attributes {dimension_semantics = [#tpu.dimension_semantics<parallel>], iteration_bounds = array<i64: 1>, scalar_prefetch = 0 : i64, scratch_operands = 0 : i64, tpu.core_type = #tpu.core_type<tc>, window_params = [{transform_indices = @transform_0, window_bounds = array<i64: 512, 128>}, {pipeline_mode = #tpu.pipeline_mode<synchronous>, transform_indices = @transform_1, window_bounds = array<i64: 1, 128>}, {pipeline_mode = #tpu.pipeline_mode<synchronous>, transform_indices = @transform_2, window_bounds = array<i64: 1, 128>}, {transform_indices = @transform_3, window_bounds = array<i64: 512, 128>}, {pipeline_mode = #tpu.pipeline_mode<synchronous>, transform_indices = @transform_4, window_bounds = array<i64: 1, 128>}, {pipeline_mode = #tpu.pipeline_mode<synchronous>, transform_indices = @transform_5, window_bounds = array<i64: 1, 128>}, {transform_indices = @transform_6, window_bounds = array<i64: 512, 128>}]} {
    %c0 = arith.constant 0 : index
    %c0_0 = arith.constant 0 : index
    %0 = vector.load %arg1[%c0, %c0_0] : memref<512x128xbf16, #tpu.memory_space<vmem>>, vector<512x128xbf16>
    %1 = arith.extf %0 : vector<512x128xbf16> to vector<512x128xf32>
    %c0_1 = arith.constant 0 : index
    %c0_2 = arith.constant 0 : index
    %2 = vector.load %arg2[%c0_1, %c0_2] : memref<1x128xf32, #tpu.memory_space<vmem>>, vector<1x128xf32>
    %3 = vector.broadcast %2 : vector<1x128xf32> to vector<512x128xf32>
    %4 = arith.mulf %1, %3 : vector<512x128xf32>
    %c0_3 = arith.constant 0 : index
    %c0_4 = arith.constant 0 : index
    %5 = vector.load %arg3[%c0_3, %c0_4] : memref<1x128xf32, #tpu.memory_space<vmem>>, vector<1x128xf32>
    %6 = vector.broadcast %5 : vector<1x128xf32> to vector<512x128xf32>
    %7 = arith.addf %4, %6 : vector<512x128xf32>
    %c0_5 = arith.constant 0 : index
    %c0_6 = arith.constant 0 : index
    %8 = vector.load %arg4[%c0_5, %c0_6] : memref<512x128xbf16, #tpu.memory_space<vmem>>, vector<512x128xbf16>
    %9 = arith.extf %8 : vector<512x128xbf16> to vector<512x128xf32>
    %c0_7 = arith.constant 0 : index
    %c0_8 = arith.constant 0 : index
    %10 = vector.load %arg5[%c0_7, %c0_8] : memref<1x128xf32, #tpu.memory_space<vmem>>, vector<1x128xf32>
    %11 = vector.broadcast %10 : vector<1x128xf32> to vector<512x128xf32>
    %12 = arith.mulf %9, %11 : vector<512x128xf32>
    %13 = arith.addf %7, %12 : vector<512x128xf32>
    %c0_9 = arith.constant 0 : index
    %c0_10 = arith.constant 0 : index
    %14 = vector.load %arg6[%c0_9, %c0_10] : memref<1x128xf32, #tpu.memory_space<vmem>>, vector<1x128xf32>
    %15 = vector.broadcast %14 : vector<1x128xf32> to vector<512x128xf32>
    %16 = arith.addf %13, %15 : vector<512x128xf32>
    %cst = arith.constant 0.000000e+00 : f32
    %17 = vector.broadcast %cst : f32 to vector<512x128xf32>
    %18 = arith.maximumf %16, %17 : vector<512x128xf32>
    %c0_11 = arith.constant 0 : index
    %c0_12 = arith.constant 0 : index
    %19 = vector.load %arg7[%c0_11, %c0_12] : memref<512x128xf32, #tpu.memory_space<vmem>>, vector<512x128xf32>
    tpu.vector_store %arg7[%c0_11, %c0_12], %18 {strides = array<i32>} : memref<512x128xf32, #tpu.memory_space<vmem>>, vector<512x128xf32>,
    return
  }
  func.func @transform_0(%arg0: i32) -> (i32, i32) {
    %c0_i32 = arith.constant 0 : i32
    %c0_i32_0 = arith.constant 0 : i32
    return %arg0, %c0_i32 : i32, i32
  }
  func.func @transform_1(%arg0: i32) -> (i32, i32) {
    %c0_i32 = arith.constant 0 : i32
    %c0_i32_0 = arith.constant 0 : i32
    %c0_i32_1 = arith.constant 0 : i32
    return %c0_i32, %c0_i32_0 : i32, i32
  }
  func.func @transform_2(%arg0: i32) -> (i32, i32) {
    %c0_i32 = arith.constant 0 : i32
    %c0_i32_0 = arith.constant 0 : i32
    %c0_i32_1 = arith.constant 0 : i32
    return %c0_i32, %c0_i32_0 : i32, i32
  }
  func.func @transform_3(%arg0: i32) -> (i32, i32) {
    %c0_i32 = arith.constant 0 : i32
    %c0_i32_0 = arith.constant 0 : i32
    return %arg0, %c0_i32 : i32, i32
  }
  func.func @transform_4(%arg0: i32) -> (i32, i32) {
    %c0_i32 = arith.constant 0 : i32
    %c0_i32_0 = arith.constant 0 : i32
    %c0_i32_1 = arith.constant 0 : i32
    return %c0_i32, %c0_i32_0 : i32, i32
  }
  func.func @transform_5(%arg0: i32) -> (i32, i32) {
    %c0_i32 = arith.constant 0 : i32
    %c0_i32_0 = arith.constant 0 : i32
    %c0_i32_1 = arith.constant 0 : i32
    return %c0_i32, %c0_i32_0 : i32, i32
  }
  func.func @transform_6(%arg0: i32) -> (i32, i32) {
    %c0_i32 = arith.constant 0 : i32
    %c0_i32_0 = arith.constant 0 : i32
    return %arg0, %c0_i32 : i32, i32
  }
}

</mosaic_0001>

<llo_original>
// kernel: _lambda_.6
$region0: #{_lambda_.6}
  #allocation0 [shape = 'u32[]', space=smem, size = 0x4, offset = 0x4, fixed_abs, tag = 'smem constant byte address 0x4 - core index']
  #allocation1 [shape = 'u32[144,128]{1,0:T(1,128)}', space=vmem, size = 0x12000, scoped, tag = 'internal scratch']
  %s0 = inlined_call_operand.vmem [shape: bf16[512,128], index: 0, kind: input, shape index: {}]
  %s1 = inlined_call_operand.vmem [shape: f32[1,128], index: 1, kind: input, shape index: {}]
  %s2 = inlined_call_operand.vmem [shape: f32[1,128], index: 2, kind: input, shape index: {}]
  %s3 = inlined_call_operand.vmem [shape: bf16[2,18,18,128], index: 3, kind: output, shape index: {}]
  %s4 = sld [smem:[#allocation0]]
  $region45: #{_lambda_.6} parent=0
    _
  %s6 = ssub.s32 1, %s4
  %s7 = scalar_select 0, %s6, %s4
  loop: start=0, step=1, limit=4
  $region2: #{_lambda_.6} parent=0 // loop_pre_header
    _
  $region3: #{_lambda_.6} parent=0 // loop_header
    %s9 = sphi 0, %s13
    %p10 = scmp.ge.s32.totalorder %s9, 4
    %s19 = sphi 0, %s21
    %s22 = sphi 0, %s19
    %s23 = sphi 0, %s22
    %s39 = sphi 0, %s23
    %s43 = sphi 0, %s43
    %s45 = sphi 0, %s43
    %s46 = sphi 0, %s45
    %s60 = sphi 0, %s46
    %s64 = sphi 0, %s64
    %s66 = sphi 0, %s64
    %s67 = sphi 0, %s66
    %s81 = sphi 0, %s67
    %s87 = sphi 0, %s89
    %s90 = sphi 0, %s87
    %s91 = sphi 0, %s90
    %s107 = sphi 0, %s91
  $region4: #{_lambda_.6} parent=0 // loop_header_branch
    %12 = sbr.rel (%p10) target = $region8
  $region5: #{_lambda_.6} parent=0 // loop_body
    %s14 = ssub.s32 %s9, 1
    %s15 = ssub.s32 %s9, 2
    %s16 = sadd.s32 %s9, 1
    %s17 = ssub.s32 %s9, %s16
    %p18 = scmp.eq.s32.totalorder %s17, 0
    %s20 = sadd.s32 %s19, 1
    %s21 = scalar_select %p18, %s19, %s20
    %p24 = pneg %p18
    %p25 = scmp.eq.s32.totalorder %s9, 1
    %p26 = por %p24, %p25
    %p27 = scmp.ne.s32.totalorder %s19, %s22
    %p28 = scmp.eq.s32.totalorder %s9, 0
    %p29 = por %p27, %p28
    %p30 = scmp.ne.s32.totalorder %s19, %s22
    %p31 = scmp.eq.s32.totalorder %s14, 1
    %p32 = por %p30, %p31
    %p33 = scmp.ne.s32.totalorder %s22, %s23
    %p34 = scmp.eq.s32.totalorder %s14, 0
    %p35 = por %p33, %p34
    %p36 = scmp.ne.s32.totalorder %s22, %s23
    %p37 = scmp.eq.s32.totalorder %s15, 1
    %p38 = por %p36, %p37
    %p40 = scmp.ne.s32.totalorder %s23, %s39
    %p41 = scmp.eq.s32.totalorder %s15, 0
    %p42 = por %p40, %p41
    %s44 = sadd.s32 %s43, 1
    %p47 = scmp.eq.s32.totalorder %s9, 1
    %p48 = scmp.ne.s32.totalorder %s43, %s45
    %p49 = scmp.eq.s32.totalorder %s9, 0
    %p50 = por %p48, %p49
    %p51 = scmp.ne.s32.totalorder %s43, %s45
    %p52 = scmp.eq.s32.totalorder %s14, 1
    %p53 = por %p51, %p52
    %p54 = scmp.ne.s32.totalorder %s45, %s46
    %p55 = scmp.eq.s32.totalorder %s14, 0
    %p56 = por %p54, %p55
    %p57 = scmp.ne.s32.totalorder %s45, %s46
    %p58 = scmp.eq.s32.totalorder %s15, 1
    %p59 = por %p57, %p58
    %p61 = scmp.ne.s32.totalorder %s46, %s60
    %p62 = scmp.eq.s32.totalorder %s15, 0
    %p63 = por %p61, %p62
    %s65 = sadd.s32 %s64, 1
    %p68 = scmp.eq.s32.totalorder %s9, 1
    %p69 = scmp.ne.s32.totalorder %s64, %s66
    %p70 = scmp.eq.s32.totalorder %s9, 0
    %p71 = por %p69, %p70
    %p72 = scmp.ne.s32.totalorder %s64, %s66
    %p73 = scmp.eq.s32.totalorder %s14, 1
    %p74 = por %p72, %p73
    %p75 = scmp.ne.s32.totalorder %s66, %s67
    %p76 = scmp.eq.s32.totalorder %s14, 0
    %p77 = por %p75, %p76
    %p78 = scmp.ne.s32.totalorder %s66, %s67
    %p79 = scmp.eq.s32.totalorder %s15, 1
    %p80 = por %p78, %p79
    %p82 = scmp.ne.s32.totalorder %s67, %s81
    %p83 = scmp.eq.s32.totalorder %s15, 0
    %p84 = por %p82, %p83
    %s85 = ssub.s32 %s9, %s16
    %p86 = scmp.eq.s32.totalorder %s85, 0
    %s88 = sadd.s32 %s87, 1
    %s89 = scalar_select %p86, %s87, %s88
    %p92 = pneg %p86
    %p93 = scmp.eq.s32.totalorder %s9, 1
    %p94 = por %p92, %p93
    %p95 = scmp.ne.s32.totalorder %s87, %s90
    %p96 = scmp.eq.s32.totalorder %s9, 0
    %p97 = por %p95, %p96
    %p98 = scmp.ne.s32.totalorder %s87, %s90
    %p99 = scmp.eq.s32.totalorder %s14, 1
    %p100 = por %p98, %p99
    %p101 = scmp.ne.s32.totalorder %s90, %s91
    %p102 = scmp.eq.s32.totalorder %s14, 0
    %p103 = por %p101, %p102
    %p104 = scmp.ne.s32.totalorder %s90, %s91
    %p105 = scmp.eq.s32.totalorder %s15, 1
    %p106 = por %p104, %p105
    %p108 = scmp.ne.s32.totalorder %s91, %s107
    %p109 = scmp.eq.s32.totalorder %s15, 0
    %p110 = por %p108, %p109
    %p111 = scmp.le.s32.totalorder 1, %s9
    %p112 = scmp.lt.s32.totalorder %s9, 3
    %p113 = pnand %p111, %p112
    %p114 = pneg %p113
    // Predicated region
    $region9: #{_lambda_.6} parent=5 // pred_check
      _
    $region10: #{_lambda_.6} parent=5 // pred_check_branch
      %116 = sbr.rel (%p113) target = $region12
    $region11: #{_lambda_.6} parent=5 // pred_region
      %s117 = ssub.s32 %s9, 1
      // Predicated region
      $region13: #{_lambda_.6} parent=11 // pred_check
        %p118 = pneg %p56
      $region14: #{_lambda_.6} parent=11 // pred_check_branch
        %120 = sbr.rel (%p118) target = $region16
      $region15: #{_lambda_.6} parent=11 // pred_region
        _
      $region16: #{_lambda_.6} parent=11 // pred_fallthru
        _
      // Predicated region
      $region17: #{_lambda_.6} parent=11 // pred_check
        %p121 = pneg %p77
      $region18: #{_lambda_.6} parent=11 // pred_check_branch
        %123 = sbr.rel (%p121) target = $region20
      $region19: #{_lambda_.6} parent=11 // pred_region
        _
      $region20: #{_lambda_.6} parent=11 // pred_fallthru
        _
    $region12: #{_lambda_.6} parent=5 // pred_fallthru
      _
    %p124 = scmp.lt.s32.totalorder %s9, 2
    // Predicated region
    $region21: #{_lambda_.6} parent=5 // pred_check
      %p125 = pneg %p124
    $region22: #{_lambda_.6} parent=5 // pred_check_branch
      %127 = sbr.rel (%p125) target = $region24
    $region23: #{_lambda_.6} parent=5 // pred_region
      // Predicated region
      $region25: #{_lambda_.6} parent=23 // pred_check
        %p128 = pneg %p29
      $region26: #{_lambda_.6} parent=23 // pred_check_branch
        %130 = sbr.rel (%p128) target = $region28
      $region27: #{_lambda_.6} parent=23 // pred_region
        %s131 = smul.u32 32, %s9
        %p132 = scmp.lt.s32.totalorder %s131, 63
        %s133 = scalar_select %p132, %s131, 63
        %s134 = smul.addr %s133, 4
        %s135 = scalar_lea.vmem %s0, %s134
        %s136 = smul.u32 32, %s9
      $region28: #{_lambda_.6} parent=23 // pred_fallthru
        _
    $region24: #{_lambda_.6} parent=5 // pred_fallthru
      _
    %p137 = scmp.le.s32.totalorder 1, %s9
    %p138 = scmp.lt.s32.totalorder %s9, 3
    %p139 = pnand %p137, %p138
    %p140 = pneg %p139
    // Predicated region
    $region29: #{_lambda_.6} parent=5 // pred_check
      _
    $region30: #{_lambda_.6} parent=5 // pred_check_branch
      %142 = sbr.rel (%p139) target = $region32
    $region31: #{_lambda_.6} parent=5 // pred_region
      %s143 = ssub.s32 %s9, 1
      %s144 = smul.u32 32, %s14
      %p145 = scmp.lt.s32.totalorder %s144, 63
      %s146 = scalar_select %p145, %s144, 63
      %s147 = smul.addr %s146, 4
      %s148 = scalar_lea.vmem %s0, %s147
      %p149 = pneg %p35
      %p150 = pneg %p32
      %p151 = pneg %p56
      %p152 = pneg %p53
      %p153 = pneg %p77
      %p154 = pneg %p74
      %p155 = pneg %p103
      %p156 = pneg %p100
      %p157 = scmp.lt.s32.totalorder %s14, 1
      %s158 = scalar_select %p157, %s14, 1
      %s159 = smul.addr %s158, 54
      %s160 = smul.addr %s159, 4
      %s161 = scalar_lea.vmem %s3, %s160
      %s162 = smul.u32 32, %s14
      %p163 = scmp.lt.s32.totalorder %s162, 63
      %s164 = scalar_select %p163, %s162, 63
      %s165 = smul.addr %s164, 4
      %s166 = scalar_lea.vmem %s0, %s165
      %s167 = smul.u32 32, %s14
      %p168 = scmp.lt.s32.totalorder %s14, 1
      %s169 = scalar_select %p168, %s14, 1
      %s170 = smul.addr %s169, 54
      %s171 = smul.addr %s170, 4
      %s172 = scalar_lea.vmem %s3, %s171
      %174 = vst [vmem:[%s172] sm:$0xf] 0
      %175 = vst [vmem:[%s172 + $0x4] sm:$0xf] 0
      %176 = vst [vmem:[%s172 + $0x8] sm:$0x1] 0
      %177 = vst [vmem:[%s172 + $0xc] sm:$0xf] 0
      %178 = vst [vmem:[%s172 + $0x10] sm:$0xf] 0
      %179 = vst [vmem:[%s172 + $0x14] sm:$0x1] 0
      %180 = vst [vmem:[%s172 + $0x18] sm:$0xf] 0
      %181 = vst [vmem:[%s172 + $0x1c] sm:$0xf] 0
      %182 = vst [vmem:[%s172 + $0x20] sm:$0x1] 0
      %183 = vst [vmem:[%s172 + $0x24] sm:$0xf] 0
      %184 = vst [vmem:[%s172 + $0x28] sm:$0xf] 0
      %185 = vst [vmem:[%s172 + $0x2c] sm:$0x1] 0
      %186 = vst [vmem:[%s172 + $0x30] sm:$0xf] 0
      %187 = vst [vmem:[%s172 + $0x34] sm:$0xf] 0
      %188 = vst [vmem:[%s172 + $0x38] sm:$0x1] 0
      %189 = vst [vmem:[%s172 + $0x3c] sm:$0xf] 0
      %190 = vst [vmem:[%s172 + $0x40] sm:$0xf] 0
      %191 = vst [vmem:[%s172 + $0x44] sm:$0x1] 0
      %192 = vst [vmem:[%s172 + $0x48] sm:$0xf] 0
      %193 = vst [vmem:[%s172 + $0x4c] sm:$0xf] 0
      %194 = vst [vmem:[%s172 + $0x50] sm:$0x1] 0
      %195 = vst [vmem:[%s172 + $0x54] sm:$0xf] 0
      %196 = vst [vmem:[%s172 + $0x58] sm:$0xf] 0
      %197 = vst [vmem:[%s172 + $0x5c] sm:$0x1] 0
      %198 = vst [vmem:[%s172 + $0x60] sm:$0xf] 0
      %199 = vst [vmem:[%s172 + $0x64] sm:$0xf] 0
      %200 = vst [vmem:[%s172 + $0x68] sm:$0x1] 0
      %201 = vst [vmem:[%s172 + $0x6c] sm:$0xf] 0
      %202 = vst [vmem:[%s172 + $0x70] sm:$0xf] 0
      %203 = vst [vmem:[%s172 + $0x74] sm:$0x1] 0
      %204 = vst [vmem:[%s172 + $0x78] sm:$0xf] 0
      %205 = vst [vmem:[%s172 + $0x7c] sm:$0xf] 0
      %206 = vst [vmem:[%s172 + $0x80] sm:$0x1] 0
      %207 = vst [vmem:[%s172 + $0x84] sm:$0xf] 0
      %208 = vst [vmem:[%s172 + $0x88] sm:$0xf] 0
      %209 = vst [vmem:[%s172 + $0x8c] sm:$0x1] 0
      %210 = vst [vmem:[%s172 + $0x90] sm:$0xf] 0
      %211 = vst [vmem:[%s172 + $0x94] sm:$0xf] 0
      %212 = vst [vmem:[%s172 + $0x98] sm:$0x1] 0
      %213 = vst [vmem:[%s172 + $0x9c] sm:$0xf] 0
      %214 = vst [vmem:[%s172 + $0xa0] sm:$0xf] 0
      %215 = vst [vmem:[%s172 + $0xa4] sm:$0x1] 0
      %216 = vst [vmem:[%s172 + $0xa8] sm:$0xf] 0
      %217 = vst [vmem:[%s172 + $0xac] sm:$0xf] 0
      %218 = vst [vmem:[%s172 + $0xb0] sm:$0x1] 0
      %219 = vst [vmem:[%s172 + $0xb4] sm:$0xf] 0
      %220 = vst [vmem:[%s172 + $0xb8] sm:$0xf] 0
      %221 = vst [vmem:[%s172 + $0xbc] sm:$0x1] 0
      %222 = vst [vmem:[%s172 + $0xc0] sm:$0xf] 0
      %223 = vst [vmem:[%s172 + $0xc4] sm:$0xf] 0
      %224 = vst [vmem:[%s172 + $0xc8] sm:$0x1] 0
      %225 = vst [vmem:[%s172 + $0xcc] sm:$0xf] 0
      %226 = vst [vmem:[%s172 + $0xd0] sm:$0xf] 0
      %227 = vst [vmem:[%s172 + $0xd4] sm:$0x1] 0
      %v228 = vld [vmem:[%s166] sm:$0xf]
      %v229 = vld [vmem:[%s166 + $0x4] sm:$0xf]
      %v230 = vld [vmem:[%s166 + $0x8] sm:$0xf]
      %v231 = vld [vmem:[%s166 + $0xc] sm:$0xf]
      %v232 = vld [vmem:[%s166 + $0x10] sm:$0xf]
      %v233 = vld [vmem:[%s166 + $0x14] sm:$0xf]
      %v234 = vld [vmem:[%s166 + $0x18] sm:$0xf]
      %v235 = vld [vmem:[%s166 + $0x1c] sm:$0xf]
      %v236 = vld [vmem:[%s166 + $0x20] sm:$0xf]
      %v237 = vld [vmem:[%s166 + $0x24] sm:$0xf]
      %v238 = vld [vmem:[%s166 + $0x28] sm:$0xf]
      %v239 = vld [vmem:[%s166 + $0x2c] sm:$0xf]
      %v240 = vld [vmem:[%s166 + $0x30] sm:$0xf]
      %v241 = vld [vmem:[%s166 + $0x34] sm:$0xf]
      %v242 = vld [vmem:[%s166 + $0x38] sm:$0xf]
      %v243 = vld [vmem:[%s166 + $0x3c] sm:$0xf]
      %v244 = vld [vmem:[%s166 + $0x40] sm:$0xf]
      %v245 = vld [vmem:[%s166 + $0x44] sm:$0xf]
      %v246 = vld [vmem:[%s166 + $0x48] sm:$0xf]
      %v247 = vld [vmem:[%s166 + $0x4c] sm:$0xf]
      %v248 = vld [vmem:[%s166 + $0x50] sm:$0xf]
      %v249 = vld [vmem:[%s166 + $0x54] sm:$0xf]
      %v250 = vld [vmem:[%s166 + $0x58] sm:$0xf]
      %v251 = vld [vmem:[%s166 + $0x5c] sm:$0xf]
      %v252 = vld [vmem:[%s166 + $0x60] sm:$0xf]
      %v253 = vld [vmem:[%s166 + $0x64] sm:$0xf]
      %v254 = vld [vmem:[%s166 + $0x68] sm:$0xf]
      %v255 = vld [vmem:[%s166 + $0x6c] sm:$0xf]
      %v256 = vld [vmem:[%s166 + $0x70] sm:$0xf]
      %v257 = vld [vmem:[%s166 + $0x74] sm:$0xf]
      %v258 = vld [vmem:[%s166 + $0x78] sm:$0xf]
      %v259 = vld [vmem:[%s166 + $0x7c] sm:$0xf]
      %v260 = vunpack.c.l.bf16 %v228
      %v261 = vunpack.c.l.bf16 %v229
      %v262 = vunpack.c.l.bf16 %v230
      %v263 = vunpack.c.l.bf16 %v231
      %v264 = vunpack.c.l.bf16 %v232
      %v265 = vunpack.c.l.bf16 %v233
      %v266 = vunpack.c.l.bf16 %v234
      %v267 = vunpack.c.l.bf16 %v235
      %v268 = vunpack.c.l.bf16 %v236
      %v269 = vunpack.c.l.bf16 %v237
      %v270 = vunpack.c.l.bf16 %v238
      %v271 = vunpack.c.l.bf16 %v239
      %v272 = vunpack.c.l.bf16 %v240
      %v273 = vunpack.c.l.bf16 %v241
      %v274 = vunpack.c.l.bf16 %v242
      %v275 = vunpack.c.l.bf16 %v243
      %v276 = vunpack.c.l.bf16 %v244
      %v277 = vunpack.c.l.bf16 %v245
      %v278 = vunpack.c.l.bf16 %v246
      %v279 = vunpack.c.l.bf16 %v247
      %v280 = vunpack.c.l.bf16 %v248
      %v281 = vunpack.c.l.bf16 %v249
      %v282 = vunpack.c.l.bf16 %v250
      %v283 = vunpack.c.l.bf16 %v251
      %v284 = vunpack.c.l.bf16 %v252
      %v285 = vunpack.c.l.bf16 %v253
      %v286 = vunpack.c.l.bf16 %v254
      %v287 = vunpack.c.l.bf16 %v255
      %v288 = vunpack.c.l.bf16 %v256
      %v289 = vunpack.c.l.bf16 %v257
      %v290 = vunpack.c.l.bf16 %v258
      %v291 = vunpack.c.l.bf16 %v259
      %v292 = vld [vmem:[%s1] sm:$0x1]
      %v294 = vlaneseq
      %v295 = vshrl.u32 %v294, 7
      %v296 = vsub.s32 0, %v295
      %v297 = vrot.slane %v292, %v296
      %v299 = vmul.f32 %v260, %v297
      %v300 = vmul.f32 %v261, %v297
      %v301 = vmul.f32 %v262, %v297
      %v302 = vmul.f32 %v263, %v297
      %v303 = vmul.f32 %v264, %v297
      %v304 = vmul.f32 %v265, %v297
      %v305 = vmul.f32 %v266, %v297
      %v306 = vmul.f32 %v267, %v297
      %v307 = vmul.f32 %v268, %v297
      %v308 = vmul.f32 %v269, %v297
      %v309 = vmul.f32 %v270, %v297
      %v310 = vmul.f32 %v271, %v297
      %v311 = vmul.f32 %v272, %v297
      %v312 = vmul.f32 %v273, %v297
      %v313 = vmul.f32 %v274, %v297
      %v314 = vmul.f32 %v275, %v297
      %v315 = vmul.f32 %v276, %v297
      %v316 = vmul.f32 %v277, %v297
      %v317 = vmul.f32 %v278, %v297
      %v318 = vmul.f32 %v279, %v297
      %v319 = vmul.f32 %v280, %v297
      %v320 = vmul.f32 %v281, %v297
      %v321 = vmul.f32 %v282, %v297
      %v322 = vmul.f32 %v283, %v297
      %v323 = vmul.f32 %v284, %v297
      %v324 = vmul.f32 %v285, %v297
      %v325 = vmul.f32 %v286, %v297
      %v326 = vmul.f32 %v287, %v297
      %v327 = vmul.f32 %v288, %v297
      %v328 = vmul.f32 %v289, %v297
      %v329 = vmul.f32 %v290, %v297
      %v330 = vmul.f32 %v291, %v297
      %v331 = vld [vmem:[%s2] sm:$0x1]
      %v333 = vlaneseq
      %v334 = vshrl.u32 %v333, 7
      %v335 = vsub.s32 0, %v334
      %v336 = vrot.slane %v331, %v335
      %v338 = vadd.f32 %v299, %v336
      %v339 = vadd.f32 %v300, %v336
      %v340 = vadd.f32 %v301, %v336
      %v341 = vadd.f32 %v302, %v336
      %v342 = vadd.f32 %v303, %v336
      %v343 = vadd.f32 %v304, %v336
      %v344 = vadd.f32 %v305, %v336
      %v345 = vadd.f32 %v306, %v336
      %v346 = vadd.f32 %v307, %v336
      %v347 = vadd.f32 %v308, %v336
      %v348 = vadd.f32 %v309, %v336
      %v349 = vadd.f32 %v310, %v336
      %v350 = vadd.f32 %v311, %v336
      %v351 = vadd.f32 %v312, %v336
      %v352 = vadd.f32 %v313, %v336
      %v353 = vadd.f32 %v314, %v336
      %v354 = vadd.f32 %v315, %v336
      %v355 = vadd.f32 %v316, %v336
      %v356 = vadd.f32 %v317, %v336
      %v357 = vadd.f32 %v318, %v336
      %v358 = vadd.f32 %v319, %v336
      %v359 = vadd.f32 %v320, %v336
      %v360 = vadd.f32 %v321, %v336
      %v361 = vadd.f32 %v322, %v336
      %v362 = vadd.f32 %v323, %v336
      %v363 = vadd.f32 %v324, %v336
      %v364 = vadd.f32 %v325, %v336
      %v365 = vadd.f32 %v326, %v336
      %v366 = vadd.f32 %v327, %v336
      %v367 = vadd.f32 %v328, %v336
      %v368 = vadd.f32 %v329, %v336
      %v369 = vadd.f32 %v330, %v336
      %v370 = vmax.f32 %v338, 0.0
      %v371 = vmax.f32 %v339, 0.0
      %v372 = vmax.f32 %v340, 0.0
      %v373 = vmax.f32 %v341, 0.0
      %v374 = vmax.f32 %v342, 0.0
      %v375 = vmax.f32 %v343, 0.0
      %v376 = vmax.f32 %v344, 0.0
      %v377 = vmax.f32 %v345, 0.0
      %v378 = vmax.f32 %v346, 0.0
      %v379 = vmax.f32 %v347, 0.0
      %v380 = vmax.f32 %v348, 0.0
      %v381 = vmax.f32 %v349, 0.0
      %v382 = vmax.f32 %v350, 0.0
      %v383 = vmax.f32 %v351, 0.0
      %v384 = vmax.f32 %v352, 0.0
      %v385 = vmax.f32 %v353, 0.0
      %v386 = vmax.f32 %v354, 0.0
      %v387 = vmax.f32 %v355, 0.0
      %v388 = vmax.f32 %v356, 0.0
      %v389 = vmax.f32 %v357, 0.0
      %v390 = vmax.f32 %v358, 0.0
      %v391 = vmax.f32 %v359, 0.0
      %v392 = vmax.f32 %v360, 0.0
      %v393 = vmax.f32 %v361, 0.0
      %v394 = vmax.f32 %v362, 0.0
      %v395 = vmax.f32 %v363, 0.0
      %v396 = vmax.f32 %v364, 0.0
      %v397 = vmax.f32 %v365, 0.0
      %v398 = vmax.f32 %v366, 0.0
      %v399 = vmax.f32 %v367, 0.0
      %v400 = vmax.f32 %v368, 0.0
      %v401 = vmax.f32 %v369, 0.0
      %v402 = vpack.c.bf16 %v371, %v370
      %v403 = vpack.c.bf16 %v373, %v372
      %v404 = vpack.c.bf16 %v375, %v374
      %v405 = vpack.c.bf16 %v377, %v376
      %v406 = vpack.c.bf16 %v379, %v378
      %v407 = vpack.c.bf16 %v381, %v380
      %v408 = vpack.c.bf16 %v383, %v382
      %v409 = vpack.c.bf16 %v385, %v384
      %v410 = vpack.c.bf16 %v387, %v386
      %v411 = vpack.c.bf16 %v389, %v388
      %v412 = vpack.c.bf16 %v391, %v390
      %v413 = vpack.c.bf16 %v393, %v392
      %v414 = vpack.c.bf16 %v395, %v394
      %v415 = vpack.c.bf16 %v397, %v396
      %v416 = vpack.c.bf16 %v399, %v398
      %v417 = vpack.c.bf16 %v401, %v400
      %v434 = vunpack.c.l.b16 %v402
      %v435 = vunpack.c.h.b16 %v402
      %v436 = vunpack.c.l.b16 %v403
      %v437 = vunpack.c.h.b16 %v403
      %v438 = vunpack.c.l.b16 %v404
      %v439 = vunpack.c.h.b16 %v404
      %v440 = vunpack.c.l.b16 %v405
      %v441 = vunpack.c.h.b16 %v405
      %v442 = vunpack.c.l.b16 %v406
      %v443 = vunpack.c.h.b16 %v406
      %v444 = vunpack.c.l.b16 %v407
      %v445 = vunpack.c.h.b16 %v407
      %v446 = vunpack.c.l.b16 %v408
      %v447 = vunpack.c.h.b16 %v408
      %v448 = vunpack.c.l.b16 %v409
      %v449 = vunpack.c.h.b16 %v409
      %v450 = vunpack.c.l.b16 %v410
      %v451 = vunpack.c.h.b16 %v410
      %v452 = vunpack.c.l.b16 %v411
      %v453 = vunpack.c.h.b16 %v411
      %v454 = vunpack.c.l.b16 %v412
      %v455 = vunpack.c.h.b16 %v412
      %v456 = vunpack.c.l.b16 %v413
      %v457 = vunpack.c.h.b16 %v413
      %v458 = vunpack.c.l.b16 %v414
      %v459 = vunpack.c.h.b16 %v414
      %v460 = vunpack.c.l.b16 %v415
      %v461 = vunpack.c.h.b16 %v415
      %v462 = vunpack.c.l.b16 %v416
      %v463 = vunpack.c.h.b16 %v416
      %v464 = vunpack.c.l.b16 %v417
      %v465 = vunpack.c.h.b16 %v417
      %v466 = vpack.c.b16 %v434, %v434
      %v467 = vpack.c.b16 %v435, %v435
      %v468 = vpack.c.b16 %v436, %v436
      %v469 = vpack.c.b16 %v437, %v437
      %v470 = vpack.c.b16 %v438, %v438
      %v471 = vpack.c.b16 %v439, %v439
      %v472 = vpack.c.b16 %v440, %v440
      %v473 = vpack.c.b16 %v441, %v441
      %v474 = vpack.c.b16 %v442, %v442
      %v475 = vpack.c.b16 %v443, %v443
      %v476 = vpack.c.b16 %v444, %v444
      %v477 = vpack.c.b16 %v445, %v445
      %v478 = vpack.c.b16 %v446, %v446
      %v479 = vpack.c.b16 %v447, %v447
      %v480 = vpack.c.b16 %v448, %v448
      %v481 = vpack.c.b16 %v449, %v449
      %v482 = vpack.c.b16 %v450, %v450
      %v483 = vpack.c.b16 %v451, %v451
      %v484 = vpack.c.b16 %v452, %v452
      %v485 = vpack.c.b16 %v453, %v453
      %v486 = vpack.c.b16 %v454, %v454
      %v487 = vpack.c.b16 %v455, %v455
      %v488 = vpack.c.b16 %v456, %v456
      %v489 = vpack.c.b16 %v457, %v457
      %v490 = vpack.c.b16 %v458, %v458
      %v491 = vpack.c.b16 %v459, %v459
      %v492 = vpack.c.b16 %v460, %v460
      %v493 = vpack.c.b16 %v461, %v461
      %v494 = vpack.c.b16 %v462, %v462
      %v495 = vpack.c.b16 %v463, %v463
      %v496 = vpack.c.b16 %v464, %v464
      %v497 = vpack.c.b16 %v465, %v465
      %vm498 = vsmask.f32 256
      %vm499 = vsmask.f32 4368
      %vm500 = vmor %vm498, %vm499
      %v502 = vshrl.u32 %v466, 16
      %v504 = vrot.slane %v502, 7
      %v505 = vshll.u32 %v466, 16
      %v507 = vor.u32 %v504, %v505
      %v508 = vrot.slane %v504, 4
      %v510 = vshrl.u32 %v467, 16
      %v512 = vrot.slane %v510, 7
      %v513 = vshll.u32 %v467, 16
      %v515 = vor.u32 %v512, %v513
      %v516 = vsel %vm500, %v508, %v515
      %v517 = vrot.slane %v512, 4
      %v519 = vshrl.u32 %v468, 16
      %v521 = vrot.slane %v519, 7
      %v522 = vshll.u32 %v468, 16
      %v524 = vor.u32 %v521, %v522
      %v525 = vrot.slane %v521, 4
      %v527 = vshrl.u32 %v469, 16
      %v529 = vrot.slane %v527, 7
      %v530 = vshll.u32 %v469, 16
      %v532 = vor.u32 %v529, %v530
      %v533 = vsel %vm500, %v525, %v532
      %v534 = vrot.slane %v529, 4
      %v536 = vshrl.u32 %v470, 16
      %v538 = vrot.slane %v536, 7
      %v539 = vshll.u32 %v470, 16
      %v541 = vor.u32 %v538, %v539
      %v542 = vrot.slane %v538, 4
      %v544 = vshrl.u32 %v471, 16
      %v546 = vrot.slane %v544, 7
      %v547 = vshll.u32 %v471, 16
      %v549 = vor.u32 %v546, %v547
      %v550 = vsel %vm500, %v542, %v549
      %v551 = vrot.slane %v546, 4
      %v553 = vshrl.u32 %v472, 16
      %v555 = vrot.slane %v553, 7
      %v556 = vshll.u32 %v472, 16
      %v558 = vor.u32 %v555, %v556
      %v559 = vrot.slane %v555, 4
      %v561 = vshrl.u32 %v473, 16
      %v563 = vrot.slane %v561, 7
      %v564 = vshll.u32 %v473, 16
      %v566 = vor.u32 %v563, %v564
      %v567 = vsel %vm500, %v559, %v566
      %v568 = vrot.slane %v563, 4
      %v570 = vshrl.u32 %v474, 16
      %v572 = vrot.slane %v570, 7
      %v573 = vshll.u32 %v474, 16
      %v575 = vor.u32 %v572, %v573
      %v576 = vrot.slane %v572, 4
      %v578 = vshrl.u32 %v475, 16
      %v580 = vrot.slane %v578, 7
      %v581 = vshll.u32 %v475, 16
      %v583 = vor.u32 %v580, %v581
      %v584 = vsel %vm500, %v576, %v583
      %v585 = vrot.slane %v580, 4
      %v587 = vshrl.u32 %v476, 16
      %v589 = vrot.slane %v587, 7
      %v590 = vshll.u32 %v476, 16
      %v592 = vor.u32 %v589, %v590
      %v593 = vrot.slane %v589, 4
      %v595 = vshrl.u32 %v477, 16
      %v597 = vrot.slane %v595, 7
      %v598 = vshll.u32 %v477, 16
      %v600 = vor.u32 %v597, %v598
      %v601 = vsel %vm500, %v593, %v600
      %v602 = vrot.slane %v597, 4
      %v604 = vshrl.u32 %v478, 16
      %v606 = vrot.slane %v604, 7
      %v607 = vshll.u32 %v478, 16
      %v609 = vor.u32 %v606, %v607
      %v610 = vrot.slane %v606, 4
      %v612 = vshrl.u32 %v479, 16
      %v614 = vrot.slane %v612, 7
      %v615 = vshll.u32 %v479, 16
      %v617 = vor.u32 %v614, %v615
      %v618 = vsel %vm500, %v610, %v617
      %v619 = vrot.slane %v614, 4
      %v621 = vshrl.u32 %v480, 16
      %v623 = vrot.slane %v621, 7
      %v624 = vshll.u32 %v480, 16
      %v626 = vor.u32 %v623, %v624
      %v627 = vrot.slane %v623, 4
      %v629 = vshrl.u32 %v481, 16
      %v631 = vrot.slane %v629, 7
      %v632 = vshll.u32 %v481, 16
      %v634 = vor.u32 %v631, %v632
      %v635 = vsel %vm500, %v627, %v634
      %v636 = vrot.slane %v631, 4
      %v638 = vshrl.u32 %v482, 16
      %v640 = vrot.slane %v638, 7
      %v641 = vshll.u32 %v482, 16
      %v643 = vor.u32 %v640, %v641
      %v644 = vrot.slane %v640, 4
      %v646 = vshrl.u32 %v483, 16
      %v648 = vrot.slane %v646, 7
      %v649 = vshll.u32 %v483, 16
      %v651 = vor.u32 %v648, %v649
      %v652 = vsel %vm500, %v644, %v651
      %v653 = vrot.slane %v648, 4
      %v655 = vshrl.u32 %v484, 16
      %v657 = vrot.slane %v655, 7
      %v658 = vshll.u32 %v484, 16
      %v660 = vor.u32 %v657, %v658
      %v661 = vrot.slane %v657, 4
      %v663 = vshrl.u32 %v485, 16
      %v665 = vrot.slane %v663, 7
      %v666 = vshll.u32 %v485, 16
      %v668 = vor.u32 %v665, %v666
      %v669 = vsel %vm500, %v661, %v668
      %v670 = vrot.slane %v665, 4
      %v672 = vshrl.u32 %v486, 16
      %v674 = vrot.slane %v672, 7
      %v675 = vshll.u32 %v486, 16
      %v677 = vor.u32 %v674, %v675
      %v678 = vrot.slane %v674, 4
      %v680 = vshrl.u32 %v487, 16
      %v682 = vrot.slane %v680, 7
      %v683 = vshll.u32 %v487, 16
      %v685 = vor.u32 %v682, %v683
      %v686 = vsel %vm500, %v678, %v685
      %v687 = vrot.slane %v682, 4
      %v689 = vshrl.u32 %v488, 16
      %v691 = vrot.slane %v689, 7
      %v692 = vshll.u32 %v488, 16
      %v694 = vor.u32 %v691, %v692
      %v695 = vrot.slane %v691, 4
      %v697 = vshrl.u32 %v489, 16
      %v699 = vrot.slane %v697, 7
      %v700 = vshll.u32 %v489, 16
      %v702 = vor.u32 %v699, %v700
      %v703 = vsel %vm500, %v695, %v702
      %v704 = vrot.slane %v699, 4
      %v706 = vshrl.u32 %v490, 16
      %v708 = vrot.slane %v706, 7
      %v709 = vshll.u32 %v490, 16
      %v711 = vor.u32 %v708, %v709
      %v712 = vrot.slane %v708, 4
      %v714 = vshrl.u32 %v491, 16
      %v716 = vrot.slane %v714, 7
      %v717 = vshll.u32 %v491, 16
      %v719 = vor.u32 %v716, %v717
      %v720 = vsel %vm500, %v712, %v719
      %v721 = vrot.slane %v716, 4
      %v723 = vshrl.u32 %v492, 16
      %v725 = vrot.slane %v723, 7
      %v726 = vshll.u32 %v492, 16
      %v728 = vor.u32 %v725, %v726
      %v729 = vrot.slane %v725, 4
      %v731 = vshrl.u32 %v493, 16
      %v733 = vrot.slane %v731, 7
      %v734 = vshll.u32 %v493, 16
      %v736 = vor.u32 %v733, %v734
      %v737 = vsel %vm500, %v729, %v736
      %v738 = vrot.slane %v733, 4
      %v740 = vshrl.u32 %v494, 16
      %v742 = vrot.slane %v740, 7
      %v743 = vshll.u32 %v494, 16
      %v745 = vor.u32 %v742, %v743
      %v746 = vrot.slane %v742, 4
      %v748 = vshrl.u32 %v495, 16
      %v750 = vrot.slane %v748, 7
      %v751 = vshll.u32 %v495, 16
      %v753 = vor.u32 %v750, %v751
      %v754 = vsel %vm500, %v746, %v753
      %v755 = vrot.slane %v750, 4
      %v757 = vshrl.u32 %v496, 16
      %v759 = vrot.slane %v757, 7
      %v760 = vshll.u32 %v496, 16
      %v762 = vor.u32 %v759, %v760
      %v763 = vrot.slane %v759, 4
      %v765 = vshrl.u32 %v497, 16
      %v767 = vrot.slane %v765, 7
      %v768 = vshll.u32 %v497, 16
      %v770 = vor.u32 %v767, %v768
      %v771 = vsel %vm500, %v763, %v770
      %v772 = vrot.slane %v767, 4
      %s821 = scalar_lea.vmem %s172, 12
      %vm822 = vcmask 1043456
      %vm823 = vsmask.f32 7938
      %vm824 = vmand %vm822, %vm823
      %v825 = vld [vmem:[%s821] sm:$0xf]
      %v826 = vsel %vm824, %v507, %v825
      %827 = vst [vmem:[%s821] sm:$0xf] %v826
      %828 = vst [vmem:[%s821 + $0x4] sm:$0xf] %v516
      %vm829 = vcmask 1040384
      %vm830 = vmand %vm829, %vm498
      %v831 = vld [vmem:[%s821 + $0x8] sm:$0x1]
      %v832 = vsel %vm830, %v517, %v831
      %833 = vst [vmem:[%s821 + $0x8] sm:$0x1] %v832
      %v834 = vld [vmem:[%s821 + $0xc] sm:$0xf]
      %v835 = vsel %vm824, %v524, %v834
      %836 = vst [vmem:[%s821 + $0xc] sm:$0xf] %v835
      %837 = vst [vmem:[%s821 + $0x10] sm:$0xf] %v533
      %v838 = vld [vmem:[%s821 + $0x14] sm:$0x1]
      %v839 = vsel %vm830, %v534, %v838
      %840 = vst [vmem:[%s821 + $0x14] sm:$0x1] %v839
      %v841 = vld [vmem:[%s821 + $0x18] sm:$0xf]
      %v842 = vsel %vm824, %v541, %v841
      %843 = vst [vmem:[%s821 + $0x18] sm:$0xf] %v842
      %844 = vst [vmem:[%s821 + $0x1c] sm:$0xf] %v550
      %v845 = vld [vmem:[%s821 + $0x20] sm:$0x1]
      %v846 = vsel %vm830, %v551, %v845
      %847 = vst [vmem:[%s821 + $0x20] sm:$0x1] %v846
      %v848 = vld [vmem:[%s821 + $0x24] sm:$0xf]
      %v849 = vsel %vm824, %v558, %v848
      %850 = vst [vmem:[%s821 + $0x24] sm:$0xf] %v849
      %851 = vst [vmem:[%s821 + $0x28] sm:$0xf] %v567
      %v852 = vld [vmem:[%s821 + $0x2c] sm:$0x1]
      %v853 = vsel %vm830, %v568, %v852
      %854 = vst [vmem:[%s821 + $0x2c] sm:$0x1] %v853
      %v855 = vld [vmem:[%s821 + $0x30] sm:$0xf]
      %v856 = vsel %vm824, %v575, %v855
      %857 = vst [vmem:[%s821 + $0x30] sm:$0xf] %v856
      %858 = vst [vmem:[%s821 + $0x34] sm:$0xf] %v584
      %v859 = vld [vmem:[%s821 + $0x38] sm:$0x1]
      %v860 = vsel %vm830, %v585, %v859
      %861 = vst [vmem:[%s821 + $0x38] sm:$0x1] %v860
      %v862 = vld [vmem:[%s821 + $0x3c] sm:$0xf]
      %v863 = vsel %vm824, %v592, %v862
      %864 = vst [vmem:[%s821 + $0x3c] sm:$0xf] %v863
      %865 = vst [vmem:[%s821 + $0x40] sm:$0xf] %v601
      %v866 = vld [vmem:[%s821 + $0x44] sm:$0x1]
      %v867 = vsel %vm830, %v602, %v866
      %868 = vst [vmem:[%s821 + $0x44] sm:$0x1] %v867
      %v869 = vld [vmem:[%s821 + $0x48] sm:$0xf]
      %v870 = vsel %vm824, %v609, %v869
      %871 = vst [vmem:[%s821 + $0x48] sm:$0xf] %v870
      %872 = vst [vmem:[%s821 + $0x4c] sm:$0xf] %v618
      %v873 = vld [vmem:[%s821 + $0x50] sm:$0x1]
      %v874 = vsel %vm830, %v619, %v873
      %875 = vst [vmem:[%s821 + $0x50] sm:$0x1] %v874
      %v876 = vld [vmem:[%s821 + $0x54] sm:$0xf]
      %v877 = vsel %vm824, %v626, %v876
      %878 = vst [vmem:[%s821 + $0x54] sm:$0xf] %v877
      %879 = vst [vmem:[%s821 + $0x58] sm:$0xf] %v635
      %v880 = vld [vmem:[%s821 + $0x5c] sm:$0x1]
      %v881 = vsel %vm830, %v636, %v880
      %882 = vst [vmem:[%s821 + $0x5c] sm:$0x1] %v881
      %v883 = vld [vmem:[%s821 + $0x60] sm:$0xf]
      %v884 = vsel %vm824, %v643, %v883
      %885 = vst [vmem:[%s821 + $0x60] sm:$0xf] %v884
      %886 = vst [vmem:[%s821 + $0x64] sm:$0xf] %v652
      %v887 = vld [vmem:[%s821 + $0x68] sm:$0x1]
      %v888 = vsel %vm830, %v653, %v887
      %889 = vst [vmem:[%s821 + $0x68] sm:$0x1] %v888
      %v890 = vld [vmem:[%s821 + $0x6c] sm:$0xf]
      %v891 = vsel %vm824, %v660, %v890
      %892 = vst [vmem:[%s821 + $0x6c] sm:$0xf] %v891
      %893 = vst [vmem:[%s821 + $0x70] sm:$0xf] %v669
      %v894 = vld [vmem:[%s821 + $0x74] sm:$0x1]
      %v895 = vsel %vm830, %v670, %v894
      %896 = vst [vmem:[%s821 + $0x74] sm:$0x1] %v895
      %v897 = vld [vmem:[%s821 + $0x78] sm:$0xf]
      %v898 = vsel %vm824, %v677, %v897
      %899 = vst [vmem:[%s821 + $0x78] sm:$0xf] %v898
      %900 = vst [vmem:[%s821 + $0x7c] sm:$0xf] %v686
      %v901 = vld [vmem:[%s821 + $0x80] sm:$0x1]
      %v902 = vsel %vm830, %v687, %v901
      %903 = vst [vmem:[%s821 + $0x80] sm:$0x1] %v902
      %v904 = vld [vmem:[%s821 + $0x84] sm:$0xf]
      %v905 = vsel %vm824, %v694, %v904
      %906 = vst [vmem:[%s821 + $0x84] sm:$0xf] %v905
      %907 = vst [vmem:[%s821 + $0x88] sm:$0xf] %v703
      %v908 = vld [vmem:[%s821 + $0x8c] sm:$0x1]
      %v909 = vsel %vm830, %v704, %v908
      %910 = vst [vmem:[%s821 + $0x8c] sm:$0x1] %v909
      %v911 = vld [vmem:[%s821 + $0x90] sm:$0xf]
      %v912 = vsel %vm824, %v711, %v911
      %913 = vst [vmem:[%s821 + $0x90] sm:$0xf] %v912
      %914 = vst [vmem:[%s821 + $0x94] sm:$0xf] %v720
      %v915 = vld [vmem:[%s821 + $0x98] sm:$0x1]
      %v916 = vsel %vm830, %v721, %v915
      %917 = vst [vmem:[%s821 + $0x98] sm:$0x1] %v916
      %v918 = vld [vmem:[%s821 + $0x9c] sm:$0xf]
      %v919 = vsel %vm824, %v728, %v918
      %920 = vst [vmem:[%s821 + $0x9c] sm:$0xf] %v919
      %921 = vst [vmem:[%s821 + $0xa0] sm:$0xf] %v737
      %v922 = vld [vmem:[%s821 + $0xa4] sm:$0x1]
      %v923 = vsel %vm830, %v738, %v922
      %924 = vst [vmem:[%s821 + $0xa4] sm:$0x1] %v923
      %v925 = vld [vmem:[%s821 + $0xa8] sm:$0xf]
      %v926 = vsel %vm824, %v745, %v925
      %927 = vst [vmem:[%s821 + $0xa8] sm:$0xf] %v926
      %928 = vst [vmem:[%s821 + $0xac] sm:$0xf] %v754
      %v929 = vld [vmem:[%s821 + $0xb0] sm:$0x1]
      %v930 = vsel %vm830, %v755, %v929
      %931 = vst [vmem:[%s821 + $0xb0] sm:$0x1] %v930
      %v932 = vld [vmem:[%s821 + $0xb4] sm:$0xf]
      %v933 = vsel %vm824, %v762, %v932
      %934 = vst [vmem:[%s821 + $0xb4] sm:$0xf] %v933
      %935 = vst [vmem:[%s821 + $0xb8] sm:$0xf] %v771
      %v936 = vld [vmem:[%s821 + $0xbc] sm:$0x1]
      %v937 = vsel %vm830, %v772, %v936
      %938 = vst [vmem:[%s821 + $0xbc] sm:$0x1] %v937
      %p939 = scmp.lt.s32.totalorder %s14, 1
      %s940 = scalar_select %p939, %s14, 1
      %s941 = smul.addr %s940, 54
      %s942 = smul.addr %s941, 4
      %s943 = scalar_lea.vmem %s3, %s942
      // Predicated region
      $region33: #{_lambda_.6} parent=31 // pred_check
        %p944 = pneg %p100
      $region34: #{_lambda_.6} parent=31 // pred_check_branch
        %946 = sbr.rel (%p944) target = $region36
      $region35: #{_lambda_.6} parent=31 // pred_region
        _
      $region36: #{_lambda_.6} parent=31 // pred_fallthru
        _
    $region32: #{_lambda_.6} parent=5 // pred_fallthru
      _
    %p947 = scmp.le.s32.totalorder 2, %s9
    // Predicated region
    $region37: #{_lambda_.6} parent=5 // pred_check
      %p948 = pneg %p947
    $region38: #{_lambda_.6} parent=5 // pred_check_branch
      %950 = sbr.rel (%p948) target = $region40
    $region39: #{_lambda_.6} parent=5 // pred_region
      %s951 = ssub.s32 %s9, 2
      // Predicated region
      $region41: #{_lambda_.6} parent=39 // pred_check
        %p952 = pneg %p106
      $region42: #{_lambda_.6} parent=39 // pred_check_branch
        %954 = sbr.rel (%p952) target = $region44
      $region43: #{_lambda_.6} parent=39 // pred_region
        %p955 = scmp.lt.s32.totalorder %s15, 1
        %s956 = scalar_select %p955, %s15, 1
        %s957 = smul.addr %s956, 54
        %s958 = smul.addr %s957, 4
        %s959 = scalar_lea.vmem %s3, %s958
      $region44: #{_lambda_.6} parent=39 // pred_fallthru
        _
    $region40: #{_lambda_.6} parent=5 // pred_fallthru
      _
  $region6: #{_lambda_.6} parent=0 // loop_footer
    %s13 = sadd.s32 1, %s9
  $region7: #{_lambda_.6} parent=0 // loop_footer_branch
    %8 = sbr.rel target = $region3
  $region8: #{_lambda_.6} parent=0 // loop_exit
    _

// kernel: _lambda_.5
$region0: #{_lambda_.5}
  #allocation0 [shape = 'u32[]', space=smem, size = 0x4, offset = 0x4, fixed_abs, tag = 'smem constant byte address 0x4 - core index']
  #allocation1 [shape = 'u32[144,128]{1,0:T(1,128)}', space=vmem, size = 0x12000, scoped, tag = 'internal scratch']
  %s0 = inlined_call_operand.vmem [shape: bf16[512,128], index: 0, kind: input, shape index: {}]
  %s1 = inlined_call_operand.vmem [shape: bf16[128,128], index: 1, kind: input, shape index: {}]
  %s2 = inlined_call_operand.vmem [shape: bf16[512,128], index: 2, kind: output, shape index: {0}]
  %s3 = inlined_call_operand.vmem [shape: f32[8,128], index: 3, kind: output, shape index: {1}]
  %4 = xla_tuple %s2, %s3
  %s5 = sld [smem:[#allocation0]]
  $region30: #{_lambda_.5} parent=0
    _
  %s7 = ssub.s32 1, %s5
  %s8 = scalar_select 0, %s7, %s5
  // Predicated region
  $region2: #{_lambda_.5} parent=0 // pred_check
    _
  $region3: #{_lambda_.5} parent=0 // pred_check_branch
    %10 = sbr.rel (0) target = $region5
  $region4: #{_lambda_.5} parent=0 // pred_region
    _
  $region5: #{_lambda_.5} parent=0 // pred_fallthru
    _
  // Predicated region
  $region6: #{_lambda_.5} parent=0 // pred_check
    _
  $region7: #{_lambda_.5} parent=0 // pred_check_branch
    %12 = sbr.rel (0) target = $region9
  $region8: #{_lambda_.5} parent=0 // pred_region
    _
  $region9: #{_lambda_.5} parent=0 // pred_fallthru
    _
  %p14 = scmp.eq.s32.totalorder 0, 0
  // Predicated region
  $region10: #{_lambda_.5} parent=0 // pred_check
    %p15 = pneg %p14
  $region11: #{_lambda_.5} parent=0 // pred_check_branch
    %17 = sbr.rel (%p15) target = $region13
  $region12: #{_lambda_.5} parent=0 // pred_region
    %18 = vst [vmem:[%s3] sm:$0xff] 0.0
  $region13: #{_lambda_.5} parent=0 // pred_fallthru
    _
  %v19 = vld [vmem:[%s0] sm:$0xf]
  %v20 = vld [vmem:[%s0 + $0x4] sm:$0xf]
  %v21 = vld [vmem:[%s0 + $0x8] sm:$0xf]
  %v22 = vld [vmem:[%s0 + $0xc] sm:$0xf]
  %v23 = vld [vmem:[%s0 + $0x10] sm:$0xf]
  %v24 = vld [vmem:[%s0 + $0x14] sm:$0xf]
  %v25 = vld [vmem:[%s0 + $0x18] sm:$0xf]
  %v26 = vld [vmem:[%s0 + $0x1c] sm:$0xf]
  %v27 = vld [vmem:[%s0 + $0x20] sm:$0xf]
  %v28 = vld [vmem:[%s0 + $0x24] sm:$0xf]
  %v29 = vld [vmem:[%s0 + $0x28] sm:$0xf]
  %v30 = vld [vmem:[%s0 + $0x2c] sm:$0xf]
  %v31 = vld [vmem:[%s0 + $0x30] sm:$0xf]
  %v32 = vld [vmem:[%s0 + $0x34] sm:$0xf]
  %v33 = vld [vmem:[%s0 + $0x38] sm:$0xf]
  %v34 = vld [vmem:[%s0 + $0x3c] sm:$0xf]
  %v35 = vld [vmem:[%s0 + $0x40] sm:$0xf]
  %v36 = vld [vmem:[%s0 + $0x44] sm:$0xf]
  %v37 = vld [vmem:[%s0 + $0x48] sm:$0xf]
  %v38 = vld [vmem:[%s0 + $0x4c] sm:$0xf]
  %v39 = vld [vmem:[%s0 + $0x50] sm:$0xf]
  %v40 = vld [vmem:[%s0 + $0x54] sm:$0xf]
  %v41 = vld [vmem:[%s0 + $0x58] sm:$0xf]
  %v42 = vld [vmem:[%s0 + $0x5c] sm:$0xf]
  %v43 = vld [vmem:[%s0 + $0x60] sm:$0xf]
  %v44 = vld [vmem:[%s0 + $0x64] sm:$0xf]
  %v45 = vld [vmem:[%s0 + $0x68] sm:$0xf]
  %v46 = vld [vmem:[%s0 + $0x6c] sm:$0xf]
  %v47 = vld [vmem:[%s0 + $0x70] sm:$0xf]
  %v48 = vld [vmem:[%s0 + $0x74] sm:$0xf]
  %v49 = vld [vmem:[%s0 + $0x78] sm:$0xf]
  %v50 = vld [vmem:[%s0 + $0x7c] sm:$0xf]
  %v51 = vld [vmem:[%s0 + $0x80] sm:$0xf]
  %v52 = vld [vmem:[%s0 + $0x84] sm:$0xf]
  %v53 = vld [vmem:[%s0 + $0x88] sm:$0xf]
  %v54 = vld [vmem:[%s0 + $0x8c] sm:$0xf]
  %v55 = vld [vmem:[%s0 + $0x90] sm:$0xf]
  %v56 = vld [vmem:[%s0 + $0x94] sm:$0xf]
  %v57 = vld [vmem:[%s0 + $0x98] sm:$0xf]
  %v58 = vld [vmem:[%s0 + $0x9c] sm:$0xf]
  %v59 = vld [vmem:[%s0 + $0xa0] sm:$0xf]
  %v60 = vld [vmem:[%s0 + $0xa4] sm:$0xf]
  %v61 = vld [vmem:[%s0 + $0xa8] sm:$0xf]
  %v62 = vld [vmem:[%s0 + $0xac] sm:$0xf]
  %v63 = vld [vmem:[%s0 + $0xb0] sm:$0xf]
  %v64 = vld [vmem:[%s0 + $0xb4] sm:$0xf]
  %v65 = vld [vmem:[%s0 + $0xb8] sm:$0xf]
  %v66 = vld [vmem:[%s0 + $0xbc] sm:$0xf]
  %v67 = vld [vmem:[%s0 + $0xc0] sm:$0xf]
  %v68 = vld [vmem:[%s0 + $0xc4] sm:$0xf]
  %v69 = vld [vmem:[%s0 + $0xc8] sm:$0xf]
  %v70 = vld [vmem:[%s0 + $0xcc] sm:$0xf]
  %v71 = vld [vmem:[%s0 + $0xd0] sm:$0xf]
  %v72 = vld [vmem:[%s0 + $0xd4] sm:$0xf]
  %v73 = vld [vmem:[%s0 + $0xd8] sm:$0xf]
  %v74 = vld [vmem:[%s0 + $0xdc] sm:$0xf]
  %v75 = vld [vmem:[%s0 + $0xe0] sm:$0xf]
  %v76 = vld [vmem:[%s0 + $0xe4] sm:$0xf]
  %v77 = vld [vmem:[%s0 + $0xe8] sm:$0xf]
  %v78 = vld [vmem:[%s0 + $0xec] sm:$0xf]
  %v79 = vld [vmem:[%s0 + $0xf0] sm:$0xf]
  %v80 = vld [vmem:[%s0 + $0xf4] sm:$0xf]
  %v81 = vld [vmem:[%s0 + $0xf8] sm:$0xf]
  %v82 = vld [vmem:[%s0 + $0xfc] sm:$0xf]
  %v83 = vld [vmem:[%s1] sm:$0xf]
  %v84 = vld [vmem:[%s1 + $0x4] sm:$0xf]
  %v85 = vld [vmem:[%s1 + $0x8] sm:$0xf]
  %v86 = vld [vmem:[%s1 + $0xc] sm:$0xf]
  %v87 = vld [vmem:[%s1 + $0x10] sm:$0xf]
  %v88 = vld [vmem:[%s1 + $0x14] sm:$0xf]
  %v89 = vld [vmem:[%s1 + $0x18] sm:$0xf]
  %v90 = vld [vmem:[%s1 + $0x1c] sm:$0xf]
  %v91 = vld [vmem:[%s1 + $0x20] sm:$0xf]
  %v92 = vld [vmem:[%s1 + $0x24] sm:$0xf]
  %v93 = vld [vmem:[%s1 + $0x28] sm:$0xf]
  %v94 = vld [vmem:[%s1 + $0x2c] sm:$0xf]
  %v95 = vld [vmem:[%s1 + $0x30] sm:$0xf]
  %v96 = vld [vmem:[%s1 + $0x34] sm:$0xf]
  %v97 = vld [vmem:[%s1 + $0x38] sm:$0xf]
  %v98 = vld [vmem:[%s1 + $0x3c] sm:$0xf]
  %v163 = vunpack.c.l.b16 %v19
  %v164 = vunpack.c.l.b16 %v20
  %v165 = vunpack.c.l.b16 %v21
  %v166 = vunpack.c.l.b16 %v22
  %v167 = vunpack.c.l.b16 %v23
  %v168 = vunpack.c.l.b16 %v24
  %v169 = vunpack.c.l.b16 %v25
  %v170 = vunpack.c.l.b16 %v26
  %v171 = vunpack.c.l.b16 %v27
  %v172 = vunpack.c.l.b16 %v28
  %v173 = vunpack.c.l.b16 %v29
  %v174 = vunpack.c.l.b16 %v30
  %v175 = vunpack.c.l.b16 %v31
  %v176 = vunpack.c.l.b16 %v32
  %v177 = vunpack.c.l.b16 %v33
  %v178 = vunpack.c.l.b16 %v34
  %v179 = vunpack.c.l.b16 %v35
  %v180 = vunpack.c.l.b16 %v36
  %v181 = vunpack.c.l.b16 %v37
  %v182 = vunpack.c.l.b16 %v38
  %v183 = vunpack.c.l.b16 %v39
  %v184 = vunpack.c.l.b16 %v40
  %v185 = vunpack.c.l.b16 %v41
  %v186 = vunpack.c.l.b16 %v42
  %v187 = vunpack.c.l.b16 %v43
  %v188 = vunpack.c.l.b16 %v44
  %v189 = vunpack.c.l.b16 %v45
  %v190 = vunpack.c.l.b16 %v46
  %v191 = vunpack.c.l.b16 %v47
  %v192 = vunpack.c.l.b16 %v48
  %v193 = vunpack.c.l.b16 %v49
  %v194 = vunpack.c.l.b16 %v50
  %v195 = vunpack.c.l.b16 %v51
  %v196 = vunpack.c.l.b16 %v52
  %v197 = vunpack.c.l.b16 %v53
  %v198 = vunpack.c.l.b16 %v54
  %v199 = vunpack.c.l.b16 %v55
  %v200 = vunpack.c.l.b16 %v56
  %v201 = vunpack.c.l.b16 %v57
  %v202 = vunpack.c.l.b16 %v58
  %v203 = vunpack.c.l.b16 %v59
  %v204 = vunpack.c.l.b16 %v60
  %v205 = vunpack.c.l.b16 %v61
  %v206 = vunpack.c.l.b16 %v62
  %v207 = vunpack.c.l.b16 %v63
  %v208 = vunpack.c.l.b16 %v64
  %v209 = vunpack.c.l.b16 %v65
  %v210 = vunpack.c.l.b16 %v66
  %v211 = vunpack.c.l.b16 %v67
  %v212 = vunpack.c.l.b16 %v68
  %v213 = vunpack.c.l.b16 %v69
  %v214 = vunpack.c.l.b16 %v70
  %v215 = vunpack.c.l.b16 %v71
  %v216 = vunpack.c.l.b16 %v72
  %v217 = vunpack.c.l.b16 %v73
  %v218 = vunpack.c.l.b16 %v74
  %v219 = vunpack.c.l.b16 %v75
  %v220 = vunpack.c.l.b16 %v76
  %v221 = vunpack.c.l.b16 %v77
  %v222 = vunpack.c.l.b16 %v78
  %v223 = vunpack.c.l.b16 %v79
  %v224 = vunpack.c.l.b16 %v80
  %v225 = vunpack.c.l.b16 %v81
  %v226 = vunpack.c.l.b16 %v82
  %v227 = vpack.c.b16 %v164, %v163
  %v228 = vpack.c.b16 %v166, %v165
  %v229 = vpack.c.b16 %v168, %v167
  %v230 = vpack.c.b16 %v170, %v169
  %v231 = vpack.c.b16 %v172, %v171
  %v232 = vpack.c.b16 %v174, %v173
  %v233 = vpack.c.b16 %v176, %v175
  %v234 = vpack.c.b16 %v178, %v177
  %v235 = vpack.c.b16 %v180, %v179
  %v236 = vpack.c.b16 %v182, %v181
  %v237 = vpack.c.b16 %v184, %v183
  %v238 = vpack.c.b16 %v186, %v185
  %v239 = vpack.c.b16 %v188, %v187
  %v240 = vpack.c.b16 %v190, %v189
  %v241 = vpack.c.b16 %v192, %v191
  %v242 = vpack.c.b16 %v194, %v193
  %v243 = vpack.c.b16 %v196, %v195
  %v244 = vpack.c.b16 %v198, %v197
  %v245 = vpack.c.b16 %v200, %v199
  %v246 = vpack.c.b16 %v202, %v201
  %v247 = vpack.c.b16 %v204, %v203
  %v248 = vpack.c.b16 %v206, %v205
  %v249 = vpack.c.b16 %v208, %v207
  %v250 = vpack.c.b16 %v210, %v209
  %v251 = vpack.c.b16 %v212, %v211
  %v252 = vpack.c.b16 %v214, %v213
  %v253 = vpack.c.b16 %v216, %v215
  %v254 = vpack.c.b16 %v218, %v217
  %v255 = vpack.c.b16 %v220, %v219
  %v256 = vpack.c.b16 %v222, %v221
  %v257 = vpack.c.b16 %v224, %v223
  %v258 = vpack.c.b16 %v226, %v225
  %v307 = vunpack.c.l.b16 %v83
  %v308 = vunpack.c.l.b16 %v84
  %v309 = vunpack.c.l.b16 %v85
  %v310 = vunpack.c.l.b16 %v86
  %v311 = vunpack.c.l.b16 %v87
  %v312 = vunpack.c.l.b16 %v88
  %v313 = vunpack.c.l.b16 %v89
  %v314 = vunpack.c.l.b16 %v90
  %v315 = vunpack.c.l.b16 %v91
  %v316 = vunpack.c.l.b16 %v92
  %v317 = vunpack.c.l.b16 %v93
  %v318 = vunpack.c.l.b16 %v94
  %v319 = vunpack.c.l.b16 %v95
  %v320 = vunpack.c.l.b16 %v96
  %v321 = vunpack.c.l.b16 %v97
  %v322 = vunpack.c.l.b16 %v98
  %v323 = vpack.c.b16 %v308, %v307
  %v324 = vpack.c.b16 %v310, %v309
  %v325 = vpack.c.b16 %v312, %v311
  %v326 = vpack.c.b16 %v314, %v313
  %v327 = vpack.c.b16 %v316, %v315
  %v328 = vpack.c.b16 %v318, %v317
  %v329 = vpack.c.b16 %v320, %v319
  %v330 = vpack.c.b16 %v322, %v321
  %339 = vmatprep.subr.bf16.mxu0 0
  %340 = vmatpush1.bf16.msra.mxu0 %v323
  %341 = vmatprep.subr.bf16.mxu0 0
  %342 = vmatpush1.bf16.msra.mxu0 %v324
  %343 = vmatprep.subr.bf16.mxu0 0
  %344 = vmatpush1.bf16.msra.mxu0 %v325
  %345 = vmatprep.subr.bf16.mxu0 0
  %346 = vmatpush1.bf16.msra.mxu0 %v326
  %347 = vmatprep.subr.bf16.mxu0 0
  %348 = vmatpush1.bf16.msra.mxu0 %v327
  %349 = vmatprep.subr.bf16.mxu0 0
  %350 = vmatpush1.bf16.msra.mxu0 %v328
  %351 = vmatprep.subr.bf16.mxu0 0
  %352 = vmatpush1.bf16.msra.mxu0 %v329
  %353 = vmatprep.subr.bf16.mxu0 0
  %354 = vmatpush1.bf16.msra.mxu0 %v330
  %355 = vmatprep.subr.bf16.mxu0 0
  %356 = vmatpush1.bf16.msra.mxu0 0
  %357 = vmatprep.subr.bf16.mxu0 0
  %358 = vmatpush1.bf16.msra.mxu0 0
  %359 = vmatprep.subr.bf16.mxu0 0
  %360 = vmatpush1.bf16.msra.mxu0 0
  %361 = vmatprep.subr.bf16.mxu0 0
  %362 = vmatpush1.bf16.msra.mxu0 0
  %363 = vmatprep.subr.bf16.mxu0 0
  %364 = vmatpush1.bf16.msra.mxu0 0
  %365 = vmatprep.subr.bf16.mxu0 0
  %366 = vmatpush1.bf16.msra.mxu0 0
  %367 = vmatprep.subr.bf16.mxu0 0
  %368 = vmatpush1.bf16.msra.mxu0 0
  %369 = vmatprep.subr.bf16.mxu0 0
  %370 = vmatpush1.bf16.msra.mxu0 0
  %371 = vmatprep.mubr.bf16.mxu0 0
  %372 = vmatmul.mubr.bf16.gmra.mrb[0].mxu0 %v227
  %v373 = vpop.f32.mrb[0].mxu0
  %v374 = vadd.f32 0.0, %v373
  %v375 = vpop.f32.mrb[0].mxu0
  %v376 = vpop.f32.mrb[0].mxu0
  %v377 = vadd.f32 0.0, %v376
  %v378 = vpop.f32.mrb[0].mxu0
  %379 = vmatprep.mubr.bf16.mxu0 0
  %380 = vmatmul.mubr.bf16.gmra.mrb[0].mxu0 %v228
  %v381 = vpop.f32.mrb[0].mxu0
  %v382 = vadd.f32 0.0, %v381
  %v383 = vpop.f32.mrb[0].mxu0
  %v384 = vpop.f32.mrb[0].mxu0
  %v385 = vadd.f32 0.0, %v384
  %v386 = vpop.f32.mrb[0].mxu0
  %387 = vmatprep.mubr.bf16.mxu0 0
  %388 = vmatmul.mubr.bf16.gmra.mrb[0].mxu0 %v229
  %v389 = vpop.f32.mrb[0].mxu0
  %v390 = vadd.f32 0.0, %v389
  %v391 = vpop.f32.mrb[0].mxu0
  %v392 = vpop.f32.mrb[0].mxu0
  %v393 = vadd.f32 0.0, %v392
  %v394 = vpop.f32.mrb[0].mxu0
  %395 = vmatprep.mubr.bf16.mxu0 0
  %396 = vmatmul.mubr.bf16.gmra.mrb[0].mxu0 %v230
  %v397 = vpop.f32.mrb[0].mxu0
  %v398 = vadd.f32 0.0, %v397
  %v399 = vpop.f32.mrb[0].mxu0
  %v400 = vpop.f32.mrb[0].mxu0
  %v401 = vadd.f32 0.0, %v400
  %v402 = vpop.f32.mrb[0].mxu0
  %403 = vmatprep.mubr.bf16.mxu0 0
  %404 = vmatmul.mubr.bf16.gmra.mrb[0].mxu0 %v231
  %v405 = vpop.f32.mrb[0].mxu0
  %v406 = vadd.f32 0.0, %v405
  %v407 = vpop.f32.mrb[0].mxu0
  %v408 = vpop.f32.mrb[0].mxu0
  %v409 = vadd.f32 0.0, %v408
  %v410 = vpop.f32.mrb[0].mxu0
  %411 = vmatprep.mubr.bf16.mxu0 0
  %412 = vmatmul.mubr.bf16.gmra.mrb[0].mxu0 %v232
  %v413 = vpop.f32.mrb[0].mxu0
  %v414 = vadd.f32 0.0, %v413
  %v415 = vpop.f32.mrb[0].mxu0
  %v416 = vpop.f32.mrb[0].mxu0
  %v417 = vadd.f32 0.0, %v416
  %v418 = vpop.f32.mrb[0].mxu0
  %419 = vmatprep.mubr.bf16.mxu0 0
  %420 = vmatmul.mubr.bf16.gmra.mrb[0].mxu0 %v233
  %v421 = vpop.f32.mrb[0].mxu0
  %v422 = vadd.f32 0.0, %v421
  %v423 = vpop.f32.mrb[0].mxu0
  %v424 = vpop.f32.mrb[0].mxu0
  %v425 = vadd.f32 0.0, %v424
  %v426 = vpop.f32.mrb[0].mxu0
  %427 = vmatprep.mubr.bf16.mxu0 0
  %428 = vmatmul.mubr.bf16.gmra.mrb[0].mxu0 %v234
  %v429 = vpop.f32.mrb[0].mxu0
  %v430 = vadd.f32 0.0, %v429
  %v431 = vpop.f32.mrb[0].mxu0
  %v432 = vpop.f32.mrb[0].mxu0
  %v433 = vadd.f32 0.0, %v432
  %v434 = vpop.f32.mrb[0].mxu0
  %435 = vmatprep.mubr.bf16.mxu0 0
  %436 = vmatmul.mubr.bf16.gmra.mrb[0].mxu0 %v235
  %v437 = vpop.f32.mrb[0].mxu0
  %v438 = vadd.f32 0.0, %v437
  %v439 = vpop.f32.mrb[0].mxu0
  %v440 = vpop.f32.mrb[0].mxu0
  %v441 = vadd.f32 0.0, %v440
  %v442 = vpop.f32.mrb[0].mxu0
  %443 = vmatprep.mubr.bf16.mxu0 0
  %444 = vmatmul.mubr.bf16.gmra.mrb[0].mxu0 %v236
  %v445 = vpop.f32.mrb[0].mxu0
  %v446 = vadd.f32 0.0, %v445
  %v447 = vpop.f32.mrb[0].mxu0
  %v448 = vpop.f32.mrb[0].mxu0
  %v449 = vadd.f32 0.0, %v448
  %v450 = vpop.f32.mrb[0].mxu0
  %451 = vmatprep.mubr.bf16.mxu0 0
  %452 = vmatmul.mubr.bf16.gmra.mrb[0].mxu0 %v237
  %v453 = vpop.f32.mrb[0].mxu0
  %v454 = vadd.f32 0.0, %v453
  %v455 = vpop.f32.mrb[0].mxu0
  %v456 = vpop.f32.mrb[0].mxu0
  %v457 = vadd.f32 0.0, %v456
  %v458 = vpop.f32.mrb[0].mxu0
  %459 = vmatprep.mubr.bf16.mxu0 0
  %460 = vmatmul.mubr.bf16.gmra.mrb[0].mxu0 %v238
  %v461 = vpop.f32.mrb[0].mxu0
  %v462 = vadd.f32 0.0, %v461
  %v463 = vpop.f32.mrb[0].mxu0
  %v464 = vpop.f32.mrb[0].mxu0
  %v465 = vadd.f32 0.0, %v464
  %v466 = vpop.f32.mrb[0].mxu0
  %467 = vmatprep.mubr.bf16.mxu0 0
  %468 = vmatmul.mubr.bf16.gmra.mrb[0].mxu0 %v239
  %v469 = vpop.f32.mrb[0].mxu0
  %v470 = vadd.f32 0.0, %v469
  %v471 = vpop.f32.mrb[0].mxu0
  %v472 = vpop.f32.mrb[0].mxu0
  %v473 = vadd.f32 0.0, %v472
  %v474 = vpop.f32.mrb[0].mxu0
  %475 = vmatprep.mubr.bf16.mxu0 0
  %476 = vmatmul.mubr.bf16.gmra.mrb[0].mxu0 %v240
  %v477 = vpop.f32.mrb[0].mxu0
  %v478 = vadd.f32 0.0, %v477
  %v479 = vpop.f32.mrb[0].mxu0
  %v480 = vpop.f32.mrb[0].mxu0
  %v481 = vadd.f32 0.0, %v480
  %v482 = vpop.f32.mrb[0].mxu0
  %483 = vmatprep.mubr.bf16.mxu0 0
  %484 = vmatmul.mubr.bf16.gmra.mrb[0].mxu0 %v241
  %v485 = vpop.f32.mrb[0].mxu0
  %v486 = vadd.f32 0.0, %v485
  %v487 = vpop.f32.mrb[0].mxu0
  %v488 = vpop.f32.mrb[0].mxu0
  %v489 = vadd.f32 0.0, %v488
  %v490 = vpop.f32.mrb[0].mxu0
  %491 = vmatprep.mubr.bf16.mxu0 0
  %492 = vmatmul.mubr.bf16.gmra.mrb[0].mxu0 %v242
  %v493 = vpop.f32.mrb[0].mxu0
  %v494 = vadd.f32 0.0, %v493
  %v495 = vpop.f32.mrb[0].mxu0
  %v496 = vpop.f32.mrb[0].mxu0
  %v497 = vadd.f32 0.0, %v496
  %v498 = vpop.f32.mrb[0].mxu0
  %499 = vmatprep.mubr.bf16.mxu0 0
  %500 = vmatmul.mubr.bf16.gmra.mrb[0].mxu0 %v243
  %v501 = vpop.f32.mrb[0].mxu0
  %v502 = vadd.f32 0.0, %v501
  %v503 = vpop.f32.mrb[0].mxu0
  %v504 = vpop.f32.mrb[0].mxu0
  %v505 = vadd.f32 0.0, %v504
  %v506 = vpop.f32.mrb[0].mxu0
  %507 = vmatprep.mubr.bf16.mxu0 0
  %508 = vmatmul.mubr.bf16.gmra.mrb[0].mxu0 %v244
  %v509 = vpop.f32.mrb[0].mxu0
  %v510 = vadd.f32 0.0, %v509
  %v511 = vpop.f32.mrb[0].mxu0
  %v512 = vpop.f32.mrb[0].mxu0
  %v513 = vadd.f32 0.0, %v512
  %v514 = vpop.f32.mrb[0].mxu0
  %515 = vmatprep.mubr.bf16.mxu0 0
  %516 = vmatmul.mubr.bf16.gmra.mrb[0].mxu0 %v245
  %v517 = vpop.f32.mrb[0].mxu0
  %v518 = vadd.f32 0.0, %v517
  %v519 = vpop.f32.mrb[0].mxu0
  %v520 = vpop.f32.mrb[0].mxu0
  %v521 = vadd.f32 0.0, %v520
  %v522 = vpop.f32.mrb[0].mxu0
  %523 = vmatprep.mubr.bf16.mxu0 0
  %524 = vmatmul.mubr.bf16.gmra.mrb[0].mxu0 %v246
  %v525 = vpop.f32.mrb[0].mxu0
  %v526 = vadd.f32 0.0, %v525
  %v527 = vpop.f32.mrb[0].mxu0
  %v528 = vpop.f32.mrb[0].mxu0
  %v529 = vadd.f32 0.0, %v528
  %v530 = vpop.f32.mrb[0].mxu0
  %531 = vmatprep.mubr.bf16.mxu0 0
  %532 = vmatmul.mubr.bf16.gmra.mrb[0].mxu0 %v247
  %v533 = vpop.f32.mrb[0].mxu0
  %v534 = vadd.f32 0.0, %v533
  %v535 = vpop.f32.mrb[0].mxu0
  %v536 = vpop.f32.mrb[0].mxu0
  %v537 = vadd.f32 0.0, %v536
  %v538 = vpop.f32.mrb[0].mxu0
  %539 = vmatprep.mubr.bf16.mxu0 0
  %540 = vmatmul.mubr.bf16.gmra.mrb[0].mxu0 %v248
  %v541 = vpop.f32.mrb[0].mxu0
  %v542 = vadd.f32 0.0, %v541
  %v543 = vpop.f32.mrb[0].mxu0
  %v544 = vpop.f32.mrb[0].mxu0
  %v545 = vadd.f32 0.0, %v544
  %v546 = vpop.f32.mrb[0].mxu0
  %547 = vmatprep.mubr.bf16.mxu0 0
  %548 = vmatmul.mubr.bf16.gmra.mrb[0].mxu0 %v249
  %v549 = vpop.f32.mrb[0].mxu0
  %v550 = vadd.f32 0.0, %v549
  %v551 = vpop.f32.mrb[0].mxu0
  %v552 = vpop.f32.mrb[0].mxu0
  %v553 = vadd.f32 0.0, %v552
  %v554 = vpop.f32.mrb[0].mxu0
  %555 = vmatprep.mubr.bf16.mxu0 0
  %556 = vmatmul.mubr.bf16.gmra.mrb[0].mxu0 %v250
  %v557 = vpop.f32.mrb[0].mxu0
  %v558 = vadd.f32 0.0, %v557
  %v559 = vpop.f32.mrb[0].mxu0
  %v560 = vpop.f32.mrb[0].mxu0
  %v561 = vadd.f32 0.0, %v560
  %v562 = vpop.f32.mrb[0].mxu0
  %563 = vmatprep.mubr.bf16.mxu0 0
  %564 = vmatmul.mubr.bf16.gmra.mrb[0].mxu0 %v251
  %v565 = vpop.f32.mrb[0].mxu0
  %v566 = vadd.f32 0.0, %v565
  %v567 = vpop.f32.mrb[0].mxu0
  %v568 = vpop.f32.mrb[0].mxu0
  %v569 = vadd.f32 0.0, %v568
  %v570 = vpop.f32.mrb[0].mxu0
  %571 = vmatprep.mubr.bf16.mxu0 0
  %572 = vmatmul.mubr.bf16.gmra.mrb[0].mxu0 %v252
  %v573 = vpop.f32.mrb[0].mxu0
  %v574 = vadd.f32 0.0, %v573
  %v575 = vpop.f32.mrb[0].mxu0
  %v576 = vpop.f32.mrb[0].mxu0
  %v577 = vadd.f32 0.0, %v576
  %v578 = vpop.f32.mrb[0].mxu0
  %579 = vmatprep.mubr.bf16.mxu0 0
  %580 = vmatmul.mubr.bf16.gmra.mrb[0].mxu0 %v253
  %v581 = vpop.f32.mrb[0].mxu0
  %v582 = vadd.f32 0.0, %v581
  %v583 = vpop.f32.mrb[0].mxu0
  %v584 = vpop.f32.mrb[0].mxu0
  %v585 = vadd.f32 0.0, %v584
  %v586 = vpop.f32.mrb[0].mxu0
  %587 = vmatprep.mubr.bf16.mxu0 0
  %588 = vmatmul.mubr.bf16.gmra.mrb[0].mxu0 %v254
  %v589 = vpop.f32.mrb[0].mxu0
  %v590 = vadd.f32 0.0, %v589
  %v591 = vpop.f32.mrb[0].mxu0
  %v592 = vpop.f32.mrb[0].mxu0
  %v593 = vadd.f32 0.0, %v592
  %v594 = vpop.f32.mrb[0].mxu0
  %595 = vmatprep.mubr.bf16.mxu0 0
  %596 = vmatmul.mubr.bf16.gmra.mrb[0].mxu0 %v255
  %v597 = vpop.f32.mrb[0].mxu0
  %v598 = vadd.f32 0.0, %v597
  %v599 = vpop.f32.mrb[0].mxu0
  %v600 = vpop.f32.mrb[0].mxu0
  %v601 = vadd.f32 0.0, %v600
  %v602 = vpop.f32.mrb[0].mxu0
  %603 = vmatprep.mubr.bf16.mxu0 0
  %604 = vmatmul.mubr.bf16.gmra.mrb[0].mxu0 %v256
  %v605 = vpop.f32.mrb[0].mxu0
  %v606 = vadd.f32 0.0, %v605
  %v607 = vpop.f32.mrb[0].mxu0
  %v608 = vpop.f32.mrb[0].mxu0
  %v609 = vadd.f32 0.0, %v608
  %v610 = vpop.f32.mrb[0].mxu0
  %611 = vmatprep.mubr.bf16.mxu0 0
  %612 = vmatmul.mubr.bf16.gmra.mrb[0].mxu0 %v257
  %v613 = vpop.f32.mrb[0].mxu0
  %v614 = vadd.f32 0.0, %v613
  %v615 = vpop.f32.mrb[0].mxu0
  %v616 = vpop.f32.mrb[0].mxu0
  %v617 = vadd.f32 0.0, %v616
  %v618 = vpop.f32.mrb[0].mxu0
  %619 = vmatprep.mubr.bf16.mxu0 0
  %620 = vmatmul.mubr.bf16.gmra.mrb[0].mxu0 %v258
  %v621 = vpop.f32.mrb[0].mxu0
  %v622 = vadd.f32 0.0, %v621
  %v623 = vpop.f32.mrb[0].mxu0
  %v624 = vpop.f32.mrb[0].mxu0
  %v625 = vadd.f32 0.0, %v624
  %v626 = vpop.f32.mrb[0].mxu0
  %627 = vdwg.mxu0
  %v628 = vpack.c.bf16 %v377, %v374
  %v629 = vpack.c.bf16 %v385, %v382
  %v630 = vpack.c.bf16 %v393, %v390
  %v631 = vpack.c.bf16 %v401, %v398
  %v632 = vpack.c.bf16 %v409, %v406
  %v633 = vpack.c.bf16 %v417, %v414
  %v634 = vpack.c.bf16 %v425, %v422
  %v635 = vpack.c.bf16 %v433, %v430
  %v636 = vpack.c.bf16 %v441, %v438
  %v637 = vpack.c.bf16 %v449, %v446
  %v638 = vpack.c.bf16 %v457, %v454
  %v639 = vpack.c.bf16 %v465, %v462
  %v640 = vpack.c.bf16 %v473, %v470
  %v641 = vpack.c.bf16 %v481, %v478
  %v642 = vpack.c.bf16 %v489, %v486
  %v643 = vpack.c.bf16 %v497, %v494
  %v644 = vpack.c.bf16 %v505, %v502
  %v645 = vpack.c.bf16 %v513, %v510
  %v646 = vpack.c.bf16 %v521, %v518
  %v647 = vpack.c.bf16 %v529, %v526
  %v648 = vpack.c.bf16 %v537, %v534
  %v649 = vpack.c.bf16 %v545, %v542
  %v650 = vpack.c.bf16 %v553, %v550
  %v651 = vpack.c.bf16 %v561, %v558
  %v652 = vpack.c.bf16 %v569, %v566
  %v653 = vpack.c.bf16 %v577, %v574
  %v654 = vpack.c.bf16 %v585, %v582
  %v655 = vpack.c.bf16 %v593, %v590
  %v656 = vpack.c.bf16 %v601, %v598
  %v657 = vpack.c.bf16 %v609, %v606
  %v658 = vpack.c.bf16 %v617, %v614
  %v659 = vpack.c.bf16 %v625, %v622
  %v692 = vunpack.c.l.b16 %v628
  %v693 = vunpack.c.h.b16 %v628
  %v694 = vunpack.c.l.b16 %v629
  %v695 = vunpack.c.h.b16 %v629
  %v696 = vunpack.c.l.b16 %v630
  %v697 = vunpack.c.h.b16 %v630
  %v698 = vunpack.c.l.b16 %v631
  %v699 = vunpack.c.h.b16 %v631
  %v700 = vunpack.c.l.b16 %v632
  %v701 = vunpack.c.h.b16 %v632
  %v702 = vunpack.c.l.b16 %v633
  %v703 = vunpack.c.h.b16 %v633
  %v704 = vunpack.c.l.b16 %v634
  %v705 = vunpack.c.h.b16 %v634
  %v706 = vunpack.c.l.b16 %v635
  %v707 = vunpack.c.h.b16 %v635
  %v708 = vunpack.c.l.b16 %v636
  %v709 = vunpack.c.h.b16 %v636
  %v710 = vunpack.c.l.b16 %v637
  %v711 = vunpack.c.h.b16 %v637
  %v712 = vunpack.c.l.b16 %v638
  %v713 = vunpack.c.h.b16 %v638
  %v714 = vunpack.c.l.b16 %v639
  %v715 = vunpack.c.h.b16 %v639
  %v716 = vunpack.c.l.b16 %v640
  %v717 = vunpack.c.h.b16 %v640
  %v718 = vunpack.c.l.b16 %v641
  %v719 = vunpack.c.h.b16 %v641
  %v720 = vunpack.c.l.b16 %v642
  %v721 = vunpack.c.h.b16 %v642
  %v722 = vunpack.c.l.b16 %v643
  %v723 = vunpack.c.h.b16 %v643
  %v724 = vunpack.c.l.b16 %v644
  %v725 = vunpack.c.h.b16 %v644
  %v726 = vunpack.c.l.b16 %v645
  %v727 = vunpack.c.h.b16 %v645
  %v728 = vunpack.c.l.b16 %v646
  %v729 = vunpack.c.h.b16 %v646
  %v730 = vunpack.c.l.b16 %v647
  %v731 = vunpack.c.h.b16 %v647
  %v732 = vunpack.c.l.b16 %v648
  %v733 = vunpack.c.h.b16 %v648
  %v734 = vunpack.c.l.b16 %v649
  %v735 = vunpack.c.h.b16 %v649
  %v736 = vunpack.c.l.b16 %v650
  %v737 = vunpack.c.h.b16 %v650
  %v738 = vunpack.c.l.b16 %v651
  %v739 = vunpack.c.h.b16 %v651
  %v740 = vunpack.c.l.b16 %v652
  %v741 = vunpack.c.h.b16 %v652
  %v742 = vunpack.c.l.b16 %v653
  %v743 = vunpack.c.h.b16 %v653
  %v744 = vunpack.c.l.b16 %v654
  %v745 = vunpack.c.h.b16 %v654
  %v746 = vunpack.c.l.b16 %v655
  %v747 = vunpack.c.h.b16 %v655
  %v748 = vunpack.c.l.b16 %v656
  %v749 = vunpack.c.h.b16 %v656
  %v750 = vunpack.c.l.b16 %v657
  %v751 = vunpack.c.h.b16 %v657
  %v752 = vunpack.c.l.b16 %v658
  %v753 = vunpack.c.h.b16 %v658
  %v754 = vunpack.c.l.b16 %v659
  %v755 = vunpack.c.h.b16 %v659
  %v756 = vpack.c.b16 %v692, %v692
  %v757 = vpack.c.b16 %v693, %v693
  %v758 = vpack.c.b16 %v694, %v694
  %v759 = vpack.c.b16 %v695, %v695
  %v760 = vpack.c.b16 %v696, %v696
  %v761 = vpack.c.b16 %v697, %v697
  %v762 = vpack.c.b16 %v698, %v698
  %v763 = vpack.c.b16 %v699, %v699
  %v764 = vpack.c.b16 %v700, %v700
  %v765 = vpack.c.b16 %v701, %v701
  %v766 = vpack.c.b16 %v702, %v702
  %v767 = vpack.c.b16 %v703, %v703
  %v768 = vpack.c.b16 %v704, %v704
  %v769 = vpack.c.b16 %v705, %v705
  %v770 = vpack.c.b16 %v706, %v706
  %v771 = vpack.c.b16 %v707, %v707
  %v772 = vpack.c.b16 %v708, %v708
  %v773 = vpack.c.b16 %v709, %v709
  %v774 = vpack.c.b16 %v710, %v710
  %v775 = vpack.c.b16 %v711, %v711
  %v776 = vpack.c.b16 %v712, %v712
  %v777 = vpack.c.b16 %v713, %v713
  %v778 = vpack.c.b16 %v714, %v714
  %v779 = vpack.c.b16 %v715, %v715
  %v780 = vpack.c.b16 %v716, %v716
  %v781 = vpack.c.b16 %v717, %v717
  %v782 = vpack.c.b16 %v718, %v718
  %v783 = vpack.c.b16 %v719, %v719
  %v784 = vpack.c.b16 %v720, %v720
  %v785 = vpack.c.b16 %v721, %v721
  %v786 = vpack.c.b16 %v722, %v722
  %v787 = vpack.c.b16 %v723, %v723
  %v788 = vpack.c.b16 %v724, %v724
  %v789 = vpack.c.b16 %v725, %v725
  %v790 = vpack.c.b16 %v726, %v726
  %v791 = vpack.c.b16 %v727, %v727
  %v792 = vpack.c.b16 %v728, %v728
  %v793 = vpack.c.b16 %v729, %v729
  %v794 = vpack.c.b16 %v730, %v730
  %v795 = vpack.c.b16 %v731, %v731
  %v796 = vpack.c.b16 %v732, %v732
  %v797 = vpack.c.b16 %v733, %v733
  %v798 = vpack.c.b16 %v734, %v734
  %v799 = vpack.c.b16 %v735, %v735
  %v800 = vpack.c.b16 %v736, %v736
  %v801 = vpack.c.b16 %v737, %v737
  %v802 = vpack.c.b16 %v738, %v738
  %v803 = vpack.c.b16 %v739, %v739
  %v804 = vpack.c.b16 %v740, %v740
  %v805 = vpack.c.b16 %v741, %v741
  %v806 = vpack.c.b16 %v742, %v742
  %v807 = vpack.c.b16 %v743, %v743
  %v808 = vpack.c.b16 %v744, %v744
  %v809 = vpack.c.b16 %v745, %v745
  %v810 = vpack.c.b16 %v746, %v746
  %v811 = vpack.c.b16 %v747, %v747
  %v812 = vpack.c.b16 %v748, %v748
  %v813 = vpack.c.b16 %v749, %v749
  %v814 = vpack.c.b16 %v750, %v750
  %v815 = vpack.c.b16 %v751, %v751
  %v816 = vpack.c.b16 %v752, %v752
  %v817 = vpack.c.b16 %v753, %v753
  %v818 = vpack.c.b16 %v754, %v754
  %v819 = vpack.c.b16 %v755, %v755
  %884 = vst [vmem:[%s2] sm:$0xf] %v756
  %885 = vst [vmem:[%s2 + $0x4] sm:$0xf] %v757
  %886 = vst [vmem:[%s2 + $0x8] sm:$0xf] %v758
  %887 = vst [vmem:[%s2 + $0xc] sm:$0xf] %v759
  %888 = vst [vmem:[%s2 + $0x10] sm:$0xf] %v760
  %889 = vst [vmem:[%s2 + $0x14] sm:$0xf] %v761
  %890 = vst [vmem:[%s2 + $0x18] sm:$0xf] %v762
  %891 = vst [vmem:[%s2 + $0x1c] sm:$0xf] %v763
  %892 = vst [vmem:[%s2 + $0x20] sm:$0xf] %v764
  %893 = vst [vmem:[%s2 + $0x24] sm:$0xf] %v765
  %894 = vst [vmem:[%s2 + $0x28] sm:$0xf] %v766
  %895 = vst [vmem:[%s2 + $0x2c] sm:$0xf] %v767
  %896 = vst [vmem:[%s2 + $0x30] sm:$0xf] %v768
  %897 = vst [vmem:[%s2 + $0x34] sm:$0xf] %v769
  %898 = vst [vmem:[%s2 + $0x38] sm:$0xf] %v770
  %899 = vst [vmem:[%s2 + $0x3c] sm:$0xf] %v771
  %900 = vst [vmem:[%s2 + $0x40] sm:$0xf] %v772
  %901 = vst [vmem:[%s2 + $0x44] sm:$0xf] %v773
  %902 = vst [vmem:[%s2 + $0x48] sm:$0xf] %v774
  %903 = vst [vmem:[%s2 + $0x4c] sm:$0xf] %v775
  %904 = vst [vmem:[%s2 + $0x50] sm:$0xf] %v776
  %905 = vst [vmem:[%s2 + $0x54] sm:$0xf] %v777
  %906 = vst [vmem:[%s2 + $0x58] sm:$0xf] %v778
  %907 = vst [vmem:[%s2 + $0x5c] sm:$0xf] %v779
  %908 = vst [vmem:[%s2 + $0x60] sm:$0xf] %v780
  %909 = vst [vmem:[%s2 + $0x64] sm:$0xf] %v781
  %910 = vst [vmem:[%s2 + $0x68] sm:$0xf] %v782
  %911 = vst [vmem:[%s2 + $0x6c] sm:$0xf] %v783
  %912 = vst [vmem:[%s2 + $0x70] sm:$0xf] %v784
  %913 = vst [vmem:[%s2 + $0x74] sm:$0xf] %v785
  %914 = vst [vmem:[%s2 + $0x78] sm:$0xf] %v786
  %915 = vst [vmem:[%s2 + $0x7c] sm:$0xf] %v787
  %916 = vst [vmem:[%s2 + $0x80] sm:$0xf] %v788
  %917 = vst [vmem:[%s2 + $0x84] sm:$0xf] %v789
  %918 = vst [vmem:[%s2 + $0x88] sm:$0xf] %v790
  %919 = vst [vmem:[%s2 + $0x8c] sm:$0xf] %v791
  %920 = vst [vmem:[%s2 + $0x90] sm:$0xf] %v792
  %921 = vst [vmem:[%s2 + $0x94] sm:$0xf] %v793
  %922 = vst [vmem:[%s2 + $0x98] sm:$0xf] %v794
  %923 = vst [vmem:[%s2 + $0x9c] sm:$0xf] %v795
  %924 = vst [vmem:[%s2 + $0xa0] sm:$0xf] %v796
  %925 = vst [vmem:[%s2 + $0xa4] sm:$0xf] %v797
  %926 = vst [vmem:[%s2 + $0xa8] sm:$0xf] %v798
  %927 = vst [vmem:[%s2 + $0xac] sm:$0xf] %v799
  %928 = vst [vmem:[%s2 + $0xb0] sm:$0xf] %v800
  %929 = vst [vmem:[%s2 + $0xb4] sm:$0xf] %v801
  %930 = vst [vmem:[%s2 + $0xb8] sm:$0xf] %v802
  %931 = vst [vmem:[%s2 + $0xbc] sm:$0xf] %v803
  %932 = vst [vmem:[%s2 + $0xc0] sm:$0xf] %v804
  %933 = vst [vmem:[%s2 + $0xc4] sm:$0xf] %v805
  %934 = vst [vmem:[%s2 + $0xc8] sm:$0xf] %v806
  %935 = vst [vmem:[%s2 + $0xcc] sm:$0xf] %v807
  %936 = vst [vmem:[%s2 + $0xd0] sm:$0xf] %v808
  %937 = vst [vmem:[%s2 + $0xd4] sm:$0xf] %v809
  %938 = vst [vmem:[%s2 + $0xd8] sm:$0xf] %v810
  %939 = vst [vmem:[%s2 + $0xdc] sm:$0xf] %v811
  %940 = vst [vmem:[%s2 + $0xe0] sm:$0xf] %v812
  %941 = vst [vmem:[%s2 + $0xe4] sm:$0xf] %v813
  %942 = vst [vmem:[%s2 + $0xe8] sm:$0xf] %v814
  %943 = vst [vmem:[%s2 + $0xec] sm:$0xf] %v815
  %944 = vst [vmem:[%s2 + $0xf0] sm:$0xf] %v816
  %945 = vst [vmem:[%s2 + $0xf4] sm:$0xf] %v817
  %946 = vst [vmem:[%s2 + $0xf8] sm:$0xf] %v818
  %947 = vst [vmem:[%s2 + $0xfc] sm:$0xf] %v819
  %v948 = vld [vmem:[%s3] sm:$0x1]
  %v949 = vadd.f32 %v374, %v377
  %v950 = vadd.f32 %v949, %v382
  %v951 = vadd.f32 %v950, %v385
  %v952 = vadd.f32 %v951, %v390
  %v953 = vadd.f32 %v952, %v393
  %v954 = vadd.f32 %v953, %v398
  %v955 = vadd.f32 %v954, %v401
  %v956 = vadd.f32 %v955, %v406
  %v957 = vadd.f32 %v956, %v409
  %v958 = vadd.f32 %v957, %v414
  %v959 = vadd.f32 %v958, %v417
  %v960 = vadd.f32 %v959, %v422
  %v961 = vadd.f32 %v960, %v425
  %v962 = vadd.f32 %v961, %v430
  %v963 = vadd.f32 %v962, %v433
  %v964 = vadd.f32 %v963, %v438
  %v965 = vadd.f32 %v964, %v441
  %v966 = vadd.f32 %v965, %v446
  %v967 = vadd.f32 %v966, %v449
  %v968 = vadd.f32 %v967, %v454
  %v969 = vadd.f32 %v968, %v457
  %v970 = vadd.f32 %v969, %v462
  %v971 = vadd.f32 %v970, %v465
  %v972 = vadd.f32 %v971, %v470
  %v973 = vadd.f32 %v972, %v473
  %v974 = vadd.f32 %v973, %v478
  %v975 = vadd.f32 %v974, %v481
  %v976 = vadd.f32 %v975, %v486
  %v977 = vadd.f32 %v976, %v489
  %v978 = vadd.f32 %v977, %v494
  %v979 = vadd.f32 %v978, %v497
  %v980 = vadd.f32 %v979, %v502
  %v981 = vadd.f32 %v980, %v505
  %v982 = vadd.f32 %v981, %v510
  %v983 = vadd.f32 %v982, %v513
  %v984 = vadd.f32 %v983, %v518
  %v985 = vadd.f32 %v984, %v521
  %v986 = vadd.f32 %v985, %v526
  %v987 = vadd.f32 %v986, %v529
  %v988 = vadd.f32 %v987, %v534
  %v989 = vadd.f32 %v988, %v537
  %v990 = vadd.f32 %v989, %v542
  %v991 = vadd.f32 %v990, %v545
  %v992 = vadd.f32 %v991, %v550
  %v993 = vadd.f32 %v992, %v553
  %v994 = vadd.f32 %v993, %v558
  %v995 = vadd.f32 %v994, %v561
  %v996 = vadd.f32 %v995, %v566
  %v997 = vadd.f32 %v996, %v569
  %v998 = vadd.f32 %v997, %v574
  %v999 = vadd.f32 %v998, %v577
  %v1000 = vadd.f32 %v999, %v582
  %v1001 = vadd.f32 %v1000, %v585
  %v1002 = vadd.f32 %v1001, %v590
  %v1003 = vadd.f32 %v1002, %v593
  %v1004 = vadd.f32 %v1003, %v598
  %v1005 = vadd.f32 %v1004, %v601
  %v1006 = vadd.f32 %v1005, %v606
  %v1007 = vadd.f32 %v1006, %v609
  %v1008 = vadd.f32 %v1007, %v614
  %v1009 = vadd.f32 %v1008, %v617
  %v1010 = vadd.f32 %v1009, %v622
  %v1011 = vadd.f32 %v1010, %v625
  %v1012 = vrot.slane %v1011, 4
  %v1013 = vadd.f32 %v1011, %v1012
  %v1014 = vrot.slane %v1013, 2
  %v1015 = vadd.f32 %v1013, %v1014
  %v1016 = vrot.slane %v1015, 1
  %v1017 = vadd.f32 %v1015, %v1016
  %v1018 = vadd.f32 %v948, %v1017
  %1019 = vst [vmem:[%s3] sm:$0x1] %v1018
  %v1020 = vld [vmem:[%s3 + $0x1] sm:$0x1]
  %v1021 = vmul.f32 %v374, %v374
  %v1022 = vmul.f32 %v377, %v377
  %v1023 = vmul.f32 %v382, %v382
  %v1024 = vmul.f32 %v385, %v385
  %v1025 = vmul.f32 %v390, %v390
  %v1026 = vmul.f32 %v393, %v393
  %v1027 = vmul.f32 %v398, %v398
  %v1028 = vmul.f32 %v401, %v401
  %v1029 = vmul.f32 %v406, %v406
  %v1030 = vmul.f32 %v409, %v409
  %v1031 = vmul.f32 %v414, %v414
  %v1032 = vmul.f32 %v417, %v417
  %v1033 = vmul.f32 %v422, %v422
  %v1034 = vmul.f32 %v425, %v425
  %v1035 = vmul.f32 %v430, %v430
  %v1036 = vmul.f32 %v433, %v433
  %v1037 = vmul.f32 %v438, %v438
  %v1038 = vmul.f32 %v441, %v441
  %v1039 = vmul.f32 %v446, %v446
  %v1040 = vmul.f32 %v449, %v449
  %v1041 = vmul.f32 %v454, %v454
  %v1042 = vmul.f32 %v457, %v457
  %v1043 = vmul.f32 %v462, %v462
  %v1044 = vmul.f32 %v465, %v465
  %v1045 = vmul.f32 %v470, %v470
  %v1046 = vmul.f32 %v473, %v473
  %v1047 = vmul.f32 %v478, %v478
  %v1048 = vmul.f32 %v481, %v481
  %v1049 = vmul.f32 %v486, %v486
  %v1050 = vmul.f32 %v489, %v489
  %v1051 = vmul.f32 %v494, %v494
  %v1052 = vmul.f32 %v497, %v497
  %v1053 = vmul.f32 %v502, %v502
  %v1054 = vmul.f32 %v505, %v505
  %v1055 = vmul.f32 %v510, %v510
  %v1056 = vmul.f32 %v513, %v513
  %v1057 = vmul.f32 %v518, %v518
  %v1058 = vmul.f32 %v521, %v521
  %v1059 = vmul.f32 %v526, %v526
  %v1060 = vmul.f32 %v529, %v529
  %v1061 = vmul.f32 %v534, %v534
  %v1062 = vmul.f32 %v537, %v537
  %v1063 = vmul.f32 %v542, %v542
  %v1064 = vmul.f32 %v545, %v545
  %v1065 = vmul.f32 %v550, %v550
  %v1066 = vmul.f32 %v553, %v553
  %v1067 = vmul.f32 %v558, %v558
  %v1068 = vmul.f32 %v561, %v561
  %v1069 = vmul.f32 %v566, %v566
  %v1070 = vmul.f32 %v569, %v569
  %v1071 = vmul.f32 %v574, %v574
  %v1072 = vmul.f32 %v577, %v577
  %v1073 = vmul.f32 %v582, %v582
  %v1074 = vmul.f32 %v585, %v585
  %v1075 = vmul.f32 %v590, %v590
  %v1076 = vmul.f32 %v593, %v593
  %v1077 = vmul.f32 %v598, %v598
  %v1078 = vmul.f32 %v601, %v601
  %v1079 = vmul.f32 %v606, %v606
  %v1080 = vmul.f32 %v609, %v609
  %v1081 = vmul.f32 %v614, %v614
  %v1082 = vmul.f32 %v617, %v617
  %v1083 = vmul.f32 %v622, %v622
  %v1084 = vmul.f32 %v625, %v625
  %v1085 = vadd.f32 %v1021, %v1022
  %v1086 = vadd.f32 %v1085, %v1023
  %v1087 = vadd.f32 %v1086, %v1024
  %v1088 = vadd.f32 %v1087, %v1025
  %v1089 = vadd.f32 %v1088, %v1026
  %v1090 = vadd.f32 %v1089, %v1027
  %v1091 = vadd.f32 %v1090, %v1028
  %v1092 = vadd.f32 %v1091, %v1029
  %v1093 = vadd.f32 %v1092, %v1030
  %v1094 = vadd.f32 %v1093, %v1031
  %v1095 = vadd.f32 %v1094, %v1032
  %v1096 = vadd.f32 %v1095, %v1033
  %v1097 = vadd.f32 %v1096, %v1034
  %v1098 = vadd.f32 %v1097, %v1035
  %v1099 = vadd.f32 %v1098, %v1036
  %v1100 = vadd.f32 %v1099, %v1037
  %v1101 = vadd.f32 %v1100, %v1038
  %v1102 = vadd.f32 %v1101, %v1039
  %v1103 = vadd.f32 %v1102, %v1040
  %v1104 = vadd.f32 %v1103, %v1041
  %v1105 = vadd.f32 %v1104, %v1042
  %v1106 = vadd.f32 %v1105, %v1043
  %v1107 = vadd.f32 %v1106, %v1044
  %v1108 = vadd.f32 %v1107, %v1045
  %v1109 = vadd.f32 %v1108, %v1046
  %v1110 = vadd.f32 %v1109, %v1047
  %v1111 = vadd.f32 %v1110, %v1048
  %v1112 = vadd.f32 %v1111, %v1049
  %v1113 = vadd.f32 %v1112, %v1050
  %v1114 = vadd.f32 %v1113, %v1051
  %v1115 = vadd.f32 %v1114, %v1052
  %v1116 = vadd.f32 %v1115, %v1053
  %v1117 = vadd.f32 %v1116, %v1054
  %v1118 = vadd.f32 %v1117, %v1055
  %v1119 = vadd.f32 %v1118, %v1056
  %v1120 = vadd.f32 %v1119, %v1057
  %v1121 = vadd.f32 %v1120, %v1058
  %v1122 = vadd.f32 %v1121, %v1059
  %v1123 = vadd.f32 %v1122, %v1060
  %v1124 = vadd.f32 %v1123, %v1061
  %v1125 = vadd.f32 %v1124, %v1062
  %v1126 = vadd.f32 %v1125, %v1063
  %v1127 = vadd.f32 %v1126, %v1064
  %v1128 = vadd.f32 %v1127, %v1065
  %v1129 = vadd.f32 %v1128, %v1066
  %v1130 = vadd.f32 %v1129, %v1067
  %v1131 = vadd.f32 %v1130, %v1068
  %v1132 = vadd.f32 %v1131, %v1069
  %v1133 = vadd.f32 %v1132, %v1070
  %v1134 = vadd.f32 %v1133, %v1071
  %v1135 = vadd.f32 %v1134, %v1072
  %v1136 = vadd.f32 %v1135, %v1073
  %v1137 = vadd.f32 %v1136, %v1074
  %v1138 = vadd.f32 %v1137, %v1075
  %v1139 = vadd.f32 %v1138, %v1076
  %v1140 = vadd.f32 %v1139, %v1077
  %v1141 = vadd.f32 %v1140, %v1078
  %v1142 = vadd.f32 %v1141, %v1079
  %v1143 = vadd.f32 %v1142, %v1080
  %v1144 = vadd.f32 %v1143, %v1081
  %v1145 = vadd.f32 %v1144, %v1082
  %v1146 = vadd.f32 %v1145, %v1083
  %v1147 = vadd.f32 %v1146, %v1084
  %v1148 = vrot.slane %v1147, 4
  %v1149 = vadd.f32 %v1147, %v1148
  %v1150 = vrot.slane %v1149, 2
  %v1151 = vadd.f32 %v1149, %v1150
  %v1152 = vrot.slane %v1151, 1
  %v1153 = vadd.f32 %v1151, %v1152
  %v1154 = vadd.f32 %v1020, %v1153
  %1155 = vst [vmem:[%s3 + $0x1] sm:$0x1] %v1154
  // Predicated region
  $region14: #{_lambda_.5} parent=0 // pred_check
    _
  $region15: #{_lambda_.5} parent=0 // pred_check_branch
    %1157 = sbr.rel (0) target = $region17
  $region16: #{_lambda_.5} parent=0 // pred_region
    _
  $region17: #{_lambda_.5} parent=0 // pred_fallthru
    _
  // Predicated region
  $region18: #{_lambda_.5} parent=0 // pred_check
    _
  $region19: #{_lambda_.5} parent=0 // pred_check_branch
    %1159 = sbr.rel (0) target = $region21
  $region20: #{_lambda_.5} parent=0 // pred_region
    _
  $region21: #{_lambda_.5} parent=0 // pred_fallthru
    _
  // Predicated region
  $region22: #{_lambda_.5} parent=0 // pred_check
    _
  $region23: #{_lambda_.5} parent=0 // pred_check_branch
    %1161 = sbr.rel (0) target = $region25
  $region24: #{_lambda_.5} parent=0 // pred_region
    _
  $region25: #{_lambda_.5} parent=0 // pred_fallthru
    _
  // Predicated region
  $region26: #{_lambda_.5} parent=0 // pred_check
    _
  $region27: #{_lambda_.5} parent=0 // pred_check_branch
    %1163 = sbr.rel (0) target = $region29
  $region28: #{_lambda_.5} parent=0 // pred_region
    _
  $region29: #{_lambda_.5} parent=0 // pred_fallthru
    _

// kernel: _lambda_.8
$region0: #{_lambda_.8}
  #allocation0 [shape = 'u32[]', space=smem, size = 0x4, offset = 0x4, fixed_abs, tag = 'smem constant byte address 0x4 - core index']
  #allocation1 [shape = 'u32[144,128]{1,0:T(1,128)}', space=vmem, size = 0x12000, scoped, tag = 'internal scratch']
  %s0 = inlined_call_operand.vmem [shape: bf16[512,128], index: 0, kind: input, shape index: {}]
  %s1 = inlined_call_operand.vmem [shape: f32[1,128], index: 1, kind: input, shape index: {}]
  %s2 = inlined_call_operand.vmem [shape: f32[1,128], index: 2, kind: input, shape index: {}]
  %s3 = inlined_call_operand.vmem [shape: bf16[128,128], index: 3, kind: input, shape index: {}]
  %s4 = inlined_call_operand.vmem [shape: bf16[512,128], index: 4, kind: input, shape index: {}]
  %s5 = inlined_call_operand.vmem [shape: bf16[128,128], index: 5, kind: input, shape index: {}]
  %s6 = inlined_call_operand.vmem [shape: bf16[512,128], index: 6, kind: output, shape index: {0}]
  %s7 = inlined_call_operand.vmem [shape: bf16[512,128], index: 7, kind: output, shape index: {1}]
  %s8 = inlined_call_operand.vmem [shape: f32[8,128], index: 8, kind: output, shape index: {2}]
  %s9 = inlined_call_operand.vmem [shape: f32[8,128], index: 9, kind: output, shape index: {3}]
  %10 = xla_tuple %s6, %s7, %s8, %s9
  %s11 = sld [smem:[#allocation0]]
  $region62: #{_lambda_.8} parent=0
    _
  %s13 = ssub.s32 1, %s11
  %s14 = scalar_select 0, %s13, %s11
  // Predicated region
  $region2: #{_lambda_.8} parent=0 // pred_check
    _
  $region3: #{_lambda_.8} parent=0 // pred_check_branch
    %16 = sbr.rel (0) target = $region5
  $region4: #{_lambda_.8} parent=0 // pred_region
    _
  $region5: #{_lambda_.8} parent=0 // pred_fallthru
    _
  // Predicated region
  $region6: #{_lambda_.8} parent=0 // pred_check
    _
  $region7: #{_lambda_.8} parent=0 // pred_check_branch
    %18 = sbr.rel (0) target = $region9
  $region8: #{_lambda_.8} parent=0 // pred_region
    _
  $region9: #{_lambda_.8} parent=0 // pred_fallthru
    _
  // Predicated region
  $region10: #{_lambda_.8} parent=0 // pred_check
    _
  $region11: #{_lambda_.8} parent=0 // pred_check_branch
    %20 = sbr.rel (0) target = $region13
  $region12: #{_lambda_.8} parent=0 // pred_region
    _
  $region13: #{_lambda_.8} parent=0 // pred_fallthru
    _
  // Predicated region
  $region14: #{_lambda_.8} parent=0 // pred_check
    _
  $region15: #{_lambda_.8} parent=0 // pred_check_branch
    %22 = sbr.rel (0) target = $region17
  $region16: #{_lambda_.8} parent=0 // pred_region
    _
  $region17: #{_lambda_.8} parent=0 // pred_fallthru
    _
  // Predicated region
  $region18: #{_lambda_.8} parent=0 // pred_check
    _
  $region19: #{_lambda_.8} parent=0 // pred_check_branch
    %24 = sbr.rel (0) target = $region21
  $region20: #{_lambda_.8} parent=0 // pred_region
    _
  $region21: #{_lambda_.8} parent=0 // pred_fallthru
    _
  // Predicated region
  $region22: #{_lambda_.8} parent=0 // pred_check
    _
  $region23: #{_lambda_.8} parent=0 // pred_check_branch
    %26 = sbr.rel (0) target = $region25
  $region24: #{_lambda_.8} parent=0 // pred_region
    _
  $region25: #{_lambda_.8} parent=0 // pred_fallthru
    _
  %p28 = scmp.eq.s32.totalorder 0, 0
  // Predicated region
  $region26: #{_lambda_.8} parent=0 // pred_check
    %p29 = pneg %p28
  $region27: #{_lambda_.8} parent=0 // pred_check_branch
    %31 = sbr.rel (%p29) target = $region29
  $region28: #{_lambda_.8} parent=0 // pred_region
    %32 = vst [vmem:[%s8] sm:$0xff] 0.0
    %33 = vst [vmem:[%s9] sm:$0xff] 0.0
  $region29: #{_lambda_.8} parent=0 // pred_fallthru
    _
  %v34 = vld [vmem:[%s0] sm:$0xf]
  %v35 = vld [vmem:[%s0 + $0x4] sm:$0xf]
  %v36 = vld [vmem:[%s0 + $0x8] sm:$0xf]
  %v37 = vld [vmem:[%s0 + $0xc] sm:$0xf]
  %v38 = vld [vmem:[%s0 + $0x10] sm:$0xf]
  %v39 = vld [vmem:[%s0 + $0x14] sm:$0xf]
  %v40 = vld [vmem:[%s0 + $0x18] sm:$0xf]
  %v41 = vld [vmem:[%s0 + $0x1c] sm:$0xf]
  %v42 = vld [vmem:[%s0 + $0x20] sm:$0xf]
  %v43 = vld [vmem:[%s0 + $0x24] sm:$0xf]
  %v44 = vld [vmem:[%s0 + $0x28] sm:$0xf]
  %v45 = vld [vmem:[%s0 + $0x2c] sm:$0xf]
  %v46 = vld [vmem:[%s0 + $0x30] sm:$0xf]
  %v47 = vld [vmem:[%s0 + $0x34] sm:$0xf]
  %v48 = vld [vmem:[%s0 + $0x38] sm:$0xf]
  %v49 = vld [vmem:[%s0 + $0x3c] sm:$0xf]
  %v50 = vld [vmem:[%s0 + $0x40] sm:$0xf]
  %v51 = vld [vmem:[%s0 + $0x44] sm:$0xf]
  %v52 = vld [vmem:[%s0 + $0x48] sm:$0xf]
  %v53 = vld [vmem:[%s0 + $0x4c] sm:$0xf]
  %v54 = vld [vmem:[%s0 + $0x50] sm:$0xf]
  %v55 = vld [vmem:[%s0 + $0x54] sm:$0xf]
  %v56 = vld [vmem:[%s0 + $0x58] sm:$0xf]
  %v57 = vld [vmem:[%s0 + $0x5c] sm:$0xf]
  %v58 = vld [vmem:[%s0 + $0x60] sm:$0xf]
  %v59 = vld [vmem:[%s0 + $0x64] sm:$0xf]
  %v60 = vld [vmem:[%s0 + $0x68] sm:$0xf]
  %v61 = vld [vmem:[%s0 + $0x6c] sm:$0xf]
  %v62 = vld [vmem:[%s0 + $0x70] sm:$0xf]
  %v63 = vld [vmem:[%s0 + $0x74] sm:$0xf]
  %v64 = vld [vmem:[%s0 + $0x78] sm:$0xf]
  %v65 = vld [vmem:[%s0 + $0x7c] sm:$0xf]
  %v66 = vld [vmem:[%s0 + $0x80] sm:$0xf]
  %v67 = vld [vmem:[%s0 + $0x84] sm:$0xf]
  %v68 = vld [vmem:[%s0 + $0x88] sm:$0xf]
  %v69 = vld [vmem:[%s0 + $0x8c] sm:$0xf]
  %v70 = vld [vmem:[%s0 + $0x90] sm:$0xf]
  %v71 = vld [vmem:[%s0 + $0x94] sm:$0xf]
  %v72 = vld [vmem:[%s0 + $0x98] sm:$0xf]
  %v73 = vld [vmem:[%s0 + $0x9c] sm:$0xf]
  %v74 = vld [vmem:[%s0 + $0xa0] sm:$0xf]
  %v75 = vld [vmem:[%s0 + $0xa4] sm:$0xf]
  %v76 = vld [vmem:[%s0 + $0xa8] sm:$0xf]
  %v77 = vld [vmem:[%s0 + $0xac] sm:$0xf]
  %v78 = vld [vmem:[%s0 + $0xb0] sm:$0xf]
  %v79 = vld [vmem:[%s0 + $0xb4] sm:$0xf]
  %v80 = vld [vmem:[%s0 + $0xb8] sm:$0xf]
  %v81 = vld [vmem:[%s0 + $0xbc] sm:$0xf]
  %v82 = vld [vmem:[%s0 + $0xc0] sm:$0xf]
  %v83 = vld [vmem:[%s0 + $0xc4] sm:$0xf]
  %v84 = vld [vmem:[%s0 + $0xc8] sm:$0xf]
  %v85 = vld [vmem:[%s0 + $0xcc] sm:$0xf]
  %v86 = vld [vmem:[%s0 + $0xd0] sm:$0xf]
  %v87 = vld [vmem:[%s0 + $0xd4] sm:$0xf]
  %v88 = vld [vmem:[%s0 + $0xd8] sm:$0xf]
  %v89 = vld [vmem:[%s0 + $0xdc] sm:$0xf]
  %v90 = vld [vmem:[%s0 + $0xe0] sm:$0xf]
  %v91 = vld [vmem:[%s0 + $0xe4] sm:$0xf]
  %v92 = vld [vmem:[%s0 + $0xe8] sm:$0xf]
  %v93 = vld [vmem:[%s0 + $0xec] sm:$0xf]
  %v94 = vld [vmem:[%s0 + $0xf0] sm:$0xf]
  %v95 = vld [vmem:[%s0 + $0xf4] sm:$0xf]
  %v96 = vld [vmem:[%s0 + $0xf8] sm:$0xf]
  %v97 = vld [vmem:[%s0 + $0xfc] sm:$0xf]
  %v98 = vunpack.c.l.bf16 %v34
  %v99 = vunpack.c.l.bf16 %v35
  %v100 = vunpack.c.l.bf16 %v36
  %v101 = vunpack.c.l.bf16 %v37
  %v102 = vunpack.c.l.bf16 %v38
  %v103 = vunpack.c.l.bf16 %v39
  %v104 = vunpack.c.l.bf16 %v40
  %v105 = vunpack.c.l.bf16 %v41
  %v106 = vunpack.c.l.bf16 %v42
  %v107 = vunpack.c.l.bf16 %v43
  %v108 = vunpack.c.l.bf16 %v44
  %v109 = vunpack.c.l.bf16 %v45
  %v110 = vunpack.c.l.bf16 %v46
  %v111 = vunpack.c.l.bf16 %v47
  %v112 = vunpack.c.l.bf16 %v48
  %v113 = vunpack.c.l.bf16 %v49
  %v114 = vunpack.c.l.bf16 %v50
  %v115 = vunpack.c.l.bf16 %v51
  %v116 = vunpack.c.l.bf16 %v52
  %v117 = vunpack.c.l.bf16 %v53
  %v118 = vunpack.c.l.bf16 %v54
  %v119 = vunpack.c.l.bf16 %v55
  %v120 = vunpack.c.l.bf16 %v56
  %v121 = vunpack.c.l.bf16 %v57
  %v122 = vunpack.c.l.bf16 %v58
  %v123 = vunpack.c.l.bf16 %v59
  %v124 = vunpack.c.l.bf16 %v60
  %v125 = vunpack.c.l.bf16 %v61
  %v126 = vunpack.c.l.bf16 %v62
  %v127 = vunpack.c.l.bf16 %v63
  %v128 = vunpack.c.l.bf16 %v64
  %v129 = vunpack.c.l.bf16 %v65
  %v130 = vunpack.c.l.bf16 %v66
  %v131 = vunpack.c.l.bf16 %v67
  %v132 = vunpack.c.l.bf16 %v68
  %v133 = vunpack.c.l.bf16 %v69
  %v134 = vunpack.c.l.bf16 %v70
  %v135 = vunpack.c.l.bf16 %v71
  %v136 = vunpack.c.l.bf16 %v72
  %v137 = vunpack.c.l.bf16 %v73
  %v138 = vunpack.c.l.bf16 %v74
  %v139 = vunpack.c.l.bf16 %v75
  %v140 = vunpack.c.l.bf16 %v76
  %v141 = vunpack.c.l.bf16 %v77
  %v142 = vunpack.c.l.bf16 %v78
  %v143 = vunpack.c.l.bf16 %v79
  %v144 = vunpack.c.l.bf16 %v80
  %v145 = vunpack.c.l.bf16 %v81
  %v146 = vunpack.c.l.bf16 %v82
  %v147 = vunpack.c.l.bf16 %v83
  %v148 = vunpack.c.l.bf16 %v84
  %v149 = vunpack.c.l.bf16 %v85
  %v150 = vunpack.c.l.bf16 %v86
  %v151 = vunpack.c.l.bf16 %v87
  %v152 = vunpack.c.l.bf16 %v88
  %v153 = vunpack.c.l.bf16 %v89
  %v154 = vunpack.c.l.bf16 %v90
  %v155 = vunpack.c.l.bf16 %v91
  %v156 = vunpack.c.l.bf16 %v92
  %v157 = vunpack.c.l.bf16 %v93
  %v158 = vunpack.c.l.bf16 %v94
  %v159 = vunpack.c.l.bf16 %v95
  %v160 = vunpack.c.l.bf16 %v96
  %v161 = vunpack.c.l.bf16 %v97
  %v162 = vld [vmem:[%s1] sm:$0x1]
  %v164 = vlaneseq
  %v165 = vshrl.u32 %v164, 7
  %v166 = vsub.s32 0, %v165
  %v167 = vrot.slane %v162, %v166
  %v169 = vmul.f32 %v98, %v167
  %v170 = vmul.f32 %v99, %v167
  %v171 = vmul.f32 %v100, %v167
  %v172 = vmul.f32 %v101, %v167
  %v173 = vmul.f32 %v102, %v167
  %v174 = vmul.f32 %v103, %v167
  %v175 = vmul.f32 %v104, %v167
  %v176 = vmul.f32 %v105, %v167
  %v177 = vmul.f32 %v106, %v167
  %v178 = vmul.f32 %v107, %v167
  %v179 = vmul.f32 %v108, %v167
  %v180 = vmul.f32 %v109, %v167
  %v181 = vmul.f32 %v110, %v167
  %v182 = vmul.f32 %v111, %v167
  %v183 = vmul.f32 %v112, %v167
  %v184 = vmul.f32 %v113, %v167
  %v185 = vmul.f32 %v114, %v167
  %v186 = vmul.f32 %v115, %v167
  %v187 = vmul.f32 %v116, %v167
  %v188 = vmul.f32 %v117, %v167
  %v189 = vmul.f32 %v118, %v167
  %v190 = vmul.f32 %v119, %v167
  %v191 = vmul.f32 %v120, %v167
  %v192 = vmul.f32 %v121, %v167
  %v193 = vmul.f32 %v122, %v167
  %v194 = vmul.f32 %v123, %v167
  %v195 = vmul.f32 %v124, %v167
  %v196 = vmul.f32 %v125, %v167
  %v197 = vmul.f32 %v126, %v167
  %v198 = vmul.f32 %v127, %v167
  %v199 = vmul.f32 %v128, %v167
  %v200 = vmul.f32 %v129, %v167
  %v201 = vmul.f32 %v130, %v167
  %v202 = vmul.f32 %v131, %v167
  %v203 = vmul.f32 %v132, %v167
  %v204 = vmul.f32 %v133, %v167
  %v205 = vmul.f32 %v134, %v167
  %v206 = vmul.f32 %v135, %v167
  %v207 = vmul.f32 %v136, %v167
  %v208 = vmul.f32 %v137, %v167
  %v209 = vmul.f32 %v138, %v167
  %v210 = vmul.f32 %v139, %v167
  %v211 = vmul.f32 %v140, %v167
  %v212 = vmul.f32 %v141, %v167
  %v213 = vmul.f32 %v142, %v167
  %v214 = vmul.f32 %v143, %v167
  %v215 = vmul.f32 %v144, %v167
  %v216 = vmul.f32 %v145, %v167
  %v217 = vmul.f32 %v146, %v167
  %v218 = vmul.f32 %v147, %v167
  %v219 = vmul.f32 %v148, %v167
  %v220 = vmul.f32 %v149, %v167
  %v221 = vmul.f32 %v150, %v167
  %v222 = vmul.f32 %v151, %v167
  %v223 = vmul.f32 %v152, %v167
  %v224 = vmul.f32 %v153, %v167
  %v225 = vmul.f32 %v154, %v167
  %v226 = vmul.f32 %v155, %v167
  %v227 = vmul.f32 %v156, %v167
  %v228 = vmul.f32 %v157, %v167
  %v229 = vmul.f32 %v158, %v167
  %v230 = vmul.f32 %v159, %v167
  %v231 = vmul.f32 %v160, %v167
  %v232 = vmul.f32 %v161, %v167
  %v233 = vld [vmem:[%s2] sm:$0x1]
  %v235 = vlaneseq
  %v236 = vshrl.u32 %v235, 7
  %v237 = vsub.s32 0, %v236
  %v238 = vrot.slane %v233, %v237
  %v240 = vadd.f32 %v169, %v238
  %v241 = vadd.f32 %v170, %v238
  %v242 = vadd.f32 %v171, %v238
  %v243 = vadd.f32 %v172, %v238
  %v244 = vadd.f32 %v173, %v238
  %v245 = vadd.f32 %v174, %v238
  %v246 = vadd.f32 %v175, %v238
  %v247 = vadd.f32 %v176, %v238
  %v248 = vadd.f32 %v177, %v238
  %v249 = vadd.f32 %v178, %v238
  %v250 = vadd.f32 %v179, %v238
  %v251 = vadd.f32 %v180, %v238
  %v252 = vadd.f32 %v181, %v238
  %v253 = vadd.f32 %v182, %v238
  %v254 = vadd.f32 %v183, %v238
  %v255 = vadd.f32 %v184, %v238
  %v256 = vadd.f32 %v185, %v238
  %v257 = vadd.f32 %v186, %v238
  %v258 = vadd.f32 %v187, %v238
  %v259 = vadd.f32 %v188, %v238
  %v260 = vadd.f32 %v189, %v238
  %v261 = vadd.f32 %v190, %v238
  %v262 = vadd.f32 %v191, %v238
  %v263 = vadd.f32 %v192, %v238
  %v264 = vadd.f32 %v193, %v238
  %v265 = vadd.f32 %v194, %v238
  %v266 = vadd.f32 %v195, %v238
  %v267 = vadd.f32 %v196, %v238
  %v268 = vadd.f32 %v197, %v238
  %v269 = vadd.f32 %v198, %v238
  %v270 = vadd.f32 %v199, %v238
  %v271 = vadd.f32 %v200, %v238
  %v272 = vadd.f32 %v201, %v238
  %v273 = vadd.f32 %v202, %v238
  %v274 = vadd.f32 %v203, %v238
  %v275 = vadd.f32 %v204, %v238
  %v276 = vadd.f32 %v205, %v238
  %v277 = vadd.f32 %v206, %v238
  %v278 = vadd.f32 %v207, %v238
  %v279 = vadd.f32 %v208, %v238
  %v280 = vadd.f32 %v209, %v238
  %v281 = vadd.f32 %v210, %v238
  %v282 = vadd.f32 %v211, %v238
  %v283 = vadd.f32 %v212, %v238
  %v284 = vadd.f32 %v213, %v238
  %v285 = vadd.f32 %v214, %v238
  %v286 = vadd.f32 %v215, %v238
  %v287 = vadd.f32 %v216, %v238
  %v288 = vadd.f32 %v217, %v238
  %v289 = vadd.f32 %v218, %v238
  %v290 = vadd.f32 %v219, %v238
  %v291 = vadd.f32 %v220, %v238
  %v292 = vadd.f32 %v221, %v238
  %v293 = vadd.f32 %v222, %v238
  %v294 = vadd.f32 %v223, %v238
  %v295 = vadd.f32 %v224, %v238
  %v296 = vadd.f32 %v225, %v238
  %v297 = vadd.f32 %v226, %v238
  %v298 = vadd.f32 %v227, %v238
  %v299 = vadd.f32 %v228, %v238
  %v300 = vadd.f32 %v229, %v238
  %v301 = vadd.f32 %v230, %v238
  %v302 = vadd.f32 %v231, %v238
  %v303 = vadd.f32 %v232, %v238
  %v304 = vmax.f32 %v240, 0.0
  %v305 = vmax.f32 %v241, 0.0
  %v306 = vmax.f32 %v242, 0.0
  %v307 = vmax.f32 %v243, 0.0
  %v308 = vmax.f32 %v244, 0.0
  %v309 = vmax.f32 %v245, 0.0
  %v310 = vmax.f32 %v246, 0.0
  %v311 = vmax.f32 %v247, 0.0
  %v312 = vmax.f32 %v248, 0.0
  %v313 = vmax.f32 %v249, 0.0
  %v314 = vmax.f32 %v250, 0.0
  %v315 = vmax.f32 %v251, 0.0
  %v316 = vmax.f32 %v252, 0.0
  %v317 = vmax.f32 %v253, 0.0
  %v318 = vmax.f32 %v254, 0.0
  %v319 = vmax.f32 %v255, 0.0
  %v320 = vmax.f32 %v256, 0.0
  %v321 = vmax.f32 %v257, 0.0
  %v322 = vmax.f32 %v258, 0.0
  %v323 = vmax.f32 %v259, 0.0
  %v324 = vmax.f32 %v260, 0.0
  %v325 = vmax.f32 %v261, 0.0
  %v326 = vmax.f32 %v262, 0.0
  %v327 = vmax.f32 %v263, 0.0
  %v328 = vmax.f32 %v264, 0.0
  %v329 = vmax.f32 %v265, 0.0
  %v330 = vmax.f32 %v266, 0.0
  %v331 = vmax.f32 %v267, 0.0
  %v332 = vmax.f32 %v268, 0.0
  %v333 = vmax.f32 %v269, 0.0
  %v334 = vmax.f32 %v270, 0.0
  %v335 = vmax.f32 %v271, 0.0
  %v336 = vmax.f32 %v272, 0.0
  %v337 = vmax.f32 %v273, 0.0
  %v338 = vmax.f32 %v274, 0.0
  %v339 = vmax.f32 %v275, 0.0
  %v340 = vmax.f32 %v276, 0.0
  %v341 = vmax.f32 %v277, 0.0
  %v342 = vmax.f32 %v278, 0.0
  %v343 = vmax.f32 %v279, 0.0
  %v344 = vmax.f32 %v280, 0.0
  %v345 = vmax.f32 %v281, 0.0
  %v346 = vmax.f32 %v282, 0.0
  %v347 = vmax.f32 %v283, 0.0
  %v348 = vmax.f32 %v284, 0.0
  %v349 = vmax.f32 %v285, 0.0
  %v350 = vmax.f32 %v286, 0.0
  %v351 = vmax.f32 %v287, 0.0
  %v352 = vmax.f32 %v288, 0.0
  %v353 = vmax.f32 %v289, 0.0
  %v354 = vmax.f32 %v290, 0.0
  %v355 = vmax.f32 %v291, 0.0
  %v356 = vmax.f32 %v292, 0.0
  %v357 = vmax.f32 %v293, 0.0
  %v358 = vmax.f32 %v294, 0.0
  %v359 = vmax.f32 %v295, 0.0
  %v360 = vmax.f32 %v296, 0.0
  %v361 = vmax.f32 %v297, 0.0
  %v362 = vmax.f32 %v298, 0.0
  %v363 = vmax.f32 %v299, 0.0
  %v364 = vmax.f32 %v300, 0.0
  %v365 = vmax.f32 %v301, 0.0
  %v366 = vmax.f32 %v302, 0.0
  %v367 = vmax.f32 %v303, 0.0
  %v368 = vpack.c.bf16 %v305, %v304
  %v369 = vpack.c.bf16 %v307, %v306
  %v370 = vpack.c.bf16 %v309, %v308
  %v371 = vpack.c.bf16 %v311, %v310
  %v372 = vpack.c.bf16 %v313, %v312
  %v373 = vpack.c.bf16 %v315, %v314
  %v374 = vpack.c.bf16 %v317, %v316
  %v375 = vpack.c.bf16 %v319, %v318
  %v376 = vpack.c.bf16 %v321, %v320
  %v377 = vpack.c.bf16 %v323, %v322
  %v378 = vpack.c.bf16 %v325, %v324
  %v379 = vpack.c.bf16 %v327, %v326
  %v380 = vpack.c.bf16 %v329, %v328
  %v381 = vpack.c.bf16 %v331, %v330
  %v382 = vpack.c.bf16 %v333, %v332
  %v383 = vpack.c.bf16 %v335, %v334
  %v384 = vpack.c.bf16 %v337, %v336
  %v385 = vpack.c.bf16 %v339, %v338
  %v386 = vpack.c.bf16 %v341, %v340
  %v387 = vpack.c.bf16 %v343, %v342
  %v388 = vpack.c.bf16 %v345, %v344
  %v389 = vpack.c.bf16 %v347, %v346
  %v390 = vpack.c.bf16 %v349, %v348
  %v391 = vpack.c.bf16 %v351, %v350
  %v392 = vpack.c.bf16 %v353, %v352
  %v393 = vpack.c.bf16 %v355, %v354
  %v394 = vpack.c.bf16 %v357, %v356
  %v395 = vpack.c.bf16 %v359, %v358
  %v396 = vpack.c.bf16 %v361, %v360
  %v397 = vpack.c.bf16 %v363, %v362
  %v398 = vpack.c.bf16 %v365, %v364
  %v399 = vpack.c.bf16 %v367, %v366
  %v400 = vld [vmem:[%s3] sm:$0xf]
  %v401 = vld [vmem:[%s3 + $0x4] sm:$0xf]
  %v402 = vld [vmem:[%s3 + $0x8] sm:$0xf]
  %v403 = vld [vmem:[%s3 + $0xc] sm:$0xf]
  %v404 = vld [vmem:[%s3 + $0x10] sm:$0xf]
  %v405 = vld [vmem:[%s3 + $0x14] sm:$0xf]
  %v406 = vld [vmem:[%s3 + $0x18] sm:$0xf]
  %v407 = vld [vmem:[%s3 + $0x1c] sm:$0xf]
  %v408 = vld [vmem:[%s3 + $0x20] sm:$0xf]
  %v409 = vld [vmem:[%s3 + $0x24] sm:$0xf]
  %v410 = vld [vmem:[%s3 + $0x28] sm:$0xf]
  %v411 = vld [vmem:[%s3 + $0x2c] sm:$0xf]
  %v412 = vld [vmem:[%s3 + $0x30] sm:$0xf]
  %v413 = vld [vmem:[%s3 + $0x34] sm:$0xf]
  %v414 = vld [vmem:[%s3 + $0x38] sm:$0xf]
  %v415 = vld [vmem:[%s3 + $0x3c] sm:$0xf]
  %v432 = vunpack.c.l.b16 %v400
  %v433 = vunpack.c.l.b16 %v401
  %v434 = vunpack.c.l.b16 %v402
  %v435 = vunpack.c.l.b16 %v403
  %v436 = vunpack.c.l.b16 %v404
  %v437 = vunpack.c.l.b16 %v405
  %v438 = vunpack.c.l.b16 %v406
  %v439 = vunpack.c.l.b16 %v407
  %v440 = vunpack.c.l.b16 %v408
  %v441 = vunpack.c.l.b16 %v409
  %v442 = vunpack.c.l.b16 %v410
  %v443 = vunpack.c.l.b16 %v411
  %v444 = vunpack.c.l.b16 %v412
  %v445 = vunpack.c.l.b16 %v413
  %v446 = vunpack.c.l.b16 %v414
  %v447 = vunpack.c.l.b16 %v415
  %v448 = vpack.c.b16 %v433, %v432
  %v449 = vpack.c.b16 %v435, %v434
  %v450 = vpack.c.b16 %v437, %v436
  %v451 = vpack.c.b16 %v439, %v438
  %v452 = vpack.c.b16 %v441, %v440
  %v453 = vpack.c.b16 %v443, %v442
  %v454 = vpack.c.b16 %v445, %v444
  %v455 = vpack.c.b16 %v447, %v446
  %464 = vmatprep.subr.bf16.mxu0 0
  %465 = vmatpush1.bf16.msra.mxu0 %v448
  %466 = vmatprep.subr.bf16.mxu0 0
  %467 = vmatpush1.bf16.msra.mxu0 %v449
  %468 = vmatprep.subr.bf16.mxu0 0
  %469 = vmatpush1.bf16.msra.mxu0 %v450
  %470 = vmatprep.subr.bf16.mxu0 0
  %471 = vmatpush1.bf16.msra.mxu0 %v451
  %472 = vmatprep.subr.bf16.mxu0 0
  %473 = vmatpush1.bf16.msra.mxu0 %v452
  %474 = vmatprep.subr.bf16.mxu0 0
  %475 = vmatpush1.bf16.msra.mxu0 %v453
  %476 = vmatprep.subr.bf16.mxu0 0
  %477 = vmatpush1.bf16.msra.mxu0 %v454
  %478 = vmatprep.subr.bf16.mxu0 0
  %479 = vmatpush1.bf16.msra.mxu0 %v455
  %480 = vmatprep.subr.bf16.mxu0 0
  %481 = vmatpush1.bf16.msra.mxu0 0
  %482 = vmatprep.subr.bf16.mxu0 0
  %483 = vmatpush1.bf16.msra.mxu0 0
  %484 = vmatprep.subr.bf16.mxu0 0
  %485 = vmatpush1.bf16.msra.mxu0 0
  %486 = vmatprep.subr.bf16.mxu0 0
  %487 = vmatpush1.bf16.msra.mxu0 0
  %488 = vmatprep.subr.bf16.mxu0 0
  %489 = vmatpush1.bf16.msra.mxu0 0
  %490 = vmatprep.subr.bf16.mxu0 0
  %491 = vmatpush1.bf16.msra.mxu0 0
  %492 = vmatprep.subr.bf16.mxu0 0
  %493 = vmatpush1.bf16.msra.mxu0 0
  %494 = vmatprep.subr.bf16.mxu0 0
  %495 = vmatpush1.bf16.msra.mxu0 0
  %496 = vmatprep.mubr.bf16.mxu0 0
  %497 = vmatmul.mubr.bf16.gmra.mrb[0].mxu0 %v368
  %v498 = vpop.f32.mrb[0].mxu0
  %v499 = vadd.f32 0.0, %v498
  %v500 = vpop.f32.mrb[0].mxu0
  %v501 = vpop.f32.mrb[0].mxu0
  %v502 = vadd.f32 0.0, %v501
  %v503 = vpop.f32.mrb[0].mxu0
  %504 = vmatprep.mubr.bf16.mxu0 0
  %505 = vmatmul.mubr.bf16.gmra.mrb[0].mxu0 %v369
  %v506 = vpop.f32.mrb[0].mxu0
  %v507 = vadd.f32 0.0, %v506
  %v508 = vpop.f32.mrb[0].mxu0
  %v509 = vpop.f32.mrb[0].mxu0
  %v510 = vadd.f32 0.0, %v509
  %v511 = vpop.f32.mrb[0].mxu0
  %512 = vmatprep.mubr.bf16.mxu0 0
  %513 = vmatmul.mubr.bf16.gmra.mrb[0].mxu0 %v370
  %v514 = vpop.f32.mrb[0].mxu0
  %v515 = vadd.f32 0.0, %v514
  %v516 = vpop.f32.mrb[0].mxu0
  %v517 = vpop.f32.mrb[0].mxu0
  %v518 = vadd.f32 0.0, %v517
  %v519 = vpop.f32.mrb[0].mxu0
  %520 = vmatprep.mubr.bf16.mxu0 0
  %521 = vmatmul.mubr.bf16.gmra.mrb[0].mxu0 %v371
  %v522 = vpop.f32.mrb[0].mxu0
  %v523 = vadd.f32 0.0, %v522
  %v524 = vpop.f32.mrb[0].mxu0
  %v525 = vpop.f32.mrb[0].mxu0
  %v526 = vadd.f32 0.0, %v525
  %v527 = vpop.f32.mrb[0].mxu0
  %528 = vmatprep.mubr.bf16.mxu0 0
  %529 = vmatmul.mubr.bf16.gmra.mrb[0].mxu0 %v372
  %v530 = vpop.f32.mrb[0].mxu0
  %v531 = vadd.f32 0.0, %v530
  %v532 = vpop.f32.mrb[0].mxu0
  %v533 = vpop.f32.mrb[0].mxu0
  %v534 = vadd.f32 0.0, %v533
  %v535 = vpop.f32.mrb[0].mxu0
  %536 = vmatprep.mubr.bf16.mxu0 0
  %537 = vmatmul.mubr.bf16.gmra.mrb[0].mxu0 %v373
  %v538 = vpop.f32.mrb[0].mxu0
  %v539 = vadd.f32 0.0, %v538
  %v540 = vpop.f32.mrb[0].mxu0
  %v541 = vpop.f32.mrb[0].mxu0
  %v542 = vadd.f32 0.0, %v541
  %v543 = vpop.f32.mrb[0].mxu0
  %544 = vmatprep.mubr.bf16.mxu0 0
  %545 = vmatmul.mubr.bf16.gmra.mrb[0].mxu0 %v374
  %v546 = vpop.f32.mrb[0].mxu0
  %v547 = vadd.f32 0.0, %v546
  %v548 = vpop.f32.mrb[0].mxu0
  %v549 = vpop.f32.mrb[0].mxu0
  %v550 = vadd.f32 0.0, %v549
  %v551 = vpop.f32.mrb[0].mxu0
  %552 = vmatprep.mubr.bf16.mxu0 0
  %553 = vmatmul.mubr.bf16.gmra.mrb[0].mxu0 %v375
  %v554 = vpop.f32.mrb[0].mxu0
  %v555 = vadd.f32 0.0, %v554
  %v556 = vpop.f32.mrb[0].mxu0
  %v557 = vpop.f32.mrb[0].mxu0
  %v558 = vadd.f32 0.0, %v557
  %v559 = vpop.f32.mrb[0].mxu0
  %560 = vmatprep.mubr.bf16.mxu0 0
  %561 = vmatmul.mubr.bf16.gmra.mrb[0].mxu0 %v376
  %v562 = vpop.f32.mrb[0].mxu0
  %v563 = vadd.f32 0.0, %v562
  %v564 = vpop.f32.mrb[0].mxu0
  %v565 = vpop.f32.mrb[0].mxu0
  %v566 = vadd.f32 0.0, %v565
  %v567 = vpop.f32.mrb[0].mxu0
  %568 = vmatprep.mubr.bf16.mxu0 0
  %569 = vmatmul.mubr.bf16.gmra.mrb[0].mxu0 %v377
  %v570 = vpop.f32.mrb[0].mxu0
  %v571 = vadd.f32 0.0, %v570
  %v572 = vpop.f32.mrb[0].mxu0
  %v573 = vpop.f32.mrb[0].mxu0
  %v574 = vadd.f32 0.0, %v573
  %v575 = vpop.f32.mrb[0].mxu0
  %576 = vmatprep.mubr.bf16.mxu0 0
  %577 = vmatmul.mubr.bf16.gmra.mrb[0].mxu0 %v378
  %v578 = vpop.f32.mrb[0].mxu0
  %v579 = vadd.f32 0.0, %v578
  %v580 = vpop.f32.mrb[0].mxu0
  %v581 = vpop.f32.mrb[0].mxu0
  %v582 = vadd.f32 0.0, %v581
  %v583 = vpop.f32.mrb[0].mxu0
  %584 = vmatprep.mubr.bf16.mxu0 0
  %585 = vmatmul.mubr.bf16.gmra.mrb[0].mxu0 %v379
  %v586 = vpop.f32.mrb[0].mxu0
  %v587 = vadd.f32 0.0, %v586
  %v588 = vpop.f32.mrb[0].mxu0
  %v589 = vpop.f32.mrb[0].mxu0
  %v590 = vadd.f32 0.0, %v589
  %v591 = vpop.f32.mrb[0].mxu0
  %592 = vmatprep.mubr.bf16.mxu0 0
  %593 = vmatmul.mubr.bf16.gmra.mrb[0].mxu0 %v380
  %v594 = vpop.f32.mrb[0].mxu0
  %v595 = vadd.f32 0.0, %v594
  %v596 = vpop.f32.mrb[0].mxu0
  %v597 = vpop.f32.mrb[0].mxu0
  %v598 = vadd.f32 0.0, %v597
  %v599 = vpop.f32.mrb[0].mxu0
  %600 = vmatprep.mubr.bf16.mxu0 0
  %601 = vmatmul.mubr.bf16.gmra.mrb[0].mxu0 %v381
  %v602 = vpop.f32.mrb[0].mxu0
  %v603 = vadd.f32 0.0, %v602
  %v604 = vpop.f32.mrb[0].mxu0
  %v605 = vpop.f32.mrb[0].mxu0
  %v606 = vadd.f32 0.0, %v605
  %v607 = vpop.f32.mrb[0].mxu0
  %608 = vmatprep.mubr.bf16.mxu0 0
  %609 = vmatmul.mubr.bf16.gmra.mrb[0].mxu0 %v382
  %v610 = vpop.f32.mrb[0].mxu0
  %v611 = vadd.f32 0.0, %v610
  %v612 = vpop.f32.mrb[0].mxu0
  %v613 = vpop.f32.mrb[0].mxu0
  %v614 = vadd.f32 0.0, %v613
  %v615 = vpop.f32.mrb[0].mxu0
  %616 = vmatprep.mubr.bf16.mxu0 0
  %617 = vmatmul.mubr.bf16.gmra.mrb[0].mxu0 %v383
  %v618 = vpop.f32.mrb[0].mxu0
  %v619 = vadd.f32 0.0, %v618
  %v620 = vpop.f32.mrb[0].mxu0
  %v621 = vpop.f32.mrb[0].mxu0
  %v622 = vadd.f32 0.0, %v621
  %v623 = vpop.f32.mrb[0].mxu0
  %624 = vmatprep.mubr.bf16.mxu0 0
  %625 = vmatmul.mubr.bf16.gmra.mrb[0].mxu0 %v384
  %v626 = vpop.f32.mrb[0].mxu0
  %v627 = vadd.f32 0.0, %v626
  %v628 = vpop.f32.mrb[0].mxu0
  %v629 = vpop.f32.mrb[0].mxu0
  %v630 = vadd.f32 0.0, %v629
  %v631 = vpop.f32.mrb[0].mxu0
  %632 = vmatprep.mubr.bf16.mxu0 0
  %633 = vmatmul.mubr.bf16.gmra.mrb[0].mxu0 %v385
  %v634 = vpop.f32.mrb[0].mxu0
  %v635 = vadd.f32 0.0, %v634
  %v636 = vpop.f32.mrb[0].mxu0
  %v637 = vpop.f32.mrb[0].mxu0
  %v638 = vadd.f32 0.0, %v637
  %v639 = vpop.f32.mrb[0].mxu0
  %640 = vmatprep.mubr.bf16.mxu0 0
  %641 = vmatmul.mubr.bf16.gmra.mrb[0].mxu0 %v386
  %v642 = vpop.f32.mrb[0].mxu0
  %v643 = vadd.f32 0.0, %v642
  %v644 = vpop.f32.mrb[0].mxu0
  %v645 = vpop.f32.mrb[0].mxu0
  %v646 = vadd.f32 0.0, %v645
  %v647 = vpop.f32.mrb[0].mxu0
  %648 = vmatprep.mubr.bf16.mxu0 0
  %649 = vmatmul.mubr.bf16.gmra.mrb[0].mxu0 %v387
  %v650 = vpop.f32.mrb[0].mxu0
  %v651 = vadd.f32 0.0, %v650
  %v652 = vpop.f32.mrb[0].mxu0
  %v653 = vpop.f32.mrb[0].mxu0
  %v654 = vadd.f32 0.0, %v653
  %v655 = vpop.f32.mrb[0].mxu0
  %656 = vmatprep.mubr.bf16.mxu0 0
  %657 = vmatmul.mubr.bf16.gmra.mrb[0].mxu0 %v388
  %v658 = vpop.f32.mrb[0].mxu0
  %v659 = vadd.f32 0.0, %v658
  %v660 = vpop.f32.mrb[0].mxu0
  %v661 = vpop.f32.mrb[0].mxu0
  %v662 = vadd.f32 0.0, %v661
  %v663 = vpop.f32.mrb[0].mxu0
  %664 = vmatprep.mubr.bf16.mxu0 0
  %665 = vmatmul.mubr.bf16.gmra.mrb[0].mxu0 %v389
  %v666 = vpop.f32.mrb[0].mxu0
  %v667 = vadd.f32 0.0, %v666
  %v668 = vpop.f32.mrb[0].mxu0
  %v669 = vpop.f32.mrb[0].mxu0
  %v670 = vadd.f32 0.0, %v669
  %v671 = vpop.f32.mrb[0].mxu0
  %672 = vmatprep.mubr.bf16.mxu0 0
  %673 = vmatmul.mubr.bf16.gmra.mrb[0].mxu0 %v390
  %v674 = vpop.f32.mrb[0].mxu0
  %v675 = vadd.f32 0.0, %v674
  %v676 = vpop.f32.mrb[0].mxu0
  %v677 = vpop.f32.mrb[0].mxu0
  %v678 = vadd.f32 0.0, %v677
  %v679 = vpop.f32.mrb[0].mxu0
  %680 = vmatprep.mubr.bf16.mxu0 0
  %681 = vmatmul.mubr.bf16.gmra.mrb[0].mxu0 %v391
  %v682 = vpop.f32.mrb[0].mxu0
  %v683 = vadd.f32 0.0, %v682
  %v684 = vpop.f32.mrb[0].mxu0
  %v685 = vpop.f32.mrb[0].mxu0
  %v686 = vadd.f32 0.0, %v685
  %v687 = vpop.f32.mrb[0].mxu0
  %688 = vmatprep.mubr.bf16.mxu0 0
  %689 = vmatmul.mubr.bf16.gmra.mrb[0].mxu0 %v392
  %v690 = vpop.f32.mrb[0].mxu0
  %v691 = vadd.f32 0.0, %v690
  %v692 = vpop.f32.mrb[0].mxu0
  %v693 = vpop.f32.mrb[0].mxu0
  %v694 = vadd.f32 0.0, %v693
  %v695 = vpop.f32.mrb[0].mxu0
  %696 = vmatprep.mubr.bf16.mxu0 0
  %697 = vmatmul.mubr.bf16.gmra.mrb[0].mxu0 %v393
  %v698 = vpop.f32.mrb[0].mxu0
  %v699 = vadd.f32 0.0, %v698
  %v700 = vpop.f32.mrb[0].mxu0
  %v701 = vpop.f32.mrb[0].mxu0
  %v702 = vadd.f32 0.0, %v701
  %v703 = vpop.f32.mrb[0].mxu0
  %704 = vmatprep.mubr.bf16.mxu0 0
  %705 = vmatmul.mubr.bf16.gmra.mrb[0].mxu0 %v394
  %v706 = vpop.f32.mrb[0].mxu0
  %v707 = vadd.f32 0.0, %v706
  %v708 = vpop.f32.mrb[0].mxu0
  %v709 = vpop.f32.mrb[0].mxu0
  %v710 = vadd.f32 0.0, %v709
  %v711 = vpop.f32.mrb[0].mxu0
  %712 = vmatprep.mubr.bf16.mxu0 0
  %713 = vmatmul.mubr.bf16.gmra.mrb[0].mxu0 %v395
  %v714 = vpop.f32.mrb[0].mxu0
  %v715 = vadd.f32 0.0, %v714
  %v716 = vpop.f32.mrb[0].mxu0
  %v717 = vpop.f32.mrb[0].mxu0
  %v718 = vadd.f32 0.0, %v717
  %v719 = vpop.f32.mrb[0].mxu0
  %720 = vmatprep.mubr.bf16.mxu0 0
  %721 = vmatmul.mubr.bf16.gmra.mrb[0].mxu0 %v396
  %v722 = vpop.f32.mrb[0].mxu0
  %v723 = vadd.f32 0.0, %v722
  %v724 = vpop.f32.mrb[0].mxu0
  %v725 = vpop.f32.mrb[0].mxu0
  %v726 = vadd.f32 0.0, %v725
  %v727 = vpop.f32.mrb[0].mxu0
  %728 = vmatprep.mubr.bf16.mxu0 0
  %729 = vmatmul.mubr.bf16.gmra.mrb[0].mxu0 %v397
  %v730 = vpop.f32.mrb[0].mxu0
  %v731 = vadd.f32 0.0, %v730
  %v732 = vpop.f32.mrb[0].mxu0
  %v733 = vpop.f32.mrb[0].mxu0
  %v734 = vadd.f32 0.0, %v733
  %v735 = vpop.f32.mrb[0].mxu0
  %736 = vmatprep.mubr.bf16.mxu0 0
  %737 = vmatmul.mubr.bf16.gmra.mrb[0].mxu0 %v398
  %v738 = vpop.f32.mrb[0].mxu0
  %v739 = vadd.f32 0.0, %v738
  %v740 = vpop.f32.mrb[0].mxu0
  %v741 = vpop.f32.mrb[0].mxu0
  %v742 = vadd.f32 0.0, %v741
  %v743 = vpop.f32.mrb[0].mxu0
  %744 = vmatprep.mubr.bf16.mxu0 0
  %745 = vmatmul.mubr.bf16.gmra.mrb[0].mxu0 %v399
  %v746 = vpop.f32.mrb[0].mxu0
  %v747 = vadd.f32 0.0, %v746
  %v748 = vpop.f32.mrb[0].mxu0
  %v749 = vpop.f32.mrb[0].mxu0
  %v750 = vadd.f32 0.0, %v749
  %v751 = vpop.f32.mrb[0].mxu0
  %752 = vdwg.mxu0
  %v753 = vld [vmem:[%s4] sm:$0xf]
  %v754 = vld [vmem:[%s4 + $0x4] sm:$0xf]
  %v755 = vld [vmem:[%s4 + $0x8] sm:$0xf]
  %v756 = vld [vmem:[%s4 + $0xc] sm:$0xf]
  %v757 = vld [vmem:[%s4 + $0x10] sm:$0xf]
  %v758 = vld [vmem:[%s4 + $0x14] sm:$0xf]
  %v759 = vld [vmem:[%s4 + $0x18] sm:$0xf]
  %v760 = vld [vmem:[%s4 + $0x1c] sm:$0xf]
  %v761 = vld [vmem:[%s4 + $0x20] sm:$0xf]
  %v762 = vld [vmem:[%s4 + $0x24] sm:$0xf]
  %v763 = vld [vmem:[%s4 + $0x28] sm:$0xf]
  %v764 = vld [vmem:[%s4 + $0x2c] sm:$0xf]
  %v765 = vld [vmem:[%s4 + $0x30] sm:$0xf]
  %v766 = vld [vmem:[%s4 + $0x34] sm:$0xf]
  %v767 = vld [vmem:[%s4 + $0x38] sm:$0xf]
  %v768 = vld [vmem:[%s4 + $0x3c] sm:$0xf]
  %v769 = vld [vmem:[%s4 + $0x40] sm:$0xf]
  %v770 = vld [vmem:[%s4 + $0x44] sm:$0xf]
  %v771 = vld [vmem:[%s4 + $0x48] sm:$0xf]
  %v772 = vld [vmem:[%s4 + $0x4c] sm:$0xf]
  %v773 = vld [vmem:[%s4 + $0x50] sm:$0xf]
  %v774 = vld [vmem:[%s4 + $0x54] sm:$0xf]
  %v775 = vld [vmem:[%s4 + $0x58] sm:$0xf]
  %v776 = vld [vmem:[%s4 + $0x5c] sm:$0xf]
  %v777 = vld [vmem:[%s4 + $0x60] sm:$0xf]
  %v778 = vld [vmem:[%s4 + $0x64] sm:$0xf]
  %v779 = vld [vmem:[%s4 + $0x68] sm:$0xf]
  %v780 = vld [vmem:[%s4 + $0x6c] sm:$0xf]
  %v781 = vld [vmem:[%s4 + $0x70] sm:$0xf]
  %v782 = vld [vmem:[%s4 + $0x74] sm:$0xf]
  %v783 = vld [vmem:[%s4 + $0x78] sm:$0xf]
  %v784 = vld [vmem:[%s4 + $0x7c] sm:$0xf]
  %v785 = vld [vmem:[%s4 + $0x80] sm:$0xf]
  %v786 = vld [vmem:[%s4 + $0x84] sm:$0xf]
  %v787 = vld [vmem:[%s4 + $0x88] sm:$0xf]
  %v788 = vld [vmem:[%s4 + $0x8c] sm:$0xf]
  %v789 = vld [vmem:[%s4 + $0x90] sm:$0xf]
  %v790 = vld [vmem:[%s4 + $0x94] sm:$0xf]
  %v791 = vld [vmem:[%s4 + $0x98] sm:$0xf]
  %v792 = vld [vmem:[%s4 + $0x9c] sm:$0xf]
  %v793 = vld [vmem:[%s4 + $0xa0] sm:$0xf]
  %v794 = vld [vmem:[%s4 + $0xa4] sm:$0xf]
  %v795 = vld [vmem:[%s4 + $0xa8] sm:$0xf]
  %v796 = vld [vmem:[%s4 + $0xac] sm:$0xf]
  %v797 = vld [vmem:[%s4 + $0xb0] sm:$0xf]
  %v798 = vld [vmem:[%s4 + $0xb4] sm:$0xf]
  %v799 = vld [vmem:[%s4 + $0xb8] sm:$0xf]
  %v800 = vld [vmem:[%s4 + $0xbc] sm:$0xf]
  %v801 = vld [vmem:[%s4 + $0xc0] sm:$0xf]
  %v802 = vld [vmem:[%s4 + $0xc4] sm:$0xf]
  %v803 = vld [vmem:[%s4 + $0xc8] sm:$0xf]
  %v804 = vld [vmem:[%s4 + $0xcc] sm:$0xf]
  %v805 = vld [vmem:[%s4 + $0xd0] sm:$0xf]
  %v806 = vld [vmem:[%s4 + $0xd4] sm:$0xf]
  %v807 = vld [vmem:[%s4 + $0xd8] sm:$0xf]
  %v808 = vld [vmem:[%s4 + $0xdc] sm:$0xf]
  %v809 = vld [vmem:[%s4 + $0xe0] sm:$0xf]
  %v810 = vld [vmem:[%s4 + $0xe4] sm:$0xf]
  %v811 = vld [vmem:[%s4 + $0xe8] sm:$0xf]
  %v812 = vld [vmem:[%s4 + $0xec] sm:$0xf]
  %v813 = vld [vmem:[%s4 + $0xf0] sm:$0xf]
  %v814 = vld [vmem:[%s4 + $0xf4] sm:$0xf]
  %v815 = vld [vmem:[%s4 + $0xf8] sm:$0xf]
  %v816 = vld [vmem:[%s4 + $0xfc] sm:$0xf]
  %v817 = vld [vmem:[%s5] sm:$0xf]
  %v818 = vld [vmem:[%s5 + $0x4] sm:$0xf]
  %v819 = vld [vmem:[%s5 + $0x8] sm:$0xf]
  %v820 = vld [vmem:[%s5 + $0xc] sm:$0xf]
  %v821 = vld [vmem:[%s5 + $0x10] sm:$0xf]
  %v822 = vld [vmem:[%s5 + $0x14] sm:$0xf]
  %v823 = vld [vmem:[%s5 + $0x18] sm:$0xf]
  %v824 = vld [vmem:[%s5 + $0x1c] sm:$0xf]
  %v825 = vld [vmem:[%s5 + $0x20] sm:$0xf]
  %v826 = vld [vmem:[%s5 + $0x24] sm:$0xf]
  %v827 = vld [vmem:[%s5 + $0x28] sm:$0xf]
  %v828 = vld [vmem:[%s5 + $0x2c] sm:$0xf]
  %v829 = vld [vmem:[%s5 + $0x30] sm:$0xf]
  %v830 = vld [vmem:[%s5 + $0x34] sm:$0xf]
  %v831 = vld [vmem:[%s5 + $0x38] sm:$0xf]
  %v832 = vld [vmem:[%s5 + $0x3c] sm:$0xf]
  %v897 = vunpack.c.l.b16 %v753
  %v898 = vunpack.c.l.b16 %v754
  %v899 = vunpack.c.l.b16 %v755
  %v900 = vunpack.c.l.b16 %v756
  %v901 = vunpack.c.l.b16 %v757
  %v902 = vunpack.c.l.b16 %v758
  %v903 = vunpack.c.l.b16 %v759
  %v904 = vunpack.c.l.b16 %v760
  %v905 = vunpack.c.l.b16 %v761
  %v906 = vunpack.c.l.b16 %v762
  %v907 = vunpack.c.l.b16 %v763
  %v908 = vunpack.c.l.b16 %v764
  %v909 = vunpack.c.l.b16 %v765
  %v910 = vunpack.c.l.b16 %v766
  %v911 = vunpack.c.l.b16 %v767
  %v912 = vunpack.c.l.b16 %v768
  %v913 = vunpack.c.l.b16 %v769
  %v914 = vunpack.c.l.b16 %v770
  %v915 = vunpack.c.l.b16 %v771
  %v916 = vunpack.c.l.b16 %v772
  %v917 = vunpack.c.l.b16 %v773
  %v918 = vunpack.c.l.b16 %v774
  %v919 = vunpack.c.l.b16 %v775
  %v920 = vunpack.c.l.b16 %v776
  %v921 = vunpack.c.l.b16 %v777
  %v922 = vunpack.c.l.b16 %v778
  %v923 = vunpack.c.l.b16 %v779
  %v924 = vunpack.c.l.b16 %v780
  %v925 = vunpack.c.l.b16 %v781
  %v926 = vunpack.c.l.b16 %v782
  %v927 = vunpack.c.l.b16 %v783
  %v928 = vunpack.c.l.b16 %v784
  %v929 = vunpack.c.l.b16 %v785
  %v930 = vunpack.c.l.b16 %v786
  %v931 = vunpack.c.l.b16 %v787
  %v932 = vunpack.c.l.b16 %v788
  %v933 = vunpack.c.l.b16 %v789
  %v934 = vunpack.c.l.b16 %v790
  %v935 = vunpack.c.l.b16 %v791
  %v936 = vunpack.c.l.b16 %v792
  %v937 = vunpack.c.l.b16 %v793
  %v938 = vunpack.c.l.b16 %v794
  %v939 = vunpack.c.l.b16 %v795
  %v940 = vunpack.c.l.b16 %v796
  %v941 = vunpack.c.l.b16 %v797
  %v942 = vunpack.c.l.b16 %v798
  %v943 = vunpack.c.l.b16 %v799
  %v944 = vunpack.c.l.b16 %v800
  %v945 = vunpack.c.l.b16 %v801
  %v946 = vunpack.c.l.b16 %v802
  %v947 = vunpack.c.l.b16 %v803
  %v948 = vunpack.c.l.b16 %v804
  %v949 = vunpack.c.l.b16 %v805
  %v950 = vunpack.c.l.b16 %v806
  %v951 = vunpack.c.l.b16 %v807
  %v952 = vunpack.c.l.b16 %v808
  %v953 = vunpack.c.l.b16 %v809
  %v954 = vunpack.c.l.b16 %v810
  %v955 = vunpack.c.l.b16 %v811
  %v956 = vunpack.c.l.b16 %v812
  %v957 = vunpack.c.l.b16 %v813
  %v958 = vunpack.c.l.b16 %v814
  %v959 = vunpack.c.l.b16 %v815
  %v960 = vunpack.c.l.b16 %v816
  %v961 = vpack.c.b16 %v898, %v897
  %v962 = vpack.c.b16 %v900, %v899
  %v963 = vpack.c.b16 %v902, %v901
  %v964 = vpack.c.b16 %v904, %v903
  %v965 = vpack.c.b16 %v906, %v905
  %v966 = vpack.c.b16 %v908, %v907
  %v967 = vpack.c.b16 %v910, %v909
  %v968 = vpack.c.b16 %v912, %v911
  %v969 = vpack.c.b16 %v914, %v913
  %v970 = vpack.c.b16 %v916, %v915
  %v971 = vpack.c.b16 %v918, %v917
  %v972 = vpack.c.b16 %v920, %v919
  %v973 = vpack.c.b16 %v922, %v921
  %v974 = vpack.c.b16 %v924, %v923
  %v975 = vpack.c.b16 %v926, %v925
  %v976 = vpack.c.b16 %v928, %v927
  %v977 = vpack.c.b16 %v930, %v929
  %v978 = vpack.c.b16 %v932, %v931
  %v979 = vpack.c.b16 %v934, %v933
  %v980 = vpack.c.b16 %v936, %v935
  %v981 = vpack.c.b16 %v938, %v937
  %v982 = vpack.c.b16 %v940, %v939
  %v983 = vpack.c.b16 %v942, %v941
  %v984 = vpack.c.b16 %v944, %v943
  %v985 = vpack.c.b16 %v946, %v945
  %v986 = vpack.c.b16 %v948, %v947
  %v987 = vpack.c.b16 %v950, %v949
  %v988 = vpack.c.b16 %v952, %v951
  %v989 = vpack.c.b16 %v954, %v953
  %v990 = vpack.c.b16 %v956, %v955
  %v991 = vpack.c.b16 %v958, %v957
  %v992 = vpack.c.b16 %v960, %v959
  %v1041 = vunpack.c.l.b16 %v817
  %v1042 = vunpack.c.l.b16 %v818
  %v1043 = vunpack.c.l.b16 %v819
  %v1044 = vunpack.c.l.b16 %v820
  %v1045 = vunpack.c.l.b16 %v821
  %v1046 = vunpack.c.l.b16 %v822
  %v1047 = vunpack.c.l.b16 %v823
  %v1048 = vunpack.c.l.b16 %v824
  %v1049 = vunpack.c.l.b16 %v825
  %v1050 = vunpack.c.l.b16 %v826
  %v1051 = vunpack.c.l.b16 %v827
  %v1052 = vunpack.c.l.b16 %v828
  %v1053 = vunpack.c.l.b16 %v829
  %v1054 = vunpack.c.l.b16 %v830
  %v1055 = vunpack.c.l.b16 %v831
  %v1056 = vunpack.c.l.b16 %v832
  %v1057 = vpack.c.b16 %v1042, %v1041
  %v1058 = vpack.c.b16 %v1044, %v1043
  %v1059 = vpack.c.b16 %v1046, %v1045
  %v1060 = vpack.c.b16 %v1048, %v1047
  %v1061 = vpack.c.b16 %v1050, %v1049
  %v1062 = vpack.c.b16 %v1052, %v1051
  %v1063 = vpack.c.b16 %v1054, %v1053
  %v1064 = vpack.c.b16 %v1056, %v1055
  %1073 = vmatprep.subr.bf16.mxu0 0
  %1074 = vmatpush1.bf16.msra.mxu0 %v1057
  %1075 = vmatprep.subr.bf16.mxu0 0
  %1076 = vmatpush1.bf16.msra.mxu0 %v1058
  %1077 = vmatprep.subr.bf16.mxu0 0
  %1078 = vmatpush1.bf16.msra.mxu0 %v1059
  %1079 = vmatprep.subr.bf16.mxu0 0
  %1080 = vmatpush1.bf16.msra.mxu0 %v1060
  %1081 = vmatprep.subr.bf16.mxu0 0
  %1082 = vmatpush1.bf16.msra.mxu0 %v1061
  %1083 = vmatprep.subr.bf16.mxu0 0
  %1084 = vmatpush1.bf16.msra.mxu0 %v1062
  %1085 = vmatprep.subr.bf16.mxu0 0
  %1086 = vmatpush1.bf16.msra.mxu0 %v1063
  %1087 = vmatprep.subr.bf16.mxu0 0
  %1088 = vmatpush1.bf16.msra.mxu0 %v1064
  %1089 = vmatprep.subr.bf16.mxu0 0
  %1090 = vmatpush1.bf16.msra.mxu0 0
  %1091 = vmatprep.subr.bf16.mxu0 0
  %1092 = vmatpush1.bf16.msra.mxu0 0
  %1093 = vmatprep.subr.bf16.mxu0 0
  %1094 = vmatpush1.bf16.msra.mxu0 0
  %1095 = vmatprep.subr.bf16.mxu0 0
  %1096 = vmatpush1.bf16.msra.mxu0 0
  %1097 = vmatprep.subr.bf16.mxu0 0
  %1098 = vmatpush1.bf16.msra.mxu0 0
  %1099 = vmatprep.subr.bf16.mxu0 0
  %1100 = vmatpush1.bf16.msra.mxu0 0
  %1101 = vmatprep.subr.bf16.mxu0 0
  %1102 = vmatpush1.bf16.msra.mxu0 0
  %1103 = vmatprep.subr.bf16.mxu0 0
  %1104 = vmatpush1.bf16.msra.mxu0 0
  %1105 = vmatprep.mubr.bf16.mxu0 0
  %1106 = vmatmul.mubr.bf16.gmra.mrb[0].mxu0 %v961
  %v1107 = vpop.f32.mrb[0].mxu0
  %v1108 = vadd.f32 0.0, %v1107
  %v1109 = vpop.f32.mrb[0].mxu0
  %v1110 = vpop.f32.mrb[0].mxu0
  %v1111 = vadd.f32 0.0, %v1110
  %v1112 = vpop.f32.mrb[0].mxu0
  %1113 = vmatprep.mubr.bf16.mxu0 0
  %1114 = vmatmul.mubr.bf16.gmra.mrb[0].mxu0 %v962
  %v1115 = vpop.f32.mrb[0].mxu0
  %v1116 = vadd.f32 0.0, %v1115
  %v1117 = vpop.f32.mrb[0].mxu0
  %v1118 = vpop.f32.mrb[0].mxu0
  %v1119 = vadd.f32 0.0, %v1118
  %v1120 = vpop.f32.mrb[0].mxu0
  %1121 = vmatprep.mubr.bf16.mxu0 0
  %1122 = vmatmul.mubr.bf16.gmra.mrb[0].mxu0 %v963
  %v1123 = vpop.f32.mrb[0].mxu0
  %v1124 = vadd.f32 0.0, %v1123
  %v1125 = vpop.f32.mrb[0].mxu0
  %v1126 = vpop.f32.mrb[0].mxu0
  %v1127 = vadd.f32 0.0, %v1126
  %v1128 = vpop.f32.mrb[0].mxu0
  %1129 = vmatprep.mubr.bf16.mxu0 0
  %1130 = vmatmul.mubr.bf16.gmra.mrb[0].mxu0 %v964
  %v1131 = vpop.f32.mrb[0].mxu0
  %v1132 = vadd.f32 0.0, %v1131
  %v1133 = vpop.f32.mrb[0].mxu0
  %v1134 = vpop.f32.mrb[0].mxu0
  %v1135 = vadd.f32 0.0, %v1134
  %v1136 = vpop.f32.mrb[0].mxu0
  %1137 = vmatprep.mubr.bf16.mxu0 0
  %1138 = vmatmul.mubr.bf16.gmra.mrb[0].mxu0 %v965
  %v1139 = vpop.f32.mrb[0].mxu0
  %v1140 = vadd.f32 0.0, %v1139
  %v1141 = vpop.f32.mrb[0].mxu0
  %v1142 = vpop.f32.mrb[0].mxu0
  %v1143 = vadd.f32 0.0, %v1142
  %v1144 = vpop.f32.mrb[0].mxu0
  %1145 = vmatprep.mubr.bf16.mxu0 0
  %1146 = vmatmul.mubr.bf16.gmra.mrb[0].mxu0 %v966
  %v1147 = vpop.f32.mrb[0].mxu0
  %v1148 = vadd.f32 0.0, %v1147
  %v1149 = vpop.f32.mrb[0].mxu0
  %v1150 = vpop.f32.mrb[0].mxu0
  %v1151 = vadd.f32 0.0, %v1150
  %v1152 = vpop.f32.mrb[0].mxu0
  %1153 = vmatprep.mubr.bf16.mxu0 0
  %1154 = vmatmul.mubr.bf16.gmra.mrb[0].mxu0 %v967
  %v1155 = vpop.f32.mrb[0].mxu0
  %v1156 = vadd.f32 0.0, %v1155
  %v1157 = vpop.f32.mrb[0].mxu0
  %v1158 = vpop.f32.mrb[0].mxu0
  %v1159 = vadd.f32 0.0, %v1158
  %v1160 = vpop.f32.mrb[0].mxu0
  %1161 = vmatprep.mubr.bf16.mxu0 0
  %1162 = vmatmul.mubr.bf16.gmra.mrb[0].mxu0 %v968
  %v1163 = vpop.f32.mrb[0].mxu0
  %v1164 = vadd.f32 0.0, %v1163
  %v1165 = vpop.f32.mrb[0].mxu0
  %v1166 = vpop.f32.mrb[0].mxu0
  %v1167 = vadd.f32 0.0, %v1166
  %v1168 = vpop.f32.mrb[0].mxu0
  %1169 = vmatprep.mubr.bf16.mxu0 0
  %1170 = vmatmul.mubr.bf16.gmra.mrb[0].mxu0 %v969
  %v1171 = vpop.f32.mrb[0].mxu0
  %v1172 = vadd.f32 0.0, %v1171
  %v1173 = vpop.f32.mrb[0].mxu0
  %v1174 = vpop.f32.mrb[0].mxu0
  %v1175 = vadd.f32 0.0, %v1174
  %v1176 = vpop.f32.mrb[0].mxu0
  %1177 = vmatprep.mubr.bf16.mxu0 0
  %1178 = vmatmul.mubr.bf16.gmra.mrb[0].mxu0 %v970
  %v1179 = vpop.f32.mrb[0].mxu0
  %v1180 = vadd.f32 0.0, %v1179
  %v1181 = vpop.f32.mrb[0].mxu0
  %v1182 = vpop.f32.mrb[0].mxu0
  %v1183 = vadd.f32 0.0, %v1182
  %v1184 = vpop.f32.mrb[0].mxu0
  %1185 = vmatprep.mubr.bf16.mxu0 0
  %1186 = vmatmul.mubr.bf16.gmra.mrb[0].mxu0 %v971
  %v1187 = vpop.f32.mrb[0].mxu0
  %v1188 = vadd.f32 0.0, %v1187
  %v1189 = vpop.f32.mrb[0].mxu0
  %v1190 = vpop.f32.mrb[0].mxu0
  %v1191 = vadd.f32 0.0, %v1190
  %v1192 = vpop.f32.mrb[0].mxu0
  %1193 = vmatprep.mubr.bf16.mxu0 0
  %1194 = vmatmul.mubr.bf16.gmra.mrb[0].mxu0 %v972
  %v1195 = vpop.f32.mrb[0].mxu0
  %v1196 = vadd.f32 0.0, %v1195
  %v1197 = vpop.f32.mrb[0].mxu0
  %v1198 = vpop.f32.mrb[0].mxu0
  %v1199 = vadd.f32 0.0, %v1198
  %v1200 = vpop.f32.mrb[0].mxu0
  %1201 = vmatprep.mubr.bf16.mxu0 0
  %1202 = vmatmul.mubr.bf16.gmra.mrb[0].mxu0 %v973
  %v1203 = vpop.f32.mrb[0].mxu0
  %v1204 = vadd.f32 0.0, %v1203
  %v1205 = vpop.f32.mrb[0].mxu0
  %v1206 = vpop.f32.mrb[0].mxu0
  %v1207 = vadd.f32 0.0, %v1206
  %v1208 = vpop.f32.mrb[0].mxu0
  %1209 = vmatprep.mubr.bf16.mxu0 0
  %1210 = vmatmul.mubr.bf16.gmra.mrb[0].mxu0 %v974
  %v1211 = vpop.f32.mrb[0].mxu0
  %v1212 = vadd.f32 0.0, %v1211
  %v1213 = vpop.f32.mrb[0].mxu0
  %v1214 = vpop.f32.mrb[0].mxu0
  %v1215 = vadd.f32 0.0, %v1214
  %v1216 = vpop.f32.mrb[0].mxu0
  %1217 = vmatprep.mubr.bf16.mxu0 0
  %1218 = vmatmul.mubr.bf16.gmra.mrb[0].mxu0 %v975
  %v1219 = vpop.f32.mrb[0].mxu0
  %v1220 = vadd.f32 0.0, %v1219
  %v1221 = vpop.f32.mrb[0].mxu0
  %v1222 = vpop.f32.mrb[0].mxu0
  %v1223 = vadd.f32 0.0, %v1222
  %v1224 = vpop.f32.mrb[0].mxu0
  %1225 = vmatprep.mubr.bf16.mxu0 0
  %1226 = vmatmul.mubr.bf16.gmra.mrb[0].mxu0 %v976
  %v1227 = vpop.f32.mrb[0].mxu0
  %v1228 = vadd.f32 0.0, %v1227
  %v1229 = vpop.f32.mrb[0].mxu0
  %v1230 = vpop.f32.mrb[0].mxu0
  %v1231 = vadd.f32 0.0, %v1230
  %v1232 = vpop.f32.mrb[0].mxu0
  %1233 = vmatprep.mubr.bf16.mxu0 0
  %1234 = vmatmul.mubr.bf16.gmra.mrb[0].mxu0 %v977
  %v1235 = vpop.f32.mrb[0].mxu0
  %v1236 = vadd.f32 0.0, %v1235
  %v1237 = vpop.f32.mrb[0].mxu0
  %v1238 = vpop.f32.mrb[0].mxu0
  %v1239 = vadd.f32 0.0, %v1238
  %v1240 = vpop.f32.mrb[0].mxu0
  %1241 = vmatprep.mubr.bf16.mxu0 0
  %1242 = vmatmul.mubr.bf16.gmra.mrb[0].mxu0 %v978
  %v1243 = vpop.f32.mrb[0].mxu0
  %v1244 = vadd.f32 0.0, %v1243
  %v1245 = vpop.f32.mrb[0].mxu0
  %v1246 = vpop.f32.mrb[0].mxu0
  %v1247 = vadd.f32 0.0, %v1246
  %v1248 = vpop.f32.mrb[0].mxu0
  %1249 = vmatprep.mubr.bf16.mxu0 0
  %1250 = vmatmul.mubr.bf16.gmra.mrb[0].mxu0 %v979
  %v1251 = vpop.f32.mrb[0].mxu0
  %v1252 = vadd.f32 0.0, %v1251
  %v1253 = vpop.f32.mrb[0].mxu0
  %v1254 = vpop.f32.mrb[0].mxu0
  %v1255 = vadd.f32 0.0, %v1254
  %v1256 = vpop.f32.mrb[0].mxu0
  %1257 = vmatprep.mubr.bf16.mxu0 0
  %1258 = vmatmul.mubr.bf16.gmra.mrb[0].mxu0 %v980
  %v1259 = vpop.f32.mrb[0].mxu0
  %v1260 = vadd.f32 0.0, %v1259
  %v1261 = vpop.f32.mrb[0].mxu0
  %v1262 = vpop.f32.mrb[0].mxu0
  %v1263 = vadd.f32 0.0, %v1262
  %v1264 = vpop.f32.mrb[0].mxu0
  %1265 = vmatprep.mubr.bf16.mxu0 0
  %1266 = vmatmul.mubr.bf16.gmra.mrb[0].mxu0 %v981
  %v1267 = vpop.f32.mrb[0].mxu0
  %v1268 = vadd.f32 0.0, %v1267
  %v1269 = vpop.f32.mrb[0].mxu0
  %v1270 = vpop.f32.mrb[0].mxu0
  %v1271 = vadd.f32 0.0, %v1270
  %v1272 = vpop.f32.mrb[0].mxu0
  %1273 = vmatprep.mubr.bf16.mxu0 0
  %1274 = vmatmul.mubr.bf16.gmra.mrb[0].mxu0 %v982
  %v1275 = vpop.f32.mrb[0].mxu0
  %v1276 = vadd.f32 0.0, %v1275
  %v1277 = vpop.f32.mrb[0].mxu0
  %v1278 = vpop.f32.mrb[0].mxu0
  %v1279 = vadd.f32 0.0, %v1278
  %v1280 = vpop.f32.mrb[0].mxu0
  %1281 = vmatprep.mubr.bf16.mxu0 0
  %1282 = vmatmul.mubr.bf16.gmra.mrb[0].mxu0 %v983
  %v1283 = vpop.f32.mrb[0].mxu0
  %v1284 = vadd.f32 0.0, %v1283
  %v1285 = vpop.f32.mrb[0].mxu0
  %v1286 = vpop.f32.mrb[0].mxu0
  %v1287 = vadd.f32 0.0, %v1286
  %v1288 = vpop.f32.mrb[0].mxu0
  %1289 = vmatprep.mubr.bf16.mxu0 0
  %1290 = vmatmul.mubr.bf16.gmra.mrb[0].mxu0 %v984
  %v1291 = vpop.f32.mrb[0].mxu0
  %v1292 = vadd.f32 0.0, %v1291
  %v1293 = vpop.f32.mrb[0].mxu0
  %v1294 = vpop.f32.mrb[0].mxu0
  %v1295 = vadd.f32 0.0, %v1294
  %v1296 = vpop.f32.mrb[0].mxu0
  %1297 = vmatprep.mubr.bf16.mxu0 0
  %1298 = vmatmul.mubr.bf16.gmra.mrb[0].mxu0 %v985
  %v1299 = vpop.f32.mrb[0].mxu0
  %v1300 = vadd.f32 0.0, %v1299
  %v1301 = vpop.f32.mrb[0].mxu0
  %v1302 = vpop.f32.mrb[0].mxu0
  %v1303 = vadd.f32 0.0, %v1302
  %v1304 = vpop.f32.mrb[0].mxu0
  %1305 = vmatprep.mubr.bf16.mxu0 0
  %1306 = vmatmul.mubr.bf16.gmra.mrb[0].mxu0 %v986
  %v1307 = vpop.f32.mrb[0].mxu0
  %v1308 = vadd.f32 0.0, %v1307
  %v1309 = vpop.f32.mrb[0].mxu0
  %v1310 = vpop.f32.mrb[0].mxu0
  %v1311 = vadd.f32 0.0, %v1310
  %v1312 = vpop.f32.mrb[0].mxu0
  %1313 = vmatprep.mubr.bf16.mxu0 0
  %1314 = vmatmul.mubr.bf16.gmra.mrb[0].mxu0 %v987
  %v1315 = vpop.f32.mrb[0].mxu0
  %v1316 = vadd.f32 0.0, %v1315
  %v1317 = vpop.f32.mrb[0].mxu0
  %v1318 = vpop.f32.mrb[0].mxu0
  %v1319 = vadd.f32 0.0, %v1318
  %v1320 = vpop.f32.mrb[0].mxu0
  %1321 = vmatprep.mubr.bf16.mxu0 0
  %1322 = vmatmul.mubr.bf16.gmra.mrb[0].mxu0 %v988
  %v1323 = vpop.f32.mrb[0].mxu0
  %v1324 = vadd.f32 0.0, %v1323
  %v1325 = vpop.f32.mrb[0].mxu0
  %v1326 = vpop.f32.mrb[0].mxu0
  %v1327 = vadd.f32 0.0, %v1326
  %v1328 = vpop.f32.mrb[0].mxu0
  %1329 = vmatprep.mubr.bf16.mxu0 0
  %1330 = vmatmul.mubr.bf16.gmra.mrb[0].mxu0 %v989
  %v1331 = vpop.f32.mrb[0].mxu0
  %v1332 = vadd.f32 0.0, %v1331
  %v1333 = vpop.f32.mrb[0].mxu0
  %v1334 = vpop.f32.mrb[0].mxu0
  %v1335 = vadd.f32 0.0, %v1334
  %v1336 = vpop.f32.mrb[0].mxu0
  %1337 = vmatprep.mubr.bf16.mxu0 0
  %1338 = vmatmul.mubr.bf16.gmra.mrb[0].mxu0 %v990
  %v1339 = vpop.f32.mrb[0].mxu0
  %v1340 = vadd.f32 0.0, %v1339
  %v1341 = vpop.f32.mrb[0].mxu0
  %v1342 = vpop.f32.mrb[0].mxu0
  %v1343 = vadd.f32 0.0, %v1342
  %v1344 = vpop.f32.mrb[0].mxu0
  %1345 = vmatprep.mubr.bf16.mxu0 0
  %1346 = vmatmul.mubr.bf16.gmra.mrb[0].mxu0 %v991
  %v1347 = vpop.f32.mrb[0].mxu0
  %v1348 = vadd.f32 0.0, %v1347
  %v1349 = vpop.f32.mrb[0].mxu0
  %v1350 = vpop.f32.mrb[0].mxu0
  %v1351 = vadd.f32 0.0, %v1350
  %v1352 = vpop.f32.mrb[0].mxu0
  %1353 = vmatprep.mubr.bf16.mxu0 0
  %1354 = vmatmul.mubr.bf16.gmra.mrb[0].mxu0 %v992
  %v1355 = vpop.f32.mrb[0].mxu0
  %v1356 = vadd.f32 0.0, %v1355
  %v1357 = vpop.f32.mrb[0].mxu0
  %v1358 = vpop.f32.mrb[0].mxu0
  %v1359 = vadd.f32 0.0, %v1358
  %v1360 = vpop.f32.mrb[0].mxu0
  %1361 = vdwg.mxu0
  %v1362 = vpack.c.bf16 %v502, %v499
  %v1363 = vpack.c.bf16 %v510, %v507
  %v1364 = vpack.c.bf16 %v518, %v515
  %v1365 = vpack.c.bf16 %v526, %v523
  %v1366 = vpack.c.bf16 %v534, %v531
  %v1367 = vpack.c.bf16 %v542, %v539
  %v1368 = vpack.c.bf16 %v550, %v547
  %v1369 = vpack.c.bf16 %v558, %v555
  %v1370 = vpack.c.bf16 %v566, %v563
  %v1371 = vpack.c.bf16 %v574, %v571
  %v1372 = vpack.c.bf16 %v582, %v579
  %v1373 = vpack.c.bf16 %v590, %v587
  %v1374 = vpack.c.bf16 %v598, %v595
  %v1375 = vpack.c.bf16 %v606, %v603
  %v1376 = vpack.c.bf16 %v614, %v611
  %v1377 = vpack.c.bf16 %v622, %v619
  %v1378 = vpack.c.bf16 %v630, %v627
  %v1379 = vpack.c.bf16 %v638, %v635
  %v1380 = vpack.c.bf16 %v646, %v643
  %v1381 = vpack.c.bf16 %v654, %v651
  %v1382 = vpack.c.bf16 %v662, %v659
  %v1383 = vpack.c.bf16 %v670, %v667
  %v1384 = vpack.c.bf16 %v678, %v675
  %v1385 = vpack.c.bf16 %v686, %v683
  %v1386 = vpack.c.bf16 %v694, %v691
  %v1387 = vpack.c.bf16 %v702, %v699
  %v1388 = vpack.c.bf16 %v710, %v707
  %v1389 = vpack.c.bf16 %v718, %v715
  %v1390 = vpack.c.bf16 %v726, %v723
  %v1391 = vpack.c.bf16 %v734, %v731
  %v1392 = vpack.c.bf16 %v742, %v739
  %v1393 = vpack.c.bf16 %v750, %v747
  %v1426 = vunpack.c.l.b16 %v1362
  %v1427 = vunpack.c.h.b16 %v1362
  %v1428 = vunpack.c.l.b16 %v1363
  %v1429 = vunpack.c.h.b16 %v1363
  %v1430 = vunpack.c.l.b16 %v1364
  %v1431 = vunpack.c.h.b16 %v1364
  %v1432 = vunpack.c.l.b16 %v1365
  %v1433 = vunpack.c.h.b16 %v1365
  %v1434 = vunpack.c.l.b16 %v1366
  %v1435 = vunpack.c.h.b16 %v1366
  %v1436 = vunpack.c.l.b16 %v1367
  %v1437 = vunpack.c.h.b16 %v1367
  %v1438 = vunpack.c.l.b16 %v1368
  %v1439 = vunpack.c.h.b16 %v1368
  %v1440 = vunpack.c.l.b16 %v1369
  %v1441 = vunpack.c.h.b16 %v1369
  %v1442 = vunpack.c.l.b16 %v1370
  %v1443 = vunpack.c.h.b16 %v1370
  %v1444 = vunpack.c.l.b16 %v1371
  %v1445 = vunpack.c.h.b16 %v1371
  %v1446 = vunpack.c.l.b16 %v1372
  %v1447 = vunpack.c.h.b16 %v1372
  %v1448 = vunpack.c.l.b16 %v1373
  %v1449 = vunpack.c.h.b16 %v1373
  %v1450 = vunpack.c.l.b16 %v1374
  %v1451 = vunpack.c.h.b16 %v1374
  %v1452 = vunpack.c.l.b16 %v1375
  %v1453 = vunpack.c.h.b16 %v1375
  %v1454 = vunpack.c.l.b16 %v1376
  %v1455 = vunpack.c.h.b16 %v1376
  %v1456 = vunpack.c.l.b16 %v1377
  %v1457 = vunpack.c.h.b16 %v1377
  %v1458 = vunpack.c.l.b16 %v1378
  %v1459 = vunpack.c.h.b16 %v1378
  %v1460 = vunpack.c.l.b16 %v1379
  %v1461 = vunpack.c.h.b16 %v1379
  %v1462 = vunpack.c.l.b16 %v1380
  %v1463 = vunpack.c.h.b16 %v1380
  %v1464 = vunpack.c.l.b16 %v1381
  %v1465 = vunpack.c.h.b16 %v1381
  %v1466 = vunpack.c.l.b16 %v1382
  %v1467 = vunpack.c.h.b16 %v1382
  %v1468 = vunpack.c.l.b16 %v1383
  %v1469 = vunpack.c.h.b16 %v1383
  %v1470 = vunpack.c.l.b16 %v1384
  %v1471 = vunpack.c.h.b16 %v1384
  %v1472 = vunpack.c.l.b16 %v1385
  %v1473 = vunpack.c.h.b16 %v1385
  %v1474 = vunpack.c.l.b16 %v1386
  %v1475 = vunpack.c.h.b16 %v1386
  %v1476 = vunpack.c.l.b16 %v1387
  %v1477 = vunpack.c.h.b16 %v1387
  %v1478 = vunpack.c.l.b16 %v1388
  %v1479 = vunpack.c.h.b16 %v1388
  %v1480 = vunpack.c.l.b16 %v1389
  %v1481 = vunpack.c.h.b16 %v1389
  %v1482 = vunpack.c.l.b16 %v1390
  %v1483 = vunpack.c.h.b16 %v1390
  %v1484 = vunpack.c.l.b16 %v1391
  %v1485 = vunpack.c.h.b16 %v1391
  %v1486 = vunpack.c.l.b16 %v1392
  %v1487 = vunpack.c.h.b16 %v1392
  %v1488 = vunpack.c.l.b16 %v1393
  %v1489 = vunpack.c.h.b16 %v1393
  %v1490 = vpack.c.b16 %v1426, %v1426
  %v1491 = vpack.c.b16 %v1427, %v1427
  %v1492 = vpack.c.b16 %v1428, %v1428
  %v1493 = vpack.c.b16 %v1429, %v1429
  %v1494 = vpack.c.b16 %v1430, %v1430
  %v1495 = vpack.c.b16 %v1431, %v1431
  %v1496 = vpack.c.b16 %v1432, %v1432
  %v1497 = vpack.c.b16 %v1433, %v1433
  %v1498 = vpack.c.b16 %v1434, %v1434
  %v1499 = vpack.c.b16 %v1435, %v1435
  %v1500 = vpack.c.b16 %v1436, %v1436
  %v1501 = vpack.c.b16 %v1437, %v1437
  %v1502 = vpack.c.b16 %v1438, %v1438
  %v1503 = vpack.c.b16 %v1439, %v1439
  %v1504 = vpack.c.b16 %v1440, %v1440
  %v1505 = vpack.c.b16 %v1441, %v1441
  %v1506 = vpack.c.b16 %v1442, %v1442
  %v1507 = vpack.c.b16 %v1443, %v1443
  %v1508 = vpack.c.b16 %v1444, %v1444
  %v1509 = vpack.c.b16 %v1445, %v1445
  %v1510 = vpack.c.b16 %v1446, %v1446
  %v1511 = vpack.c.b16 %v1447, %v1447
  %v1512 = vpack.c.b16 %v1448, %v1448
  %v1513 = vpack.c.b16 %v1449, %v1449
  %v1514 = vpack.c.b16 %v1450, %v1450
  %v1515 = vpack.c.b16 %v1451, %v1451
  %v1516 = vpack.c.b16 %v1452, %v1452
  %v1517 = vpack.c.b16 %v1453, %v1453
  %v1518 = vpack.c.b16 %v1454, %v1454
  %v1519 = vpack.c.b16 %v1455, %v1455
  %v1520 = vpack.c.b16 %v1456, %v1456
  %v1521 = vpack.c.b16 %v1457, %v1457
  %v1522 = vpack.c.b16 %v1458, %v1458
  %v1523 = vpack.c.b16 %v1459, %v1459
  %v1524 = vpack.c.b16 %v1460, %v1460
  %v1525 = vpack.c.b16 %v1461, %v1461
  %v1526 = vpack.c.b16 %v1462, %v1462
  %v1527 = vpack.c.b16 %v1463, %v1463
  %v1528 = vpack.c.b16 %v1464, %v1464
  %v1529 = vpack.c.b16 %v1465, %v1465
  %v1530 = vpack.c.b16 %v1466, %v1466
  %v1531 = vpack.c.b16 %v1467, %v1467
  %v1532 = vpack.c.b16 %v1468, %v1468
  %v1533 = vpack.c.b16 %v1469, %v1469
  %v1534 = vpack.c.b16 %v1470, %v1470
  %v1535 = vpack.c.b16 %v1471, %v1471
  %v1536 = vpack.c.b16 %v1472, %v1472
  %v1537 = vpack.c.b16 %v1473, %v1473
  %v1538 = vpack.c.b16 %v1474, %v1474
  %v1539 = vpack.c.b16 %v1475, %v1475
  %v1540 = vpack.c.b16 %v1476, %v1476
  %v1541 = vpack.c.b16 %v1477, %v1477
  %v1542 = vpack.c.b16 %v1478, %v1478
  %v1543 = vpack.c.b16 %v1479, %v1479
  %v1544 = vpack.c.b16 %v1480, %v1480
  %v1545 = vpack.c.b16 %v1481, %v1481
  %v1546 = vpack.c.b16 %v1482, %v1482
  %v1547 = vpack.c.b16 %v1483, %v1483
  %v1548 = vpack.c.b16 %v1484, %v1484
  %v1549 = vpack.c.b16 %v1485, %v1485
  %v1550 = vpack.c.b16 %v1486, %v1486
  %v1551 = vpack.c.b16 %v1487, %v1487
  %v1552 = vpack.c.b16 %v1488, %v1488
  %v1553 = vpack.c.b16 %v1489, %v1489
  %1618 = vst [vmem:[%s6] sm:$0xf] %v1490
  %1619 = vst [vmem:[%s6 + $0x4] sm:$0xf] %v1491
  %1620 = vst [vmem:[%s6 + $0x8] sm:$0xf] %v1492
  %1621 = vst [vmem:[%s6 + $0xc] sm:$0xf] %v1493
  %1622 = vst [vmem:[%s6 + $0x10] sm:$0xf] %v1494
  %1623 = vst [vmem:[%s6 + $0x14] sm:$0xf] %v1495
  %1624 = vst [vmem:[%s6 + $0x18] sm:$0xf] %v1496
  %1625 = vst [vmem:[%s6 + $0x1c] sm:$0xf] %v1497
  %1626 = vst [vmem:[%s6 + $0x20] sm:$0xf] %v1498
  %1627 = vst [vmem:[%s6 + $0x24] sm:$0xf] %v1499
  %1628 = vst [vmem:[%s6 + $0x28] sm:$0xf] %v1500
  %1629 = vst [vmem:[%s6 + $0x2c] sm:$0xf] %v1501
  %1630 = vst [vmem:[%s6 + $0x30] sm:$0xf] %v1502
  %1631 = vst [vmem:[%s6 + $0x34] sm:$0xf] %v1503
  %1632 = vst [vmem:[%s6 + $0x38] sm:$0xf] %v1504
  %1633 = vst [vmem:[%s6 + $0x3c] sm:$0xf] %v1505
  %1634 = vst [vmem:[%s6 + $0x40] sm:$0xf] %v1506
  %1635 = vst [vmem:[%s6 + $0x44] sm:$0xf] %v1507
  %1636 = vst [vmem:[%s6 + $0x48] sm:$0xf] %v1508
  %1637 = vst [vmem:[%s6 + $0x4c] sm:$0xf] %v1509
  %1638 = vst [vmem:[%s6 + $0x50] sm:$0xf] %v1510
  %1639 = vst [vmem:[%s6 + $0x54] sm:$0xf] %v1511
  %1640 = vst [vmem:[%s6 + $0x58] sm:$0xf] %v1512
  %1641 = vst [vmem:[%s6 + $0x5c] sm:$0xf] %v1513
  %1642 = vst [vmem:[%s6 + $0x60] sm:$0xf] %v1514
  %1643 = vst [vmem:[%s6 + $0x64] sm:$0xf] %v1515
  %1644 = vst [vmem:[%s6 + $0x68] sm:$0xf] %v1516
  %1645 = vst [vmem:[%s6 + $0x6c] sm:$0xf] %v1517
  %1646 = vst [vmem:[%s6 + $0x70] sm:$0xf] %v1518
  %1647 = vst [vmem:[%s6 + $0x74] sm:$0xf] %v1519
  %1648 = vst [vmem:[%s6 + $0x78] sm:$0xf] %v1520
  %1649 = vst [vmem:[%s6 + $0x7c] sm:$0xf] %v1521
  %1650 = vst [vmem:[%s6 + $0x80] sm:$0xf] %v1522
  %1651 = vst [vmem:[%s6 + $0x84] sm:$0xf] %v1523
  %1652 = vst [vmem:[%s6 + $0x88] sm:$0xf] %v1524
  %1653 = vst [vmem:[%s6 + $0x8c] sm:$0xf] %v1525
  %1654 = vst [vmem:[%s6 + $0x90] sm:$0xf] %v1526
  %1655 = vst [vmem:[%s6 + $0x94] sm:$0xf] %v1527
  %1656 = vst [vmem:[%s6 + $0x98] sm:$0xf] %v1528
  %1657 = vst [vmem:[%s6 + $0x9c] sm:$0xf] %v1529
  %1658 = vst [vmem:[%s6 + $0xa0] sm:$0xf] %v1530
  %1659 = vst [vmem:[%s6 + $0xa4] sm:$0xf] %v1531
  %1660 = vst [vmem:[%s6 + $0xa8] sm:$0xf] %v1532
  %1661 = vst [vmem:[%s6 + $0xac] sm:$0xf] %v1533
  %1662 = vst [vmem:[%s6 + $0xb0] sm:$0xf] %v1534
  %1663 = vst [vmem:[%s6 + $0xb4] sm:$0xf] %v1535
  %1664 = vst [vmem:[%s6 + $0xb8] sm:$0xf] %v1536
  %1665 = vst [vmem:[%s6 + $0xbc] sm:$0xf] %v1537
  %1666 = vst [vmem:[%s6 + $0xc0] sm:$0xf] %v1538
  %1667 = vst [vmem:[%s6 + $0xc4] sm:$0xf] %v1539
  %1668 = vst [vmem:[%s6 + $0xc8] sm:$0xf] %v1540
  %1669 = vst [vmem:[%s6 + $0xcc] sm:$0xf] %v1541
  %1670 = vst [vmem:[%s6 + $0xd0] sm:$0xf] %v1542
  %1671 = vst [vmem:[%s6 + $0xd4] sm:$0xf] %v1543
  %1672 = vst [vmem:[%s6 + $0xd8] sm:$0xf] %v1544
  %1673 = vst [vmem:[%s6 + $0xdc] sm:$0xf] %v1545
  %1674 = vst [vmem:[%s6 + $0xe0] sm:$0xf] %v1546
  %1675 = vst [vmem:[%s6 + $0xe4] sm:$0xf] %v1547
  %1676 = vst [vmem:[%s6 + $0xe8] sm:$0xf] %v1548
  %1677 = vst [vmem:[%s6 + $0xec] sm:$0xf] %v1549
  %1678 = vst [vmem:[%s6 + $0xf0] sm:$0xf] %v1550
  %1679 = vst [vmem:[%s6 + $0xf4] sm:$0xf] %v1551
  %1680 = vst [vmem:[%s6 + $0xf8] sm:$0xf] %v1552
  %1681 = vst [vmem:[%s6 + $0xfc] sm:$0xf] %v1553
  %v1682 = vpack.c.bf16 %v1111, %v1108
  %v1683 = vpack.c.bf16 %v1119, %v1116
  %v1684 = vpack.c.bf16 %v1127, %v1124
  %v1685 = vpack.c.bf16 %v1135, %v1132
  %v1686 = vpack.c.bf16 %v1143, %v1140
  %v1687 = vpack.c.bf16 %v1151, %v1148
  %v1688 = vpack.c.bf16 %v1159, %v1156
  %v1689 = vpack.c.bf16 %v1167, %v1164
  %v1690 = vpack.c.bf16 %v1175, %v1172
  %v1691 = vpack.c.bf16 %v1183, %v1180
  %v1692 = vpack.c.bf16 %v1191, %v1188
  %v1693 = vpack.c.bf16 %v1199, %v1196
  %v1694 = vpack.c.bf16 %v1207, %v1204
  %v1695 = vpack.c.bf16 %v1215, %v1212
  %v1696 = vpack.c.bf16 %v1223, %v1220
  %v1697 = vpack.c.bf16 %v1231, %v1228
  %v1698 = vpack.c.bf16 %v1239, %v1236
  %v1699 = vpack.c.bf16 %v1247, %v1244
  %v1700 = vpack.c.bf16 %v1255, %v1252
  %v1701 = vpack.c.bf16 %v1263, %v1260
  %v1702 = vpack.c.bf16 %v1271, %v1268
  %v1703 = vpack.c.bf16 %v1279, %v1276
  %v1704 = vpack.c.bf16 %v1287, %v1284
  %v1705 = vpack.c.bf16 %v1295, %v1292
  %v1706 = vpack.c.bf16 %v1303, %v1300
  %v1707 = vpack.c.bf16 %v1311, %v1308
  %v1708 = vpack.c.bf16 %v1319, %v1316
  %v1709 = vpack.c.bf16 %v1327, %v1324
  %v1710 = vpack.c.bf16 %v1335, %v1332
  %v1711 = vpack.c.bf16 %v1343, %v1340
  %v1712 = vpack.c.bf16 %v1351, %v1348
  %v1713 = vpack.c.bf16 %v1359, %v1356
  %v1746 = vunpack.c.l.b16 %v1682
  %v1747 = vunpack.c.h.b16 %v1682
  %v1748 = vunpack.c.l.b16 %v1683
  %v1749 = vunpack.c.h.b16 %v1683
  %v1750 = vunpack.c.l.b16 %v1684
  %v1751 = vunpack.c.h.b16 %v1684
  %v1752 = vunpack.c.l.b16 %v1685
  %v1753 = vunpack.c.h.b16 %v1685
  %v1754 = vunpack.c.l.b16 %v1686
  %v1755 = vunpack.c.h.b16 %v1686
  %v1756 = vunpack.c.l.b16 %v1687
  %v1757 = vunpack.c.h.b16 %v1687
  %v1758 = vunpack.c.l.b16 %v1688
  %v1759 = vunpack.c.h.b16 %v1688
  %v1760 = vunpack.c.l.b16 %v1689
  %v1761 = vunpack.c.h.b16 %v1689
  %v1762 = vunpack.c.l.b16 %v1690
  %v1763 = vunpack.c.h.b16 %v1690
  %v1764 = vunpack.c.l.b16 %v1691
  %v1765 = vunpack.c.h.b16 %v1691
  %v1766 = vunpack.c.l.b16 %v1692
  %v1767 = vunpack.c.h.b16 %v1692
  %v1768 = vunpack.c.l.b16 %v1693
  %v1769 = vunpack.c.h.b16 %v1693
  %v1770 = vunpack.c.l.b16 %v1694
  %v1771 = vunpack.c.h.b16 %v1694
  %v1772 = vunpack.c.l.b16 %v1695
  %v1773 = vunpack.c.h.b16 %v1695
  %v1774 = vunpack.c.l.b16 %v1696
  %v1775 = vunpack.c.h.b16 %v1696
  %v1776 = vunpack.c.l.b16 %v1697
  %v1777 = vunpack.c.h.b16 %v1697
  %v1778 = vunpack.c.l.b16 %v1698
  %v1779 = vunpack.c.h.b16 %v1698
  %v1780 = vunpack.c.l.b16 %v1699
  %v1781 = vunpack.c.h.b16 %v1699
  %v1782 = vunpack.c.l.b16 %v1700
  %v1783 = vunpack.c.h.b16 %v1700
  %v1784 = vunpack.c.l.b16 %v1701
  %v1785 = vunpack.c.h.b16 %v1701
  %v1786 = vunpack.c.l.b16 %v1702
  %v1787 = vunpack.c.h.b16 %v1702
  %v1788 = vunpack.c.l.b16 %v1703
  %v1789 = vunpack.c.h.b16 %v1703
  %v1790 = vunpack.c.l.b16 %v1704
  %v1791 = vunpack.c.h.b16 %v1704
  %v1792 = vunpack.c.l.b16 %v1705
  %v1793 = vunpack.c.h.b16 %v1705
  %v1794 = vunpack.c.l.b16 %v1706
  %v1795 = vunpack.c.h.b16 %v1706
  %v1796 = vunpack.c.l.b16 %v1707
  %v1797 = vunpack.c.h.b16 %v1707
  %v1798 = vunpack.c.l.b16 %v1708
  %v1799 = vunpack.c.h.b16 %v1708
  %v1800 = vunpack.c.l.b16 %v1709
  %v1801 = vunpack.c.h.b16 %v1709
  %v1802 = vunpack.c.l.b16 %v1710
  %v1803 = vunpack.c.h.b16 %v1710
  %v1804 = vunpack.c.l.b16 %v1711
  %v1805 = vunpack.c.h.b16 %v1711
  %v1806 = vunpack.c.l.b16 %v1712
  %v1807 = vunpack.c.h.b16 %v1712
  %v1808 = vunpack.c.l.b16 %v1713
  %v1809 = vunpack.c.h.b16 %v1713
  %v1810 = vpack.c.b16 %v1746, %v1746
  %v1811 = vpack.c.b16 %v1747, %v1747
  %v1812 = vpack.c.b16 %v1748, %v1748
  %v1813 = vpack.c.b16 %v1749, %v1749
  %v1814 = vpack.c.b16 %v1750, %v1750
  %v1815 = vpack.c.b16 %v1751, %v1751
  %v1816 = vpack.c.b16 %v1752, %v1752
  %v1817 = vpack.c.b16 %v1753, %v1753
  %v1818 = vpack.c.b16 %v1754, %v1754
  %v1819 = vpack.c.b16 %v1755, %v1755
  %v1820 = vpack.c.b16 %v1756, %v1756
  %v1821 = vpack.c.b16 %v1757, %v1757
  %v1822 = vpack.c.b16 %v1758, %v1758
  %v1823 = vpack.c.b16 %v1759, %v1759
  %v1824 = vpack.c.b16 %v1760, %v1760
  %v1825 = vpack.c.b16 %v1761, %v1761
  %v1826 = vpack.c.b16 %v1762, %v1762
  %v1827 = vpack.c.b16 %v1763, %v1763
  %v1828 = vpack.c.b16 %v1764, %v1764
  %v1829 = vpack.c.b16 %v1765, %v1765
  %v1830 = vpack.c.b16 %v1766, %v1766
  %v1831 = vpack.c.b16 %v1767, %v1767
  %v1832 = vpack.c.b16 %v1768, %v1768
  %v1833 = vpack.c.b16 %v1769, %v1769
  %v1834 = vpack.c.b16 %v1770, %v1770
  %v1835 = vpack.c.b16 %v1771, %v1771
  %v1836 = vpack.c.b16 %v1772, %v1772
  %v1837 = vpack.c.b16 %v1773, %v1773
  %v1838 = vpack.c.b16 %v1774, %v1774
  %v1839 = vpack.c.b16 %v1775, %v1775
  %v1840 = vpack.c.b16 %v1776, %v1776
  %v1841 = vpack.c.b16 %v1777, %v1777
  %v1842 = vpack.c.b16 %v1778, %v1778
  %v1843 = vpack.c.b16 %v1779, %v1779
  %v1844 = vpack.c.b16 %v1780, %v1780
  %v1845 = vpack.c.b16 %v1781, %v1781
  %v1846 = vpack.c.b16 %v1782, %v1782
  %v1847 = vpack.c.b16 %v1783, %v1783
  %v1848 = vpack.c.b16 %v1784, %v1784
  %v1849 = vpack.c.b16 %v1785, %v1785
  %v1850 = vpack.c.b16 %v1786, %v1786
  %v1851 = vpack.c.b16 %v1787, %v1787
  %v1852 = vpack.c.b16 %v1788, %v1788
  %v1853 = vpack.c.b16 %v1789, %v1789
  %v1854 = vpack.c.b16 %v1790, %v1790
  %v1855 = vpack.c.b16 %v1791, %v1791
  %v1856 = vpack.c.b16 %v1792, %v1792
  %v1857 = vpack.c.b16 %v1793, %v1793
  %v1858 = vpack.c.b16 %v1794, %v1794
  %v1859 = vpack.c.b16 %v1795, %v1795
  %v1860 = vpack.c.b16 %v1796, %v1796
  %v1861 = vpack.c.b16 %v1797, %v1797
  %v1862 = vpack.c.b16 %v1798, %v1798
  %v1863 = vpack.c.b16 %v1799, %v1799
  %v1864 = vpack.c.b16 %v1800, %v1800
  %v1865 = vpack.c.b16 %v1801, %v1801
  %v1866 = vpack.c.b16 %v1802, %v1802
  %v1867 = vpack.c.b16 %v1803, %v1803
  %v1868 = vpack.c.b16 %v1804, %v1804
  %v1869 = vpack.c.b16 %v1805, %v1805
  %v1870 = vpack.c.b16 %v1806, %v1806
  %v1871 = vpack.c.b16 %v1807, %v1807
  %v1872 = vpack.c.b16 %v1808, %v1808
  %v1873 = vpack.c.b16 %v1809, %v1809
  %1938 = vst [vmem:[%s7] sm:$0xf] %v1810
  %1939 = vst [vmem:[%s7 + $0x4] sm:$0xf] %v1811
  %1940 = vst [vmem:[%s7 + $0x8] sm:$0xf] %v1812
  %1941 = vst [vmem:[%s7 + $0xc] sm:$0xf] %v1813
  %1942 = vst [vmem:[%s7 + $0x10] sm:$0xf] %v1814
  %1943 = vst [vmem:[%s7 + $0x14] sm:$0xf] %v1815
  %1944 = vst [vmem:[%s7 + $0x18] sm:$0xf] %v1816
  %1945 = vst [vmem:[%s7 + $0x1c] sm:$0xf] %v1817
  %1946 = vst [vmem:[%s7 + $0x20] sm:$0xf] %v1818
  %1947 = vst [vmem:[%s7 + $0x24] sm:$0xf] %v1819
  %1948 = vst [vmem:[%s7 + $0x28] sm:$0xf] %v1820
  %1949 = vst [vmem:[%s7 + $0x2c] sm:$0xf] %v1821
  %1950 = vst [vmem:[%s7 + $0x30] sm:$0xf] %v1822
  %1951 = vst [vmem:[%s7 + $0x34] sm:$0xf] %v1823
  %1952 = vst [vmem:[%s7 + $0x38] sm:$0xf] %v1824
  %1953 = vst [vmem:[%s7 + $0x3c] sm:$0xf] %v1825
  %1954 = vst [vmem:[%s7 + $0x40] sm:$0xf] %v1826
  %1955 = vst [vmem:[%s7 + $0x44] sm:$0xf] %v1827
  %1956 = vst [vmem:[%s7 + $0x48] sm:$0xf] %v1828
  %1957 = vst [vmem:[%s7 + $0x4c] sm:$0xf] %v1829
  %1958 = vst [vmem:[%s7 + $0x50] sm:$0xf] %v1830
  %1959 = vst [vmem:[%s7 + $0x54] sm:$0xf] %v1831
  %1960 = vst [vmem:[%s7 + $0x58] sm:$0xf] %v1832
  %1961 = vst [vmem:[%s7 + $0x5c] sm:$0xf] %v1833
  %1962 = vst [vmem:[%s7 + $0x60] sm:$0xf] %v1834
  %1963 = vst [vmem:[%s7 + $0x64] sm:$0xf] %v1835
  %1964 = vst [vmem:[%s7 + $0x68] sm:$0xf] %v1836
  %1965 = vst [vmem:[%s7 + $0x6c] sm:$0xf] %v1837
  %1966 = vst [vmem:[%s7 + $0x70] sm:$0xf] %v1838
  %1967 = vst [vmem:[%s7 + $0x74] sm:$0xf] %v1839
  %1968 = vst [vmem:[%s7 + $0x78] sm:$0xf] %v1840
  %1969 = vst [vmem:[%s7 + $0x7c] sm:$0xf] %v1841
  %1970 = vst [vmem:[%s7 + $0x80] sm:$0xf] %v1842
  %1971 = vst [vmem:[%s7 + $0x84] sm:$0xf] %v1843
  %1972 = vst [vmem:[%s7 + $0x88] sm:$0xf] %v1844
  %1973 = vst [vmem:[%s7 + $0x8c] sm:$0xf] %v1845
  %1974 = vst [vmem:[%s7 + $0x90] sm:$0xf] %v1846
  %1975 = vst [vmem:[%s7 + $0x94] sm:$0xf] %v1847
  %1976 = vst [vmem:[%s7 + $0x98] sm:$0xf] %v1848
  %1977 = vst [vmem:[%s7 + $0x9c] sm:$0xf] %v1849
  %1978 = vst [vmem:[%s7 + $0xa0] sm:$0xf] %v1850
  %1979 = vst [vmem:[%s7 + $0xa4] sm:$0xf] %v1851
  %1980 = vst [vmem:[%s7 + $0xa8] sm:$0xf] %v1852
  %1981 = vst [vmem:[%s7 + $0xac] sm:$0xf] %v1853
  %1982 = vst [vmem:[%s7 + $0xb0] sm:$0xf] %v1854
  %1983 = vst [vmem:[%s7 + $0xb4] sm:$0xf] %v1855
  %1984 = vst [vmem:[%s7 + $0xb8] sm:$0xf] %v1856
  %1985 = vst [vmem:[%s7 + $0xbc] sm:$0xf] %v1857
  %1986 = vst [vmem:[%s7 + $0xc0] sm:$0xf] %v1858
  %1987 = vst [vmem:[%s7 + $0xc4] sm:$0xf] %v1859
  %1988 = vst [vmem:[%s7 + $0xc8] sm:$0xf] %v1860
  %1989 = vst [vmem:[%s7 + $0xcc] sm:$0xf] %v1861
  %1990 = vst [vmem:[%s7 + $0xd0] sm:$0xf] %v1862
  %1991 = vst [vmem:[%s7 + $0xd4] sm:$0xf] %v1863
  %1992 = vst [vmem:[%s7 + $0xd8] sm:$0xf] %v1864
  %1993 = vst [vmem:[%s7 + $0xdc] sm:$0xf] %v1865
  %1994 = vst [vmem:[%s7 + $0xe0] sm:$0xf] %v1866
  %1995 = vst [vmem:[%s7 + $0xe4] sm:$0xf] %v1867
  %1996 = vst [vmem:[%s7 + $0xe8] sm:$0xf] %v1868
  %1997 = vst [vmem:[%s7 + $0xec] sm:$0xf] %v1869
  %1998 = vst [vmem:[%s7 + $0xf0] sm:$0xf] %v1870
  %1999 = vst [vmem:[%s7 + $0xf4] sm:$0xf] %v1871
  %2000 = vst [vmem:[%s7 + $0xf8] sm:$0xf] %v1872
  %2001 = vst [vmem:[%s7 + $0xfc] sm:$0xf] %v1873
  %v2002 = vld [vmem:[%s8] sm:$0x1]
  %v2003 = vadd.f32 %v499, %v502
  %v2004 = vadd.f32 %v2003, %v507
  %v2005 = vadd.f32 %v2004, %v510
  %v2006 = vadd.f32 %v2005, %v515
  %v2007 = vadd.f32 %v2006, %v518
  %v2008 = vadd.f32 %v2007, %v523
  %v2009 = vadd.f32 %v2008, %v526
  %v2010 = vadd.f32 %v2009, %v531
  %v2011 = vadd.f32 %v2010, %v534
  %v2012 = vadd.f32 %v2011, %v539
  %v2013 = vadd.f32 %v2012, %v542
  %v2014 = vadd.f32 %v2013, %v547
  %v2015 = vadd.f32 %v2014, %v550
  %v2016 = vadd.f32 %v2015, %v555
  %v2017 = vadd.f32 %v2016, %v558
  %v2018 = vadd.f32 %v2017, %v563
  %v2019 = vadd.f32 %v2018, %v566
  %v2020 = vadd.f32 %v2019, %v571
  %v2021 = vadd.f32 %v2020, %v574
  %v2022 = vadd.f32 %v2021, %v579
  %v2023 = vadd.f32 %v2022, %v582
  %v2024 = vadd.f32 %v2023, %v587
  %v2025 = vadd.f32 %v2024, %v590
  %v2026 = vadd.f32 %v2025, %v595
  %v2027 = vadd.f32 %v2026, %v598
  %v2028 = vadd.f32 %v2027, %v603
  %v2029 = vadd.f32 %v2028, %v606
  %v2030 = vadd.f32 %v2029, %v611
  %v2031 = vadd.f32 %v2030, %v614
  %v2032 = vadd.f32 %v2031, %v619
  %v2033 = vadd.f32 %v2032, %v622
  %v2034 = vadd.f32 %v2033, %v627
  %v2035 = vadd.f32 %v2034, %v630
  %v2036 = vadd.f32 %v2035, %v635
  %v2037 = vadd.f32 %v2036, %v638
  %v2038 = vadd.f32 %v2037, %v643
  %v2039 = vadd.f32 %v2038, %v646
  %v2040 = vadd.f32 %v2039, %v651
  %v2041 = vadd.f32 %v2040, %v654
  %v2042 = vadd.f32 %v2041, %v659
  %v2043 = vadd.f32 %v2042, %v662
  %v2044 = vadd.f32 %v2043, %v667
  %v2045 = vadd.f32 %v2044, %v670
  %v2046 = vadd.f32 %v2045, %v675
  %v2047 = vadd.f32 %v2046, %v678
  %v2048 = vadd.f32 %v2047, %v683
  %v2049 = vadd.f32 %v2048, %v686
  %v2050 = vadd.f32 %v2049, %v691
  %v2051 = vadd.f32 %v2050, %v694
  %v2052 = vadd.f32 %v2051, %v699
  %v2053 = vadd.f32 %v2052, %v702
  %v2054 = vadd.f32 %v2053, %v707
  %v2055 = vadd.f32 %v2054, %v710
  %v2056 = vadd.f32 %v2055, %v715
  %v2057 = vadd.f32 %v2056, %v718
  %v2058 = vadd.f32 %v2057, %v723
  %v2059 = vadd.f32 %v2058, %v726
  %v2060 = vadd.f32 %v2059, %v731
  %v2061 = vadd.f32 %v2060, %v734
  %v2062 = vadd.f32 %v2061, %v739
  %v2063 = vadd.f32 %v2062, %v742
  %v2064 = vadd.f32 %v2063, %v747
  %v2065 = vadd.f32 %v2064, %v750
  %v2066 = vrot.slane %v2065, 4
  %v2067 = vadd.f32 %v2065, %v2066
  %v2068 = vrot.slane %v2067, 2
  %v2069 = vadd.f32 %v2067, %v2068
  %v2070 = vrot.slane %v2069, 1
  %v2071 = vadd.f32 %v2069, %v2070
  %v2072 = vadd.f32 %v2002, %v2071
  %2073 = vst [vmem:[%s8] sm:$0x1] %v2072
  %v2074 = vld [vmem:[%s8 + $0x1] sm:$0x1]
  %v2075 = vmul.f32 %v499, %v499
  %v2076 = vmul.f32 %v502, %v502
  %v2077 = vmul.f32 %v507, %v507
  %v2078 = vmul.f32 %v510, %v510
  %v2079 = vmul.f32 %v515, %v515
  %v2080 = vmul.f32 %v518, %v518
  %v2081 = vmul.f32 %v523, %v523
  %v2082 = vmul.f32 %v526, %v526
  %v2083 = vmul.f32 %v531, %v531
  %v2084 = vmul.f32 %v534, %v534
  %v2085 = vmul.f32 %v539, %v539
  %v2086 = vmul.f32 %v542, %v542
  %v2087 = vmul.f32 %v547, %v547
  %v2088 = vmul.f32 %v550, %v550
  %v2089 = vmul.f32 %v555, %v555
  %v2090 = vmul.f32 %v558, %v558
  %v2091 = vmul.f32 %v563, %v563
  %v2092 = vmul.f32 %v566, %v566
  %v2093 = vmul.f32 %v571, %v571
  %v2094 = vmul.f32 %v574, %v574
  %v2095 = vmul.f32 %v579, %v579
  %v2096 = vmul.f32 %v582, %v582
  %v2097 = vmul.f32 %v587, %v587
  %v2098 = vmul.f32 %v590, %v590
  %v2099 = vmul.f32 %v595, %v595
  %v2100 = vmul.f32 %v598, %v598
  %v2101 = vmul.f32 %v603, %v603
  %v2102 = vmul.f32 %v606, %v606
  %v2103 = vmul.f32 %v611, %v611
  %v2104 = vmul.f32 %v614, %v614
  %v2105 = vmul.f32 %v619, %v619
  %v2106 = vmul.f32 %v622, %v622
  %v2107 = vmul.f32 %v627, %v627
  %v2108 = vmul.f32 %v630, %v630
  %v2109 = vmul.f32 %v635, %v635
  %v2110 = vmul.f32 %v638, %v638
  %v2111 = vmul.f32 %v643, %v643
  %v2112 = vmul.f32 %v646, %v646
  %v2113 = vmul.f32 %v651, %v651
  %v2114 = vmul.f32 %v654, %v654
  %v2115 = vmul.f32 %v659, %v659
  %v2116 = vmul.f32 %v662, %v662
  %v2117 = vmul.f32 %v667, %v667
  %v2118 = vmul.f32 %v670, %v670
  %v2119 = vmul.f32 %v675, %v675
  %v2120 = vmul.f32 %v678, %v678
  %v2121 = vmul.f32 %v683, %v683
  %v2122 = vmul.f32 %v686, %v686
  %v2123 = vmul.f32 %v691, %v691
  %v2124 = vmul.f32 %v694, %v694
  %v2125 = vmul.f32 %v699, %v699
  %v2126 = vmul.f32 %v702, %v702
  %v2127 = vmul.f32 %v707, %v707
  %v2128 = vmul.f32 %v710, %v710
  %v2129 = vmul.f32 %v715, %v715
  %v2130 = vmul.f32 %v718, %v718
  %v2131 = vmul.f32 %v723, %v723
  %v2132 = vmul.f32 %v726, %v726
  %v2133 = vmul.f32 %v731, %v731
  %v2134 = vmul.f32 %v734, %v734
  %v2135 = vmul.f32 %v739, %v739
  %v2136 = vmul.f32 %v742, %v742
  %v2137 = vmul.f32 %v747, %v747
  %v2138 = vmul.f32 %v750, %v750
  %v2139 = vadd.f32 %v2075, %v2076
  %v2140 = vadd.f32 %v2139, %v2077
  %v2141 = vadd.f32 %v2140, %v2078
  %v2142 = vadd.f32 %v2141, %v2079
  %v2143 = vadd.f32 %v2142, %v2080
  %v2144 = vadd.f32 %v2143, %v2081
  %v2145 = vadd.f32 %v2144, %v2082
  %v2146 = vadd.f32 %v2145, %v2083
  %v2147 = vadd.f32 %v2146, %v2084
  %v2148 = vadd.f32 %v2147, %v2085
  %v2149 = vadd.f32 %v2148, %v2086
  %v2150 = vadd.f32 %v2149, %v2087
  %v2151 = vadd.f32 %v2150, %v2088
  %v2152 = vadd.f32 %v2151, %v2089
  %v2153 = vadd.f32 %v2152, %v2090
  %v2154 = vadd.f32 %v2153, %v2091
  %v2155 = vadd.f32 %v2154, %v2092
  %v2156 = vadd.f32 %v2155, %v2093
  %v2157 = vadd.f32 %v2156, %v2094
  %v2158 = vadd.f32 %v2157, %v2095
  %v2159 = vadd.f32 %v2158, %v2096
  %v2160 = vadd.f32 %v2159, %v2097
  %v2161 = vadd.f32 %v2160, %v2098
  %v2162 = vadd.f32 %v2161, %v2099
  %v2163 = vadd.f32 %v2162, %v2100
  %v2164 = vadd.f32 %v2163, %v2101
  %v2165 = vadd.f32 %v2164, %v2102
  %v2166 = vadd.f32 %v2165, %v2103
  %v2167 = vadd.f32 %v2166, %v2104
  %v2168 = vadd.f32 %v2167, %v2105
  %v2169 = vadd.f32 %v2168, %v2106
  %v2170 = vadd.f32 %v2169, %v2107
  %v2171 = vadd.f32 %v2170, %v2108
  %v2172 = vadd.f32 %v2171, %v2109
  %v2173 = vadd.f32 %v2172, %v2110
  %v2174 = vadd.f32 %v2173, %v2111
  %v2175 = vadd.f32 %v2174, %v2112
  %v2176 = vadd.f32 %v2175, %v2113
  %v2177 = vadd.f32 %v2176, %v2114
  %v2178 = vadd.f32 %v2177, %v2115
  %v2179 = vadd.f32 %v2178, %v2116
  %v2180 = vadd.f32 %v2179, %v2117
  %v2181 = vadd.f32 %v2180, %v2118
  %v2182 = vadd.f32 %v2181, %v2119
  %v2183 = vadd.f32 %v2182, %v2120
  %v2184 = vadd.f32 %v2183, %v2121
  %v2185 = vadd.f32 %v2184, %v2122
  %v2186 = vadd.f32 %v2185, %v2123
  %v2187 = vadd.f32 %v2186, %v2124
  %v2188 = vadd.f32 %v2187, %v2125
  %v2189 = vadd.f32 %v2188, %v2126
  %v2190 = vadd.f32 %v2189, %v2127
  %v2191 = vadd.f32 %v2190, %v2128
  %v2192 = vadd.f32 %v2191, %v2129
  %v2193 = vadd.f32 %v2192, %v2130
  %v2194 = vadd.f32 %v2193, %v2131
  %v2195 = vadd.f32 %v2194, %v2132
  %v2196 = vadd.f32 %v2195, %v2133
  %v2197 = vadd.f32 %v2196, %v2134
  %v2198 = vadd.f32 %v2197, %v2135
  %v2199 = vadd.f32 %v2198, %v2136
  %v2200 = vadd.f32 %v2199, %v2137
  %v2201 = vadd.f32 %v2200, %v2138
  %v2202 = vrot.slane %v2201, 4
  %v2203 = vadd.f32 %v2201, %v2202
  %v2204 = vrot.slane %v2203, 2
  %v2205 = vadd.f32 %v2203, %v2204
  %v2206 = vrot.slane %v2205, 1
  %v2207 = vadd.f32 %v2205, %v2206
  %v2208 = vadd.f32 %v2074, %v2207
  %2209 = vst [vmem:[%s8 + $0x1] sm:$0x1] %v2208
  %v2210 = vld [vmem:[%s9] sm:$0x1]
  %v2211 = vadd.f32 %v1108, %v1111
  %v2212 = vadd.f32 %v2211, %v1116
  %v2213 = vadd.f32 %v2212, %v1119
  %v2214 = vadd.f32 %v2213, %v1124
  %v2215 = vadd.f32 %v2214, %v1127
  %v2216 = vadd.f32 %v2215, %v1132
  %v2217 = vadd.f32 %v2216, %v1135
  %v2218 = vadd.f32 %v2217, %v1140
  %v2219 = vadd.f32 %v2218, %v1143
  %v2220 = vadd.f32 %v2219, %v1148
  %v2221 = vadd.f32 %v2220, %v1151
  %v2222 = vadd.f32 %v2221, %v1156
  %v2223 = vadd.f32 %v2222, %v1159
  %v2224 = vadd.f32 %v2223, %v1164
  %v2225 = vadd.f32 %v2224, %v1167
  %v2226 = vadd.f32 %v2225, %v1172
  %v2227 = vadd.f32 %v2226, %v1175
  %v2228 = vadd.f32 %v2227, %v1180
  %v2229 = vadd.f32 %v2228, %v1183
  %v2230 = vadd.f32 %v2229, %v1188
  %v2231 = vadd.f32 %v2230, %v1191
  %v2232 = vadd.f32 %v2231, %v1196
  %v2233 = vadd.f32 %v2232, %v1199
  %v2234 = vadd.f32 %v2233, %v1204
  %v2235 = vadd.f32 %v2234, %v1207
  %v2236 = vadd.f32 %v2235, %v1212
  %v2237 = vadd.f32 %v2236, %v1215
  %v2238 = vadd.f32 %v2237, %v1220
  %v2239 = vadd.f32 %v2238, %v1223
  %v2240 = vadd.f32 %v2239, %v1228
  %v2241 = vadd.f32 %v2240, %v1231
  %v2242 = vadd.f32 %v2241, %v1236
  %v2243 = vadd.f32 %v2242, %v1239
  %v2244 = vadd.f32 %v2243, %v1244
  %v2245 = vadd.f32 %v2244, %v1247
  %v2246 = vadd.f32 %v2245, %v1252
  %v2247 = vadd.f32 %v2246, %v1255
  %v2248 = vadd.f32 %v2247, %v1260
  %v2249 = vadd.f32 %v2248, %v1263
  %v2250 = vadd.f32 %v2249, %v1268
  %v2251 = vadd.f32 %v2250, %v1271
  %v2252 = vadd.f32 %v2251, %v1276
  %v2253 = vadd.f32 %v2252, %v1279
  %v2254 = vadd.f32 %v2253, %v1284
  %v2255 = vadd.f32 %v2254, %v1287
  %v2256 = vadd.f32 %v2255, %v1292
  %v2257 = vadd.f32 %v2256, %v1295
  %v2258 = vadd.f32 %v2257, %v1300
  %v2259 = vadd.f32 %v2258, %v1303
  %v2260 = vadd.f32 %v2259, %v1308
  %v2261 = vadd.f32 %v2260, %v1311
  %v2262 = vadd.f32 %v2261, %v1316
  %v2263 = vadd.f32 %v2262, %v1319
  %v2264 = vadd.f32 %v2263, %v1324
  %v2265 = vadd.f32 %v2264, %v1327
  %v2266 = vadd.f32 %v2265, %v1332
  %v2267 = vadd.f32 %v2266, %v1335
  %v2268 = vadd.f32 %v2267, %v1340
  %v2269 = vadd.f32 %v2268, %v1343
  %v2270 = vadd.f32 %v2269, %v1348
  %v2271 = vadd.f32 %v2270, %v1351
  %v2272 = vadd.f32 %v2271, %v1356
  %v2273 = vadd.f32 %v2272, %v1359
  %v2274 = vrot.slane %v2273, 4
  %v2275 = vadd.f32 %v2273, %v2274
  %v2276 = vrot.slane %v2275, 2
  %v2277 = vadd.f32 %v2275, %v2276
  %v2278 = vrot.slane %v2277, 1
  %v2279 = vadd.f32 %v2277, %v2278
  %v2280 = vadd.f32 %v2210, %v2279
  %2281 = vst [vmem:[%s9] sm:$0x1] %v2280
  %v2282 = vld [vmem:[%s9 + $0x1] sm:$0x1]
  %v2283 = vmul.f32 %v1108, %v1108
  %v2284 = vmul.f32 %v1111, %v1111
  %v2285 = vmul.f32 %v1116, %v1116
  %v2286 = vmul.f32 %v1119, %v1119
  %v2287 = vmul.f32 %v1124, %v1124
  %v2288 = vmul.f32 %v1127, %v1127
  %v2289 = vmul.f32 %v1132, %v1132
  %v2290 = vmul.f32 %v1135, %v1135
  %v2291 = vmul.f32 %v1140, %v1140
  %v2292 = vmul.f32 %v1143, %v1143
  %v2293 = vmul.f32 %v1148, %v1148
  %v2294 = vmul.f32 %v1151, %v1151
  %v2295 = vmul.f32 %v1156, %v1156
  %v2296 = vmul.f32 %v1159, %v1159
  %v2297 = vmul.f32 %v1164, %v1164
  %v2298 = vmul.f32 %v1167, %v1167
  %v2299 = vmul.f32 %v1172, %v1172
  %v2300 = vmul.f32 %v1175, %v1175
  %v2301 = vmul.f32 %v1180, %v1180
  %v2302 = vmul.f32 %v1183, %v1183
  %v2303 = vmul.f32 %v1188, %v1188
  %v2304 = vmul.f32 %v1191, %v1191
  %v2305 = vmul.f32 %v1196, %v1196
  %v2306 = vmul.f32 %v1199, %v1199
  %v2307 = vmul.f32 %v1204, %v1204
  %v2308 = vmul.f32 %v1207, %v1207
  %v2309 = vmul.f32 %v1212, %v1212
  %v2310 = vmul.f32 %v1215, %v1215
  %v2311 = vmul.f32 %v1220, %v1220
  %v2312 = vmul.f32 %v1223, %v1223
  %v2313 = vmul.f32 %v1228, %v1228
  %v2314 = vmul.f32 %v1231, %v1231
  %v2315 = vmul.f32 %v1236, %v1236
  %v2316 = vmul.f32 %v1239, %v1239
  %v2317 = vmul.f32 %v1244, %v1244
  %v2318 = vmul.f32 %v1247, %v1247
  %v2319 = vmul.f32 %v1252, %v1252
  %v2320 = vmul.f32 %v1255, %v1255
  %v2321 = vmul.f32 %v1260, %v1260
  %v2322 = vmul.f32 %v1263, %v1263
  %v2323 = vmul.f32 %v1268, %v1268
  %v2324 = vmul.f32 %v1271, %v1271
  %v2325 = vmul.f32 %v1276, %v1276
  %v2326 = vmul.f32 %v1279, %v1279
  %v2327 = vmul.f32 %v1284, %v1284
  %v2328 = vmul.f32 %v1287, %v1287
  %v2329 = vmul.f32 %v1292, %v1292
  %v2330 = vmul.f32 %v1295, %v1295
  %v2331 = vmul.f32 %v1300, %v1300
  %v2332 = vmul.f32 %v1303, %v1303
  %v2333 = vmul.f32 %v1308, %v1308
  %v2334 = vmul.f32 %v1311, %v1311
  %v2335 = vmul.f32 %v1316, %v1316
  %v2336 = vmul.f32 %v1319, %v1319
  %v2337 = vmul.f32 %v1324, %v1324
  %v2338 = vmul.f32 %v1327, %v1327
  %v2339 = vmul.f32 %v1332, %v1332
  %v2340 = vmul.f32 %v1335, %v1335
  %v2341 = vmul.f32 %v1340, %v1340
  %v2342 = vmul.f32 %v1343, %v1343
  %v2343 = vmul.f32 %v1348, %v1348
  %v2344 = vmul.f32 %v1351, %v1351
  %v2345 = vmul.f32 %v1356, %v1356
  %v2346 = vmul.f32 %v1359, %v1359
  %v2347 = vadd.f32 %v2283, %v2284
  %v2348 = vadd.f32 %v2347, %v2285
  %v2349 = vadd.f32 %v2348, %v2286
  %v2350 = vadd.f32 %v2349, %v2287
  %v2351 = vadd.f32 %v2350, %v2288
  %v2352 = vadd.f32 %v2351, %v2289
  %v2353 = vadd.f32 %v2352, %v2290
  %v2354 = vadd.f32 %v2353, %v2291
  %v2355 = vadd.f32 %v2354, %v2292
  %v2356 = vadd.f32 %v2355, %v2293
  %v2357 = vadd.f32 %v2356, %v2294
  %v2358 = vadd.f32 %v2357, %v2295
  %v2359 = vadd.f32 %v2358, %v2296
  %v2360 = vadd.f32 %v2359, %v2297
  %v2361 = vadd.f32 %v2360, %v2298
  %v2362 = vadd.f32 %v2361, %v2299
  %v2363 = vadd.f32 %v2362, %v2300
  %v2364 = vadd.f32 %v2363, %v2301
  %v2365 = vadd.f32 %v2364, %v2302
  %v2366 = vadd.f32 %v2365, %v2303
  %v2367 = vadd.f32 %v2366, %v2304
  %v2368 = vadd.f32 %v2367, %v2305
  %v2369 = vadd.f32 %v2368, %v2306
  %v2370 = vadd.f32 %v2369, %v2307
  %v2371 = vadd.f32 %v2370, %v2308
  %v2372 = vadd.f32 %v2371, %v2309
  %v2373 = vadd.f32 %v2372, %v2310
  %v2374 = vadd.f32 %v2373, %v2311
  %v2375 = vadd.f32 %v2374, %v2312
  %v2376 = vadd.f32 %v2375, %v2313
  %v2377 = vadd.f32 %v2376, %v2314
  %v2378 = vadd.f32 %v2377, %v2315
  %v2379 = vadd.f32 %v2378, %v2316
  %v2380 = vadd.f32 %v2379, %v2317
  %v2381 = vadd.f32 %v2380, %v2318
  %v2382 = vadd.f32 %v2381, %v2319
  %v2383 = vadd.f32 %v2382, %v2320
  %v2384 = vadd.f32 %v2383, %v2321
  %v2385 = vadd.f32 %v2384, %v2322
  %v2386 = vadd.f32 %v2385, %v2323
  %v2387 = vadd.f32 %v2386, %v2324
  %v2388 = vadd.f32 %v2387, %v2325
  %v2389 = vadd.f32 %v2388, %v2326
  %v2390 = vadd.f32 %v2389, %v2327
  %v2391 = vadd.f32 %v2390, %v2328
  %v2392 = vadd.f32 %v2391, %v2329
  %v2393 = vadd.f32 %v2392, %v2330
  %v2394 = vadd.f32 %v2393, %v2331
  %v2395 = vadd.f32 %v2394, %v2332
  %v2396 = vadd.f32 %v2395, %v2333
  %v2397 = vadd.f32 %v2396, %v2334
  %v2398 = vadd.f32 %v2397, %v2335
  %v2399 = vadd.f32 %v2398, %v2336
  %v2400 = vadd.f32 %v2399, %v2337
  %v2401 = vadd.f32 %v2400, %v2338
  %v2402 = vadd.f32 %v2401, %v2339
  %v2403 = vadd.f32 %v2402, %v2340
  %v2404 = vadd.f32 %v2403, %v2341
  %v2405 = vadd.f32 %v2404, %v2342
  %v2406 = vadd.f32 %v2405, %v2343
  %v2407 = vadd.f32 %v2406, %v2344
  %v2408 = vadd.f32 %v2407, %v2345
  %v2409 = vadd.f32 %v2408, %v2346
  %v2410 = vrot.slane %v2409, 4
  %v2411 = vadd.f32 %v2409, %v2410
  %v2412 = vrot.slane %v2411, 2
  %v2413 = vadd.f32 %v2411, %v2412
  %v2414 = vrot.slane %v2413, 1
  %v2415 = vadd.f32 %v2413, %v2414
  %v2416 = vadd.f32 %v2282, %v2415
  %2417 = vst [vmem:[%s9 + $0x1] sm:$0x1] %v2416
  // Predicated region
  $region30: #{_lambda_.8} parent=0 // pred_check
    _
  $region31: #{_lambda_.8} parent=0 // pred_check_branch
    %2419 = sbr.rel (0) target = $region33
  $region32: #{_lambda_.8} parent=0 // pred_region
    _
  $region33: #{_lambda_.8} parent=0 // pred_fallthru
    _
  // Predicated region
  $region34: #{_lambda_.8} parent=0 // pred_check
    _
  $region35: #{_lambda_.8} parent=0 // pred_check_branch
    %2421 = sbr.rel (0) target = $region37
  $region36: #{_lambda_.8} parent=0 // pred_region
    _
  $region37: #{_lambda_.8} parent=0 // pred_fallthru
    _
  // Predicated region
  $region38: #{_lambda_.8} parent=0 // pred_check
    _
  $region39: #{_lambda_.8} parent=0 // pred_check_branch
    %2423 = sbr.rel (0) target = $region41
  $region40: #{_lambda_.8} parent=0 // pred_region
    _
  $region41: #{_lambda_.8} parent=0 // pred_fallthru
    _
  // Predicated region
  $region42: #{_lambda_.8} parent=0 // pred_check
    _
  $region43: #{_lambda_.8} parent=0 // pred_check_branch
    %2425 = sbr.rel (0) target = $region45
  $region44: #{_lambda_.8} parent=0 // pred_region
    _
  $region45: #{_lambda_.8} parent=0 // pred_fallthru
    _
  // Predicated region
  $region46: #{_lambda_.8} parent=0 // pred_check
    _
  $region47: #{_lambda_.8} parent=0 // pred_check_branch
    %2427 = sbr.rel (0) target = $region49
  $region48: #{_lambda_.8} parent=0 // pred_region
    _
  $region49: #{_lambda_.8} parent=0 // pred_fallthru
    _
  // Predicated region
  $region50: #{_lambda_.8} parent=0 // pred_check
    _
  $region51: #{_lambda_.8} parent=0 // pred_check_branch
    %2429 = sbr.rel (0) target = $region53
  $region52: #{_lambda_.8} parent=0 // pred_region
    _
  $region53: #{_lambda_.8} parent=0 // pred_fallthru
    _
  // Predicated region
  $region54: #{_lambda_.8} parent=0 // pred_check
    _
  $region55: #{_lambda_.8} parent=0 // pred_check_branch
    %2431 = sbr.rel (0) target = $region57
  $region56: #{_lambda_.8} parent=0 // pred_region
    _
  $region57: #{_lambda_.8} parent=0 // pred_fallthru
    _
  // Predicated region
  $region58: #{_lambda_.8} parent=0 // pred_check
    _
  $region59: #{_lambda_.8} parent=0 // pred_check_branch
    %2433 = sbr.rel (0) target = $region61
  $region60: #{_lambda_.8} parent=0 // pred_region
    _
  $region61: #{_lambda_.8} parent=0 // pred_fallthru
    _

// kernel: _lambda_.9
$region0: #{_lambda_.9}
  #allocation0 [shape = 'u32[]', space=smem, size = 0x4, offset = 0x4, fixed_abs, tag = 'smem constant byte address 0x4 - core index']
  #allocation1 [shape = 'u32[144,128]{1,0:T(1,128)}', space=vmem, size = 0x12000, scoped, tag = 'internal scratch']
  %s0 = inlined_call_operand.vmem [shape: bf16[512,128], index: 0, kind: input, shape index: {}]
  %s1 = inlined_call_operand.vmem [shape: f32[1,128], index: 1, kind: input, shape index: {}]
  %s2 = inlined_call_operand.vmem [shape: f32[1,128], index: 2, kind: input, shape index: {}]
  %s3 = inlined_call_operand.vmem [shape: bf16[512,128], index: 3, kind: input, shape index: {}]
  %s4 = inlined_call_operand.vmem [shape: f32[1,128], index: 4, kind: input, shape index: {}]
  %s5 = inlined_call_operand.vmem [shape: f32[1,128], index: 5, kind: input, shape index: {}]
  %s6 = inlined_call_operand.vmem [shape: f32[512,128], index: 6, kind: output, shape index: {}]
  %s7 = sld [smem:[#allocation0]]
  $region34: #{_lambda_.9} parent=0
    _
  %s9 = ssub.s32 1, %s7
  %s10 = scalar_select 0, %s9, %s7
  // Predicated region
  $region2: #{_lambda_.9} parent=0 // pred_check
    _
  $region3: #{_lambda_.9} parent=0 // pred_check_branch
    %12 = sbr.rel (0) target = $region5
  $region4: #{_lambda_.9} parent=0 // pred_region
    _
  $region5: #{_lambda_.9} parent=0 // pred_fallthru
    _
  // Predicated region
  $region6: #{_lambda_.9} parent=0 // pred_check
    _
  $region7: #{_lambda_.9} parent=0 // pred_check_branch
    %14 = sbr.rel (0) target = $region9
  $region8: #{_lambda_.9} parent=0 // pred_region
    _
  $region9: #{_lambda_.9} parent=0 // pred_fallthru
    _
  // Predicated region
  $region10: #{_lambda_.9} parent=0 // pred_check
    _
  $region11: #{_lambda_.9} parent=0 // pred_check_branch
    %16 = sbr.rel (0) target = $region13
  $region12: #{_lambda_.9} parent=0 // pred_region
    _
  $region13: #{_lambda_.9} parent=0 // pred_fallthru
    _
  // Predicated region
  $region14: #{_lambda_.9} parent=0 // pred_check
    _
  $region15: #{_lambda_.9} parent=0 // pred_check_branch
    %18 = sbr.rel (0) target = $region17
  $region16: #{_lambda_.9} parent=0 // pred_region
    _
  $region17: #{_lambda_.9} parent=0 // pred_fallthru
    _
  // Predicated region
  $region18: #{_lambda_.9} parent=0 // pred_check
    _
  $region19: #{_lambda_.9} parent=0 // pred_check_branch
    %20 = sbr.rel (0) target = $region21
  $region20: #{_lambda_.9} parent=0 // pred_region
    _
  $region21: #{_lambda_.9} parent=0 // pred_fallthru
    _
  // Predicated region
  $region22: #{_lambda_.9} parent=0 // pred_check
    _
  $region23: #{_lambda_.9} parent=0 // pred_check_branch
    %22 = sbr.rel (0) target = $region25
  $region24: #{_lambda_.9} parent=0 // pred_region
    _
  $region25: #{_lambda_.9} parent=0 // pred_fallthru
    _
  %v23 = vld [vmem:[%s0] sm:$0xf]
  %v24 = vld [vmem:[%s0 + $0x4] sm:$0xf]
  %v25 = vld [vmem:[%s0 + $0x8] sm:$0xf]
  %v26 = vld [vmem:[%s0 + $0xc] sm:$0xf]
  %v27 = vld [vmem:[%s0 + $0x10] sm:$0xf]
  %v28 = vld [vmem:[%s0 + $0x14] sm:$0xf]
  %v29 = vld [vmem:[%s0 + $0x18] sm:$0xf]
  %v30 = vld [vmem:[%s0 + $0x1c] sm:$0xf]
  %v31 = vld [vmem:[%s0 + $0x20] sm:$0xf]
  %v32 = vld [vmem:[%s0 + $0x24] sm:$0xf]
  %v33 = vld [vmem:[%s0 + $0x28] sm:$0xf]
  %v34 = vld [vmem:[%s0 + $0x2c] sm:$0xf]
  %v35 = vld [vmem:[%s0 + $0x30] sm:$0xf]
  %v36 = vld [vmem:[%s0 + $0x34] sm:$0xf]
  %v37 = vld [vmem:[%s0 + $0x38] sm:$0xf]
  %v38 = vld [vmem:[%s0 + $0x3c] sm:$0xf]
  %v39 = vld [vmem:[%s0 + $0x40] sm:$0xf]
  %v40 = vld [vmem:[%s0 + $0x44] sm:$0xf]
  %v41 = vld [vmem:[%s0 + $0x48] sm:$0xf]
  %v42 = vld [vmem:[%s0 + $0x4c] sm:$0xf]
  %v43 = vld [vmem:[%s0 + $0x50] sm:$0xf]
  %v44 = vld [vmem:[%s0 + $0x54] sm:$0xf]
  %v45 = vld [vmem:[%s0 + $0x58] sm:$0xf]
  %v46 = vld [vmem:[%s0 + $0x5c] sm:$0xf]
  %v47 = vld [vmem:[%s0 + $0x60] sm:$0xf]
  %v48 = vld [vmem:[%s0 + $0x64] sm:$0xf]
  %v49 = vld [vmem:[%s0 + $0x68] sm:$0xf]
  %v50 = vld [vmem:[%s0 + $0x6c] sm:$0xf]
  %v51 = vld [vmem:[%s0 + $0x70] sm:$0xf]
  %v52 = vld [vmem:[%s0 + $0x74] sm:$0xf]
  %v53 = vld [vmem:[%s0 + $0x78] sm:$0xf]
  %v54 = vld [vmem:[%s0 + $0x7c] sm:$0xf]
  %v55 = vld [vmem:[%s0 + $0x80] sm:$0xf]
  %v56 = vld [vmem:[%s0 + $0x84] sm:$0xf]
  %v57 = vld [vmem:[%s0 + $0x88] sm:$0xf]
  %v58 = vld [vmem:[%s0 + $0x8c] sm:$0xf]
  %v59 = vld [vmem:[%s0 + $0x90] sm:$0xf]
  %v60 = vld [vmem:[%s0 + $0x94] sm:$0xf]
  %v61 = vld [vmem:[%s0 + $0x98] sm:$0xf]
  %v62 = vld [vmem:[%s0 + $0x9c] sm:$0xf]
  %v63 = vld [vmem:[%s0 + $0xa0] sm:$0xf]
  %v64 = vld [vmem:[%s0 + $0xa4] sm:$0xf]
  %v65 = vld [vmem:[%s0 + $0xa8] sm:$0xf]
  %v66 = vld [vmem:[%s0 + $0xac] sm:$0xf]
  %v67 = vld [vmem:[%s0 + $0xb0] sm:$0xf]
  %v68 = vld [vmem:[%s0 + $0xb4] sm:$0xf]
  %v69 = vld [vmem:[%s0 + $0xb8] sm:$0xf]
  %v70 = vld [vmem:[%s0 + $0xbc] sm:$0xf]
  %v71 = vld [vmem:[%s0 + $0xc0] sm:$0xf]
  %v72 = vld [vmem:[%s0 + $0xc4] sm:$0xf]
  %v73 = vld [vmem:[%s0 + $0xc8] sm:$0xf]
  %v74 = vld [vmem:[%s0 + $0xcc] sm:$0xf]
  %v75 = vld [vmem:[%s0 + $0xd0] sm:$0xf]
  %v76 = vld [vmem:[%s0 + $0xd4] sm:$0xf]
  %v77 = vld [vmem:[%s0 + $0xd8] sm:$0xf]
  %v78 = vld [vmem:[%s0 + $0xdc] sm:$0xf]
  %v79 = vld [vmem:[%s0 + $0xe0] sm:$0xf]
  %v80 = vld [vmem:[%s0 + $0xe4] sm:$0xf]
  %v81 = vld [vmem:[%s0 + $0xe8] sm:$0xf]
  %v82 = vld [vmem:[%s0 + $0xec] sm:$0xf]
  %v83 = vld [vmem:[%s0 + $0xf0] sm:$0xf]
  %v84 = vld [vmem:[%s0 + $0xf4] sm:$0xf]
  %v85 = vld [vmem:[%s0 + $0xf8] sm:$0xf]
  %v86 = vld [vmem:[%s0 + $0xfc] sm:$0xf]
  %v87 = vunpack.c.l.bf16 %v23
  %v88 = vunpack.c.l.bf16 %v24
  %v89 = vunpack.c.l.bf16 %v25
  %v90 = vunpack.c.l.bf16 %v26
  %v91 = vunpack.c.l.bf16 %v27
  %v92 = vunpack.c.l.bf16 %v28
  %v93 = vunpack.c.l.bf16 %v29
  %v94 = vunpack.c.l.bf16 %v30
  %v95 = vunpack.c.l.bf16 %v31
  %v96 = vunpack.c.l.bf16 %v32
  %v97 = vunpack.c.l.bf16 %v33
  %v98 = vunpack.c.l.bf16 %v34
  %v99 = vunpack.c.l.bf16 %v35
  %v100 = vunpack.c.l.bf16 %v36
  %v101 = vunpack.c.l.bf16 %v37
  %v102 = vunpack.c.l.bf16 %v38
  %v103 = vunpack.c.l.bf16 %v39
  %v104 = vunpack.c.l.bf16 %v40
  %v105 = vunpack.c.l.bf16 %v41
  %v106 = vunpack.c.l.bf16 %v42
  %v107 = vunpack.c.l.bf16 %v43
  %v108 = vunpack.c.l.bf16 %v44
  %v109 = vunpack.c.l.bf16 %v45
  %v110 = vunpack.c.l.bf16 %v46
  %v111 = vunpack.c.l.bf16 %v47
  %v112 = vunpack.c.l.bf16 %v48
  %v113 = vunpack.c.l.bf16 %v49
  %v114 = vunpack.c.l.bf16 %v50
  %v115 = vunpack.c.l.bf16 %v51
  %v116 = vunpack.c.l.bf16 %v52
  %v117 = vunpack.c.l.bf16 %v53
  %v118 = vunpack.c.l.bf16 %v54
  %v119 = vunpack.c.l.bf16 %v55
  %v120 = vunpack.c.l.bf16 %v56
  %v121 = vunpack.c.l.bf16 %v57
  %v122 = vunpack.c.l.bf16 %v58
  %v123 = vunpack.c.l.bf16 %v59
  %v124 = vunpack.c.l.bf16 %v60
  %v125 = vunpack.c.l.bf16 %v61
  %v126 = vunpack.c.l.bf16 %v62
  %v127 = vunpack.c.l.bf16 %v63
  %v128 = vunpack.c.l.bf16 %v64
  %v129 = vunpack.c.l.bf16 %v65
  %v130 = vunpack.c.l.bf16 %v66
  %v131 = vunpack.c.l.bf16 %v67
  %v132 = vunpack.c.l.bf16 %v68
  %v133 = vunpack.c.l.bf16 %v69
  %v134 = vunpack.c.l.bf16 %v70
  %v135 = vunpack.c.l.bf16 %v71
  %v136 = vunpack.c.l.bf16 %v72
  %v137 = vunpack.c.l.bf16 %v73
  %v138 = vunpack.c.l.bf16 %v74
  %v139 = vunpack.c.l.bf16 %v75
  %v140 = vunpack.c.l.bf16 %v76
  %v141 = vunpack.c.l.bf16 %v77
  %v142 = vunpack.c.l.bf16 %v78
  %v143 = vunpack.c.l.bf16 %v79
  %v144 = vunpack.c.l.bf16 %v80
  %v145 = vunpack.c.l.bf16 %v81
  %v146 = vunpack.c.l.bf16 %v82
  %v147 = vunpack.c.l.bf16 %v83
  %v148 = vunpack.c.l.bf16 %v84
  %v149 = vunpack.c.l.bf16 %v85
  %v150 = vunpack.c.l.bf16 %v86
  %v151 = vld [vmem:[%s1] sm:$0x1]
  %v153 = vlaneseq
  %v154 = vshrl.u32 %v153, 7
  %v155 = vsub.s32 0, %v154
  %v156 = vrot.slane %v151, %v155
  %v158 = vmul.f32 %v87, %v156
  %v159 = vmul.f32 %v88, %v156
  %v160 = vmul.f32 %v89, %v156
  %v161 = vmul.f32 %v90, %v156
  %v162 = vmul.f32 %v91, %v156
  %v163 = vmul.f32 %v92, %v156
  %v164 = vmul.f32 %v93, %v156
  %v165 = vmul.f32 %v94, %v156
  %v166 = vmul.f32 %v95, %v156
  %v167 = vmul.f32 %v96, %v156
  %v168 = vmul.f32 %v97, %v156
  %v169 = vmul.f32 %v98, %v156
  %v170 = vmul.f32 %v99, %v156
  %v171 = vmul.f32 %v100, %v156
  %v172 = vmul.f32 %v101, %v156
  %v173 = vmul.f32 %v102, %v156
  %v174 = vmul.f32 %v103, %v156
  %v175 = vmul.f32 %v104, %v156
  %v176 = vmul.f32 %v105, %v156
  %v177 = vmul.f32 %v106, %v156
  %v178 = vmul.f32 %v107, %v156
  %v179 = vmul.f32 %v108, %v156
  %v180 = vmul.f32 %v109, %v156
  %v181 = vmul.f32 %v110, %v156
  %v182 = vmul.f32 %v111, %v156
  %v183 = vmul.f32 %v112, %v156
  %v184 = vmul.f32 %v113, %v156
  %v185 = vmul.f32 %v114, %v156
  %v186 = vmul.f32 %v115, %v156
  %v187 = vmul.f32 %v116, %v156
  %v188 = vmul.f32 %v117, %v156
  %v189 = vmul.f32 %v118, %v156
  %v190 = vmul.f32 %v119, %v156
  %v191 = vmul.f32 %v120, %v156
  %v192 = vmul.f32 %v121, %v156
  %v193 = vmul.f32 %v122, %v156
  %v194 = vmul.f32 %v123, %v156
  %v195 = vmul.f32 %v124, %v156
  %v196 = vmul.f32 %v125, %v156
  %v197 = vmul.f32 %v126, %v156
  %v198 = vmul.f32 %v127, %v156
  %v199 = vmul.f32 %v128, %v156
  %v200 = vmul.f32 %v129, %v156
  %v201 = vmul.f32 %v130, %v156
  %v202 = vmul.f32 %v131, %v156
  %v203 = vmul.f32 %v132, %v156
  %v204 = vmul.f32 %v133, %v156
  %v205 = vmul.f32 %v134, %v156
  %v206 = vmul.f32 %v135, %v156
  %v207 = vmul.f32 %v136, %v156
  %v208 = vmul.f32 %v137, %v156
  %v209 = vmul.f32 %v138, %v156
  %v210 = vmul.f32 %v139, %v156
  %v211 = vmul.f32 %v140, %v156
  %v212 = vmul.f32 %v141, %v156
  %v213 = vmul.f32 %v142, %v156
  %v214 = vmul.f32 %v143, %v156
  %v215 = vmul.f32 %v144, %v156
  %v216 = vmul.f32 %v145, %v156
  %v217 = vmul.f32 %v146, %v156
  %v218 = vmul.f32 %v147, %v156
  %v219 = vmul.f32 %v148, %v156
  %v220 = vmul.f32 %v149, %v156
  %v221 = vmul.f32 %v150, %v156
  %v222 = vld [vmem:[%s2] sm:$0x1]
  %v224 = vlaneseq
  %v225 = vshrl.u32 %v224, 7
  %v226 = vsub.s32 0, %v225
  %v227 = vrot.slane %v222, %v226
  %v229 = vadd.f32 %v158, %v227
  %v230 = vadd.f32 %v159, %v227
  %v231 = vadd.f32 %v160, %v227
  %v232 = vadd.f32 %v161, %v227
  %v233 = vadd.f32 %v162, %v227
  %v234 = vadd.f32 %v163, %v227
  %v235 = vadd.f32 %v164, %v227
  %v236 = vadd.f32 %v165, %v227
  %v237 = vadd.f32 %v166, %v227
  %v238 = vadd.f32 %v167, %v227
  %v239 = vadd.f32 %v168, %v227
  %v240 = vadd.f32 %v169, %v227
  %v241 = vadd.f32 %v170, %v227
  %v242 = vadd.f32 %v171, %v227
  %v243 = vadd.f32 %v172, %v227
  %v244 = vadd.f32 %v173, %v227
  %v245 = vadd.f32 %v174, %v227
  %v246 = vadd.f32 %v175, %v227
  %v247 = vadd.f32 %v176, %v227
  %v248 = vadd.f32 %v177, %v227
  %v249 = vadd.f32 %v178, %v227
  %v250 = vadd.f32 %v179, %v227
  %v251 = vadd.f32 %v180, %v227
  %v252 = vadd.f32 %v181, %v227
  %v253 = vadd.f32 %v182, %v227
  %v254 = vadd.f32 %v183, %v227
  %v255 = vadd.f32 %v184, %v227
  %v256 = vadd.f32 %v185, %v227
  %v257 = vadd.f32 %v186, %v227
  %v258 = vadd.f32 %v187, %v227
  %v259 = vadd.f32 %v188, %v227
  %v260 = vadd.f32 %v189, %v227
  %v261 = vadd.f32 %v190, %v227
  %v262 = vadd.f32 %v191, %v227
  %v263 = vadd.f32 %v192, %v227
  %v264 = vadd.f32 %v193, %v227
  %v265 = vadd.f32 %v194, %v227
  %v266 = vadd.f32 %v195, %v227
  %v267 = vadd.f32 %v196, %v227
  %v268 = vadd.f32 %v197, %v227
  %v269 = vadd.f32 %v198, %v227
  %v270 = vadd.f32 %v199, %v227
  %v271 = vadd.f32 %v200, %v227
  %v272 = vadd.f32 %v201, %v227
  %v273 = vadd.f32 %v202, %v227
  %v274 = vadd.f32 %v203, %v227
  %v275 = vadd.f32 %v204, %v227
  %v276 = vadd.f32 %v205, %v227
  %v277 = vadd.f32 %v206, %v227
  %v278 = vadd.f32 %v207, %v227
  %v279 = vadd.f32 %v208, %v227
  %v280 = vadd.f32 %v209, %v227
  %v281 = vadd.f32 %v210, %v227
  %v282 = vadd.f32 %v211, %v227
  %v283 = vadd.f32 %v212, %v227
  %v284 = vadd.f32 %v213, %v227
  %v285 = vadd.f32 %v214, %v227
  %v286 = vadd.f32 %v215, %v227
  %v287 = vadd.f32 %v216, %v227
  %v288 = vadd.f32 %v217, %v227
  %v289 = vadd.f32 %v218, %v227
  %v290 = vadd.f32 %v219, %v227
  %v291 = vadd.f32 %v220, %v227
  %v292 = vadd.f32 %v221, %v227
  %v293 = vld [vmem:[%s3] sm:$0xf]
  %v294 = vld [vmem:[%s3 + $0x4] sm:$0xf]
  %v295 = vld [vmem:[%s3 + $0x8] sm:$0xf]
  %v296 = vld [vmem:[%s3 + $0xc] sm:$0xf]
  %v297 = vld [vmem:[%s3 + $0x10] sm:$0xf]
  %v298 = vld [vmem:[%s3 + $0x14] sm:$0xf]
  %v299 = vld [vmem:[%s3 + $0x18] sm:$0xf]
  %v300 = vld [vmem:[%s3 + $0x1c] sm:$0xf]
  %v301 = vld [vmem:[%s3 + $0x20] sm:$0xf]
  %v302 = vld [vmem:[%s3 + $0x24] sm:$0xf]
  %v303 = vld [vmem:[%s3 + $0x28] sm:$0xf]
  %v304 = vld [vmem:[%s3 + $0x2c] sm:$0xf]
  %v305 = vld [vmem:[%s3 + $0x30] sm:$0xf]
  %v306 = vld [vmem:[%s3 + $0x34] sm:$0xf]
  %v307 = vld [vmem:[%s3 + $0x38] sm:$0xf]
  %v308 = vld [vmem:[%s3 + $0x3c] sm:$0xf]
  %v309 = vld [vmem:[%s3 + $0x40] sm:$0xf]
  %v310 = vld [vmem:[%s3 + $0x44] sm:$0xf]
  %v311 = vld [vmem:[%s3 + $0x48] sm:$0xf]
  %v312 = vld [vmem:[%s3 + $0x4c] sm:$0xf]
  %v313 = vld [vmem:[%s3 + $0x50] sm:$0xf]
  %v314 = vld [vmem:[%s3 + $0x54] sm:$0xf]
  %v315 = vld [vmem:[%s3 + $0x58] sm:$0xf]
  %v316 = vld [vmem:[%s3 + $0x5c] sm:$0xf]
  %v317 = vld [vmem:[%s3 + $0x60] sm:$0xf]
  %v318 = vld [vmem:[%s3 + $0x64] sm:$0xf]
  %v319 = vld [vmem:[%s3 + $0x68] sm:$0xf]
  %v320 = vld [vmem:[%s3 + $0x6c] sm:$0xf]
  %v321 = vld [vmem:[%s3 + $0x70] sm:$0xf]
  %v322 = vld [vmem:[%s3 + $0x74] sm:$0xf]
  %v323 = vld [vmem:[%s3 + $0x78] sm:$0xf]
  %v324 = vld [vmem:[%s3 + $0x7c] sm:$0xf]
  %v325 = vld [vmem:[%s3 + $0x80] sm:$0xf]
  %v326 = vld [vmem:[%s3 + $0x84] sm:$0xf]
  %v327 = vld [vmem:[%s3 + $0x88] sm:$0xf]
  %v328 = vld [vmem:[%s3 + $0x8c] sm:$0xf]
  %v329 = vld [vmem:[%s3 + $0x90] sm:$0xf]
  %v330 = vld [vmem:[%s3 + $0x94] sm:$0xf]
  %v331 = vld [vmem:[%s3 + $0x98] sm:$0xf]
  %v332 = vld [vmem:[%s3 + $0x9c] sm:$0xf]
  %v333 = vld [vmem:[%s3 + $0xa0] sm:$0xf]
  %v334 = vld [vmem:[%s3 + $0xa4] sm:$0xf]
  %v335 = vld [vmem:[%s3 + $0xa8] sm:$0xf]
  %v336 = vld [vmem:[%s3 + $0xac] sm:$0xf]
  %v337 = vld [vmem:[%s3 + $0xb0] sm:$0xf]
  %v338 = vld [vmem:[%s3 + $0xb4] sm:$0xf]
  %v339 = vld [vmem:[%s3 + $0xb8] sm:$0xf]
  %v340 = vld [vmem:[%s3 + $0xbc] sm:$0xf]
  %v341 = vld [vmem:[%s3 + $0xc0] sm:$0xf]
  %v342 = vld [vmem:[%s3 + $0xc4] sm:$0xf]
  %v343 = vld [vmem:[%s3 + $0xc8] sm:$0xf]
  %v344 = vld [vmem:[%s3 + $0xcc] sm:$0xf]
  %v345 = vld [vmem:[%s3 + $0xd0] sm:$0xf]
  %v346 = vld [vmem:[%s3 + $0xd4] sm:$0xf]
  %v347 = vld [vmem:[%s3 + $0xd8] sm:$0xf]
  %v348 = vld [vmem:[%s3 + $0xdc] sm:$0xf]
  %v349 = vld [vmem:[%s3 + $0xe0] sm:$0xf]
  %v350 = vld [vmem:[%s3 + $0xe4] sm:$0xf]
  %v351 = vld [vmem:[%s3 + $0xe8] sm:$0xf]
  %v352 = vld [vmem:[%s3 + $0xec] sm:$0xf]
  %v353 = vld [vmem:[%s3 + $0xf0] sm:$0xf]
  %v354 = vld [vmem:[%s3 + $0xf4] sm:$0xf]
  %v355 = vld [vmem:[%s3 + $0xf8] sm:$0xf]
  %v356 = vld [vmem:[%s3 + $0xfc] sm:$0xf]
  %v357 = vunpack.c.l.bf16 %v293
  %v358 = vunpack.c.l.bf16 %v294
  %v359 = vunpack.c.l.bf16 %v295
  %v360 = vunpack.c.l.bf16 %v296
  %v361 = vunpack.c.l.bf16 %v297
  %v362 = vunpack.c.l.bf16 %v298
  %v363 = vunpack.c.l.bf16 %v299
  %v364 = vunpack.c.l.bf16 %v300
  %v365 = vunpack.c.l.bf16 %v301
  %v366 = vunpack.c.l.bf16 %v302
  %v367 = vunpack.c.l.bf16 %v303
  %v368 = vunpack.c.l.bf16 %v304
  %v369 = vunpack.c.l.bf16 %v305
  %v370 = vunpack.c.l.bf16 %v306
  %v371 = vunpack.c.l.bf16 %v307
  %v372 = vunpack.c.l.bf16 %v308
  %v373 = vunpack.c.l.bf16 %v309
  %v374 = vunpack.c.l.bf16 %v310
  %v375 = vunpack.c.l.bf16 %v311
  %v376 = vunpack.c.l.bf16 %v312
  %v377 = vunpack.c.l.bf16 %v313
  %v378 = vunpack.c.l.bf16 %v314
  %v379 = vunpack.c.l.bf16 %v315
  %v380 = vunpack.c.l.bf16 %v316
  %v381 = vunpack.c.l.bf16 %v317
  %v382 = vunpack.c.l.bf16 %v318
  %v383 = vunpack.c.l.bf16 %v319
  %v384 = vunpack.c.l.bf16 %v320
  %v385 = vunpack.c.l.bf16 %v321
  %v386 = vunpack.c.l.bf16 %v322
  %v387 = vunpack.c.l.bf16 %v323
  %v388 = vunpack.c.l.bf16 %v324
  %v389 = vunpack.c.l.bf16 %v325
  %v390 = vunpack.c.l.bf16 %v326
  %v391 = vunpack.c.l.bf16 %v327
  %v392 = vunpack.c.l.bf16 %v328
  %v393 = vunpack.c.l.bf16 %v329
  %v394 = vunpack.c.l.bf16 %v330
  %v395 = vunpack.c.l.bf16 %v331
  %v396 = vunpack.c.l.bf16 %v332
  %v397 = vunpack.c.l.bf16 %v333
  %v398 = vunpack.c.l.bf16 %v334
  %v399 = vunpack.c.l.bf16 %v335
  %v400 = vunpack.c.l.bf16 %v336
  %v401 = vunpack.c.l.bf16 %v337
  %v402 = vunpack.c.l.bf16 %v338
  %v403 = vunpack.c.l.bf16 %v339
  %v404 = vunpack.c.l.bf16 %v340
  %v405 = vunpack.c.l.bf16 %v341
  %v406 = vunpack.c.l.bf16 %v342
  %v407 = vunpack.c.l.bf16 %v343
  %v408 = vunpack.c.l.bf16 %v344
  %v409 = vunpack.c.l.bf16 %v345
  %v410 = vunpack.c.l.bf16 %v346
  %v411 = vunpack.c.l.bf16 %v347
  %v412 = vunpack.c.l.bf16 %v348
  %v413 = vunpack.c.l.bf16 %v349
  %v414 = vunpack.c.l.bf16 %v350
  %v415 = vunpack.c.l.bf16 %v351
  %v416 = vunpack.c.l.bf16 %v352
  %v417 = vunpack.c.l.bf16 %v353
  %v418 = vunpack.c.l.bf16 %v354
  %v419 = vunpack.c.l.bf16 %v355
  %v420 = vunpack.c.l.bf16 %v356
  %v421 = vld [vmem:[%s4] sm:$0x1]
  %v423 = vlaneseq
  %v424 = vshrl.u32 %v423, 7
  %v425 = vsub.s32 0, %v424
  %v426 = vrot.slane %v421, %v425
  %v428 = vmul.f32 %v357, %v426
  %v429 = vmul.f32 %v358, %v426
  %v430 = vmul.f32 %v359, %v426
  %v431 = vmul.f32 %v360, %v426
  %v432 = vmul.f32 %v361, %v426
  %v433 = vmul.f32 %v362, %v426
  %v434 = vmul.f32 %v363, %v426
  %v435 = vmul.f32 %v364, %v426
  %v436 = vmul.f32 %v365, %v426
  %v437 = vmul.f32 %v366, %v426
  %v438 = vmul.f32 %v367, %v426
  %v439 = vmul.f32 %v368, %v426
  %v440 = vmul.f32 %v369, %v426
  %v441 = vmul.f32 %v370, %v426
  %v442 = vmul.f32 %v371, %v426
  %v443 = vmul.f32 %v372, %v426
  %v444 = vmul.f32 %v373, %v426
  %v445 = vmul.f32 %v374, %v426
  %v446 = vmul.f32 %v375, %v426
  %v447 = vmul.f32 %v376, %v426
  %v448 = vmul.f32 %v377, %v426
  %v449 = vmul.f32 %v378, %v426
  %v450 = vmul.f32 %v379, %v426
  %v451 = vmul.f32 %v380, %v426
  %v452 = vmul.f32 %v381, %v426
  %v453 = vmul.f32 %v382, %v426
  %v454 = vmul.f32 %v383, %v426
  %v455 = vmul.f32 %v384, %v426
  %v456 = vmul.f32 %v385, %v426
  %v457 = vmul.f32 %v386, %v426
  %v458 = vmul.f32 %v387, %v426
  %v459 = vmul.f32 %v388, %v426
  %v460 = vmul.f32 %v389, %v426
  %v461 = vmul.f32 %v390, %v426
  %v462 = vmul.f32 %v391, %v426
  %v463 = vmul.f32 %v392, %v426
  %v464 = vmul.f32 %v393, %v426
  %v465 = vmul.f32 %v394, %v426
  %v466 = vmul.f32 %v395, %v426
  %v467 = vmul.f32 %v396, %v426
  %v468 = vmul.f32 %v397, %v426
  %v469 = vmul.f32 %v398, %v426
  %v470 = vmul.f32 %v399, %v426
  %v471 = vmul.f32 %v400, %v426
  %v472 = vmul.f32 %v401, %v426
  %v473 = vmul.f32 %v402, %v426
  %v474 = vmul.f32 %v403, %v426
  %v475 = vmul.f32 %v404, %v426
  %v476 = vmul.f32 %v405, %v426
  %v477 = vmul.f32 %v406, %v426
  %v478 = vmul.f32 %v407, %v426
  %v479 = vmul.f32 %v408, %v426
  %v480 = vmul.f32 %v409, %v426
  %v481 = vmul.f32 %v410, %v426
  %v482 = vmul.f32 %v411, %v426
  %v483 = vmul.f32 %v412, %v426
  %v484 = vmul.f32 %v413, %v426
  %v485 = vmul.f32 %v414, %v426
  %v486 = vmul.f32 %v415, %v426
  %v487 = vmul.f32 %v416, %v426
  %v488 = vmul.f32 %v417, %v426
  %v489 = vmul.f32 %v418, %v426
  %v490 = vmul.f32 %v419, %v426
  %v491 = vmul.f32 %v420, %v426
  %v492 = vadd.f32 %v229, %v428
  %v493 = vadd.f32 %v230, %v429
  %v494 = vadd.f32 %v231, %v430
  %v495 = vadd.f32 %v232, %v431
  %v496 = vadd.f32 %v233, %v432
  %v497 = vadd.f32 %v234, %v433
  %v498 = vadd.f32 %v235, %v434
  %v499 = vadd.f32 %v236, %v435
  %v500 = vadd.f32 %v237, %v436
  %v501 = vadd.f32 %v238, %v437
  %v502 = vadd.f32 %v239, %v438
  %v503 = vadd.f32 %v240, %v439
  %v504 = vadd.f32 %v241, %v440
  %v505 = vadd.f32 %v242, %v441
  %v506 = vadd.f32 %v243, %v442
  %v507 = vadd.f32 %v244, %v443
  %v508 = vadd.f32 %v245, %v444
  %v509 = vadd.f32 %v246, %v445
  %v510 = vadd.f32 %v247, %v446
  %v511 = vadd.f32 %v248, %v447
  %v512 = vadd.f32 %v249, %v448
  %v513 = vadd.f32 %v250, %v449
  %v514 = vadd.f32 %v251, %v450
  %v515 = vadd.f32 %v252, %v451
  %v516 = vadd.f32 %v253, %v452
  %v517 = vadd.f32 %v254, %v453
  %v518 = vadd.f32 %v255, %v454
  %v519 = vadd.f32 %v256, %v455
  %v520 = vadd.f32 %v257, %v456
  %v521 = vadd.f32 %v258, %v457
  %v522 = vadd.f32 %v259, %v458
  %v523 = vadd.f32 %v260, %v459
  %v524 = vadd.f32 %v261, %v460
  %v525 = vadd.f32 %v262, %v461
  %v526 = vadd.f32 %v263, %v462
  %v527 = vadd.f32 %v264, %v463
  %v528 = vadd.f32 %v265, %v464
  %v529 = vadd.f32 %v266, %v465
  %v530 = vadd.f32 %v267, %v466
  %v531 = vadd.f32 %v268, %v467
  %v532 = vadd.f32 %v269, %v468
  %v533 = vadd.f32 %v270, %v469
  %v534 = vadd.f32 %v271, %v470
  %v535 = vadd.f32 %v272, %v471
  %v536 = vadd.f32 %v273, %v472
  %v537 = vadd.f32 %v274, %v473
  %v538 = vadd.f32 %v275, %v474
  %v539 = vadd.f32 %v276, %v475
  %v540 = vadd.f32 %v277, %v476
  %v541 = vadd.f32 %v278, %v477
  %v542 = vadd.f32 %v279, %v478
  %v543 = vadd.f32 %v280, %v479
  %v544 = vadd.f32 %v281, %v480
  %v545 = vadd.f32 %v282, %v481
  %v546 = vadd.f32 %v283, %v482
  %v547 = vadd.f32 %v284, %v483
  %v548 = vadd.f32 %v285, %v484
  %v549 = vadd.f32 %v286, %v485
  %v550 = vadd.f32 %v287, %v486
  %v551 = vadd.f32 %v288, %v487
  %v552 = vadd.f32 %v289, %v488
  %v553 = vadd.f32 %v290, %v489
  %v554 = vadd.f32 %v291, %v490
  %v555 = vadd.f32 %v292, %v491
  %v556 = vld [vmem:[%s5] sm:$0x1]
  %v558 = vlaneseq
  %v559 = vshrl.u32 %v558, 7
  %v560 = vsub.s32 0, %v559
  %v561 = vrot.slane %v556, %v560
  %v563 = vadd.f32 %v492, %v561
  %v564 = vadd.f32 %v493, %v561
  %v565 = vadd.f32 %v494, %v561
  %v566 = vadd.f32 %v495, %v561
  %v567 = vadd.f32 %v496, %v561
  %v568 = vadd.f32 %v497, %v561
  %v569 = vadd.f32 %v498, %v561
  %v570 = vadd.f32 %v499, %v561
  %v571 = vadd.f32 %v500, %v561
  %v572 = vadd.f32 %v501, %v561
  %v573 = vadd.f32 %v502, %v561
  %v574 = vadd.f32 %v503, %v561
  %v575 = vadd.f32 %v504, %v561
  %v576 = vadd.f32 %v505, %v561
  %v577 = vadd.f32 %v506, %v561
  %v578 = vadd.f32 %v507, %v561
  %v579 = vadd.f32 %v508, %v561
  %v580 = vadd.f32 %v509, %v561
  %v581 = vadd.f32 %v510, %v561
  %v582 = vadd.f32 %v511, %v561
  %v583 = vadd.f32 %v512, %v561
  %v584 = vadd.f32 %v513, %v561
  %v585 = vadd.f32 %v514, %v561
  %v586 = vadd.f32 %v515, %v561
  %v587 = vadd.f32 %v516, %v561
  %v588 = vadd.f32 %v517, %v561
  %v589 = vadd.f32 %v518, %v561
  %v590 = vadd.f32 %v519, %v561
  %v591 = vadd.f32 %v520, %v561
  %v592 = vadd.f32 %v521, %v561
  %v593 = vadd.f32 %v522, %v561
  %v594 = vadd.f32 %v523, %v561
  %v595 = vadd.f32 %v524, %v561
  %v596 = vadd.f32 %v525, %v561
  %v597 = vadd.f32 %v526, %v561
  %v598 = vadd.f32 %v527, %v561
  %v599 = vadd.f32 %v528, %v561
  %v600 = vadd.f32 %v529, %v561
  %v601 = vadd.f32 %v530, %v561
  %v602 = vadd.f32 %v531, %v561
  %v603 = vadd.f32 %v532, %v561
  %v604 = vadd.f32 %v533, %v561
  %v605 = vadd.f32 %v534, %v561
  %v606 = vadd.f32 %v535, %v561
  %v607 = vadd.f32 %v536, %v561
  %v608 = vadd.f32 %v537, %v561
  %v609 = vadd.f32 %v538, %v561
  %v610 = vadd.f32 %v539, %v561
  %v611 = vadd.f32 %v540, %v561
  %v612 = vadd.f32 %v541, %v561
  %v613 = vadd.f32 %v542, %v561
  %v614 = vadd.f32 %v543, %v561
  %v615 = vadd.f32 %v544, %v561
  %v616 = vadd.f32 %v545, %v561
  %v617 = vadd.f32 %v546, %v561
  %v618 = vadd.f32 %v547, %v561
  %v619 = vadd.f32 %v548, %v561
  %v620 = vadd.f32 %v549, %v561
  %v621 = vadd.f32 %v550, %v561
  %v622 = vadd.f32 %v551, %v561
  %v623 = vadd.f32 %v552, %v561
  %v624 = vadd.f32 %v553, %v561
  %v625 = vadd.f32 %v554, %v561
  %v626 = vadd.f32 %v555, %v561
  %v627 = vmax.f32 %v563, 0.0
  %v628 = vmax.f32 %v564, 0.0
  %v629 = vmax.f32 %v565, 0.0
  %v630 = vmax.f32 %v566, 0.0
  %v631 = vmax.f32 %v567, 0.0
  %v632 = vmax.f32 %v568, 0.0
  %v633 = vmax.f32 %v569, 0.0
  %v634 = vmax.f32 %v570, 0.0
  %v635 = vmax.f32 %v571, 0.0
  %v636 = vmax.f32 %v572, 0.0
  %v637 = vmax.f32 %v573, 0.0
  %v638 = vmax.f32 %v574, 0.0
  %v639 = vmax.f32 %v575, 0.0
  %v640 = vmax.f32 %v576, 0.0
  %v641 = vmax.f32 %v577, 0.0
  %v642 = vmax.f32 %v578, 0.0
  %v643 = vmax.f32 %v579, 0.0
  %v644 = vmax.f32 %v580, 0.0
  %v645 = vmax.f32 %v581, 0.0
  %v646 = vmax.f32 %v582, 0.0
  %v647 = vmax.f32 %v583, 0.0
  %v648 = vmax.f32 %v584, 0.0
  %v649 = vmax.f32 %v585, 0.0
  %v650 = vmax.f32 %v586, 0.0
  %v651 = vmax.f32 %v587, 0.0
  %v652 = vmax.f32 %v588, 0.0
  %v653 = vmax.f32 %v589, 0.0
  %v654 = vmax.f32 %v590, 0.0
  %v655 = vmax.f32 %v591, 0.0
  %v656 = vmax.f32 %v592, 0.0
  %v657 = vmax.f32 %v593, 0.0
  %v658 = vmax.f32 %v594, 0.0
  %v659 = vmax.f32 %v595, 0.0
  %v660 = vmax.f32 %v596, 0.0
  %v661 = vmax.f32 %v597, 0.0
  %v662 = vmax.f32 %v598, 0.0
  %v663 = vmax.f32 %v599, 0.0
  %v664 = vmax.f32 %v600, 0.0
  %v665 = vmax.f32 %v601, 0.0
  %v666 = vmax.f32 %v602, 0.0
  %v667 = vmax.f32 %v603, 0.0
  %v668 = vmax.f32 %v604, 0.0
  %v669 = vmax.f32 %v605, 0.0
  %v670 = vmax.f32 %v606, 0.0
  %v671 = vmax.f32 %v607, 0.0
  %v672 = vmax.f32 %v608, 0.0
  %v673 = vmax.f32 %v609, 0.0
  %v674 = vmax.f32 %v610, 0.0
  %v675 = vmax.f32 %v611, 0.0
  %v676 = vmax.f32 %v612, 0.0
  %v677 = vmax.f32 %v613, 0.0
  %v678 = vmax.f32 %v614, 0.0
  %v679 = vmax.f32 %v615, 0.0
  %v680 = vmax.f32 %v616, 0.0
  %v681 = vmax.f32 %v617, 0.0
  %v682 = vmax.f32 %v618, 0.0
  %v683 = vmax.f32 %v619, 0.0
  %v684 = vmax.f32 %v620, 0.0
  %v685 = vmax.f32 %v621, 0.0
  %v686 = vmax.f32 %v622, 0.0
  %v687 = vmax.f32 %v623, 0.0
  %v688 = vmax.f32 %v624, 0.0
  %v689 = vmax.f32 %v625, 0.0
  %v690 = vmax.f32 %v626, 0.0
  %691 = vst [vmem:[%s6] sm:$0xff] %v627
  %692 = vst [vmem:[%s6 + $0x8] sm:$0xff] %v628
  %693 = vst [vmem:[%s6 + $0x10] sm:$0xff] %v629
  %694 = vst [vmem:[%s6 + $0x18] sm:$0xff] %v630
  %695 = vst [vmem:[%s6 + $0x20] sm:$0xff] %v631
  %696 = vst [vmem:[%s6 + $0x28] sm:$0xff] %v632
  %697 = vst [vmem:[%s6 + $0x30] sm:$0xff] %v633
  %698 = vst [vmem:[%s6 + $0x38] sm:$0xff] %v634
  %699 = vst [vmem:[%s6 + $0x40] sm:$0xff] %v635
  %700 = vst [vmem:[%s6 + $0x48] sm:$0xff] %v636
  %701 = vst [vmem:[%s6 + $0x50] sm:$0xff] %v637
  %702 = vst [vmem:[%s6 + $0x58] sm:$0xff] %v638
  %703 = vst [vmem:[%s6 + $0x60] sm:$0xff] %v639
  %704 = vst [vmem:[%s6 + $0x68] sm:$0xff] %v640
  %705 = vst [vmem:[%s6 + $0x70] sm:$0xff] %v641
  %706 = vst [vmem:[%s6 + $0x78] sm:$0xff] %v642
  %707 = vst [vmem:[%s6 + $0x80] sm:$0xff] %v643
  %708 = vst [vmem:[%s6 + $0x88] sm:$0xff] %v644
  %709 = vst [vmem:[%s6 + $0x90] sm:$0xff] %v645
  %710 = vst [vmem:[%s6 + $0x98] sm:$0xff] %v646
  %711 = vst [vmem:[%s6 + $0xa0] sm:$0xff] %v647
  %712 = vst [vmem:[%s6 + $0xa8] sm:$0xff] %v648
  %713 = vst [vmem:[%s6 + $0xb0] sm:$0xff] %v649
  %714 = vst [vmem:[%s6 + $0xb8] sm:$0xff] %v650
  %715 = vst [vmem:[%s6 + $0xc0] sm:$0xff] %v651
  %716 = vst [vmem:[%s6 + $0xc8] sm:$0xff] %v652
  %717 = vst [vmem:[%s6 + $0xd0] sm:$0xff] %v653
  %718 = vst [vmem:[%s6 + $0xd8] sm:$0xff] %v654
  %719 = vst [vmem:[%s6 + $0xe0] sm:$0xff] %v655
  %720 = vst [vmem:[%s6 + $0xe8] sm:$0xff] %v656
  %721 = vst [vmem:[%s6 + $0xf0] sm:$0xff] %v657
  %722 = vst [vmem:[%s6 + $0xf8] sm:$0xff] %v658
  %723 = vst [vmem:[%s6 + $0x100] sm:$0xff] %v659
  %724 = vst [vmem:[%s6 + $0x108] sm:$0xff] %v660
  %725 = vst [vmem:[%s6 + $0x110] sm:$0xff] %v661
  %726 = vst [vmem:[%s6 + $0x118] sm:$0xff] %v662
  %727 = vst [vmem:[%s6 + $0x120] sm:$0xff] %v663
  %728 = vst [vmem:[%s6 + $0x128] sm:$0xff] %v664
  %729 = vst [vmem:[%s6 + $0x130] sm:$0xff] %v665
  %730 = vst [vmem:[%s6 + $0x138] sm:$0xff] %v666
  %731 = vst [vmem:[%s6 + $0x140] sm:$0xff] %v667
  %732 = vst [vmem:[%s6 + $0x148] sm:$0xff] %v668
  %733 = vst [vmem:[%s6 + $0x150] sm:$0xff] %v669
  %734 = vst [vmem:[%s6 + $0x158] sm:$0xff] %v670
  %735 = vst [vmem:[%s6 + $0x160] sm:$0xff] %v671
  %736 = vst [vmem:[%s6 + $0x168] sm:$0xff] %v672
  %737 = vst [vmem:[%s6 + $0x170] sm:$0xff] %v673
  %738 = vst [vmem:[%s6 + $0x178] sm:$0xff] %v674
  %739 = vst [vmem:[%s6 + $0x180] sm:$0xff] %v675
  %740 = vst [vmem:[%s6 + $0x188] sm:$0xff] %v676
  %741 = vst [vmem:[%s6 + $0x190] sm:$0xff] %v677
  %742 = vst [vmem:[%s6 + $0x198] sm:$0xff] %v678
  %743 = vst [vmem:[%s6 + $0x1a0] sm:$0xff] %v679
  %744 = vst [vmem:[%s6 + $0x1a8] sm:$0xff] %v680
  %745 = vst [vmem:[%s6 + $0x1b0] sm:$0xff] %v681
  %746 = vst [vmem:[%s6 + $0x1b8] sm:$0xff] %v682
  %747 = vst [vmem:[%s6 + $0x1c0] sm:$0xff] %v683
  %748 = vst [vmem:[%s6 + $0x1c8] sm:$0xff] %v684
  %749 = vst [vmem:[%s6 + $0x1d0] sm:$0xff] %v685
  %750 = vst [vmem:[%s6 + $0x1d8] sm:$0xff] %v686
  %751 = vst [vmem:[%s6 + $0x1e0] sm:$0xff] %v687
  %752 = vst [vmem:[%s6 + $0x1e8] sm:$0xff] %v688
  %753 = vst [vmem:[%s6 + $0x1f0] sm:$0xff] %v689
  %754 = vst [vmem:[%s6 + $0x1f8] sm:$0xff] %v690
  // Predicated region
  $region26: #{_lambda_.9} parent=0 // pred_check
    _
  $region27: #{_lambda_.9} parent=0 // pred_check_branch
    %756 = sbr.rel (0) target = $region29
  $region28: #{_lambda_.9} parent=0 // pred_region
    _
  $region29: #{_lambda_.9} parent=0 // pred_fallthru
    _
  // Predicated region
  $region30: #{_lambda_.9} parent=0 // pred_check
    _
  $region31: #{_lambda_.9} parent=0 // pred_check_branch
    %758 = sbr.rel (0) target = $region33
  $region32: #{_lambda_.9} parent=0 // pred_region
    _
  $region33: #{_lambda_.9} parent=0 // pred_fallthru
    _

// kernel: _lambda_.7
$region0: #{_lambda_.7}
  #allocation0 [shape = 'u32[]', space=smem, size = 0x4, offset = 0x4, fixed_abs, tag = 'smem constant byte address 0x4 - core index']
  #allocation1 [shape = 'u32[144,128]{1,0:T(1,128)}', space=vmem, size = 0x12000, scoped, tag = 'internal scratch']
  #allocation2 [shape = 'f32[256,128]{1,0:T(8,128)}', space=vmem, size = 0x20000, scoped, tag = 'scratch operand']
  %s0 = inlined_call_operand.vmem [shape: bf16[2,18,18,128], index: 0, kind: input, shape index: {}]
  %s1 = inlined_call_operand.vmem [shape: bf16[3,3,128,128], index: 1, kind: input, shape index: {}]
  %s2 = inlined_call_operand.vmem [shape: bf16[512,128], index: 2, kind: output, shape index: {0}]
  %s3 = inlined_call_operand.vmem [shape: f32[8,128], index: 3, kind: output, shape index: {1}]
  %4 = xla_tuple %s2, %s3
  %s5 = sld [smem:[#allocation0]]
  $region53: #{_lambda_.7} parent=0
    _
  %s7 = ssub.s32 1, %s5
  %s8 = scalar_select 0, %s7, %s5
  loop: start=0, step=1, limit=4
  $region2: #{_lambda_.7} parent=0 // loop_pre_header
    _
  $region3: #{_lambda_.7} parent=0 // loop_header
    %s10 = sphi 0, %s14
    %p11 = scmp.ge.s32.totalorder %s10, 4
    %s17 = sphi 0, %s29
    %s18 = sphi 0, %s25
    %s19 = sphi 0, %s17
    %s20 = sphi 0, %s18
    %s21 = sphi 0, %s19
    %s22 = sphi 0, %s20
    %s32 = sphi 0, %s34
    %s35 = sphi 0, %s32
    %s36 = sphi 0, %s35
    %s52 = sphi 0, %s36
    %s56 = sphi 0, %s56
    %s58 = sphi 0, %s56
    %s59 = sphi 0, %s58
    %s73 = sphi 0, %s59
    %s81 = sphi 0, %s83
    %s84 = sphi 0, %s81
    %s85 = sphi 0, %s84
    %s101 = sphi 0, %s85
    %s105 = sphi 0, %s105
    %s107 = sphi 0, %s105
    %s108 = sphi 0, %s107
    %s122 = sphi 0, %s108
  $region4: #{_lambda_.7} parent=0 // loop_header_branch
    %13 = sbr.rel (%p11) target = $region8
  $region5: #{_lambda_.7} parent=0 // loop_body
    %s15 = ssub.s32 %s10, 1
    %s16 = ssub.s32 %s10, 2
    %s23 = sadd.s32 1, %s18
    %p24 = scmp.ge.s32.totalorder %s23, 1
    %s25 = scalar_select %p24, 0, %s23
    %s26 = sadd.s32 1, %s17
    %s27 = scalar_select %p24, %s26, %s17
    %p28 = scmp.ge.s32.totalorder %s27, 2
    %s29 = scalar_select %p28, 0, %s27
    %s30 = ssub.s32 %s17, %s29
    %p31 = scmp.eq.s32.totalorder %s30, 0
    %s33 = sadd.s32 %s32, 1
    %s34 = scalar_select %p31, %s32, %s33
    %p37 = pneg %p31
    %p38 = scmp.eq.s32.totalorder %s10, 1
    %p39 = por %p37, %p38
    %p40 = scmp.ne.s32.totalorder %s32, %s35
    %p41 = scmp.eq.s32.totalorder %s10, 0
    %p42 = por %p40, %p41
    %p43 = scmp.ne.s32.totalorder %s32, %s35
    %p44 = scmp.eq.s32.totalorder %s15, 1
    %p45 = por %p43, %p44
    %p46 = scmp.ne.s32.totalorder %s35, %s36
    %p47 = scmp.eq.s32.totalorder %s15, 0
    %p48 = por %p46, %p47
    %p49 = scmp.ne.s32.totalorder %s35, %s36
    %p50 = scmp.eq.s32.totalorder %s16, 1
    %p51 = por %p49, %p50
    %p53 = scmp.ne.s32.totalorder %s36, %s52
    %p54 = scmp.eq.s32.totalorder %s16, 0
    %p55 = por %p53, %p54
    %s57 = sadd.s32 %s56, 1
    %p60 = scmp.eq.s32.totalorder %s10, 1
    %p61 = scmp.ne.s32.totalorder %s56, %s58
    %p62 = scmp.eq.s32.totalorder %s10, 0
    %p63 = por %p61, %p62
    %p64 = scmp.ne.s32.totalorder %s56, %s58
    %p65 = scmp.eq.s32.totalorder %s15, 1
    %p66 = por %p64, %p65
    %p67 = scmp.ne.s32.totalorder %s58, %s59
    %p68 = scmp.eq.s32.totalorder %s15, 0
    %p69 = por %p67, %p68
    %p70 = scmp.ne.s32.totalorder %s58, %s59
    %p71 = scmp.eq.s32.totalorder %s16, 1
    %p72 = por %p70, %p71
    %p74 = scmp.ne.s32.totalorder %s59, %s73
    %p75 = scmp.eq.s32.totalorder %s16, 0
    %p76 = por %p74, %p75
    %s77 = sadd.s32 %s17, %s18
    %s78 = sadd.s32 %s29, %s25
    %s79 = ssub.s32 %s77, %s78
    %p80 = scmp.eq.s32.totalorder %s79, 0
    %s82 = sadd.s32 %s81, 1
    %s83 = scalar_select %p80, %s81, %s82
    %p86 = pneg %p80
    %p87 = scmp.eq.s32.totalorder %s10, 1
    %p88 = por %p86, %p87
    %p89 = scmp.ne.s32.totalorder %s81, %s84
    %p90 = scmp.eq.s32.totalorder %s10, 0
    %p91 = por %p89, %p90
    %p92 = scmp.ne.s32.totalorder %s81, %s84
    %p93 = scmp.eq.s32.totalorder %s15, 1
    %p94 = por %p92, %p93
    %p95 = scmp.ne.s32.totalorder %s84, %s85
    %p96 = scmp.eq.s32.totalorder %s15, 0
    %p97 = por %p95, %p96
    %p98 = scmp.ne.s32.totalorder %s84, %s85
    %p99 = scmp.eq.s32.totalorder %s16, 1
    %p100 = por %p98, %p99
    %p102 = scmp.ne.s32.totalorder %s85, %s101
    %p103 = scmp.eq.s32.totalorder %s16, 0
    %p104 = por %p102, %p103
    %s106 = sadd.s32 %s105, 1
    %p109 = scmp.eq.s32.totalorder %s10, 1
    %p110 = scmp.ne.s32.totalorder %s105, %s107
    %p111 = scmp.eq.s32.totalorder %s10, 0
    %p112 = por %p110, %p111
    %p113 = scmp.ne.s32.totalorder %s105, %s107
    %p114 = scmp.eq.s32.totalorder %s15, 1
    %p115 = por %p113, %p114
    %p116 = scmp.ne.s32.totalorder %s107, %s108
    %p117 = scmp.eq.s32.totalorder %s15, 0
    %p118 = por %p116, %p117
    %p119 = scmp.ne.s32.totalorder %s107, %s108
    %p120 = scmp.eq.s32.totalorder %s16, 1
    %p121 = por %p119, %p120
    %p123 = scmp.ne.s32.totalorder %s108, %s122
    %p124 = scmp.eq.s32.totalorder %s16, 0
    %p125 = por %p123, %p124
    %p126 = scmp.le.s32.totalorder 1, %s10
    %p127 = scmp.lt.s32.totalorder %s10, 3
    %p128 = pnand %p126, %p127
    %p129 = pneg %p128
    // Predicated region
    $region9: #{_lambda_.7} parent=5 // pred_check
      _
    $region10: #{_lambda_.7} parent=5 // pred_check_branch
      %131 = sbr.rel (%p128) target = $region12
    $region11: #{_lambda_.7} parent=5 // pred_region
      %s132 = ssub.s32 %s10, 1
      // Predicated region
      $region13: #{_lambda_.7} parent=11 // pred_check
        %p133 = pneg %p69
      $region14: #{_lambda_.7} parent=11 // pred_check_branch
        %135 = sbr.rel (%p133) target = $region16
      $region15: #{_lambda_.7} parent=11 // pred_region
        _
      $region16: #{_lambda_.7} parent=11 // pred_fallthru
        _
    $region12: #{_lambda_.7} parent=5 // pred_fallthru
      _
    %p136 = scmp.lt.s32.totalorder %s10, 2
    // Predicated region
    $region17: #{_lambda_.7} parent=5 // pred_check
      %p137 = pneg %p136
    $region18: #{_lambda_.7} parent=5 // pred_check_branch
      %139 = sbr.rel (%p137) target = $region20
    $region19: #{_lambda_.7} parent=5 // pred_region
      // Predicated region
      $region21: #{_lambda_.7} parent=19 // pred_check
        %p140 = pneg %p42
      $region22: #{_lambda_.7} parent=19 // pred_check_branch
        %142 = sbr.rel (%p140) target = $region24
      $region23: #{_lambda_.7} parent=19 // pred_region
        %p143 = scmp.lt.s32.totalorder %s17, 1
        %s144 = scalar_select %p143, %s17, 1
        %s145 = smul.addr %s144, 54
        %s146 = smul.addr %s145, 4
        %s147 = scalar_lea.vmem %s0, %s146
      $region24: #{_lambda_.7} parent=19 // pred_fallthru
        _
    $region20: #{_lambda_.7} parent=5 // pred_fallthru
      _
    %p148 = scmp.le.s32.totalorder 1, %s10
    %p149 = scmp.lt.s32.totalorder %s10, 3
    %p150 = pnand %p148, %p149
    %p151 = pneg %p150
    // Predicated region
    $region25: #{_lambda_.7} parent=5 // pred_check
      _
    $region26: #{_lambda_.7} parent=5 // pred_check_branch
      %153 = sbr.rel (%p150) target = $region28
    $region27: #{_lambda_.7} parent=5 // pred_region
      %s154 = ssub.s32 %s10, 1
      %p155 = scmp.lt.s32.totalorder %s19, 1
      %s156 = scalar_select %p155, %s19, 1
      %s157 = smul.addr %s156, 54
      %s158 = smul.addr %s157, 4
      %s159 = scalar_lea.vmem %s0, %s158
      %p160 = pneg %p48
      %p161 = pneg %p45
      %p162 = pneg %p69
      %p163 = pneg %p66
      %p164 = pneg %p97
      %p165 = pneg %p94
      %s166 = sadd.s32 %s19, %s20
      %s167 = smul.u32 32, %s166
      %p168 = scmp.lt.s32.totalorder %s167, 63
      %s169 = scalar_select %p168, %s167, 63
      %s170 = smul.addr %s169, 4
      %s171 = scalar_lea.vmem %s2, %s170
      %p172 = pneg %p118
      %p173 = pneg %p115
      %p174 = scmp.lt.s32.totalorder %s19, 1
      %s175 = scalar_select %p174, %s19, 1
      %s176 = smul.addr %s175, 54
      %s177 = smul.addr %s176, 4
      %s178 = scalar_lea.vmem %s0, %s177
      %s179 = sadd.s32 %s19, %s20
      %s180 = smul.u32 32, %s179
      %p181 = scmp.lt.s32.totalorder %s180, 63
      %s182 = scalar_select %p181, %s180, 63
      %s183 = smul.addr %s182, 4
      %s184 = scalar_lea.vmem %s2, %s183
      %s185 = sadd.s32 %s19, %s20
      %s186 = smul.u32 32, %s185
      %p188 = scmp.eq.s32.totalorder %s19, 0
      %p189 = scmp.eq.s32.totalorder %s20, 0
      %p190 = pnand %p188, %p189
      %p191 = pneg %p190
      // Predicated region
      $region29: #{_lambda_.7} parent=27 // pred_check
        _
      $region30: #{_lambda_.7} parent=27 // pred_check_branch
        %193 = sbr.rel (%p190) target = $region32
      $region31: #{_lambda_.7} parent=27 // pred_region
        %194 = vst [vmem:[%s3] sm:$0xff] 0.0
      $region32: #{_lambda_.7} parent=27 // pred_fallthru
        _
      %s195 = smul.u32 %s20, 16
      %s196 = smul.u32 %s195, 3
      %s197 = smul.addr %s196, 4
      %s198 = scalar_lea.vmem %s178, %s197
      %v199 = vld [vmem:[%s198] sm:$0xf]
      %v200 = vld [vmem:[%s198 + $0x4] sm:$0xf]
      %v201 = vld [vmem:[%s198 + $0x8] sm:$0x1]
      %v202 = vld [vmem:[%s198 + $0xc] sm:$0xf]
      %v203 = vld [vmem:[%s198 + $0x10] sm:$0xf]
      %v204 = vld [vmem:[%s198 + $0x14] sm:$0x1]
      %v205 = vld [vmem:[%s198 + $0x18] sm:$0xf]
      %v206 = vld [vmem:[%s198 + $0x1c] sm:$0xf]
      %v207 = vld [vmem:[%s198 + $0x20] sm:$0x1]
      %v208 = vld [vmem:[%s198 + $0x24] sm:$0xf]
      %v209 = vld [vmem:[%s198 + $0x28] sm:$0xf]
      %v210 = vld [vmem:[%s198 + $0x2c] sm:$0x1]
      %v211 = vld [vmem:[%s198 + $0x30] sm:$0xf]
      %v212 = vld [vmem:[%s198 + $0x34] sm:$0xf]
      %v213 = vld [vmem:[%s198 + $0x38] sm:$0x1]
      %v214 = vld [vmem:[%s198 + $0x3c] sm:$0xf]
      %v215 = vld [vmem:[%s198 + $0x40] sm:$0xf]
      %v216 = vld [vmem:[%s198 + $0x44] sm:$0x1]
      %v217 = vld [vmem:[%s198 + $0x48] sm:$0xf]
      %v218 = vld [vmem:[%s198 + $0x4c] sm:$0xf]
      %v219 = vld [vmem:[%s198 + $0x50] sm:$0x1]
      %v220 = vld [vmem:[%s198 + $0x54] sm:$0xf]
      %v221 = vld [vmem:[%s198 + $0x58] sm:$0xf]
      %v222 = vld [vmem:[%s198 + $0x5c] sm:$0x1]
      %v223 = vld [vmem:[%s198 + $0x60] sm:$0xf]
      %v224 = vld [vmem:[%s198 + $0x64] sm:$0xf]
      %v225 = vld [vmem:[%s198 + $0x68] sm:$0x1]
      %v226 = vld [vmem:[%s198 + $0x6c] sm:$0xf]
      %v227 = vld [vmem:[%s198 + $0x70] sm:$0xf]
      %v228 = vld [vmem:[%s198 + $0x74] sm:$0x1]
      %v229 = vld [vmem:[%s198 + $0x78] sm:$0xf]
      %v230 = vld [vmem:[%s198 + $0x7c] sm:$0xf]
      %v231 = vld [vmem:[%s198 + $0x80] sm:$0x1]
      %v232 = vld [vmem:[%s198 + $0x84] sm:$0xf]
      %v233 = vld [vmem:[%s198 + $0x88] sm:$0xf]
      %v234 = vld [vmem:[%s198 + $0x8c] sm:$0x1]
      %v235 = vld [vmem:[%s198 + $0x90] sm:$0xf]
      %v236 = vld [vmem:[%s198 + $0x94] sm:$0xf]
      %v237 = vld [vmem:[%s198 + $0x98] sm:$0x1]
      %v238 = vld [vmem:[%s198 + $0x9c] sm:$0xf]
      %v239 = vld [vmem:[%s198 + $0xa0] sm:$0xf]
      %v240 = vld [vmem:[%s198 + $0xa4] sm:$0x1]
      %v241 = vld [vmem:[%s198 + $0xa8] sm:$0xf]
      %v242 = vld [vmem:[%s198 + $0xac] sm:$0xf]
      %v243 = vld [vmem:[%s198 + $0xb0] sm:$0x1]
      %v244 = vld [vmem:[%s198 + $0xb4] sm:$0xf]
      %v245 = vld [vmem:[%s198 + $0xb8] sm:$0xf]
      %v246 = vld [vmem:[%s198 + $0xbc] sm:$0x1]
      %v247 = vld [vmem:[%s1] sm:$0xf]
      %v248 = vld [vmem:[%s1 + $0x4] sm:$0xf]
      %v249 = vld [vmem:[%s1 + $0x8] sm:$0xf]
      %v250 = vld [vmem:[%s1 + $0xc] sm:$0xf]
      %v251 = vld [vmem:[%s1 + $0x10] sm:$0xf]
      %v252 = vld [vmem:[%s1 + $0x14] sm:$0xf]
      %v253 = vld [vmem:[%s1 + $0x18] sm:$0xf]
      %v254 = vld [vmem:[%s1 + $0x1c] sm:$0xf]
      %v255 = vld [vmem:[%s1 + $0x20] sm:$0xf]
      %v256 = vld [vmem:[%s1 + $0x24] sm:$0xf]
      %v257 = vld [vmem:[%s1 + $0x28] sm:$0xf]
      %v258 = vld [vmem:[%s1 + $0x2c] sm:$0xf]
      %v259 = vld [vmem:[%s1 + $0x30] sm:$0xf]
      %v260 = vld [vmem:[%s1 + $0x34] sm:$0xf]
      %v261 = vld [vmem:[%s1 + $0x38] sm:$0xf]
      %v262 = vld [vmem:[%s1 + $0x3c] sm:$0xf]
      %vm263 = vsmask.f32 3328
      %vm264 = vsmask.f32 7440
      %vm265 = vmor %vm263, %vm264
      %v267 = vshrl.u32 %v199, 16
      %v269 = vrot.slane %v267, 4
      %v270 = vshll.u32 %v199, 16
      %v272 = vrot.slane %v270, 5
      %v273 = vor.u32 %v269, %v272
      %v274 = vrot.slane %v273, 4
      %v276 = vshll.u32 %v200, 16
      %v278 = vrot.slane %v276, 5
      %v279 = vsel %vm265, %v274, %v278
      %v280 = vshrl.u32 %v200, 16
      %v282 = vrot.slane %v280, 4
      %v283 = vor.u32 %v282, %v278
      %v284 = vrot.slane %v283, 4
      %v286 = vshll.u32 %v201, 16
      %v288 = vrot.slane %v286, 5
      %v289 = vsel %vm265, %v284, %v288
      %v291 = vshrl.u32 %v202, 16
      %v293 = vrot.slane %v291, 4
      %v294 = vshll.u32 %v202, 16
      %v296 = vrot.slane %v294, 5
      %v297 = vor.u32 %v293, %v296
      %v298 = vrot.slane %v297, 4
      %v300 = vshll.u32 %v203, 16
      %v302 = vrot.slane %v300, 5
      %v303 = vsel %vm265, %v298, %v302
      %v304 = vshrl.u32 %v203, 16
      %v306 = vrot.slane %v304, 4
      %v307 = vor.u32 %v306, %v302
      %v308 = vrot.slane %v307, 4
      %v310 = vshll.u32 %v204, 16
      %v312 = vrot.slane %v310, 5
      %v313 = vsel %vm265, %v308, %v312
      %v315 = vshrl.u32 %v205, 16
      %v317 = vrot.slane %v315, 4
      %v318 = vshll.u32 %v205, 16
      %v320 = vrot.slane %v318, 5
      %v321 = vor.u32 %v317, %v320
      %v322 = vrot.slane %v321, 4
      %v324 = vshll.u32 %v206, 16
      %v326 = vrot.slane %v324, 5
      %v327 = vsel %vm265, %v322, %v326
      %v328 = vshrl.u32 %v206, 16
      %v330 = vrot.slane %v328, 4
      %v331 = vor.u32 %v330, %v326
      %v332 = vrot.slane %v331, 4
      %v334 = vshll.u32 %v207, 16
      %v336 = vrot.slane %v334, 5
      %v337 = vsel %vm265, %v332, %v336
      %v339 = vshrl.u32 %v208, 16
      %v341 = vrot.slane %v339, 4
      %v342 = vshll.u32 %v208, 16
      %v344 = vrot.slane %v342, 5
      %v345 = vor.u32 %v341, %v344
      %v346 = vrot.slane %v345, 4
      %v348 = vshll.u32 %v209, 16
      %v350 = vrot.slane %v348, 5
      %v351 = vsel %vm265, %v346, %v350
      %v352 = vshrl.u32 %v209, 16
      %v354 = vrot.slane %v352, 4
      %v355 = vor.u32 %v354, %v350
      %v356 = vrot.slane %v355, 4
      %v358 = vshll.u32 %v210, 16
      %v360 = vrot.slane %v358, 5
      %v361 = vsel %vm265, %v356, %v360
      %v363 = vshrl.u32 %v211, 16
      %v365 = vrot.slane %v363, 4
      %v366 = vshll.u32 %v211, 16
      %v368 = vrot.slane %v366, 5
      %v369 = vor.u32 %v365, %v368
      %v370 = vrot.slane %v369, 4
      %v372 = vshll.u32 %v212, 16
      %v374 = vrot.slane %v372, 5
      %v375 = vsel %vm265, %v370, %v374
      %v376 = vshrl.u32 %v212, 16
      %v378 = vrot.slane %v376, 4
      %v379 = vor.u32 %v378, %v374
      %v380 = vrot.slane %v379, 4
      %v382 = vshll.u32 %v213, 16
      %v384 = vrot.slane %v382, 5
      %v385 = vsel %vm265, %v380, %v384
      %v387 = vshrl.u32 %v214, 16
      %v389 = vrot.slane %v387, 4
      %v390 = vshll.u32 %v214, 16
      %v392 = vrot.slane %v390, 5
      %v393 = vor.u32 %v389, %v392
      %v394 = vrot.slane %v393, 4
      %v396 = vshll.u32 %v215, 16
      %v398 = vrot.slane %v396, 5
      %v399 = vsel %vm265, %v394, %v398
      %v400 = vshrl.u32 %v215, 16
      %v402 = vrot.slane %v400, 4
      %v403 = vor.u32 %v402, %v398
      %v404 = vrot.slane %v403, 4
      %v406 = vshll.u32 %v216, 16
      %v408 = vrot.slane %v406, 5
      %v409 = vsel %vm265, %v404, %v408
      %v411 = vshrl.u32 %v217, 16
      %v413 = vrot.slane %v411, 4
      %v414 = vshll.u32 %v217, 16
      %v416 = vrot.slane %v414, 5
      %v417 = vor.u32 %v413, %v416
      %v418 = vrot.slane %v417, 4
      %v420 = vshll.u32 %v218, 16
      %v422 = vrot.slane %v420, 5
      %v423 = vsel %vm265, %v418, %v422
      %v424 = vshrl.u32 %v218, 16
      %v426 = vrot.slane %v424, 4
      %v427 = vor.u32 %v426, %v422
      %v428 = vrot.slane %v427, 4
      %v430 = vshll.u32 %v219, 16
      %v432 = vrot.slane %v430, 5
      %v433 = vsel %vm265, %v428, %v432
      %v435 = vshrl.u32 %v220, 16
      %v437 = vrot.slane %v435, 4
      %v438 = vshll.u32 %v220, 16
      %v440 = vrot.slane %v438, 5
      %v441 = vor.u32 %v437, %v440
      %v442 = vrot.slane %v441, 4
      %v444 = vshll.u32 %v221, 16
      %v446 = vrot.slane %v444, 5
      %v447 = vsel %vm265, %v442, %v446
      %v448 = vshrl.u32 %v221, 16
      %v450 = vrot.slane %v448, 4
      %v451 = vor.u32 %v450, %v446
      %v452 = vrot.slane %v451, 4
      %v454 = vshll.u32 %v222, 16
      %v456 = vrot.slane %v454, 5
      %v457 = vsel %vm265, %v452, %v456
      %v459 = vshrl.u32 %v223, 16
      %v461 = vrot.slane %v459, 4
      %v462 = vshll.u32 %v223, 16
      %v464 = vrot.slane %v462, 5
      %v465 = vor.u32 %v461, %v464
      %v466 = vrot.slane %v465, 4
      %v468 = vshll.u32 %v224, 16
      %v470 = vrot.slane %v468, 5
      %v471 = vsel %vm265, %v466, %v470
      %v472 = vshrl.u32 %v224, 16
      %v474 = vrot.slane %v472, 4
      %v475 = vor.u32 %v474, %v470
      %v476 = vrot.slane %v475, 4
      %v478 = vshll.u32 %v225, 16
      %v480 = vrot.slane %v478, 5
      %v481 = vsel %vm265, %v476, %v480
      %v483 = vshrl.u32 %v226, 16
      %v485 = vrot.slane %v483, 4
      %v486 = vshll.u32 %v226, 16
      %v488 = vrot.slane %v486, 5
      %v489 = vor.u32 %v485, %v488
      %v490 = vrot.slane %v489, 4
      %v492 = vshll.u32 %v227, 16
      %v494 = vrot.slane %v492, 5
      %v495 = vsel %vm265, %v490, %v494
      %v496 = vshrl.u32 %v227, 16
      %v498 = vrot.slane %v496, 4
      %v499 = vor.u32 %v498, %v494
      %v500 = vrot.slane %v499, 4
      %v502 = vshll.u32 %v228, 16
      %v504 = vrot.slane %v502, 5
      %v505 = vsel %vm265, %v500, %v504
      %v507 = vshrl.u32 %v229, 16
      %v509 = vrot.slane %v507, 4
      %v510 = vshll.u32 %v229, 16
      %v512 = vrot.slane %v510, 5
      %v513 = vor.u32 %v509, %v512
      %v514 = vrot.slane %v513, 4
      %v516 = vshll.u32 %v230, 16
      %v518 = vrot.slane %v516, 5
      %v519 = vsel %vm265, %v514, %v518
      %v520 = vshrl.u32 %v230, 16
      %v522 = vrot.slane %v520, 4
      %v523 = vor.u32 %v522, %v518
      %v524 = vrot.slane %v523, 4
      %v526 = vshll.u32 %v231, 16
      %v528 = vrot.slane %v526, 5
      %v529 = vsel %vm265, %v524, %v528
      %v531 = vshrl.u32 %v232, 16
      %v533 = vrot.slane %v531, 4
      %v534 = vshll.u32 %v232, 16
      %v536 = vrot.slane %v534, 5
      %v537 = vor.u32 %v533, %v536
      %v538 = vrot.slane %v537, 4
      %v540 = vshll.u32 %v233, 16
      %v542 = vrot.slane %v540, 5
      %v543 = vsel %vm265, %v538, %v542
      %v544 = vshrl.u32 %v233, 16
      %v546 = vrot.slane %v544, 4
      %v547 = vor.u32 %v546, %v542
      %v548 = vrot.slane %v547, 4
      %v550 = vshll.u32 %v234, 16
      %v552 = vrot.slane %v550, 5
      %v553 = vsel %vm265, %v548, %v552
      %v555 = vshrl.u32 %v235, 16
      %v557 = vrot.slane %v555, 4
      %v558 = vshll.u32 %v235, 16
      %v560 = vrot.slane %v558, 5
      %v561 = vor.u32 %v557, %v560
      %v562 = vrot.slane %v561, 4
      %v564 = vshll.u32 %v236, 16
      %v566 = vrot.slane %v564, 5
      %v567 = vsel %vm265, %v562, %v566
      %v568 = vshrl.u32 %v236, 16
      %v570 = vrot.slane %v568, 4
      %v571 = vor.u32 %v570, %v566
      %v572 = vrot.slane %v571, 4
      %v574 = vshll.u32 %v237, 16
      %v576 = vrot.slane %v574, 5
      %v577 = vsel %vm265, %v572, %v576
      %v579 = vshrl.u32 %v238, 16
      %v581 = vrot.slane %v579, 4
      %v582 = vshll.u32 %v238, 16
      %v584 = vrot.slane %v582, 5
      %v585 = vor.u32 %v581, %v584
      %v586 = vrot.slane %v585, 4
      %v588 = vshll.u32 %v239, 16
      %v590 = vrot.slane %v588, 5
      %v591 = vsel %vm265, %v586, %v590
      %v592 = vshrl.u32 %v239, 16
      %v594 = vrot.slane %v592, 4
      %v595 = vor.u32 %v594, %v590
      %v596 = vrot.slane %v595, 4
      %v598 = vshll.u32 %v240, 16
      %v600 = vrot.slane %v598, 5
      %v601 = vsel %vm265, %v596, %v600
      %v603 = vshrl.u32 %v241, 16
      %v605 = vrot.slane %v603, 4
      %v606 = vshll.u32 %v241, 16
      %v608 = vrot.slane %v606, 5
      %v609 = vor.u32 %v605, %v608
      %v610 = vrot.slane %v609, 4
      %v612 = vshll.u32 %v242, 16
      %v614 = vrot.slane %v612, 5
      %v615 = vsel %vm265, %v610, %v614
      %v616 = vshrl.u32 %v242, 16
      %v618 = vrot.slane %v616, 4
      %v619 = vor.u32 %v618, %v614
      %v620 = vrot.slane %v619, 4
      %v622 = vshll.u32 %v243, 16
      %v624 = vrot.slane %v622, 5
      %v625 = vsel %vm265, %v620, %v624
      %v627 = vshrl.u32 %v244, 16
      %v629 = vrot.slane %v627, 4
      %v630 = vshll.u32 %v244, 16
      %v632 = vrot.slane %v630, 5
      %v633 = vor.u32 %v629, %v632
      %v634 = vrot.slane %v633, 4
      %v636 = vshll.u32 %v245, 16
      %v638 = vrot.slane %v636, 5
      %v639 = vsel %vm265, %v634, %v638
      %v640 = vshrl.u32 %v245, 16
      %v642 = vrot.slane %v640, 4
      %v643 = vor.u32 %v642, %v638
      %v644 = vrot.slane %v643, 4
      %v646 = vshll.u32 %v246, 16
      %v648 = vrot.slane %v646, 5
      %v649 = vsel %vm265, %v644, %v648
      %s650 = scalar_lea.vmem %s1, 64
      %v651 = vld [vmem:[%s650] sm:$0xf]
      %v652 = vld [vmem:[%s650 + $0x4] sm:$0xf]
      %v653 = vld [vmem:[%s650 + $0x8] sm:$0xf]
      %v654 = vld [vmem:[%s650 + $0xc] sm:$0xf]
      %v655 = vld [vmem:[%s650 + $0x10] sm:$0xf]
      %v656 = vld [vmem:[%s650 + $0x14] sm:$0xf]
      %v657 = vld [vmem:[%s650 + $0x18] sm:$0xf]
      %v658 = vld [vmem:[%s650 + $0x1c] sm:$0xf]
      %v659 = vld [vmem:[%s650 + $0x20] sm:$0xf]
      %v660 = vld [vmem:[%s650 + $0x24] sm:$0xf]
      %v661 = vld [vmem:[%s650 + $0x28] sm:$0xf]
      %v662 = vld [vmem:[%s650 + $0x2c] sm:$0xf]
      %v663 = vld [vmem:[%s650 + $0x30] sm:$0xf]
      %v664 = vld [vmem:[%s650 + $0x34] sm:$0xf]
      %v665 = vld [vmem:[%s650 + $0x38] sm:$0xf]
      %v666 = vld [vmem:[%s650 + $0x3c] sm:$0xf]
      %v667 = vunpack.c.l.b16 %v279
      %v668 = vunpack.c.l.b16 %v289
      %v669 = vunpack.c.l.b16 %v303
      %v670 = vunpack.c.l.b16 %v313
      %v671 = vunpack.c.l.b16 %v327
      %v672 = vunpack.c.l.b16 %v337
      %v673 = vunpack.c.l.b16 %v351
      %v674 = vunpack.c.l.b16 %v361
      %v675 = vunpack.c.l.b16 %v375
      %v676 = vunpack.c.l.b16 %v385
      %v677 = vunpack.c.l.b16 %v399
      %v678 = vunpack.c.l.b16 %v409
      %v679 = vunpack.c.l.b16 %v423
      %v680 = vunpack.c.l.b16 %v433
      %v681 = vunpack.c.l.b16 %v447
      %v682 = vunpack.c.l.b16 %v457
      %v683 = vunpack.c.l.b16 %v471
      %v684 = vunpack.c.l.b16 %v481
      %v685 = vunpack.c.l.b16 %v495
      %v686 = vunpack.c.l.b16 %v505
      %v687 = vunpack.c.l.b16 %v519
      %v688 = vunpack.c.l.b16 %v529
      %v689 = vunpack.c.l.b16 %v543
      %v690 = vunpack.c.l.b16 %v553
      %v691 = vunpack.c.l.b16 %v567
      %v692 = vunpack.c.l.b16 %v577
      %v693 = vunpack.c.l.b16 %v591
      %v694 = vunpack.c.l.b16 %v601
      %v695 = vunpack.c.l.b16 %v615
      %v696 = vunpack.c.l.b16 %v625
      %v697 = vunpack.c.l.b16 %v639
      %v698 = vunpack.c.l.b16 %v649
      %v699 = vpack.c.b16 %v668, %v667
      %v700 = vpack.c.b16 %v670, %v669
      %v701 = vpack.c.b16 %v672, %v671
      %v702 = vpack.c.b16 %v674, %v673
      %v703 = vpack.c.b16 %v676, %v675
      %v704 = vpack.c.b16 %v678, %v677
      %v705 = vpack.c.b16 %v680, %v679
      %v706 = vpack.c.b16 %v682, %v681
      %v707 = vpack.c.b16 %v684, %v683
      %v708 = vpack.c.b16 %v686, %v685
      %v709 = vpack.c.b16 %v688, %v687
      %v710 = vpack.c.b16 %v690, %v689
      %v711 = vpack.c.b16 %v692, %v691
      %v712 = vpack.c.b16 %v694, %v693
      %v713 = vpack.c.b16 %v696, %v695
      %v714 = vpack.c.b16 %v698, %v697
      %v747 = vunpack.c.l.b16 %v651
      %v748 = vunpack.c.l.b16 %v652
      %v749 = vunpack.c.l.b16 %v653
      %v750 = vunpack.c.l.b16 %v654
      %v751 = vunpack.c.l.b16 %v655
      %v752 = vunpack.c.l.b16 %v656
      %v753 = vunpack.c.l.b16 %v657
      %v754 = vunpack.c.l.b16 %v658
      %v755 = vunpack.c.l.b16 %v659
      %v756 = vunpack.c.l.b16 %v660
      %v757 = vunpack.c.l.b16 %v661
      %v758 = vunpack.c.l.b16 %v662
      %v759 = vunpack.c.l.b16 %v663
      %v760 = vunpack.c.l.b16 %v664
      %v761 = vunpack.c.l.b16 %v665
      %v762 = vunpack.c.l.b16 %v666
      %v763 = vpack.c.b16 %v748, %v747
      %v764 = vpack.c.b16 %v750, %v749
      %v765 = vpack.c.b16 %v752, %v751
      %v766 = vpack.c.b16 %v754, %v753
      %v767 = vpack.c.b16 %v756, %v755
      %v768 = vpack.c.b16 %v758, %v757
      %v769 = vpack.c.b16 %v760, %v759
      %v770 = vpack.c.b16 %v762, %v761
      %779 = vmatprep.subr.bf16.mxu0 0
      %780 = vmatpush1.bf16.msra.mxu0 %v763
      %781 = vmatprep.subr.bf16.mxu0 0
      %782 = vmatpush1.bf16.msra.mxu0 %v764
      %783 = vmatprep.subr.bf16.mxu0 0
      %784 = vmatpush1.bf16.msra.mxu0 %v765
      %785 = vmatprep.subr.bf16.mxu0 0
      %786 = vmatpush1.bf16.msra.mxu0 %v766
      %787 = vmatprep.subr.bf16.mxu0 0
      %788 = vmatpush1.bf16.msra.mxu0 %v767
      %789 = vmatprep.subr.bf16.mxu0 0
      %790 = vmatpush1.bf16.msra.mxu0 %v768
      %791 = vmatprep.subr.bf16.mxu0 0
      %792 = vmatpush1.bf16.msra.mxu0 %v769
      %793 = vmatprep.subr.bf16.mxu0 0
      %794 = vmatpush1.bf16.msra.mxu0 %v770
      %795 = vmatprep.subr.bf16.mxu0 0
      %796 = vmatpush1.bf16.msra.mxu0 0
      %797 = vmatprep.subr.bf16.mxu0 0
      %798 = vmatpush1.bf16.msra.mxu0 0
      %799 = vmatprep.subr.bf16.mxu0 0
      %800 = vmatpush1.bf16.msra.mxu0 0
      %801 = vmatprep.subr.bf16.mxu0 0
      %802 = vmatpush1.bf16.msra.mxu0 0
      %803 = vmatprep.subr.bf16.mxu0 0
      %804 = vmatpush1.bf16.msra.mxu0 0
      %805 = vmatprep.subr.bf16.mxu0 0
      %806 = vmatpush1.bf16.msra.mxu0 0
      %807 = vmatprep.subr.bf16.mxu0 0
      %808 = vmatpush1.bf16.msra.mxu0 0
      %809 = vmatprep.subr.bf16.mxu0 0
      %810 = vmatpush1.bf16.msra.mxu0 0
      %811 = vmatprep.mubr.bf16.mxu0 0
      %812 = vmatmul.mubr.bf16.gmra.mrb[0].mxu0 %v699
      %v813 = vpop.f32.mrb[0].mxu0
      %v814 = vadd.f32 0.0, %v813
      %v815 = vpop.f32.mrb[0].mxu0
      %v816 = vpop.f32.mrb[0].mxu0
      %v817 = vadd.f32 0.0, %v816
      %v818 = vpop.f32.mrb[0].mxu0
      %819 = vmatprep.mubr.bf16.mxu0 0
      %820 = vmatmul.mubr.bf16.gmra.mrb[0].mxu0 %v700
      %v821 = vpop.f32.mrb[0].mxu0
      %v822 = vadd.f32 0.0, %v821
      %v823 = vpop.f32.mrb[0].mxu0
      %v824 = vpop.f32.mrb[0].mxu0
      %v825 = vadd.f32 0.0, %v824
      %v826 = vpop.f32.mrb[0].mxu0
      %827 = vmatprep.mubr.bf16.mxu0 0
      %828 = vmatmul.mubr.bf16.gmra.mrb[0].mxu0 %v701
      %v829 = vpop.f32.mrb[0].mxu0
      %v830 = vadd.f32 0.0, %v829
      %v831 = vpop.f32.mrb[0].mxu0
      %v832 = vpop.f32.mrb[0].mxu0
      %v833 = vadd.f32 0.0, %v832
      %v834 = vpop.f32.mrb[0].mxu0
      %835 = vmatprep.mubr.bf16.mxu0 0
      %836 = vmatmul.mubr.bf16.gmra.mrb[0].mxu0 %v702
      %v837 = vpop.f32.mrb[0].mxu0
      %v838 = vadd.f32 0.0, %v837
      %v839 = vpop.f32.mrb[0].mxu0
      %v840 = vpop.f32.mrb[0].mxu0
      %v841 = vadd.f32 0.0, %v840
      %v842 = vpop.f32.mrb[0].mxu0
      %843 = vmatprep.mubr.bf16.mxu0 0
      %844 = vmatmul.mubr.bf16.gmra.mrb[0].mxu0 %v703
      %v845 = vpop.f32.mrb[0].mxu0
      %v846 = vadd.f32 0.0, %v845
      %v847 = vpop.f32.mrb[0].mxu0
      %v848 = vpop.f32.mrb[0].mxu0
      %v849 = vadd.f32 0.0, %v848
      %v850 = vpop.f32.mrb[0].mxu0
      %851 = vmatprep.mubr.bf16.mxu0 0
      %852 = vmatmul.mubr.bf16.gmra.mrb[0].mxu0 %v704
      %v853 = vpop.f32.mrb[0].mxu0
      %v854 = vadd.f32 0.0, %v853
      %v855 = vpop.f32.mrb[0].mxu0
      %v856 = vpop.f32.mrb[0].mxu0
      %v857 = vadd.f32 0.0, %v856
      %v858 = vpop.f32.mrb[0].mxu0
      %859 = vmatprep.mubr.bf16.mxu0 0
      %860 = vmatmul.mubr.bf16.gmra.mrb[0].mxu0 %v705
      %v861 = vpop.f32.mrb[0].mxu0
      %v862 = vadd.f32 0.0, %v861
      %v863 = vpop.f32.mrb[0].mxu0
      %v864 = vpop.f32.mrb[0].mxu0
      %v865 = vadd.f32 0.0, %v864
      %v866 = vpop.f32.mrb[0].mxu0
      %867 = vmatprep.mubr.bf16.mxu0 0
      %868 = vmatmul.mubr.bf16.gmra.mrb[0].mxu0 %v706
      %v869 = vpop.f32.mrb[0].mxu0
      %v870 = vadd.f32 0.0, %v869
      %v871 = vpop.f32.mrb[0].mxu0
      %v872 = vpop.f32.mrb[0].mxu0
      %v873 = vadd.f32 0.0, %v872
      %v874 = vpop.f32.mrb[0].mxu0
      %875 = vmatprep.mubr.bf16.mxu0 0
      %876 = vmatmul.mubr.bf16.gmra.mrb[0].mxu0 %v707
      %v877 = vpop.f32.mrb[0].mxu0
      %v878 = vadd.f32 0.0, %v877
      %v879 = vpop.f32.mrb[0].mxu0
      %v880 = vpop.f32.mrb[0].mxu0
      %v881 = vadd.f32 0.0, %v880
      %v882 = vpop.f32.mrb[0].mxu0
      %883 = vmatprep.mubr.bf16.mxu0 0
      %884 = vmatmul.mubr.bf16.gmra.mrb[0].mxu0 %v708
      %v885 = vpop.f32.mrb[0].mxu0
      %v886 = vadd.f32 0.0, %v885
      %v887 = vpop.f32.mrb[0].mxu0
      %v888 = vpop.f32.mrb[0].mxu0
      %v889 = vadd.f32 0.0, %v888
      %v890 = vpop.f32.mrb[0].mxu0
      %891 = vmatprep.mubr.bf16.mxu0 0
      %892 = vmatmul.mubr.bf16.gmra.mrb[0].mxu0 %v709
      %v893 = vpop.f32.mrb[0].mxu0
      %v894 = vadd.f32 0.0, %v893
      %v895 = vpop.f32.mrb[0].mxu0
      %v896 = vpop.f32.mrb[0].mxu0
      %v897 = vadd.f32 0.0, %v896
      %v898 = vpop.f32.mrb[0].mxu0
      %899 = vmatprep.mubr.bf16.mxu0 0
      %900 = vmatmul.mubr.bf16.gmra.mrb[0].mxu0 %v710
      %v901 = vpop.f32.mrb[0].mxu0
      %v902 = vadd.f32 0.0, %v901
      %v903 = vpop.f32.mrb[0].mxu0
      %v904 = vpop.f32.mrb[0].mxu0
      %v905 = vadd.f32 0.0, %v904
      %v906 = vpop.f32.mrb[0].mxu0
      %907 = vmatprep.mubr.bf16.mxu0 0
      %908 = vmatmul.mubr.bf16.gmra.mrb[0].mxu0 %v711
      %v909 = vpop.f32.mrb[0].mxu0
      %v910 = vadd.f32 0.0, %v909
      %v911 = vpop.f32.mrb[0].mxu0
      %v912 = vpop.f32.mrb[0].mxu0
      %v913 = vadd.f32 0.0, %v912
      %v914 = vpop.f32.mrb[0].mxu0
      %915 = vmatprep.mubr.bf16.mxu0 0
      %916 = vmatmul.mubr.bf16.gmra.mrb[0].mxu0 %v712
      %v917 = vpop.f32.mrb[0].mxu0
      %v918 = vadd.f32 0.0, %v917
      %v919 = vpop.f32.mrb[0].mxu0
      %v920 = vpop.f32.mrb[0].mxu0
      %v921 = vadd.f32 0.0, %v920
      %v922 = vpop.f32.mrb[0].mxu0
      %923 = vmatprep.mubr.bf16.mxu0 0
      %924 = vmatmul.mubr.bf16.gmra.mrb[0].mxu0 %v713
      %v925 = vpop.f32.mrb[0].mxu0
      %v926 = vadd.f32 0.0, %v925
      %v927 = vpop.f32.mrb[0].mxu0
      %v928 = vpop.f32.mrb[0].mxu0
      %v929 = vadd.f32 0.0, %v928
      %v930 = vpop.f32.mrb[0].mxu0
      %931 = vmatprep.mubr.bf16.mxu0 0
      %932 = vmatmul.mubr.bf16.gmra.mrb[0].mxu0 %v714
      %v933 = vpop.f32.mrb[0].mxu0
      %v934 = vadd.f32 0.0, %v933
      %v935 = vpop.f32.mrb[0].mxu0
      %v936 = vpop.f32.mrb[0].mxu0
      %v937 = vadd.f32 0.0, %v936
      %v938 = vpop.f32.mrb[0].mxu0
      %939 = vdwg.mxu0
      %v972 = vunpack.c.l.b16 %v199
      %v973 = vunpack.c.l.b16 %v200
      %v974 = vunpack.c.l.b16 %v202
      %v975 = vunpack.c.l.b16 %v203
      %v976 = vunpack.c.l.b16 %v205
      %v977 = vunpack.c.l.b16 %v206
      %v978 = vunpack.c.l.b16 %v208
      %v979 = vunpack.c.l.b16 %v209
      %v980 = vunpack.c.l.b16 %v211
      %v981 = vunpack.c.l.b16 %v212
      %v982 = vunpack.c.l.b16 %v214
      %v983 = vunpack.c.l.b16 %v215
      %v984 = vunpack.c.l.b16 %v217
      %v985 = vunpack.c.l.b16 %v218
      %v986 = vunpack.c.l.b16 %v220
      %v987 = vunpack.c.l.b16 %v221
      %v988 = vunpack.c.l.b16 %v223
      %v989 = vunpack.c.l.b16 %v224
      %v990 = vunpack.c.l.b16 %v226
      %v991 = vunpack.c.l.b16 %v227
      %v992 = vunpack.c.l.b16 %v229
      %v993 = vunpack.c.l.b16 %v230
      %v994 = vunpack.c.l.b16 %v232
      %v995 = vunpack.c.l.b16 %v233
      %v996 = vunpack.c.l.b16 %v235
      %v997 = vunpack.c.l.b16 %v236
      %v998 = vunpack.c.l.b16 %v238
      %v999 = vunpack.c.l.b16 %v239
      %v1000 = vunpack.c.l.b16 %v241
      %v1001 = vunpack.c.l.b16 %v242
      %v1002 = vunpack.c.l.b16 %v244
      %v1003 = vunpack.c.l.b16 %v245
      %v1004 = vpack.c.b16 %v973, %v972
      %v1005 = vpack.c.b16 %v975, %v974
      %v1006 = vpack.c.b16 %v977, %v976
      %v1007 = vpack.c.b16 %v979, %v978
      %v1008 = vpack.c.b16 %v981, %v980
      %v1009 = vpack.c.b16 %v983, %v982
      %v1010 = vpack.c.b16 %v985, %v984
      %v1011 = vpack.c.b16 %v987, %v986
      %v1012 = vpack.c.b16 %v989, %v988
      %v1013 = vpack.c.b16 %v991, %v990
      %v1014 = vpack.c.b16 %v993, %v992
      %v1015 = vpack.c.b16 %v995, %v994
      %v1016 = vpack.c.b16 %v997, %v996
      %v1017 = vpack.c.b16 %v999, %v998
      %v1018 = vpack.c.b16 %v1001, %v1000
      %v1019 = vpack.c.b16 %v1003, %v1002
      %v1052 = vunpack.c.l.b16 %v247
      %v1053 = vunpack.c.l.b16 %v248
      %v1054 = vunpack.c.l.b16 %v249
      %v1055 = vunpack.c.l.b16 %v250
      %v1056 = vunpack.c.l.b16 %v251
      %v1057 = vunpack.c.l.b16 %v252
      %v1058 = vunpack.c.l.b16 %v253
      %v1059 = vunpack.c.l.b16 %v254
      %v1060 = vunpack.c.l.b16 %v255
      %v1061 = vunpack.c.l.b16 %v256
      %v1062 = vunpack.c.l.b16 %v257
      %v1063 = vunpack.c.l.b16 %v258
      %v1064 = vunpack.c.l.b16 %v259
      %v1065 = vunpack.c.l.b16 %v260
      %v1066 = vunpack.c.l.b16 %v261
      %v1067 = vunpack.c.l.b16 %v262
      %v1068 = vpack.c.b16 %v1053, %v1052
      %v1069 = vpack.c.b16 %v1055, %v1054
      %v1070 = vpack.c.b16 %v1057, %v1056
      %v1071 = vpack.c.b16 %v1059, %v1058
      %v1072 = vpack.c.b16 %v1061, %v1060
      %v1073 = vpack.c.b16 %v1063, %v1062
      %v1074 = vpack.c.b16 %v1065, %v1064
      %v1075 = vpack.c.b16 %v1067, %v1066
      %1084 = vmatprep.subr.bf16.mxu0 0
      %1085 = vmatpush1.bf16.msra.mxu0 %v1068
      %1086 = vmatprep.subr.bf16.mxu0 0
      %1087 = vmatpush1.bf16.msra.mxu0 %v1069
      %1088 = vmatprep.subr.bf16.mxu0 0
      %1089 = vmatpush1.bf16.msra.mxu0 %v1070
      %1090 = vmatprep.subr.bf16.mxu0 0
      %1091 = vmatpush1.bf16.msra.mxu0 %v1071
      %1092 = vmatprep.subr.bf16.mxu0 0
      %1093 = vmatpush1.bf16.msra.mxu0 %v1072
      %1094 = vmatprep.subr.bf16.mxu0 0
      %1095 = vmatpush1.bf16.msra.mxu0 %v1073
      %1096 = vmatprep.subr.bf16.mxu0 0
      %1097 = vmatpush1.bf16.msra.mxu0 %v1074
      %1098 = vmatprep.subr.bf16.mxu0 0
      %1099 = vmatpush1.bf16.msra.mxu0 %v1075
      %1100 = vmatprep.subr.bf16.mxu0 0
      %1101 = vmatpush1.bf16.msra.mxu0 0
      %1102 = vmatprep.subr.bf16.mxu0 0
      %1103 = vmatpush1.bf16.msra.mxu0 0
      %1104 = vmatprep.subr.bf16.mxu0 0
      %1105 = vmatpush1.bf16.msra.mxu0 0
      %1106 = vmatprep.subr.bf16.mxu0 0
      %1107 = vmatpush1.bf16.msra.mxu0 0
      %1108 = vmatprep.subr.bf16.mxu0 0
      %1109 = vmatpush1.bf16.msra.mxu0 0
      %1110 = vmatprep.subr.bf16.mxu0 0
      %1111 = vmatpush1.bf16.msra.mxu0 0
      %1112 = vmatprep.subr.bf16.mxu0 0
      %1113 = vmatpush1.bf16.msra.mxu0 0
      %1114 = vmatprep.subr.bf16.mxu0 0
      %1115 = vmatpush1.bf16.msra.mxu0 0
      %1116 = vmatprep.mubr.bf16.mxu0 0
      %1117 = vmatmul.mubr.bf16.gmra.mrb[0].mxu0 %v1004
      %v1118 = vpop.f32.mrb[0].mxu0
      %v1119 = vadd.f32 %v814, %v1118
      %v1120 = vpop.f32.mrb[0].mxu0
      %v1121 = vpop.f32.mrb[0].mxu0
      %v1122 = vadd.f32 %v817, %v1121
      %v1123 = vpop.f32.mrb[0].mxu0
      %1124 = vmatprep.mubr.bf16.mxu0 0
      %1125 = vmatmul.mubr.bf16.gmra.mrb[0].mxu0 %v1005
      %v1126 = vpop.f32.mrb[0].mxu0
      %v1127 = vadd.f32 %v822, %v1126
      %v1128 = vpop.f32.mrb[0].mxu0
      %v1129 = vpop.f32.mrb[0].mxu0
      %v1130 = vadd.f32 %v825, %v1129
      %v1131 = vpop.f32.mrb[0].mxu0
      %1132 = vmatprep.mubr.bf16.mxu0 0
      %1133 = vmatmul.mubr.bf16.gmra.mrb[0].mxu0 %v1006
      %v1134 = vpop.f32.mrb[0].mxu0
      %v1135 = vadd.f32 %v830, %v1134
      %v1136 = vpop.f32.mrb[0].mxu0
      %v1137 = vpop.f32.mrb[0].mxu0
      %v1138 = vadd.f32 %v833, %v1137
      %v1139 = vpop.f32.mrb[0].mxu0
      %1140 = vmatprep.mubr.bf16.mxu0 0
      %1141 = vmatmul.mubr.bf16.gmra.mrb[0].mxu0 %v1007
      %v1142 = vpop.f32.mrb[0].mxu0
      %v1143 = vadd.f32 %v838, %v1142
      %v1144 = vpop.f32.mrb[0].mxu0
      %v1145 = vpop.f32.mrb[0].mxu0
      %v1146 = vadd.f32 %v841, %v1145
      %v1147 = vpop.f32.mrb[0].mxu0
      %1148 = vmatprep.mubr.bf16.mxu0 0
      %1149 = vmatmul.mubr.bf16.gmra.mrb[0].mxu0 %v1008
      %v1150 = vpop.f32.mrb[0].mxu0
      %v1151 = vadd.f32 %v846, %v1150
      %v1152 = vpop.f32.mrb[0].mxu0
      %v1153 = vpop.f32.mrb[0].mxu0
      %v1154 = vadd.f32 %v849, %v1153
      %v1155 = vpop.f32.mrb[0].mxu0
      %1156 = vmatprep.mubr.bf16.mxu0 0
      %1157 = vmatmul.mubr.bf16.gmra.mrb[0].mxu0 %v1009
      %v1158 = vpop.f32.mrb[0].mxu0
      %v1159 = vadd.f32 %v854, %v1158
      %v1160 = vpop.f32.mrb[0].mxu0
      %v1161 = vpop.f32.mrb[0].mxu0
      %v1162 = vadd.f32 %v857, %v1161
      %v1163 = vpop.f32.mrb[0].mxu0
      %1164 = vmatprep.mubr.bf16.mxu0 0
      %1165 = vmatmul.mubr.bf16.gmra.mrb[0].mxu0 %v1010
      %v1166 = vpop.f32.mrb[0].mxu0
      %v1167 = vadd.f32 %v862, %v1166
      %v1168 = vpop.f32.mrb[0].mxu0
      %v1169 = vpop.f32.mrb[0].mxu0
      %v1170 = vadd.f32 %v865, %v1169
      %v1171 = vpop.f32.mrb[0].mxu0
      %1172 = vmatprep.mubr.bf16.mxu0 0
      %1173 = vmatmul.mubr.bf16.gmra.mrb[0].mxu0 %v1011
      %v1174 = vpop.f32.mrb[0].mxu0
      %v1175 = vadd.f32 %v870, %v1174
      %v1176 = vpop.f32.mrb[0].mxu0
      %v1177 = vpop.f32.mrb[0].mxu0
      %v1178 = vadd.f32 %v873, %v1177
      %v1179 = vpop.f32.mrb[0].mxu0
      %1180 = vmatprep.mubr.bf16.mxu0 0
      %1181 = vmatmul.mubr.bf16.gmra.mrb[0].mxu0 %v1012
      %v1182 = vpop.f32.mrb[0].mxu0
      %v1183 = vadd.f32 %v878, %v1182
      %v1184 = vpop.f32.mrb[0].mxu0
      %v1185 = vpop.f32.mrb[0].mxu0
      %v1186 = vadd.f32 %v881, %v1185
      %v1187 = vpop.f32.mrb[0].mxu0
      %1188 = vmatprep.mubr.bf16.mxu0 0
      %1189 = vmatmul.mubr.bf16.gmra.mrb[0].mxu0 %v1013
      %v1190 = vpop.f32.mrb[0].mxu0
      %v1191 = vadd.f32 %v886, %v1190
      %v1192 = vpop.f32.mrb[0].mxu0
      %v1193 = vpop.f32.mrb[0].mxu0
      %v1194 = vadd.f32 %v889, %v1193
      %v1195 = vpop.f32.mrb[0].mxu0
      %1196 = vmatprep.mubr.bf16.mxu0 0
      %1197 = vmatmul.mubr.bf16.gmra.mrb[0].mxu0 %v1014
      %v1198 = vpop.f32.mrb[0].mxu0
      %v1199 = vadd.f32 %v894, %v1198
      %v1200 = vpop.f32.mrb[0].mxu0
      %v1201 = vpop.f32.mrb[0].mxu0
      %v1202 = vadd.f32 %v897, %v1201
      %v1203 = vpop.f32.mrb[0].mxu0
      %1204 = vmatprep.mubr.bf16.mxu0 0
      %1205 = vmatmul.mubr.bf16.gmra.mrb[0].mxu0 %v1015
      %v1206 = vpop.f32.mrb[0].mxu0
      %v1207 = vadd.f32 %v902, %v1206
      %v1208 = vpop.f32.mrb[0].mxu0
      %v1209 = vpop.f32.mrb[0].mxu0
      %v1210 = vadd.f32 %v905, %v1209
      %v1211 = vpop.f32.mrb[0].mxu0
      %1212 = vmatprep.mubr.bf16.mxu0 0
      %1213 = vmatmul.mubr.bf16.gmra.mrb[0].mxu0 %v1016
      %v1214 = vpop.f32.mrb[0].mxu0
      %v1215 = vadd.f32 %v910, %v1214
      %v1216 = vpop.f32.mrb[0].mxu0
      %v1217 = vpop.f32.mrb[0].mxu0
      %v1218 = vadd.f32 %v913, %v1217
      %v1219 = vpop.f32.mrb[0].mxu0
      %1220 = vmatprep.mubr.bf16.mxu0 0
      %1221 = vmatmul.mubr.bf16.gmra.mrb[0].mxu0 %v1017
      %v1222 = vpop.f32.mrb[0].mxu0
      %v1223 = vadd.f32 %v918, %v1222
      %v1224 = vpop.f32.mrb[0].mxu0
      %v1225 = vpop.f32.mrb[0].mxu0
      %v1226 = vadd.f32 %v921, %v1225
      %v1227 = vpop.f32.mrb[0].mxu0
      %1228 = vmatprep.mubr.bf16.mxu0 0
      %1229 = vmatmul.mubr.bf16.gmra.mrb[0].mxu0 %v1018
      %v1230 = vpop.f32.mrb[0].mxu0
      %v1231 = vadd.f32 %v926, %v1230
      %v1232 = vpop.f32.mrb[0].mxu0
      %v1233 = vpop.f32.mrb[0].mxu0
      %v1234 = vadd.f32 %v929, %v1233
      %v1235 = vpop.f32.mrb[0].mxu0
      %1236 = vmatprep.mubr.bf16.mxu0 0
      %1237 = vmatmul.mubr.bf16.gmra.mrb[0].mxu0 %v1019
      %v1238 = vpop.f32.mrb[0].mxu0
      %v1239 = vadd.f32 %v934, %v1238
      %v1240 = vpop.f32.mrb[0].mxu0
      %v1241 = vpop.f32.mrb[0].mxu0
      %v1242 = vadd.f32 %v937, %v1241
      %v1243 = vpop.f32.mrb[0].mxu0
      %1244 = vdwg.mxu0
      %vm1261 = vcmask 1042432
      %vm1262 = vcmask 1046532
      %vm1263 = vmor %vm1261, %vm1262
      %v1264 = vrot.slane %v199, 5
      %v1265 = vrot.slane %v1264, 4
      %v1266 = vrot.slane %v200, 5
      %v1267 = vsel %vm1263, %v1265, %v1266
      %v1268 = vrot.slane %v1266, 4
      %v1269 = vrot.slane %v201, 5
      %v1270 = vsel %vm1263, %v1268, %v1269
      %v1271 = vrot.slane %v202, 5
      %v1272 = vrot.slane %v1271, 4
      %v1273 = vrot.slane %v203, 5
      %v1274 = vsel %vm1263, %v1272, %v1273
      %v1275 = vrot.slane %v1273, 4
      %v1276 = vrot.slane %v204, 5
      %v1277 = vsel %vm1263, %v1275, %v1276
      %v1278 = vrot.slane %v205, 5
      %v1279 = vrot.slane %v1278, 4
      %v1280 = vrot.slane %v206, 5
      %v1281 = vsel %vm1263, %v1279, %v1280
      %v1282 = vrot.slane %v1280, 4
      %v1283 = vrot.slane %v207, 5
      %v1284 = vsel %vm1263, %v1282, %v1283
      %v1285 = vrot.slane %v208, 5
      %v1286 = vrot.slane %v1285, 4
      %v1287 = vrot.slane %v209, 5
      %v1288 = vsel %vm1263, %v1286, %v1287
      %v1289 = vrot.slane %v1287, 4
      %v1290 = vrot.slane %v210, 5
      %v1291 = vsel %vm1263, %v1289, %v1290
      %v1292 = vrot.slane %v211, 5
      %v1293 = vrot.slane %v1292, 4
      %v1294 = vrot.slane %v212, 5
      %v1295 = vsel %vm1263, %v1293, %v1294
      %v1296 = vrot.slane %v1294, 4
      %v1297 = vrot.slane %v213, 5
      %v1298 = vsel %vm1263, %v1296, %v1297
      %v1299 = vrot.slane %v214, 5
      %v1300 = vrot.slane %v1299, 4
      %v1301 = vrot.slane %v215, 5
      %v1302 = vsel %vm1263, %v1300, %v1301
      %v1303 = vrot.slane %v1301, 4
      %v1304 = vrot.slane %v216, 5
      %v1305 = vsel %vm1263, %v1303, %v1304
      %v1306 = vrot.slane %v217, 5
      %v1307 = vrot.slane %v1306, 4
      %v1308 = vrot.slane %v218, 5
      %v1309 = vsel %vm1263, %v1307, %v1308
      %v1310 = vrot.slane %v1308, 4
      %v1311 = vrot.slane %v219, 5
      %v1312 = vsel %vm1263, %v1310, %v1311
      %v1313 = vrot.slane %v220, 5
      %v1314 = vrot.slane %v1313, 4
      %v1315 = vrot.slane %v221, 5
      %v1316 = vsel %vm1263, %v1314, %v1315
      %v1317 = vrot.slane %v1315, 4
      %v1318 = vrot.slane %v222, 5
      %v1319 = vsel %vm1263, %v1317, %v1318
      %v1320 = vrot.slane %v223, 5
      %v1321 = vrot.slane %v1320, 4
      %v1322 = vrot.slane %v224, 5
      %v1323 = vsel %vm1263, %v1321, %v1322
      %v1324 = vrot.slane %v1322, 4
      %v1325 = vrot.slane %v225, 5
      %v1326 = vsel %vm1263, %v1324, %v1325
      %v1327 = vrot.slane %v226, 5
      %v1328 = vrot.slane %v1327, 4
      %v1329 = vrot.slane %v227, 5
      %v1330 = vsel %vm1263, %v1328, %v1329
      %v1331 = vrot.slane %v1329, 4
      %v1332 = vrot.slane %v228, 5
      %v1333 = vsel %vm1263, %v1331, %v1332
      %v1334 = vrot.slane %v229, 5
      %v1335 = vrot.slane %v1334, 4
      %v1336 = vrot.slane %v230, 5
      %v1337 = vsel %vm1263, %v1335, %v1336
      %v1338 = vrot.slane %v1336, 4
      %v1339 = vrot.slane %v231, 5
      %v1340 = vsel %vm1263, %v1338, %v1339
      %v1341 = vrot.slane %v232, 5
      %v1342 = vrot.slane %v1341, 4
      %v1343 = vrot.slane %v233, 5
      %v1344 = vsel %vm1263, %v1342, %v1343
      %v1345 = vrot.slane %v1343, 4
      %v1346 = vrot.slane %v234, 5
      %v1347 = vsel %vm1263, %v1345, %v1346
      %v1348 = vrot.slane %v235, 5
      %v1349 = vrot.slane %v1348, 4
      %v1350 = vrot.slane %v236, 5
      %v1351 = vsel %vm1263, %v1349, %v1350
      %v1352 = vrot.slane %v1350, 4
      %v1353 = vrot.slane %v237, 5
      %v1354 = vsel %vm1263, %v1352, %v1353
      %v1355 = vrot.slane %v238, 5
      %v1356 = vrot.slane %v1355, 4
      %v1357 = vrot.slane %v239, 5
      %v1358 = vsel %vm1263, %v1356, %v1357
      %v1359 = vrot.slane %v1357, 4
      %v1360 = vrot.slane %v240, 5
      %v1361 = vsel %vm1263, %v1359, %v1360
      %v1362 = vrot.slane %v241, 5
      %v1363 = vrot.slane %v1362, 4
      %v1364 = vrot.slane %v242, 5
      %v1365 = vsel %vm1263, %v1363, %v1364
      %v1366 = vrot.slane %v1364, 4
      %v1367 = vrot.slane %v243, 5
      %v1368 = vsel %vm1263, %v1366, %v1367
      %v1369 = vrot.slane %v244, 5
      %v1370 = vrot.slane %v1369, 4
      %v1371 = vrot.slane %v245, 5
      %v1372 = vsel %vm1263, %v1370, %v1371
      %v1373 = vrot.slane %v1371, 4
      %v1374 = vrot.slane %v246, 5
      %v1375 = vsel %vm1263, %v1373, %v1374
      %s1376 = scalar_lea.vmem %s1, 128
      %v1377 = vld [vmem:[%s1376] sm:$0xf]
      %v1378 = vld [vmem:[%s1376 + $0x4] sm:$0xf]
      %v1379 = vld [vmem:[%s1376 + $0x8] sm:$0xf]
      %v1380 = vld [vmem:[%s1376 + $0xc] sm:$0xf]
      %v1381 = vld [vmem:[%s1376 + $0x10] sm:$0xf]
      %v1382 = vld [vmem:[%s1376 + $0x14] sm:$0xf]
      %v1383 = vld [vmem:[%s1376 + $0x18] sm:$0xf]
      %v1384 = vld [vmem:[%s1376 + $0x1c] sm:$0xf]
      %v1385 = vld [vmem:[%s1376 + $0x20] sm:$0xf]
      %v1386 = vld [vmem:[%s1376 + $0x24] sm:$0xf]
      %v1387 = vld [vmem:[%s1376 + $0x28] sm:$0xf]
      %v1388 = vld [vmem:[%s1376 + $0x2c] sm:$0xf]
      %v1389 = vld [vmem:[%s1376 + $0x30] sm:$0xf]
      %v1390 = vld [vmem:[%s1376 + $0x34] sm:$0xf]
      %v1391 = vld [vmem:[%s1376 + $0x38] sm:$0xf]
      %v1392 = vld [vmem:[%s1376 + $0x3c] sm:$0xf]
      %v1393 = vunpack.c.l.b16 %v1267
      %v1394 = vunpack.c.l.b16 %v1270
      %v1395 = vunpack.c.l.b16 %v1274
      %v1396 = vunpack.c.l.b16 %v1277
      %v1397 = vunpack.c.l.b16 %v1281
      %v1398 = vunpack.c.l.b16 %v1284
      %v1399 = vunpack.c.l.b16 %v1288
      %v1400 = vunpack.c.l.b16 %v1291
      %v1401 = vunpack.c.l.b16 %v1295
      %v1402 = vunpack.c.l.b16 %v1298
      %v1403 = vunpack.c.l.b16 %v1302
      %v1404 = vunpack.c.l.b16 %v1305
      %v1405 = vunpack.c.l.b16 %v1309
      %v1406 = vunpack.c.l.b16 %v1312
      %v1407 = vunpack.c.l.b16 %v1316
      %v1408 = vunpack.c.l.b16 %v1319
      %v1409 = vunpack.c.l.b16 %v1323
      %v1410 = vunpack.c.l.b16 %v1326
      %v1411 = vunpack.c.l.b16 %v1330
      %v1412 = vunpack.c.l.b16 %v1333
      %v1413 = vunpack.c.l.b16 %v1337
      %v1414 = vunpack.c.l.b16 %v1340
      %v1415 = vunpack.c.l.b16 %v1344
      %v1416 = vunpack.c.l.b16 %v1347
      %v1417 = vunpack.c.l.b16 %v1351
      %v1418 = vunpack.c.l.b16 %v1354
      %v1419 = vunpack.c.l.b16 %v1358
      %v1420 = vunpack.c.l.b16 %v1361
      %v1421 = vunpack.c.l.b16 %v1365
      %v1422 = vunpack.c.l.b16 %v1368
      %v1423 = vunpack.c.l.b16 %v1372
      %v1424 = vunpack.c.l.b16 %v1375
      %v1425 = vpack.c.b16 %v1394, %v1393
      %v1426 = vpack.c.b16 %v1396, %v1395
      %v1427 = vpack.c.b16 %v1398, %v1397
      %v1428 = vpack.c.b16 %v1400, %v1399
      %v1429 = vpack.c.b16 %v1402, %v1401
      %v1430 = vpack.c.b16 %v1404, %v1403
      %v1431 = vpack.c.b16 %v1406, %v1405
      %v1432 = vpack.c.b16 %v1408, %v1407
      %v1433 = vpack.c.b16 %v1410, %v1409
      %v1434 = vpack.c.b16 %v1412, %v1411
      %v1435 = vpack.c.b16 %v1414, %v1413
      %v1436 = vpack.c.b16 %v1416, %v1415
      %v1437 = vpack.c.b16 %v1418, %v1417
      %v1438 = vpack.c.b16 %v1420, %v1419
      %v1439 = vpack.c.b16 %v1422, %v1421
      %v1440 = vpack.c.b16 %v1424, %v1423
      %v1473 = vunpack.c.l.b16 %v1377
      %v1474 = vunpack.c.l.b16 %v1378
      %v1475 = vunpack.c.l.b16 %v1379
      %v1476 = vunpack.c.l.b16 %v1380
      %v1477 = vunpack.c.l.b16 %v1381
      %v1478 = vunpack.c.l.b16 %v1382
      %v1479 = vunpack.c.l.b16 %v1383
      %v1480 = vunpack.c.l.b16 %v1384
      %v1481 = vunpack.c.l.b16 %v1385
      %v1482 = vunpack.c.l.b16 %v1386
      %v1483 = vunpack.c.l.b16 %v1387
      %v1484 = vunpack.c.l.b16 %v1388
      %v1485 = vunpack.c.l.b16 %v1389
      %v1486 = vunpack.c.l.b16 %v1390
      %v1487 = vunpack.c.l.b16 %v1391
      %v1488 = vunpack.c.l.b16 %v1392
      %v1489 = vpack.c.b16 %v1474, %v1473
      %v1490 = vpack.c.b16 %v1476, %v1475
      %v1491 = vpack.c.b16 %v1478, %v1477
      %v1492 = vpack.c.b16 %v1480, %v1479
      %v1493 = vpack.c.b16 %v1482, %v1481
      %v1494 = vpack.c.b16 %v1484, %v1483
      %v1495 = vpack.c.b16 %v1486, %v1485
      %v1496 = vpack.c.b16 %v1488, %v1487
      %1505 = vmatprep.subr.bf16.mxu0 0
      %1506 = vmatpush1.bf16.msra.mxu0 %v1489
      %1507 = vmatprep.subr.bf16.mxu0 0
      %1508 = vmatpush1.bf16.msra.mxu0 %v1490
      %1509 = vmatprep.subr.bf16.mxu0 0
      %1510 = vmatpush1.bf16.msra.mxu0 %v1491
      %1511 = vmatprep.subr.bf16.mxu0 0
      %1512 = vmatpush1.bf16.msra.mxu0 %v1492
      %1513 = vmatprep.subr.bf16.mxu0 0
      %1514 = vmatpush1.bf16.msra.mxu0 %v1493
      %1515 = vmatprep.subr.bf16.mxu0 0
      %1516 = vmatpush1.bf16.msra.mxu0 %v1494
      %1517 = vmatprep.subr.bf16.mxu0 0
      %1518 = vmatpush1.bf16.msra.mxu0 %v1495
      %1519 = vmatprep.subr.bf16.mxu0 0
      %1520 = vmatpush1.bf16.msra.mxu0 %v1496
      %1521 = vmatprep.subr.bf16.mxu0 0
      %1522 = vmatpush1.bf16.msra.mxu0 0
      %1523 = vmatprep.subr.bf16.mxu0 0
      %1524 = vmatpush1.bf16.msra.mxu0 0
      %1525 = vmatprep.subr.bf16.mxu0 0
      %1526 = vmatpush1.bf16.msra.mxu0 0
      %1527 = vmatprep.subr.bf16.mxu0 0
      %1528 = vmatpush1.bf16.msra.mxu0 0
      %1529 = vmatprep.subr.bf16.mxu0 0
      %1530 = vmatpush1.bf16.msra.mxu0 0
      %1531 = vmatprep.subr.bf16.mxu0 0
      %1532 = vmatpush1.bf16.msra.mxu0 0
      %1533 = vmatprep.subr.bf16.mxu0 0
      %1534 = vmatpush1.bf16.msra.mxu0 0
      %1535 = vmatprep.subr.bf16.mxu0 0
      %1536 = vmatpush1.bf16.msra.mxu0 0
      %1537 = vmatprep.mubr.bf16.mxu0 0
      %1538 = vmatmul.mubr.bf16.gmra.mrb[0].mxu0 %v1425
      %v1539 = vpop.f32.mrb[0].mxu0
      %v1540 = vadd.f32 0.0, %v1539
      %v1541 = vpop.f32.mrb[0].mxu0
      %v1542 = vpop.f32.mrb[0].mxu0
      %v1543 = vadd.f32 0.0, %v1542
      %v1544 = vpop.f32.mrb[0].mxu0
      %1545 = vmatprep.mubr.bf16.mxu0 0
      %1546 = vmatmul.mubr.bf16.gmra.mrb[0].mxu0 %v1426
      %v1547 = vpop.f32.mrb[0].mxu0
      %v1548 = vadd.f32 0.0, %v1547
      %v1549 = vpop.f32.mrb[0].mxu0
      %v1550 = vpop.f32.mrb[0].mxu0
      %v1551 = vadd.f32 0.0, %v1550
      %v1552 = vpop.f32.mrb[0].mxu0
      %1553 = vmatprep.mubr.bf16.mxu0 0
      %1554 = vmatmul.mubr.bf16.gmra.mrb[0].mxu0 %v1427
      %v1555 = vpop.f32.mrb[0].mxu0
      %v1556 = vadd.f32 0.0, %v1555
      %v1557 = vpop.f32.mrb[0].mxu0
      %v1558 = vpop.f32.mrb[0].mxu0
      %v1559 = vadd.f32 0.0, %v1558
      %v1560 = vpop.f32.mrb[0].mxu0
      %1561 = vmatprep.mubr.bf16.mxu0 0
      %1562 = vmatmul.mubr.bf16.gmra.mrb[0].mxu0 %v1428
      %v1563 = vpop.f32.mrb[0].mxu0
      %v1564 = vadd.f32 0.0, %v1563
      %v1565 = vpop.f32.mrb[0].mxu0
      %v1566 = vpop.f32.mrb[0].mxu0
      %v1567 = vadd.f32 0.0, %v1566
      %v1568 = vpop.f32.mrb[0].mxu0
      %1569 = vmatprep.mubr.bf16.mxu0 0
      %1570 = vmatmul.mubr.bf16.gmra.mrb[0].mxu0 %v1429
      %v1571 = vpop.f32.mrb[0].mxu0
      %v1572 = vadd.f32 0.0, %v1571
      %v1573 = vpop.f32.mrb[0].mxu0
      %v1574 = vpop.f32.mrb[0].mxu0
      %v1575 = vadd.f32 0.0, %v1574
      %v1576 = vpop.f32.mrb[0].mxu0
      %1577 = vmatprep.mubr.bf16.mxu0 0
      %1578 = vmatmul.mubr.bf16.gmra.mrb[0].mxu0 %v1430
      %v1579 = vpop.f32.mrb[0].mxu0
      %v1580 = vadd.f32 0.0, %v1579
      %v1581 = vpop.f32.mrb[0].mxu0
      %v1582 = vpop.f32.mrb[0].mxu0
      %v1583 = vadd.f32 0.0, %v1582
      %v1584 = vpop.f32.mrb[0].mxu0
      %1585 = vmatprep.mubr.bf16.mxu0 0
      %1586 = vmatmul.mubr.bf16.gmra.mrb[0].mxu0 %v1431
      %v1587 = vpop.f32.mrb[0].mxu0
      %v1588 = vadd.f32 0.0, %v1587
      %v1589 = vpop.f32.mrb[0].mxu0
      %v1590 = vpop.f32.mrb[0].mxu0
      %v1591 = vadd.f32 0.0, %v1590
      %v1592 = vpop.f32.mrb[0].mxu0
      %1593 = vmatprep.mubr.bf16.mxu0 0
      %1594 = vmatmul.mubr.bf16.gmra.mrb[0].mxu0 %v1432
      %v1595 = vpop.f32.mrb[0].mxu0
      %v1596 = vadd.f32 0.0, %v1595
      %v1597 = vpop.f32.mrb[0].mxu0
      %v1598 = vpop.f32.mrb[0].mxu0
      %v1599 = vadd.f32 0.0, %v1598
      %v1600 = vpop.f32.mrb[0].mxu0
      %1601 = vmatprep.mubr.bf16.mxu0 0
      %1602 = vmatmul.mubr.bf16.gmra.mrb[0].mxu0 %v1433
      %v1603 = vpop.f32.mrb[0].mxu0
      %v1604 = vadd.f32 0.0, %v1603
      %v1605 = vpop.f32.mrb[0].mxu0
      %v1606 = vpop.f32.mrb[0].mxu0
      %v1607 = vadd.f32 0.0, %v1606
      %v1608 = vpop.f32.mrb[0].mxu0
      %1609 = vmatprep.mubr.bf16.mxu0 0
      %1610 = vmatmul.mubr.bf16.gmra.mrb[0].mxu0 %v1434
      %v1611 = vpop.f32.mrb[0].mxu0
      %v1612 = vadd.f32 0.0, %v1611
      %v1613 = vpop.f32.mrb[0].mxu0
      %v1614 = vpop.f32.mrb[0].mxu0
      %v1615 = vadd.f32 0.0, %v1614
      %v1616 = vpop.f32.mrb[0].mxu0
      %1617 = vmatprep.mubr.bf16.mxu0 0
      %1618 = vmatmul.mubr.bf16.gmra.mrb[0].mxu0 %v1435
      %v1619 = vpop.f32.mrb[0].mxu0
      %v1620 = vadd.f32 0.0, %v1619
      %v1621 = vpop.f32.mrb[0].mxu0
      %v1622 = vpop.f32.mrb[0].mxu0
      %v1623 = vadd.f32 0.0, %v1622
      %v1624 = vpop.f32.mrb[0].mxu0
      %1625 = vmatprep.mubr.bf16.mxu0 0
      %1626 = vmatmul.mubr.bf16.gmra.mrb[0].mxu0 %v1436
      %v1627 = vpop.f32.mrb[0].mxu0
      %v1628 = vadd.f32 0.0, %v1627
      %v1629 = vpop.f32.mrb[0].mxu0
      %v1630 = vpop.f32.mrb[0].mxu0
      %v1631 = vadd.f32 0.0, %v1630
      %v1632 = vpop.f32.mrb[0].mxu0
      %1633 = vmatprep.mubr.bf16.mxu0 0
      %1634 = vmatmul.mubr.bf16.gmra.mrb[0].mxu0 %v1437
      %v1635 = vpop.f32.mrb[0].mxu0
      %v1636 = vadd.f32 0.0, %v1635
      %v1637 = vpop.f32.mrb[0].mxu0
      %v1638 = vpop.f32.mrb[0].mxu0
      %v1639 = vadd.f32 0.0, %v1638
      %v1640 = vpop.f32.mrb[0].mxu0
      %1641 = vmatprep.mubr.bf16.mxu0 0
      %1642 = vmatmul.mubr.bf16.gmra.mrb[0].mxu0 %v1438
      %v1643 = vpop.f32.mrb[0].mxu0
      %v1644 = vadd.f32 0.0, %v1643
      %v1645 = vpop.f32.mrb[0].mxu0
      %v1646 = vpop.f32.mrb[0].mxu0
      %v1647 = vadd.f32 0.0, %v1646
      %v1648 = vpop.f32.mrb[0].mxu0
      %1649 = vmatprep.mubr.bf16.mxu0 0
      %1650 = vmatmul.mubr.bf16.gmra.mrb[0].mxu0 %v1439
      %v1651 = vpop.f32.mrb[0].mxu0
      %v1652 = vadd.f32 0.0, %v1651
      %v1653 = vpop.f32.mrb[0].mxu0
      %v1654 = vpop.f32.mrb[0].mxu0
      %v1655 = vadd.f32 0.0, %v1654
      %v1656 = vpop.f32.mrb[0].mxu0
      %1657 = vmatprep.mubr.bf16.mxu0 0
      %1658 = vmatmul.mubr.bf16.gmra.mrb[0].mxu0 %v1440
      %v1659 = vpop.f32.mrb[0].mxu0
      %v1660 = vadd.f32 0.0, %v1659
      %v1661 = vpop.f32.mrb[0].mxu0
      %v1662 = vpop.f32.mrb[0].mxu0
      %v1663 = vadd.f32 0.0, %v1662
      %v1664 = vpop.f32.mrb[0].mxu0
      %1665 = vdwg.mxu0
      %v1666 = vadd.f32 %v1119, %v1540
      %v1667 = vadd.f32 %v1122, %v1543
      %v1668 = vadd.f32 %v1127, %v1548
      %v1669 = vadd.f32 %v1130, %v1551
      %v1670 = vadd.f32 %v1135, %v1556
      %v1671 = vadd.f32 %v1138, %v1559
      %v1672 = vadd.f32 %v1143, %v1564
      %v1673 = vadd.f32 %v1146, %v1567
      %v1674 = vadd.f32 %v1151, %v1572
      %v1675 = vadd.f32 %v1154, %v1575
      %v1676 = vadd.f32 %v1159, %v1580
      %v1677 = vadd.f32 %v1162, %v1583
      %v1678 = vadd.f32 %v1167, %v1588
      %v1679 = vadd.f32 %v1170, %v1591
      %v1680 = vadd.f32 %v1175, %v1596
      %v1681 = vadd.f32 %v1178, %v1599
      %v1682 = vadd.f32 %v1183, %v1604
      %v1683 = vadd.f32 %v1186, %v1607
      %v1684 = vadd.f32 %v1191, %v1612
      %v1685 = vadd.f32 %v1194, %v1615
      %v1686 = vadd.f32 %v1199, %v1620
      %v1687 = vadd.f32 %v1202, %v1623
      %v1688 = vadd.f32 %v1207, %v1628
      %v1689 = vadd.f32 %v1210, %v1631
      %v1690 = vadd.f32 %v1215, %v1636
      %v1691 = vadd.f32 %v1218, %v1639
      %v1692 = vadd.f32 %v1223, %v1644
      %v1693 = vadd.f32 %v1226, %v1647
      %v1694 = vadd.f32 %v1231, %v1652
      %v1695 = vadd.f32 %v1234, %v1655
      %v1696 = vadd.f32 %v1239, %v1660
      %v1697 = vadd.f32 %v1242, %v1663
      %1698 = vst [vmem:[#allocation2] sm:$0xff] %v1666
      %1699 = vst [vmem:[#allocation2 + $0x8] sm:$0xff] %v1667
      %1700 = vst [vmem:[#allocation2 + $0x10] sm:$0xff] %v1668
      %1701 = vst [vmem:[#allocation2 + $0x18] sm:$0xff] %v1669
      %1702 = vst [vmem:[#allocation2 + $0x20] sm:$0xff] %v1670
      %1703 = vst [vmem:[#allocation2 + $0x28] sm:$0xff] %v1671
      %1704 = vst [vmem:[#allocation2 + $0x30] sm:$0xff] %v1672
      %1705 = vst [vmem:[#allocation2 + $0x38] sm:$0xff] %v1673
      %1706 = vst [vmem:[#allocation2 + $0x40] sm:$0xff] %v1674
      %1707 = vst [vmem:[#allocation2 + $0x48] sm:$0xff] %v1675
      %1708 = vst [vmem:[#allocation2 + $0x50] sm:$0xff] %v1676
      %1709 = vst [vmem:[#allocation2 + $0x58] sm:$0xff] %v1677
      %1710 = vst [vmem:[#allocation2 + $0x60] sm:$0xff] %v1678
      %1711 = vst [vmem:[#allocation2 + $0x68] sm:$0xff] %v1679
      %1712 = vst [vmem:[#allocation2 + $0x70] sm:$0xff] %v1680
      %1713 = vst [vmem:[#allocation2 + $0x78] sm:$0xff] %v1681
      %1714 = vst [vmem:[#allocation2 + $0x80] sm:$0xff] %v1682
      %1715 = vst [vmem:[#allocation2 + $0x88] sm:$0xff] %v1683
      %1716 = vst [vmem:[#allocation2 + $0x90] sm:$0xff] %v1684
      %1717 = vst [vmem:[#allocation2 + $0x98] sm:$0xff] %v1685
      %1718 = vst [vmem:[#allocation2 + $0xa0] sm:$0xff] %v1686
      %1719 = vst [vmem:[#allocation2 + $0xa8] sm:$0xff] %v1687
      %1720 = vst [vmem:[#allocation2 + $0xb0] sm:$0xff] %v1688
      %1721 = vst [vmem:[#allocation2 + $0xb8] sm:$0xff] %v1689
      %1722 = vst [vmem:[#allocation2 + $0xc0] sm:$0xff] %v1690
      %1723 = vst [vmem:[#allocation2 + $0xc8] sm:$0xff] %v1691
      %1724 = vst [vmem:[#allocation2 + $0xd0] sm:$0xff] %v1692
      %1725 = vst [vmem:[#allocation2 + $0xd8] sm:$0xff] %v1693
      %1726 = vst [vmem:[#allocation2 + $0xe0] sm:$0xff] %v1694
      %1727 = vst [vmem:[#allocation2 + $0xe8] sm:$0xff] %v1695
      %1728 = vst [vmem:[#allocation2 + $0xf0] sm:$0xff] %v1696
      %1729 = vst [vmem:[#allocation2 + $0xf8] sm:$0xff] %v1697
      %s1730 = sadd.s32 %s195, 1
      %s1731 = smul.u32 %s1730, 3
      %s1732 = smul.addr %s1731, 4
      %s1733 = scalar_lea.vmem %s178, %s1732
      %v1734 = vld [vmem:[%s1733] sm:$0xf]
      %v1735 = vld [vmem:[%s1733 + $0x4] sm:$0xf]
      %v1736 = vld [vmem:[%s1733 + $0x8] sm:$0x1]
      %v1737 = vld [vmem:[%s1733 + $0xc] sm:$0xf]
      %v1738 = vld [vmem:[%s1733 + $0x10] sm:$0xf]
      %v1739 = vld [vmem:[%s1733 + $0x14] sm:$0x1]
      %v1740 = vld [vmem:[%s1733 + $0x18] sm:$0xf]
      %v1741 = vld [vmem:[%s1733 + $0x1c] sm:$0xf]
      %v1742 = vld [vmem:[%s1733 + $0x20] sm:$0x1]
      %v1743 = vld [vmem:[%s1733 + $0x24] sm:$0xf]
      %v1744 = vld [vmem:[%s1733 + $0x28] sm:$0xf]
      %v1745 = vld [vmem:[%s1733 + $0x2c] sm:$0x1]
      %v1746 = vld [vmem:[%s1733 + $0x30] sm:$0xf]
      %v1747 = vld [vmem:[%s1733 + $0x34] sm:$0xf]
      %v1748 = vld [vmem:[%s1733 + $0x38] sm:$0x1]
      %v1749 = vld [vmem:[%s1733 + $0x3c] sm:$0xf]
      %v1750 = vld [vmem:[%s1733 + $0x40] sm:$0xf]
      %v1751 = vld [vmem:[%s1733 + $0x44] sm:$0x1]
      %v1752 = vld [vmem:[%s1733 + $0x48] sm:$0xf]
      %v1753 = vld [vmem:[%s1733 + $0x4c] sm:$0xf]
      %v1754 = vld [vmem:[%s1733 + $0x50] sm:$0x1]
      %v1755 = vld [vmem:[%s1733 + $0x54] sm:$0xf]
      %v1756 = vld [vmem:[%s1733 + $0x58] sm:$0xf]
      %v1757 = vld [vmem:[%s1733 + $0x5c] sm:$0x1]
      %v1758 = vld [vmem:[%s1733 + $0x60] sm:$0xf]
      %v1759 = vld [vmem:[%s1733 + $0x64] sm:$0xf]
      %v1760 = vld [vmem:[%s1733 + $0x68] sm:$0x1]
      %v1761 = vld [vmem:[%s1733 + $0x6c] sm:$0xf]
      %v1762 = vld [vmem:[%s1733 + $0x70] sm:$0xf]
      %v1763 = vld [vmem:[%s1733 + $0x74] sm:$0x1]
      %v1764 = vld [vmem:[%s1733 + $0x78] sm:$0xf]
      %v1765 = vld [vmem:[%s1733 + $0x7c] sm:$0xf]
      %v1766 = vld [vmem:[%s1733 + $0x80] sm:$0x1]
      %v1767 = vld [vmem:[%s1733 + $0x84] sm:$0xf]
      %v1768 = vld [vmem:[%s1733 + $0x88] sm:$0xf]
      %v1769 = vld [vmem:[%s1733 + $0x8c] sm:$0x1]
      %v1770 = vld [vmem:[%s1733 + $0x90] sm:$0xf]
      %v1771 = vld [vmem:[%s1733 + $0x94] sm:$0xf]
      %v1772 = vld [vmem:[%s1733 + $0x98] sm:$0x1]
      %v1773 = vld [vmem:[%s1733 + $0x9c] sm:$0xf]
      %v1774 = vld [vmem:[%s1733 + $0xa0] sm:$0xf]
      %v1775 = vld [vmem:[%s1733 + $0xa4] sm:$0x1]
      %v1776 = vld [vmem:[%s1733 + $0xa8] sm:$0xf]
      %v1777 = vld [vmem:[%s1733 + $0xac] sm:$0xf]
      %v1778 = vld [vmem:[%s1733 + $0xb0] sm:$0x1]
      %v1779 = vld [vmem:[%s1733 + $0xb4] sm:$0xf]
      %v1780 = vld [vmem:[%s1733 + $0xb8] sm:$0xf]
      %v1781 = vld [vmem:[%s1733 + $0xbc] sm:$0x1]
      %s1782 = scalar_lea.vmem %s1, 192
      %v1783 = vld [vmem:[%s1782] sm:$0xf]
      %v1784 = vld [vmem:[%s1782 + $0x4] sm:$0xf]
      %v1785 = vld [vmem:[%s1782 + $0x8] sm:$0xf]
      %v1786 = vld [vmem:[%s1782 + $0xc] sm:$0xf]
      %v1787 = vld [vmem:[%s1782 + $0x10] sm:$0xf]
      %v1788 = vld [vmem:[%s1782 + $0x14] sm:$0xf]
      %v1789 = vld [vmem:[%s1782 + $0x18] sm:$0xf]
      %v1790 = vld [vmem:[%s1782 + $0x1c] sm:$0xf]
      %v1791 = vld [vmem:[%s1782 + $0x20] sm:$0xf]
      %v1792 = vld [vmem:[%s1782 + $0x24] sm:$0xf]
      %v1793 = vld [vmem:[%s1782 + $0x28] sm:$0xf]
      %v1794 = vld [vmem:[%s1782 + $0x2c] sm:$0xf]
      %v1795 = vld [vmem:[%s1782 + $0x30] sm:$0xf]
      %v1796 = vld [vmem:[%s1782 + $0x34] sm:$0xf]
      %v1797 = vld [vmem:[%s1782 + $0x38] sm:$0xf]
      %v1798 = vld [vmem:[%s1782 + $0x3c] sm:$0xf]
      %v1800 = vshrl.u32 %v1734, 16
      %v1802 = vrot.slane %v1800, 4
      %v1803 = vshll.u32 %v1734, 16
      %v1805 = vrot.slane %v1803, 5
      %v1806 = vor.u32 %v1802, %v1805
      %v1807 = vrot.slane %v1806, 4
      %v1809 = vshll.u32 %v1735, 16
      %v1811 = vrot.slane %v1809, 5
      %v1812 = vsel %vm265, %v1807, %v1811
      %v1813 = vshrl.u32 %v1735, 16
      %v1815 = vrot.slane %v1813, 4
      %v1816 = vor.u32 %v1815, %v1811
      %v1817 = vrot.slane %v1816, 4
      %v1819 = vshll.u32 %v1736, 16
      %v1821 = vrot.slane %v1819, 5
      %v1822 = vsel %vm265, %v1817, %v1821
      %v1824 = vshrl.u32 %v1737, 16
      %v1826 = vrot.slane %v1824, 4
      %v1827 = vshll.u32 %v1737, 16
      %v1829 = vrot.slane %v1827, 5
      %v1830 = vor.u32 %v1826, %v1829
      %v1831 = vrot.slane %v1830, 4
      %v1833 = vshll.u32 %v1738, 16
      %v1835 = vrot.slane %v1833, 5
      %v1836 = vsel %vm265, %v1831, %v1835
      %v1837 = vshrl.u32 %v1738, 16
      %v1839 = vrot.slane %v1837, 4
      %v1840 = vor.u32 %v1839, %v1835
      %v1841 = vrot.slane %v1840, 4
      %v1843 = vshll.u32 %v1739, 16
      %v1845 = vrot.slane %v1843, 5
      %v1846 = vsel %vm265, %v1841, %v1845
      %v1848 = vshrl.u32 %v1740, 16
      %v1850 = vrot.slane %v1848, 4
      %v1851 = vshll.u32 %v1740, 16
      %v1853 = vrot.slane %v1851, 5
      %v1854 = vor.u32 %v1850, %v1853
      %v1855 = vrot.slane %v1854, 4
      %v1857 = vshll.u32 %v1741, 16
      %v1859 = vrot.slane %v1857, 5
      %v1860 = vsel %vm265, %v1855, %v1859
      %v1861 = vshrl.u32 %v1741, 16
      %v1863 = vrot.slane %v1861, 4
      %v1864 = vor.u32 %v1863, %v1859
      %v1865 = vrot.slane %v1864, 4
      %v1867 = vshll.u32 %v1742, 16
      %v1869 = vrot.slane %v1867, 5
      %v1870 = vsel %vm265, %v1865, %v1869
      %v1872 = vshrl.u32 %v1743, 16
      %v1874 = vrot.slane %v1872, 4
      %v1875 = vshll.u32 %v1743, 16
      %v1877 = vrot.slane %v1875, 5
      %v1878 = vor.u32 %v1874, %v1877
      %v1879 = vrot.slane %v1878, 4
      %v1881 = vshll.u32 %v1744, 16
      %v1883 = vrot.slane %v1881, 5
      %v1884 = vsel %vm265, %v1879, %v1883
      %v1885 = vshrl.u32 %v1744, 16
      %v1887 = vrot.slane %v1885, 4
      %v1888 = vor.u32 %v1887, %v1883
      %v1889 = vrot.slane %v1888, 4
      %v1891 = vshll.u32 %v1745, 16
      %v1893 = vrot.slane %v1891, 5
      %v1894 = vsel %vm265, %v1889, %v1893
      %v1896 = vshrl.u32 %v1746, 16
      %v1898 = vrot.slane %v1896, 4
      %v1899 = vshll.u32 %v1746, 16
      %v1901 = vrot.slane %v1899, 5
      %v1902 = vor.u32 %v1898, %v1901
      %v1903 = vrot.slane %v1902, 4
      %v1905 = vshll.u32 %v1747, 16
      %v1907 = vrot.slane %v1905, 5
      %v1908 = vsel %vm265, %v1903, %v1907
      %v1909 = vshrl.u32 %v1747, 16
      %v1911 = vrot.slane %v1909, 4
      %v1912 = vor.u32 %v1911, %v1907
      %v1913 = vrot.slane %v1912, 4
      %v1915 = vshll.u32 %v1748, 16
      %v1917 = vrot.slane %v1915, 5
      %v1918 = vsel %vm265, %v1913, %v1917
      %v1920 = vshrl.u32 %v1749, 16
      %v1922 = vrot.slane %v1920, 4
      %v1923 = vshll.u32 %v1749, 16
      %v1925 = vrot.slane %v1923, 5
      %v1926 = vor.u32 %v1922, %v1925
      %v1927 = vrot.slane %v1926, 4
      %v1929 = vshll.u32 %v1750, 16
      %v1931 = vrot.slane %v1929, 5
      %v1932 = vsel %vm265, %v1927, %v1931
      %v1933 = vshrl.u32 %v1750, 16
      %v1935 = vrot.slane %v1933, 4
      %v1936 = vor.u32 %v1935, %v1931
      %v1937 = vrot.slane %v1936, 4
      %v1939 = vshll.u32 %v1751, 16
      %v1941 = vrot.slane %v1939, 5
      %v1942 = vsel %vm265, %v1937, %v1941
      %v1944 = vshrl.u32 %v1752, 16
      %v1946 = vrot.slane %v1944, 4
      %v1947 = vshll.u32 %v1752, 16
      %v1949 = vrot.slane %v1947, 5
      %v1950 = vor.u32 %v1946, %v1949
      %v1951 = vrot.slane %v1950, 4
      %v1953 = vshll.u32 %v1753, 16
      %v1955 = vrot.slane %v1953, 5
      %v1956 = vsel %vm265, %v1951, %v1955
      %v1957 = vshrl.u32 %v1753, 16
      %v1959 = vrot.slane %v1957, 4
      %v1960 = vor.u32 %v1959, %v1955
      %v1961 = vrot.slane %v1960, 4
      %v1963 = vshll.u32 %v1754, 16
      %v1965 = vrot.slane %v1963, 5
      %v1966 = vsel %vm265, %v1961, %v1965
      %v1968 = vshrl.u32 %v1755, 16
      %v1970 = vrot.slane %v1968, 4
      %v1971 = vshll.u32 %v1755, 16
      %v1973 = vrot.slane %v1971, 5
      %v1974 = vor.u32 %v1970, %v1973
      %v1975 = vrot.slane %v1974, 4
      %v1977 = vshll.u32 %v1756, 16
      %v1979 = vrot.slane %v1977, 5
      %v1980 = vsel %vm265, %v1975, %v1979
      %v1981 = vshrl.u32 %v1756, 16
      %v1983 = vrot.slane %v1981, 4
      %v1984 = vor.u32 %v1983, %v1979
      %v1985 = vrot.slane %v1984, 4
      %v1987 = vshll.u32 %v1757, 16
      %v1989 = vrot.slane %v1987, 5
      %v1990 = vsel %vm265, %v1985, %v1989
      %v1992 = vshrl.u32 %v1758, 16
      %v1994 = vrot.slane %v1992, 4
      %v1995 = vshll.u32 %v1758, 16
      %v1997 = vrot.slane %v1995, 5
      %v1998 = vor.u32 %v1994, %v1997
      %v1999 = vrot.slane %v1998, 4
      %v2001 = vshll.u32 %v1759, 16
      %v2003 = vrot.slane %v2001, 5
      %v2004 = vsel %vm265, %v1999, %v2003
      %v2005 = vshrl.u32 %v1759, 16
      %v2007 = vrot.slane %v2005, 4
      %v2008 = vor.u32 %v2007, %v2003
      %v2009 = vrot.slane %v2008, 4
      %v2011 = vshll.u32 %v1760, 16
      %v2013 = vrot.slane %v2011, 5
      %v2014 = vsel %vm265, %v2009, %v2013
      %v2016 = vshrl.u32 %v1761, 16
      %v2018 = vrot.slane %v2016, 4
      %v2019 = vshll.u32 %v1761, 16
      %v2021 = vrot.slane %v2019, 5
      %v2022 = vor.u32 %v2018, %v2021
      %v2023 = vrot.slane %v2022, 4
      %v2025 = vshll.u32 %v1762, 16
      %v2027 = vrot.slane %v2025, 5
      %v2028 = vsel %vm265, %v2023, %v2027
      %v2029 = vshrl.u32 %v1762, 16
      %v2031 = vrot.slane %v2029, 4
      %v2032 = vor.u32 %v2031, %v2027
      %v2033 = vrot.slane %v2032, 4
      %v2035 = vshll.u32 %v1763, 16
      %v2037 = vrot.slane %v2035, 5
      %v2038 = vsel %vm265, %v2033, %v2037
      %v2040 = vshrl.u32 %v1764, 16
      %v2042 = vrot.slane %v2040, 4
      %v2043 = vshll.u32 %v1764, 16
      %v2045 = vrot.slane %v2043, 5
      %v2046 = vor.u32 %v2042, %v2045
      %v2047 = vrot.slane %v2046, 4
      %v2049 = vshll.u32 %v1765, 16
      %v2051 = vrot.slane %v2049, 5
      %v2052 = vsel %vm265, %v2047, %v2051
      %v2053 = vshrl.u32 %v1765, 16
      %v2055 = vrot.slane %v2053, 4
      %v2056 = vor.u32 %v2055, %v2051
      %v2057 = vrot.slane %v2056, 4
      %v2059 = vshll.u32 %v1766, 16
      %v2061 = vrot.slane %v2059, 5
      %v2062 = vsel %vm265, %v2057, %v2061
      %v2064 = vshrl.u32 %v1767, 16
      %v2066 = vrot.slane %v2064, 4
      %v2067 = vshll.u32 %v1767, 16
      %v2069 = vrot.slane %v2067, 5
      %v2070 = vor.u32 %v2066, %v2069
      %v2071 = vrot.slane %v2070, 4
      %v2073 = vshll.u32 %v1768, 16
      %v2075 = vrot.slane %v2073, 5
      %v2076 = vsel %vm265, %v2071, %v2075
      %v2077 = vshrl.u32 %v1768, 16
      %v2079 = vrot.slane %v2077, 4
      %v2080 = vor.u32 %v2079, %v2075
      %v2081 = vrot.slane %v2080, 4
      %v2083 = vshll.u32 %v1769, 16
      %v2085 = vrot.slane %v2083, 5
      %v2086 = vsel %vm265, %v2081, %v2085
      %v2088 = vshrl.u32 %v1770, 16
      %v2090 = vrot.slane %v2088, 4
      %v2091 = vshll.u32 %v1770, 16
      %v2093 = vrot.slane %v2091, 5
      %v2094 = vor.u32 %v2090, %v2093
      %v2095 = vrot.slane %v2094, 4
      %v2097 = vshll.u32 %v1771, 16
      %v2099 = vrot.slane %v2097, 5
      %v2100 = vsel %vm265, %v2095, %v2099
      %v2101 = vshrl.u32 %v1771, 16
      %v2103 = vrot.slane %v2101, 4
      %v2104 = vor.u32 %v2103, %v2099
      %v2105 = vrot.slane %v2104, 4
      %v2107 = vshll.u32 %v1772, 16
      %v2109 = vrot.slane %v2107, 5
      %v2110 = vsel %vm265, %v2105, %v2109
      %v2112 = vshrl.u32 %v1773, 16
      %v2114 = vrot.slane %v2112, 4
      %v2115 = vshll.u32 %v1773, 16
      %v2117 = vrot.slane %v2115, 5
      %v2118 = vor.u32 %v2114, %v2117
      %v2119 = vrot.slane %v2118, 4
      %v2121 = vshll.u32 %v1774, 16
      %v2123 = vrot.slane %v2121, 5
      %v2124 = vsel %vm265, %v2119, %v2123
      %v2125 = vshrl.u32 %v1774, 16
      %v2127 = vrot.slane %v2125, 4
      %v2128 = vor.u32 %v2127, %v2123
      %v2129 = vrot.slane %v2128, 4
      %v2131 = vshll.u32 %v1775, 16
      %v2133 = vrot.slane %v2131, 5
      %v2134 = vsel %vm265, %v2129, %v2133
      %v2136 = vshrl.u32 %v1776, 16
      %v2138 = vrot.slane %v2136, 4
      %v2139 = vshll.u32 %v1776, 16
      %v2141 = vrot.slane %v2139, 5
      %v2142 = vor.u32 %v2138, %v2141
      %v2143 = vrot.slane %v2142, 4
      %v2145 = vshll.u32 %v1777, 16
      %v2147 = vrot.slane %v2145, 5
      %v2148 = vsel %vm265, %v2143, %v2147
      %v2149 = vshrl.u32 %v1777, 16
      %v2151 = vrot.slane %v2149, 4
      %v2152 = vor.u32 %v2151, %v2147
      %v2153 = vrot.slane %v2152, 4
      %v2155 = vshll.u32 %v1778, 16
      %v2157 = vrot.slane %v2155, 5
      %v2158 = vsel %vm265, %v2153, %v2157
      %v2160 = vshrl.u32 %v1779, 16
      %v2162 = vrot.slane %v2160, 4
      %v2163 = vshll.u32 %v1779, 16
      %v2165 = vrot.slane %v2163, 5
      %v2166 = vor.u32 %v2162, %v2165
      %v2167 = vrot.slane %v2166, 4
      %v2169 = vshll.u32 %v1780, 16
      %v2171 = vrot.slane %v2169, 5
      %v2172 = vsel %vm265, %v2167, %v2171
      %v2173 = vshrl.u32 %v1780, 16
      %v2175 = vrot.slane %v2173, 4
      %v2176 = vor.u32 %v2175, %v2171
      %v2177 = vrot.slane %v2176, 4
      %v2179 = vshll.u32 %v1781, 16
      %v2181 = vrot.slane %v2179, 5
      %v2182 = vsel %vm265, %v2177, %v2181
      %s2183 = scalar_lea.vmem %s1, 256
      %v2184 = vld [vmem:[%s2183] sm:$0xf]
      %v2185 = vld [vmem:[%s2183 + $0x4] sm:$0xf]
      %v2186 = vld [vmem:[%s2183 + $0x8] sm:$0xf]
      %v2187 = vld [vmem:[%s2183 + $0xc] sm:$0xf]
      %v2188 = vld [vmem:[%s2183 + $0x10] sm:$0xf]
      %v2189 = vld [vmem:[%s2183 + $0x14] sm:$0xf]
      %v2190 = vld [vmem:[%s2183 + $0x18] sm:$0xf]
      %v2191 = vld [vmem:[%s2183 + $0x1c] sm:$0xf]
      %v2192 = vld [vmem:[%s2183 + $0x20] sm:$0xf]
      %v2193 = vld [vmem:[%s2183 + $0x24] sm:$0xf]
      %v2194 = vld [vmem:[%s2183 + $0x28] sm:$0xf]
      %v2195 = vld [vmem:[%s2183 + $0x2c] sm:$0xf]
      %v2196 = vld [vmem:[%s2183 + $0x30] sm:$0xf]
      %v2197 = vld [vmem:[%s2183 + $0x34] sm:$0xf]
      %v2198 = vld [vmem:[%s2183 + $0x38] sm:$0xf]
      %v2199 = vld [vmem:[%s2183 + $0x3c] sm:$0xf]
      %v2200 = vunpack.c.l.b16 %v1812
      %v2201 = vunpack.c.l.b16 %v1822
      %v2202 = vunpack.c.l.b16 %v1836
      %v2203 = vunpack.c.l.b16 %v1846
      %v2204 = vunpack.c.l.b16 %v1860
      %v2205 = vunpack.c.l.b16 %v1870
      %v2206 = vunpack.c.l.b16 %v1884
      %v2207 = vunpack.c.l.b16 %v1894
      %v2208 = vunpack.c.l.b16 %v1908
      %v2209 = vunpack.c.l.b16 %v1918
      %v2210 = vunpack.c.l.b16 %v1932
      %v2211 = vunpack.c.l.b16 %v1942
      %v2212 = vunpack.c.l.b16 %v1956
      %v2213 = vunpack.c.l.b16 %v1966
      %v2214 = vunpack.c.l.b16 %v1980
      %v2215 = vunpack.c.l.b16 %v1990
      %v2216 = vunpack.c.l.b16 %v2004
      %v2217 = vunpack.c.l.b16 %v2014
      %v2218 = vunpack.c.l.b16 %v2028
      %v2219 = vunpack.c.l.b16 %v2038
      %v2220 = vunpack.c.l.b16 %v2052
      %v2221 = vunpack.c.l.b16 %v2062
      %v2222 = vunpack.c.l.b16 %v2076
      %v2223 = vunpack.c.l.b16 %v2086
      %v2224 = vunpack.c.l.b16 %v2100
      %v2225 = vunpack.c.l.b16 %v2110
      %v2226 = vunpack.c.l.b16 %v2124
      %v2227 = vunpack.c.l.b16 %v2134
      %v2228 = vunpack.c.l.b16 %v2148
      %v2229 = vunpack.c.l.b16 %v2158
      %v2230 = vunpack.c.l.b16 %v2172
      %v2231 = vunpack.c.l.b16 %v2182
      %v2232 = vpack.c.b16 %v2201, %v2200
      %v2233 = vpack.c.b16 %v2203, %v2202
      %v2234 = vpack.c.b16 %v2205, %v2204
      %v2235 = vpack.c.b16 %v2207, %v2206
      %v2236 = vpack.c.b16 %v2209, %v2208
      %v2237 = vpack.c.b16 %v2211, %v2210
      %v2238 = vpack.c.b16 %v2213, %v2212
      %v2239 = vpack.c.b16 %v2215, %v2214
      %v2240 = vpack.c.b16 %v2217, %v2216
      %v2241 = vpack.c.b16 %v2219, %v2218
      %v2242 = vpack.c.b16 %v2221, %v2220
      %v2243 = vpack.c.b16 %v2223, %v2222
      %v2244 = vpack.c.b16 %v2225, %v2224
      %v2245 = vpack.c.b16 %v2227, %v2226
      %v2246 = vpack.c.b16 %v2229, %v2228
      %v2247 = vpack.c.b16 %v2231, %v2230
      %v2280 = vunpack.c.l.b16 %v2184
      %v2281 = vunpack.c.l.b16 %v2185
      %v2282 = vunpack.c.l.b16 %v2186
      %v2283 = vunpack.c.l.b16 %v2187
      %v2284 = vunpack.c.l.b16 %v2188
      %v2285 = vunpack.c.l.b16 %v2189
      %v2286 = vunpack.c.l.b16 %v2190
      %v2287 = vunpack.c.l.b16 %v2191
      %v2288 = vunpack.c.l.b16 %v2192
      %v2289 = vunpack.c.l.b16 %v2193
      %v2290 = vunpack.c.l.b16 %v2194
      %v2291 = vunpack.c.l.b16 %v2195
      %v2292 = vunpack.c.l.b16 %v2196
      %v2293 = vunpack.c.l.b16 %v2197
      %v2294 = vunpack.c.l.b16 %v2198
      %v2295 = vunpack.c.l.b16 %v2199
      %v2296 = vpack.c.b16 %v2281, %v2280
      %v2297 = vpack.c.b16 %v2283, %v2282
      %v2298 = vpack.c.b16 %v2285, %v2284
      %v2299 = vpack.c.b16 %v2287, %v2286
      %v2300 = vpack.c.b16 %v2289, %v2288
      %v2301 = vpack.c.b16 %v2291, %v2290
      %v2302 = vpack.c.b16 %v2293, %v2292
      %v2303 = vpack.c.b16 %v2295, %v2294
      %2312 = vmatprep.subr.bf16.mxu0 0
      %2313 = vmatpush1.bf16.msra.mxu0 %v2296
      %2314 = vmatprep.subr.bf16.mxu0 0
      %2315 = vmatpush1.bf16.msra.mxu0 %v2297
      %2316 = vmatprep.subr.bf16.mxu0 0
      %2317 = vmatpush1.bf16.msra.mxu0 %v2298
      %2318 = vmatprep.subr.bf16.mxu0 0
      %2319 = vmatpush1.bf16.msra.mxu0 %v2299
      %2320 = vmatprep.subr.bf16.mxu0 0
      %2321 = vmatpush1.bf16.msra.mxu0 %v2300
      %2322 = vmatprep.subr.bf16.mxu0 0
      %2323 = vmatpush1.bf16.msra.mxu0 %v2301
      %2324 = vmatprep.subr.bf16.mxu0 0
      %2325 = vmatpush1.bf16.msra.mxu0 %v2302
      %2326 = vmatprep.subr.bf16.mxu0 0
      %2327 = vmatpush1.bf16.msra.mxu0 %v2303
      %2328 = vmatprep.subr.bf16.mxu0 0
      %2329 = vmatpush1.bf16.msra.mxu0 0
      %2330 = vmatprep.subr.bf16.mxu0 0
      %2331 = vmatpush1.bf16.msra.mxu0 0
      %2332 = vmatprep.subr.bf16.mxu0 0
      %2333 = vmatpush1.bf16.msra.mxu0 0
      %2334 = vmatprep.subr.bf16.mxu0 0
      %2335 = vmatpush1.bf16.msra.mxu0 0
      %2336 = vmatprep.subr.bf16.mxu0 0
      %2337 = vmatpush1.bf16.msra.mxu0 0
      %2338 = vmatprep.subr.bf16.mxu0 0
      %2339 = vmatpush1.bf16.msra.mxu0 0
      %2340 = vmatprep.subr.bf16.mxu0 0
      %2341 = vmatpush1.bf16.msra.mxu0 0
      %2342 = vmatprep.subr.bf16.mxu0 0
      %2343 = vmatpush1.bf16.msra.mxu0 0
      %2344 = vmatprep.mubr.bf16.mxu0 0
      %2345 = vmatmul.mubr.bf16.gmra.mrb[0].mxu0 %v2232
      %v2346 = vpop.f32.mrb[0].mxu0
      %v2347 = vadd.f32 0.0, %v2346
      %v2348 = vpop.f32.mrb[0].mxu0
      %v2349 = vpop.f32.mrb[0].mxu0
      %v2350 = vadd.f32 0.0, %v2349
      %v2351 = vpop.f32.mrb[0].mxu0
      %2352 = vmatprep.mubr.bf16.mxu0 0
      %2353 = vmatmul.mubr.bf16.gmra.mrb[0].mxu0 %v2233
      %v2354 = vpop.f32.mrb[0].mxu0
      %v2355 = vadd.f32 0.0, %v2354
      %v2356 = vpop.f32.mrb[0].mxu0
      %v2357 = vpop.f32.mrb[0].mxu0
      %v2358 = vadd.f32 0.0, %v2357
      %v2359 = vpop.f32.mrb[0].mxu0
      %2360 = vmatprep.mubr.bf16.mxu0 0
      %2361 = vmatmul.mubr.bf16.gmra.mrb[0].mxu0 %v2234
      %v2362 = vpop.f32.mrb[0].mxu0
      %v2363 = vadd.f32 0.0, %v2362
      %v2364 = vpop.f32.mrb[0].mxu0
      %v2365 = vpop.f32.mrb[0].mxu0
      %v2366 = vadd.f32 0.0, %v2365
      %v2367 = vpop.f32.mrb[0].mxu0
      %2368 = vmatprep.mubr.bf16.mxu0 0
      %2369 = vmatmul.mubr.bf16.gmra.mrb[0].mxu0 %v2235
      %v2370 = vpop.f32.mrb[0].mxu0
      %v2371 = vadd.f32 0.0, %v2370
      %v2372 = vpop.f32.mrb[0].mxu0
      %v2373 = vpop.f32.mrb[0].mxu0
      %v2374 = vadd.f32 0.0, %v2373
      %v2375 = vpop.f32.mrb[0].mxu0
      %2376 = vmatprep.mubr.bf16.mxu0 0
      %2377 = vmatmul.mubr.bf16.gmra.mrb[0].mxu0 %v2236
      %v2378 = vpop.f32.mrb[0].mxu0
      %v2379 = vadd.f32 0.0, %v2378
      %v2380 = vpop.f32.mrb[0].mxu0
      %v2381 = vpop.f32.mrb[0].mxu0
      %v2382 = vadd.f32 0.0, %v2381
      %v2383 = vpop.f32.mrb[0].mxu0
      %2384 = vmatprep.mubr.bf16.mxu0 0
      %2385 = vmatmul.mubr.bf16.gmra.mrb[0].mxu0 %v2237
      %v2386 = vpop.f32.mrb[0].mxu0
      %v2387 = vadd.f32 0.0, %v2386
      %v2388 = vpop.f32.mrb[0].mxu0
      %v2389 = vpop.f32.mrb[0].mxu0
      %v2390 = vadd.f32 0.0, %v2389
      %v2391 = vpop.f32.mrb[0].mxu0
      %2392 = vmatprep.mubr.bf16.mxu0 0
      %2393 = vmatmul.mubr.bf16.gmra.mrb[0].mxu0 %v2238
      %v2394 = vpop.f32.mrb[0].mxu0
      %v2395 = vadd.f32 0.0, %v2394
      %v2396 = vpop.f32.mrb[0].mxu0
      %v2397 = vpop.f32.mrb[0].mxu0
      %v2398 = vadd.f32 0.0, %v2397
      %v2399 = vpop.f32.mrb[0].mxu0
      %2400 = vmatprep.mubr.bf16.mxu0 0
      %2401 = vmatmul.mubr.bf16.gmra.mrb[0].mxu0 %v2239
      %v2402 = vpop.f32.mrb[0].mxu0
      %v2403 = vadd.f32 0.0, %v2402
      %v2404 = vpop.f32.mrb[0].mxu0
      %v2405 = vpop.f32.mrb[0].mxu0
      %v2406 = vadd.f32 0.0, %v2405
      %v2407 = vpop.f32.mrb[0].mxu0
      %2408 = vmatprep.mubr.bf16.mxu0 0
      %2409 = vmatmul.mubr.bf16.gmra.mrb[0].mxu0 %v2240
      %v2410 = vpop.f32.mrb[0].mxu0
      %v2411 = vadd.f32 0.0, %v2410
      %v2412 = vpop.f32.mrb[0].mxu0
      %v2413 = vpop.f32.mrb[0].mxu0
      %v2414 = vadd.f32 0.0, %v2413
      %v2415 = vpop.f32.mrb[0].mxu0
      %2416 = vmatprep.mubr.bf16.mxu0 0
      %2417 = vmatmul.mubr.bf16.gmra.mrb[0].mxu0 %v2241
      %v2418 = vpop.f32.mrb[0].mxu0
      %v2419 = vadd.f32 0.0, %v2418
      %v2420 = vpop.f32.mrb[0].mxu0
      %v2421 = vpop.f32.mrb[0].mxu0
      %v2422 = vadd.f32 0.0, %v2421
      %v2423 = vpop.f32.mrb[0].mxu0
      %2424 = vmatprep.mubr.bf16.mxu0 0
      %2425 = vmatmul.mubr.bf16.gmra.mrb[0].mxu0 %v2242
      %v2426 = vpop.f32.mrb[0].mxu0
      %v2427 = vadd.f32 0.0, %v2426
      %v2428 = vpop.f32.mrb[0].mxu0
      %v2429 = vpop.f32.mrb[0].mxu0
      %v2430 = vadd.f32 0.0, %v2429
      %v2431 = vpop.f32.mrb[0].mxu0
      %2432 = vmatprep.mubr.bf16.mxu0 0
      %2433 = vmatmul.mubr.bf16.gmra.mrb[0].mxu0 %v2243
      %v2434 = vpop.f32.mrb[0].mxu0
      %v2435 = vadd.f32 0.0, %v2434
      %v2436 = vpop.f32.mrb[0].mxu0
      %v2437 = vpop.f32.mrb[0].mxu0
      %v2438 = vadd.f32 0.0, %v2437
      %v2439 = vpop.f32.mrb[0].mxu0
      %2440 = vmatprep.mubr.bf16.mxu0 0
      %2441 = vmatmul.mubr.bf16.gmra.mrb[0].mxu0 %v2244
      %v2442 = vpop.f32.mrb[0].mxu0
      %v2443 = vadd.f32 0.0, %v2442
      %v2444 = vpop.f32.mrb[0].mxu0
      %v2445 = vpop.f32.mrb[0].mxu0
      %v2446 = vadd.f32 0.0, %v2445
      %v2447 = vpop.f32.mrb[0].mxu0
      %2448 = vmatprep.mubr.bf16.mxu0 0
      %2449 = vmatmul.mubr.bf16.gmra.mrb[0].mxu0 %v2245
      %v2450 = vpop.f32.mrb[0].mxu0
      %v2451 = vadd.f32 0.0, %v2450
      %v2452 = vpop.f32.mrb[0].mxu0
      %v2453 = vpop.f32.mrb[0].mxu0
      %v2454 = vadd.f32 0.0, %v2453
      %v2455 = vpop.f32.mrb[0].mxu0
      %2456 = vmatprep.mubr.bf16.mxu0 0
      %2457 = vmatmul.mubr.bf16.gmra.mrb[0].mxu0 %v2246
      %v2458 = vpop.f32.mrb[0].mxu0
      %v2459 = vadd.f32 0.0, %v2458
      %v2460 = vpop.f32.mrb[0].mxu0
      %v2461 = vpop.f32.mrb[0].mxu0
      %v2462 = vadd.f32 0.0, %v2461
      %v2463 = vpop.f32.mrb[0].mxu0
      %2464 = vmatprep.mubr.bf16.mxu0 0
      %2465 = vmatmul.mubr.bf16.gmra.mrb[0].mxu0 %v2247
      %v2466 = vpop.f32.mrb[0].mxu0
      %v2467 = vadd.f32 0.0, %v2466
      %v2468 = vpop.f32.mrb[0].mxu0
      %v2469 = vpop.f32.mrb[0].mxu0
      %v2470 = vadd.f32 0.0, %v2469
      %v2471 = vpop.f32.mrb[0].mxu0
      %2472 = vdwg.mxu0
      %v2505 = vunpack.c.l.b16 %v1734
      %v2506 = vunpack.c.l.b16 %v1735
      %v2507 = vunpack.c.l.b16 %v1737
      %v2508 = vunpack.c.l.b16 %v1738
      %v2509 = vunpack.c.l.b16 %v1740
      %v2510 = vunpack.c.l.b16 %v1741
      %v2511 = vunpack.c.l.b16 %v1743
      %v2512 = vunpack.c.l.b16 %v1744
      %v2513 = vunpack.c.l.b16 %v1746
      %v2514 = vunpack.c.l.b16 %v1747
      %v2515 = vunpack.c.l.b16 %v1749
      %v2516 = vunpack.c.l.b16 %v1750
      %v2517 = vunpack.c.l.b16 %v1752
      %v2518 = vunpack.c.l.b16 %v1753
      %v2519 = vunpack.c.l.b16 %v1755
      %v2520 = vunpack.c.l.b16 %v1756
      %v2521 = vunpack.c.l.b16 %v1758
      %v2522 = vunpack.c.l.b16 %v1759
      %v2523 = vunpack.c.l.b16 %v1761
      %v2524 = vunpack.c.l.b16 %v1762
      %v2525 = vunpack.c.l.b16 %v1764
      %v2526 = vunpack.c.l.b16 %v1765
      %v2527 = vunpack.c.l.b16 %v1767
      %v2528 = vunpack.c.l.b16 %v1768
      %v2529 = vunpack.c.l.b16 %v1770
      %v2530 = vunpack.c.l.b16 %v1771
      %v2531 = vunpack.c.l.b16 %v1773
      %v2532 = vunpack.c.l.b16 %v1774
      %v2533 = vunpack.c.l.b16 %v1776
      %v2534 = vunpack.c.l.b16 %v1777
      %v2535 = vunpack.c.l.b16 %v1779
      %v2536 = vunpack.c.l.b16 %v1780
      %v2537 = vpack.c.b16 %v2506, %v2505
      %v2538 = vpack.c.b16 %v2508, %v2507
      %v2539 = vpack.c.b16 %v2510, %v2509
      %v2540 = vpack.c.b16 %v2512, %v2511
      %v2541 = vpack.c.b16 %v2514, %v2513
      %v2542 = vpack.c.b16 %v2516, %v2515
      %v2543 = vpack.c.b16 %v2518, %v2517
      %v2544 = vpack.c.b16 %v2520, %v2519
      %v2545 = vpack.c.b16 %v2522, %v2521
      %v2546 = vpack.c.b16 %v2524, %v2523
      %v2547 = vpack.c.b16 %v2526, %v2525
      %v2548 = vpack.c.b16 %v2528, %v2527
      %v2549 = vpack.c.b16 %v2530, %v2529
      %v2550 = vpack.c.b16 %v2532, %v2531
      %v2551 = vpack.c.b16 %v2534, %v2533
      %v2552 = vpack.c.b16 %v2536, %v2535
      %v2585 = vunpack.c.l.b16 %v1783
      %v2586 = vunpack.c.l.b16 %v1784
      %v2587 = vunpack.c.l.b16 %v1785
      %v2588 = vunpack.c.l.b16 %v1786
      %v2589 = vunpack.c.l.b16 %v1787
      %v2590 = vunpack.c.l.b16 %v1788
      %v2591 = vunpack.c.l.b16 %v1789
      %v2592 = vunpack.c.l.b16 %v1790
      %v2593 = vunpack.c.l.b16 %v1791
      %v2594 = vunpack.c.l.b16 %v1792
      %v2595 = vunpack.c.l.b16 %v1793
      %v2596 = vunpack.c.l.b16 %v1794
      %v2597 = vunpack.c.l.b16 %v1795
      %v2598 = vunpack.c.l.b16 %v1796
      %v2599 = vunpack.c.l.b16 %v1797
      %v2600 = vunpack.c.l.b16 %v1798
      %v2601 = vpack.c.b16 %v2586, %v2585
      %v2602 = vpack.c.b16 %v2588, %v2587
      %v2603 = vpack.c.b16 %v2590, %v2589
      %v2604 = vpack.c.b16 %v2592, %v2591
      %v2605 = vpack.c.b16 %v2594, %v2593
      %v2606 = vpack.c.b16 %v2596, %v2595
      %v2607 = vpack.c.b16 %v2598, %v2597
      %v2608 = vpack.c.b16 %v2600, %v2599
      %2617 = vmatprep.subr.bf16.mxu0 0
      %2618 = vmatpush1.bf16.msra.mxu0 %v2601
      %2619 = vmatprep.subr.bf16.mxu0 0
      %2620 = vmatpush1.bf16.msra.mxu0 %v2602
      %2621 = vmatprep.subr.bf16.mxu0 0
      %2622 = vmatpush1.bf16.msra.mxu0 %v2603
      %2623 = vmatprep.subr.bf16.mxu0 0
      %2624 = vmatpush1.bf16.msra.mxu0 %v2604
      %2625 = vmatprep.subr.bf16.mxu0 0
      %2626 = vmatpush1.bf16.msra.mxu0 %v2605
      %2627 = vmatprep.subr.bf16.mxu0 0
      %2628 = vmatpush1.bf16.msra.mxu0 %v2606
      %2629 = vmatprep.subr.bf16.mxu0 0
      %2630 = vmatpush1.bf16.msra.mxu0 %v2607
      %2631 = vmatprep.subr.bf16.mxu0 0
      %2632 = vmatpush1.bf16.msra.mxu0 %v2608
      %2633 = vmatprep.subr.bf16.mxu0 0
      %2634 = vmatpush1.bf16.msra.mxu0 0
      %2635 = vmatprep.subr.bf16.mxu0 0
      %2636 = vmatpush1.bf16.msra.mxu0 0
      %2637 = vmatprep.subr.bf16.mxu0 0
      %2638 = vmatpush1.bf16.msra.mxu0 0
      %2639 = vmatprep.subr.bf16.mxu0 0
      %2640 = vmatpush1.bf16.msra.mxu0 0
      %2641 = vmatprep.subr.bf16.mxu0 0
      %2642 = vmatpush1.bf16.msra.mxu0 0
      %2643 = vmatprep.subr.bf16.mxu0 0
      %2644 = vmatpush1.bf16.msra.mxu0 0
      %2645 = vmatprep.subr.bf16.mxu0 0
      %2646 = vmatpush1.bf16.msra.mxu0 0
      %2647 = vmatprep.subr.bf16.mxu0 0
      %2648 = vmatpush1.bf16.msra.mxu0 0
      %2649 = vmatprep.mubr.bf16.mxu0 0
      %2650 = vmatmul.mubr.bf16.gmra.mrb[0].mxu0 %v2537
      %v2651 = vpop.f32.mrb[0].mxu0
      %v2652 = vadd.f32 %v2347, %v2651
      %v2653 = vpop.f32.mrb[0].mxu0
      %v2654 = vpop.f32.mrb[0].mxu0
      %v2655 = vadd.f32 %v2350, %v2654
      %v2656 = vpop.f32.mrb[0].mxu0
      %2657 = vmatprep.mubr.bf16.mxu0 0
      %2658 = vmatmul.mubr.bf16.gmra.mrb[0].mxu0 %v2538
      %v2659 = vpop.f32.mrb[0].mxu0
      %v2660 = vadd.f32 %v2355, %v2659
      %v2661 = vpop.f32.mrb[0].mxu0
      %v2662 = vpop.f32.mrb[0].mxu0
      %v2663 = vadd.f32 %v2358, %v2662
      %v2664 = vpop.f32.mrb[0].mxu0
      %2665 = vmatprep.mubr.bf16.mxu0 0
      %2666 = vmatmul.mubr.bf16.gmra.mrb[0].mxu0 %v2539
      %v2667 = vpop.f32.mrb[0].mxu0
      %v2668 = vadd.f32 %v2363, %v2667
      %v2669 = vpop.f32.mrb[0].mxu0
      %v2670 = vpop.f32.mrb[0].mxu0
      %v2671 = vadd.f32 %v2366, %v2670
      %v2672 = vpop.f32.mrb[0].mxu0
      %2673 = vmatprep.mubr.bf16.mxu0 0
      %2674 = vmatmul.mubr.bf16.gmra.mrb[0].mxu0 %v2540
      %v2675 = vpop.f32.mrb[0].mxu0
      %v2676 = vadd.f32 %v2371, %v2675
      %v2677 = vpop.f32.mrb[0].mxu0
      %v2678 = vpop.f32.mrb[0].mxu0
      %v2679 = vadd.f32 %v2374, %v2678
      %v2680 = vpop.f32.mrb[0].mxu0
      %2681 = vmatprep.mubr.bf16.mxu0 0
      %2682 = vmatmul.mubr.bf16.gmra.mrb[0].mxu0 %v2541
      %v2683 = vpop.f32.mrb[0].mxu0
      %v2684 = vadd.f32 %v2379, %v2683
      %v2685 = vpop.f32.mrb[0].mxu0
      %v2686 = vpop.f32.mrb[0].mxu0
      %v2687 = vadd.f32 %v2382, %v2686
      %v2688 = vpop.f32.mrb[0].mxu0
      %2689 = vmatprep.mubr.bf16.mxu0 0
      %2690 = vmatmul.mubr.bf16.gmra.mrb[0].mxu0 %v2542
      %v2691 = vpop.f32.mrb[0].mxu0
      %v2692 = vadd.f32 %v2387, %v2691
      %v2693 = vpop.f32.mrb[0].mxu0
      %v2694 = vpop.f32.mrb[0].mxu0
      %v2695 = vadd.f32 %v2390, %v2694
      %v2696 = vpop.f32.mrb[0].mxu0
      %2697 = vmatprep.mubr.bf16.mxu0 0
      %2698 = vmatmul.mubr.bf16.gmra.mrb[0].mxu0 %v2543
      %v2699 = vpop.f32.mrb[0].mxu0
      %v2700 = vadd.f32 %v2395, %v2699
      %v2701 = vpop.f32.mrb[0].mxu0
      %v2702 = vpop.f32.mrb[0].mxu0
      %v2703 = vadd.f32 %v2398, %v2702
      %v2704 = vpop.f32.mrb[0].mxu0
      %2705 = vmatprep.mubr.bf16.mxu0 0
      %2706 = vmatmul.mubr.bf16.gmra.mrb[0].mxu0 %v2544
      %v2707 = vpop.f32.mrb[0].mxu0
      %v2708 = vadd.f32 %v2403, %v2707
      %v2709 = vpop.f32.mrb[0].mxu0
      %v2710 = vpop.f32.mrb[0].mxu0
      %v2711 = vadd.f32 %v2406, %v2710
      %v2712 = vpop.f32.mrb[0].mxu0
      %2713 = vmatprep.mubr.bf16.mxu0 0
      %2714 = vmatmul.mubr.bf16.gmra.mrb[0].mxu0 %v2545
      %v2715 = vpop.f32.mrb[0].mxu0
      %v2716 = vadd.f32 %v2411, %v2715
      %v2717 = vpop.f32.mrb[0].mxu0
      %v2718 = vpop.f32.mrb[0].mxu0
      %v2719 = vadd.f32 %v2414, %v2718
      %v2720 = vpop.f32.mrb[0].mxu0
      %2721 = vmatprep.mubr.bf16.mxu0 0
      %2722 = vmatmul.mubr.bf16.gmra.mrb[0].mxu0 %v2546
      %v2723 = vpop.f32.mrb[0].mxu0
      %v2724 = vadd.f32 %v2419, %v2723
      %v2725 = vpop.f32.mrb[0].mxu0
      %v2726 = vpop.f32.mrb[0].mxu0
      %v2727 = vadd.f32 %v2422, %v2726
      %v2728 = vpop.f32.mrb[0].mxu0
      %2729 = vmatprep.mubr.bf16.mxu0 0
      %2730 = vmatmul.mubr.bf16.gmra.mrb[0].mxu0 %v2547
      %v2731 = vpop.f32.mrb[0].mxu0
      %v2732 = vadd.f32 %v2427, %v2731
      %v2733 = vpop.f32.mrb[0].mxu0
      %v2734 = vpop.f32.mrb[0].mxu0
      %v2735 = vadd.f32 %v2430, %v2734
      %v2736 = vpop.f32.mrb[0].mxu0
      %2737 = vmatprep.mubr.bf16.mxu0 0
      %2738 = vmatmul.mubr.bf16.gmra.mrb[0].mxu0 %v2548
      %v2739 = vpop.f32.mrb[0].mxu0
      %v2740 = vadd.f32 %v2435, %v2739
      %v2741 = vpop.f32.mrb[0].mxu0
      %v2742 = vpop.f32.mrb[0].mxu0
      %v2743 = vadd.f32 %v2438, %v2742
      %v2744 = vpop.f32.mrb[0].mxu0
      %2745 = vmatprep.mubr.bf16.mxu0 0
      %2746 = vmatmul.mubr.bf16.gmra.mrb[0].mxu0 %v2549
      %v2747 = vpop.f32.mrb[0].mxu0
      %v2748 = vadd.f32 %v2443, %v2747
      %v2749 = vpop.f32.mrb[0].mxu0
      %v2750 = vpop.f32.mrb[0].mxu0
      %v2751 = vadd.f32 %v2446, %v2750
      %v2752 = vpop.f32.mrb[0].mxu0
      %2753 = vmatprep.mubr.bf16.mxu0 0
      %2754 = vmatmul.mubr.bf16.gmra.mrb[0].mxu0 %v2550
      %v2755 = vpop.f32.mrb[0].mxu0
      %v2756 = vadd.f32 %v2451, %v2755
      %v2757 = vpop.f32.mrb[0].mxu0
      %v2758 = vpop.f32.mrb[0].mxu0
      %v2759 = vadd.f32 %v2454, %v2758
      %v2760 = vpop.f32.mrb[0].mxu0
      %2761 = vmatprep.mubr.bf16.mxu0 0
      %2762 = vmatmul.mubr.bf16.gmra.mrb[0].mxu0 %v2551
      %v2763 = vpop.f32.mrb[0].mxu0
      %v2764 = vadd.f32 %v2459, %v2763
      %v2765 = vpop.f32.mrb[0].mxu0
      %v2766 = vpop.f32.mrb[0].mxu0
      %v2767 = vadd.f32 %v2462, %v2766
      %v2768 = vpop.f32.mrb[0].mxu0
      %2769 = vmatprep.mubr.bf16.mxu0 0
      %2770 = vmatmul.mubr.bf16.gmra.mrb[0].mxu0 %v2552
      %v2771 = vpop.f32.mrb[0].mxu0
      %v2772 = vadd.f32 %v2467, %v2771
      %v2773 = vpop.f32.mrb[0].mxu0
      %v2774 = vpop.f32.mrb[0].mxu0
      %v2775 = vadd.f32 %v2470, %v2774
      %v2776 = vpop.f32.mrb[0].mxu0
      %2777 = vdwg.mxu0
      %v2794 = vrot.slane %v1734, 5
      %v2795 = vrot.slane %v2794, 4
      %v2796 = vrot.slane %v1735, 5
      %v2797 = vsel %vm1263, %v2795, %v2796
      %v2798 = vrot.slane %v2796, 4
      %v2799 = vrot.slane %v1736, 5
      %v2800 = vsel %vm1263, %v2798, %v2799
      %v2801 = vrot.slane %v1737, 5
      %v2802 = vrot.slane %v2801, 4
      %v2803 = vrot.slane %v1738, 5
      %v2804 = vsel %vm1263, %v2802, %v2803
      %v2805 = vrot.slane %v2803, 4
      %v2806 = vrot.slane %v1739, 5
      %v2807 = vsel %vm1263, %v2805, %v2806
      %v2808 = vrot.slane %v1740, 5
      %v2809 = vrot.slane %v2808, 4
      %v2810 = vrot.slane %v1741, 5
      %v2811 = vsel %vm1263, %v2809, %v2810
      %v2812 = vrot.slane %v2810, 4
      %v2813 = vrot.slane %v1742, 5
      %v2814 = vsel %vm1263, %v2812, %v2813
      %v2815 = vrot.slane %v1743, 5
      %v2816 = vrot.slane %v2815, 4
      %v2817 = vrot.slane %v1744, 5
      %v2818 = vsel %vm1263, %v2816, %v2817
      %v2819 = vrot.slane %v2817, 4
      %v2820 = vrot.slane %v1745, 5
      %v2821 = vsel %vm1263, %v2819, %v2820
      %v2822 = vrot.slane %v1746, 5
      %v2823 = vrot.slane %v2822, 4
      %v2824 = vrot.slane %v1747, 5
      %v2825 = vsel %vm1263, %v2823, %v2824
      %v2826 = vrot.slane %v2824, 4
      %v2827 = vrot.slane %v1748, 5
      %v2828 = vsel %vm1263, %v2826, %v2827
      %v2829 = vrot.slane %v1749, 5
      %v2830 = vrot.slane %v2829, 4
      %v2831 = vrot.slane %v1750, 5
      %v2832 = vsel %vm1263, %v2830, %v2831
      %v2833 = vrot.slane %v2831, 4
      %v2834 = vrot.slane %v1751, 5
      %v2835 = vsel %vm1263, %v2833, %v2834
      %v2836 = vrot.slane %v1752, 5
      %v2837 = vrot.slane %v2836, 4
      %v2838 = vrot.slane %v1753, 5
      %v2839 = vsel %vm1263, %v2837, %v2838
      %v2840 = vrot.slane %v2838, 4
      %v2841 = vrot.slane %v1754, 5
      %v2842 = vsel %vm1263, %v2840, %v2841
      %v2843 = vrot.slane %v1755, 5
      %v2844 = vrot.slane %v2843, 4
      %v2845 = vrot.slane %v1756, 5
      %v2846 = vsel %vm1263, %v2844, %v2845
      %v2847 = vrot.slane %v2845, 4
      %v2848 = vrot.slane %v1757, 5
      %v2849 = vsel %vm1263, %v2847, %v2848
      %v2850 = vrot.slane %v1758, 5
      %v2851 = vrot.slane %v2850, 4
      %v2852 = vrot.slane %v1759, 5
      %v2853 = vsel %vm1263, %v2851, %v2852
      %v2854 = vrot.slane %v2852, 4
      %v2855 = vrot.slane %v1760, 5
      %v2856 = vsel %vm1263, %v2854, %v2855
      %v2857 = vrot.slane %v1761, 5
      %v2858 = vrot.slane %v2857, 4
      %v2859 = vrot.slane %v1762, 5
      %v2860 = vsel %vm1263, %v2858, %v2859
      %v2861 = vrot.slane %v2859, 4
      %v2862 = vrot.slane %v1763, 5
      %v2863 = vsel %vm1263, %v2861, %v2862
      %v2864 = vrot.slane %v1764, 5
      %v2865 = vrot.slane %v2864, 4
      %v2866 = vrot.slane %v1765, 5
      %v2867 = vsel %vm1263, %v2865, %v2866
      %v2868 = vrot.slane %v2866, 4
      %v2869 = vrot.slane %v1766, 5
      %v2870 = vsel %vm1263, %v2868, %v2869
      %v2871 = vrot.slane %v1767, 5
      %v2872 = vrot.slane %v2871, 4
      %v2873 = vrot.slane %v1768, 5
      %v2874 = vsel %vm1263, %v2872, %v2873
      %v2875 = vrot.slane %v2873, 4
      %v2876 = vrot.slane %v1769, 5
      %v2877 = vsel %vm1263, %v2875, %v2876
      %v2878 = vrot.slane %v1770, 5
      %v2879 = vrot.slane %v2878, 4
      %v2880 = vrot.slane %v1771, 5
      %v2881 = vsel %vm1263, %v2879, %v2880
      %v2882 = vrot.slane %v2880, 4
      %v2883 = vrot.slane %v1772, 5
      %v2884 = vsel %vm1263, %v2882, %v2883
      %v2885 = vrot.slane %v1773, 5
      %v2886 = vrot.slane %v2885, 4
      %v2887 = vrot.slane %v1774, 5
      %v2888 = vsel %vm1263, %v2886, %v2887
      %v2889 = vrot.slane %v2887, 4
      %v2890 = vrot.slane %v1775, 5
      %v2891 = vsel %vm1263, %v2889, %v2890
      %v2892 = vrot.slane %v1776, 5
      %v2893 = vrot.slane %v2892, 4
      %v2894 = vrot.slane %v1777, 5
      %v2895 = vsel %vm1263, %v2893, %v2894
      %v2896 = vrot.slane %v2894, 4
      %v2897 = vrot.slane %v1778, 5
      %v2898 = vsel %vm1263, %v2896, %v2897
      %v2899 = vrot.slane %v1779, 5
      %v2900 = vrot.slane %v2899, 4
      %v2901 = vrot.slane %v1780, 5
      %v2902 = vsel %vm1263, %v2900, %v2901
      %v2903 = vrot.slane %v2901, 4
      %v2904 = vrot.slane %v1781, 5
      %v2905 = vsel %vm1263, %v2903, %v2904
      %s2906 = scalar_lea.vmem %s1, 320
      %v2907 = vld [vmem:[%s2906] sm:$0xf]
      %v2908 = vld [vmem:[%s2906 + $0x4] sm:$0xf]
      %v2909 = vld [vmem:[%s2906 + $0x8] sm:$0xf]
      %v2910 = vld [vmem:[%s2906 + $0xc] sm:$0xf]
      %v2911 = vld [vmem:[%s2906 + $0x10] sm:$0xf]
      %v2912 = vld [vmem:[%s2906 + $0x14] sm:$0xf]
      %v2913 = vld [vmem:[%s2906 + $0x18] sm:$0xf]
      %v2914 = vld [vmem:[%s2906 + $0x1c] sm:$0xf]
      %v2915 = vld [vmem:[%s2906 + $0x20] sm:$0xf]
      %v2916 = vld [vmem:[%s2906 + $0x24] sm:$0xf]
      %v2917 = vld [vmem:[%s2906 + $0x28] sm:$0xf]
      %v2918 = vld [vmem:[%s2906 + $0x2c] sm:$0xf]
      %v2919 = vld [vmem:[%s2906 + $0x30] sm:$0xf]
      %v2920 = vld [vmem:[%s2906 + $0x34] sm:$0xf]
      %v2921 = vld [vmem:[%s2906 + $0x38] sm:$0xf]
      %v2922 = vld [vmem:[%s2906 + $0x3c] sm:$0xf]
      %v2923 = vunpack.c.l.b16 %v2797
      %v2924 = vunpack.c.l.b16 %v2800
      %v2925 = vunpack.c.l.b16 %v2804
      %v2926 = vunpack.c.l.b16 %v2807
      %v2927 = vunpack.c.l.b16 %v2811
      %v2928 = vunpack.c.l.b16 %v2814
      %v2929 = vunpack.c.l.b16 %v2818
      %v2930 = vunpack.c.l.b16 %v2821
      %v2931 = vunpack.c.l.b16 %v2825
      %v2932 = vunpack.c.l.b16 %v2828
      %v2933 = vunpack.c.l.b16 %v2832
      %v2934 = vunpack.c.l.b16 %v2835
      %v2935 = vunpack.c.l.b16 %v2839
      %v2936 = vunpack.c.l.b16 %v2842
      %v2937 = vunpack.c.l.b16 %v2846
      %v2938 = vunpack.c.l.b16 %v2849
      %v2939 = vunpack.c.l.b16 %v2853
      %v2940 = vunpack.c.l.b16 %v2856
      %v2941 = vunpack.c.l.b16 %v2860
      %v2942 = vunpack.c.l.b16 %v2863
      %v2943 = vunpack.c.l.b16 %v2867
      %v2944 = vunpack.c.l.b16 %v2870
      %v2945 = vunpack.c.l.b16 %v2874
      %v2946 = vunpack.c.l.b16 %v2877
      %v2947 = vunpack.c.l.b16 %v2881
      %v2948 = vunpack.c.l.b16 %v2884
      %v2949 = vunpack.c.l.b16 %v2888
      %v2950 = vunpack.c.l.b16 %v2891
      %v2951 = vunpack.c.l.b16 %v2895
      %v2952 = vunpack.c.l.b16 %v2898
      %v2953 = vunpack.c.l.b16 %v2902
      %v2954 = vunpack.c.l.b16 %v2905
      %v2955 = vpack.c.b16 %v2924, %v2923
      %v2956 = vpack.c.b16 %v2926, %v2925
      %v2957 = vpack.c.b16 %v2928, %v2927
      %v2958 = vpack.c.b16 %v2930, %v2929
      %v2959 = vpack.c.b16 %v2932, %v2931
      %v2960 = vpack.c.b16 %v2934, %v2933
      %v2961 = vpack.c.b16 %v2936, %v2935
      %v2962 = vpack.c.b16 %v2938, %v2937
      %v2963 = vpack.c.b16 %v2940, %v2939
      %v2964 = vpack.c.b16 %v2942, %v2941
      %v2965 = vpack.c.b16 %v2944, %v2943
      %v2966 = vpack.c.b16 %v2946, %v2945
      %v2967 = vpack.c.b16 %v2948, %v2947
      %v2968 = vpack.c.b16 %v2950, %v2949
      %v2969 = vpack.c.b16 %v2952, %v2951
      %v2970 = vpack.c.b16 %v2954, %v2953
      %v3003 = vunpack.c.l.b16 %v2907
      %v3004 = vunpack.c.l.b16 %v2908
      %v3005 = vunpack.c.l.b16 %v2909
      %v3006 = vunpack.c.l.b16 %v2910
      %v3007 = vunpack.c.l.b16 %v2911
      %v3008 = vunpack.c.l.b16 %v2912
      %v3009 = vunpack.c.l.b16 %v2913
      %v3010 = vunpack.c.l.b16 %v2914
      %v3011 = vunpack.c.l.b16 %v2915
      %v3012 = vunpack.c.l.b16 %v2916
      %v3013 = vunpack.c.l.b16 %v2917
      %v3014 = vunpack.c.l.b16 %v2918
      %v3015 = vunpack.c.l.b16 %v2919
      %v3016 = vunpack.c.l.b16 %v2920
      %v3017 = vunpack.c.l.b16 %v2921
      %v3018 = vunpack.c.l.b16 %v2922
      %v3019 = vpack.c.b16 %v3004, %v3003
      %v3020 = vpack.c.b16 %v3006, %v3005
      %v3021 = vpack.c.b16 %v3008, %v3007
      %v3022 = vpack.c.b16 %v3010, %v3009
      %v3023 = vpack.c.b16 %v3012, %v3011
      %v3024 = vpack.c.b16 %v3014, %v3013
      %v3025 = vpack.c.b16 %v3016, %v3015
      %v3026 = vpack.c.b16 %v3018, %v3017
      %3035 = vmatprep.subr.bf16.mxu0 0
      %3036 = vmatpush1.bf16.msra.mxu0 %v3019
      %3037 = vmatprep.subr.bf16.mxu0 0
      %3038 = vmatpush1.bf16.msra.mxu0 %v3020
      %3039 = vmatprep.subr.bf16.mxu0 0
      %3040 = vmatpush1.bf16.msra.mxu0 %v3021
      %3041 = vmatprep.subr.bf16.mxu0 0
      %3042 = vmatpush1.bf16.msra.mxu0 %v3022
      %3043 = vmatprep.subr.bf16.mxu0 0
      %3044 = vmatpush1.bf16.msra.mxu0 %v3023
      %3045 = vmatprep.subr.bf16.mxu0 0
      %3046 = vmatpush1.bf16.msra.mxu0 %v3024
      %3047 = vmatprep.subr.bf16.mxu0 0
      %3048 = vmatpush1.bf16.msra.mxu0 %v3025
      %3049 = vmatprep.subr.bf16.mxu0 0
      %3050 = vmatpush1.bf16.msra.mxu0 %v3026
      %3051 = vmatprep.subr.bf16.mxu0 0
      %3052 = vmatpush1.bf16.msra.mxu0 0
      %3053 = vmatprep.subr.bf16.mxu0 0
      %3054 = vmatpush1.bf16.msra.mxu0 0
      %3055 = vmatprep.subr.bf16.mxu0 0
      %3056 = vmatpush1.bf16.msra.mxu0 0
      %3057 = vmatprep.subr.bf16.mxu0 0
      %3058 = vmatpush1.bf16.msra.mxu0 0
      %3059 = vmatprep.subr.bf16.mxu0 0
      %3060 = vmatpush1.bf16.msra.mxu0 0
      %3061 = vmatprep.subr.bf16.mxu0 0
      %3062 = vmatpush1.bf16.msra.mxu0 0
      %3063 = vmatprep.subr.bf16.mxu0 0
      %3064 = vmatpush1.bf16.msra.mxu0 0
      %3065 = vmatprep.subr.bf16.mxu0 0
      %3066 = vmatpush1.bf16.msra.mxu0 0
      %3067 = vmatprep.mubr.bf16.mxu0 0
      %3068 = vmatmul.mubr.bf16.gmra.mrb[0].mxu0 %v2955
      %v3069 = vpop.f32.mrb[0].mxu0
      %v3070 = vadd.f32 0.0, %v3069
      %v3071 = vpop.f32.mrb[0].mxu0
      %v3072 = vpop.f32.mrb[0].mxu0
      %v3073 = vadd.f32 0.0, %v3072
      %v3074 = vpop.f32.mrb[0].mxu0
      %3075 = vmatprep.mubr.bf16.mxu0 0
      %3076 = vmatmul.mubr.bf16.gmra.mrb[0].mxu0 %v2956
      %v3077 = vpop.f32.mrb[0].mxu0
      %v3078 = vadd.f32 0.0, %v3077
      %v3079 = vpop.f32.mrb[0].mxu0
      %v3080 = vpop.f32.mrb[0].mxu0
      %v3081 = vadd.f32 0.0, %v3080
      %v3082 = vpop.f32.mrb[0].mxu0
      %3083 = vmatprep.mubr.bf16.mxu0 0
      %3084 = vmatmul.mubr.bf16.gmra.mrb[0].mxu0 %v2957
      %v3085 = vpop.f32.mrb[0].mxu0
      %v3086 = vadd.f32 0.0, %v3085
      %v3087 = vpop.f32.mrb[0].mxu0
      %v3088 = vpop.f32.mrb[0].mxu0
      %v3089 = vadd.f32 0.0, %v3088
      %v3090 = vpop.f32.mrb[0].mxu0
      %3091 = vmatprep.mubr.bf16.mxu0 0
      %3092 = vmatmul.mubr.bf16.gmra.mrb[0].mxu0 %v2958
      %v3093 = vpop.f32.mrb[0].mxu0
      %v3094 = vadd.f32 0.0, %v3093
      %v3095 = vpop.f32.mrb[0].mxu0
      %v3096 = vpop.f32.mrb[0].mxu0
      %v3097 = vadd.f32 0.0, %v3096
      %v3098 = vpop.f32.mrb[0].mxu0
      %3099 = vmatprep.mubr.bf16.mxu0 0
      %3100 = vmatmul.mubr.bf16.gmra.mrb[0].mxu0 %v2959
      %v3101 = vpop.f32.mrb[0].mxu0
      %v3102 = vadd.f32 0.0, %v3101
      %v3103 = vpop.f32.mrb[0].mxu0
      %v3104 = vpop.f32.mrb[0].mxu0
      %v3105 = vadd.f32 0.0, %v3104
      %v3106 = vpop.f32.mrb[0].mxu0
      %3107 = vmatprep.mubr.bf16.mxu0 0
      %3108 = vmatmul.mubr.bf16.gmra.mrb[0].mxu0 %v2960
      %v3109 = vpop.f32.mrb[0].mxu0
      %v3110 = vadd.f32 0.0, %v3109
      %v3111 = vpop.f32.mrb[0].mxu0
      %v3112 = vpop.f32.mrb[0].mxu0
      %v3113 = vadd.f32 0.0, %v3112
      %v3114 = vpop.f32.mrb[0].mxu0
      %3115 = vmatprep.mubr.bf16.mxu0 0
      %3116 = vmatmul.mubr.bf16.gmra.mrb[0].mxu0 %v2961
      %v3117 = vpop.f32.mrb[0].mxu0
      %v3118 = vadd.f32 0.0, %v3117
      %v3119 = vpop.f32.mrb[0].mxu0
      %v3120 = vpop.f32.mrb[0].mxu0
      %v3121 = vadd.f32 0.0, %v3120
      %v3122 = vpop.f32.mrb[0].mxu0
      %3123 = vmatprep.mubr.bf16.mxu0 0
      %3124 = vmatmul.mubr.bf16.gmra.mrb[0].mxu0 %v2962
      %v3125 = vpop.f32.mrb[0].mxu0
      %v3126 = vadd.f32 0.0, %v3125
      %v3127 = vpop.f32.mrb[0].mxu0
      %v3128 = vpop.f32.mrb[0].mxu0
      %v3129 = vadd.f32 0.0, %v3128
      %v3130 = vpop.f32.mrb[0].mxu0
      %3131 = vmatprep.mubr.bf16.mxu0 0
      %3132 = vmatmul.mubr.bf16.gmra.mrb[0].mxu0 %v2963
      %v3133 = vpop.f32.mrb[0].mxu0
      %v3134 = vadd.f32 0.0, %v3133
      %v3135 = vpop.f32.mrb[0].mxu0
      %v3136 = vpop.f32.mrb[0].mxu0
      %v3137 = vadd.f32 0.0, %v3136
      %v3138 = vpop.f32.mrb[0].mxu0
      %3139 = vmatprep.mubr.bf16.mxu0 0
      %3140 = vmatmul.mubr.bf16.gmra.mrb[0].mxu0 %v2964
      %v3141 = vpop.f32.mrb[0].mxu0
      %v3142 = vadd.f32 0.0, %v3141
      %v3143 = vpop.f32.mrb[0].mxu0
      %v3144 = vpop.f32.mrb[0].mxu0
      %v3145 = vadd.f32 0.0, %v3144
      %v3146 = vpop.f32.mrb[0].mxu0
      %3147 = vmatprep.mubr.bf16.mxu0 0
      %3148 = vmatmul.mubr.bf16.gmra.mrb[0].mxu0 %v2965
      %v3149 = vpop.f32.mrb[0].mxu0
      %v3150 = vadd.f32 0.0, %v3149
      %v3151 = vpop.f32.mrb[0].mxu0
      %v3152 = vpop.f32.mrb[0].mxu0
      %v3153 = vadd.f32 0.0, %v3152
      %v3154 = vpop.f32.mrb[0].mxu0
      %3155 = vmatprep.mubr.bf16.mxu0 0
      %3156 = vmatmul.mubr.bf16.gmra.mrb[0].mxu0 %v2966
      %v3157 = vpop.f32.mrb[0].mxu0
      %v3158 = vadd.f32 0.0, %v3157
      %v3159 = vpop.f32.mrb[0].mxu0
      %v3160 = vpop.f32.mrb[0].mxu0
      %v3161 = vadd.f32 0.0, %v3160
      %v3162 = vpop.f32.mrb[0].mxu0
      %3163 = vmatprep.mubr.bf16.mxu0 0
      %3164 = vmatmul.mubr.bf16.gmra.mrb[0].mxu0 %v2967
      %v3165 = vpop.f32.mrb[0].mxu0
      %v3166 = vadd.f32 0.0, %v3165
      %v3167 = vpop.f32.mrb[0].mxu0
      %v3168 = vpop.f32.mrb[0].mxu0
      %v3169 = vadd.f32 0.0, %v3168
      %v3170 = vpop.f32.mrb[0].mxu0
      %3171 = vmatprep.mubr.bf16.mxu0 0
      %3172 = vmatmul.mubr.bf16.gmra.mrb[0].mxu0 %v2968
      %v3173 = vpop.f32.mrb[0].mxu0
      %v3174 = vadd.f32 0.0, %v3173
      %v3175 = vpop.f32.mrb[0].mxu0
      %v3176 = vpop.f32.mrb[0].mxu0
      %v3177 = vadd.f32 0.0, %v3176
      %v3178 = vpop.f32.mrb[0].mxu0
      %3179 = vmatprep.mubr.bf16.mxu0 0
      %3180 = vmatmul.mubr.bf16.gmra.mrb[0].mxu0 %v2969
      %v3181 = vpop.f32.mrb[0].mxu0
      %v3182 = vadd.f32 0.0, %v3181
      %v3183 = vpop.f32.mrb[0].mxu0
      %v3184 = vpop.f32.mrb[0].mxu0
      %v3185 = vadd.f32 0.0, %v3184
      %v3186 = vpop.f32.mrb[0].mxu0
      %3187 = vmatprep.mubr.bf16.mxu0 0
      %3188 = vmatmul.mubr.bf16.gmra.mrb[0].mxu0 %v2970
      %v3189 = vpop.f32.mrb[0].mxu0
      %v3190 = vadd.f32 0.0, %v3189
      %v3191 = vpop.f32.mrb[0].mxu0
      %v3192 = vpop.f32.mrb[0].mxu0
      %v3193 = vadd.f32 0.0, %v3192
      %v3194 = vpop.f32.mrb[0].mxu0
      %3195 = vdwg.mxu0
      %v3196 = vadd.f32 %v2652, %v3070
      %v3197 = vadd.f32 %v2655, %v3073
      %v3198 = vadd.f32 %v2660, %v3078
      %v3199 = vadd.f32 %v2663, %v3081
      %v3200 = vadd.f32 %v2668, %v3086
      %v3201 = vadd.f32 %v2671, %v3089
      %v3202 = vadd.f32 %v2676, %v3094
      %v3203 = vadd.f32 %v2679, %v3097
      %v3204 = vadd.f32 %v2684, %v3102
      %v3205 = vadd.f32 %v2687, %v3105
      %v3206 = vadd.f32 %v2692, %v3110
      %v3207 = vadd.f32 %v2695, %v3113
      %v3208 = vadd.f32 %v2700, %v3118
      %v3209 = vadd.f32 %v2703, %v3121
      %v3210 = vadd.f32 %v2708, %v3126
      %v3211 = vadd.f32 %v2711, %v3129
      %v3212 = vadd.f32 %v2716, %v3134
      %v3213 = vadd.f32 %v2719, %v3137
      %v3214 = vadd.f32 %v2724, %v3142
      %v3215 = vadd.f32 %v2727, %v3145
      %v3216 = vadd.f32 %v2732, %v3150
      %v3217 = vadd.f32 %v2735, %v3153
      %v3218 = vadd.f32 %v2740, %v3158
      %v3219 = vadd.f32 %v2743, %v3161
      %v3220 = vadd.f32 %v2748, %v3166
      %v3221 = vadd.f32 %v2751, %v3169
      %v3222 = vadd.f32 %v2756, %v3174
      %v3223 = vadd.f32 %v2759, %v3177
      %v3224 = vadd.f32 %v2764, %v3182
      %v3225 = vadd.f32 %v2767, %v3185
      %v3226 = vadd.f32 %v2772, %v3190
      %v3227 = vadd.f32 %v2775, %v3193
      %v3228 = vld [vmem:[#allocation2] sm:$0xff]
      %v3229 = vld [vmem:[#allocation2 + $0x8] sm:$0xff]
      %v3230 = vld [vmem:[#allocation2 + $0x10] sm:$0xff]
      %v3231 = vld [vmem:[#allocation2 + $0x18] sm:$0xff]
      %v3232 = vld [vmem:[#allocation2 + $0x20] sm:$0xff]
      %v3233 = vld [vmem:[#allocation2 + $0x28] sm:$0xff]
      %v3234 = vld [vmem:[#allocation2 + $0x30] sm:$0xff]
      %v3235 = vld [vmem:[#allocation2 + $0x38] sm:$0xff]
      %v3236 = vld [vmem:[#allocation2 + $0x40] sm:$0xff]
      %v3237 = vld [vmem:[#allocation2 + $0x48] sm:$0xff]
      %v3238 = vld [vmem:[#allocation2 + $0x50] sm:$0xff]
      %v3239 = vld [vmem:[#allocation2 + $0x58] sm:$0xff]
      %v3240 = vld [vmem:[#allocation2 + $0x60] sm:$0xff]
      %v3241 = vld [vmem:[#allocation2 + $0x68] sm:$0xff]
      %v3242 = vld [vmem:[#allocation2 + $0x70] sm:$0xff]
      %v3243 = vld [vmem:[#allocation2 + $0x78] sm:$0xff]
      %v3244 = vld [vmem:[#allocation2 + $0x80] sm:$0xff]
      %v3245 = vld [vmem:[#allocation2 + $0x88] sm:$0xff]
      %v3246 = vld [vmem:[#allocation2 + $0x90] sm:$0xff]
      %v3247 = vld [vmem:[#allocation2 + $0x98] sm:$0xff]
      %v3248 = vld [vmem:[#allocation2 + $0xa0] sm:$0xff]
      %v3249 = vld [vmem:[#allocation2 + $0xa8] sm:$0xff]
      %v3250 = vld [vmem:[#allocation2 + $0xb0] sm:$0xff]
      %v3251 = vld [vmem:[#allocation2 + $0xb8] sm:$0xff]
      %v3252 = vld [vmem:[#allocation2 + $0xc0] sm:$0xff]
      %v3253 = vld [vmem:[#allocation2 + $0xc8] sm:$0xff]
      %v3254 = vld [vmem:[#allocation2 + $0xd0] sm:$0xff]
      %v3255 = vld [vmem:[#allocation2 + $0xd8] sm:$0xff]
      %v3256 = vld [vmem:[#allocation2 + $0xe0] sm:$0xff]
      %v3257 = vld [vmem:[#allocation2 + $0xe8] sm:$0xff]
      %v3258 = vld [vmem:[#allocation2 + $0xf0] sm:$0xff]
      %v3259 = vld [vmem:[#allocation2 + $0xf8] sm:$0xff]
      %v3260 = vadd.f32 %v3228, %v3196
      %v3261 = vadd.f32 %v3229, %v3197
      %v3262 = vadd.f32 %v3230, %v3198
      %v3263 = vadd.f32 %v3231, %v3199
      %v3264 = vadd.f32 %v3232, %v3200
      %v3265 = vadd.f32 %v3233, %v3201
      %v3266 = vadd.f32 %v3234, %v3202
      %v3267 = vadd.f32 %v3235, %v3203
      %v3268 = vadd.f32 %v3236, %v3204
      %v3269 = vadd.f32 %v3237, %v3205
      %v3270 = vadd.f32 %v3238, %v3206
      %v3271 = vadd.f32 %v3239, %v3207
      %v3272 = vadd.f32 %v3240, %v3208
      %v3273 = vadd.f32 %v3241, %v3209
      %v3274 = vadd.f32 %v3242, %v3210
      %v3275 = vadd.f32 %v3243, %v3211
      %v3276 = vadd.f32 %v3244, %v3212
      %v3277 = vadd.f32 %v3245, %v3213
      %v3278 = vadd.f32 %v3246, %v3214
      %v3279 = vadd.f32 %v3247, %v3215
      %v3280 = vadd.f32 %v3248, %v3216
      %v3281 = vadd.f32 %v3249, %v3217
      %v3282 = vadd.f32 %v3250, %v3218
      %v3283 = vadd.f32 %v3251, %v3219
      %v3284 = vadd.f32 %v3252, %v3220
      %v3285 = vadd.f32 %v3253, %v3221
      %v3286 = vadd.f32 %v3254, %v3222
      %v3287 = vadd.f32 %v3255, %v3223
      %v3288 = vadd.f32 %v3256, %v3224
      %v3289 = vadd.f32 %v3257, %v3225
      %v3290 = vadd.f32 %v3258, %v3226
      %v3291 = vadd.f32 %v3259, %v3227
      %3292 = vst [vmem:[#allocation2] sm:$0xff] %v3260
      %3293 = vst [vmem:[#allocation2 + $0x8] sm:$0xff] %v3261
      %3294 = vst [vmem:[#allocation2 + $0x10] sm:$0xff] %v3262
      %3295 = vst [vmem:[#allocation2 + $0x18] sm:$0xff] %v3263
      %3296 = vst [vmem:[#allocation2 + $0x20] sm:$0xff] %v3264
      %3297 = vst [vmem:[#allocation2 + $0x28] sm:$0xff] %v3265
      %3298 = vst [vmem:[#allocation2 + $0x30] sm:$0xff] %v3266
      %3299 = vst [vmem:[#allocation2 + $0x38] sm:$0xff] %v3267
      %3300 = vst [vmem:[#allocation2 + $0x40] sm:$0xff] %v3268
      %3301 = vst [vmem:[#allocation2 + $0x48] sm:$0xff] %v3269
      %3302 = vst [vmem:[#allocation2 + $0x50] sm:$0xff] %v3270
      %3303 = vst [vmem:[#allocation2 + $0x58] sm:$0xff] %v3271
      %3304 = vst [vmem:[#allocation2 + $0x60] sm:$0xff] %v3272
      %3305 = vst [vmem:[#allocation2 + $0x68] sm:$0xff] %v3273
      %3306 = vst [vmem:[#allocation2 + $0x70] sm:$0xff] %v3274
      %3307 = vst [vmem:[#allocation2 + $0x78] sm:$0xff] %v3275
      %3308 = vst [vmem:[#allocation2 + $0x80] sm:$0xff] %v3276
      %3309 = vst [vmem:[#allocation2 + $0x88] sm:$0xff] %v3277
      %3310 = vst [vmem:[#allocation2 + $0x90] sm:$0xff] %v3278
      %3311 = vst [vmem:[#allocation2 + $0x98] sm:$0xff] %v3279
      %3312 = vst [vmem:[#allocation2 + $0xa0] sm:$0xff] %v3280
      %3313 = vst [vmem:[#allocation2 + $0xa8] sm:$0xff] %v3281
      %3314 = vst [vmem:[#allocation2 + $0xb0] sm:$0xff] %v3282
      %3315 = vst [vmem:[#allocation2 + $0xb8] sm:$0xff] %v3283
      %3316 = vst [vmem:[#allocation2 + $0xc0] sm:$0xff] %v3284
      %3317 = vst [vmem:[#allocation2 + $0xc8] sm:$0xff] %v3285
      %3318 = vst [vmem:[#allocation2 + $0xd0] sm:$0xff] %v3286
      %3319 = vst [vmem:[#allocation2 + $0xd8] sm:$0xff] %v3287
      %3320 = vst [vmem:[#allocation2 + $0xe0] sm:$0xff] %v3288
      %3321 = vst [vmem:[#allocation2 + $0xe8] sm:$0xff] %v3289
      %3322 = vst [vmem:[#allocation2 + $0xf0] sm:$0xff] %v3290
      %3323 = vst [vmem:[#allocation2 + $0xf8] sm:$0xff] %v3291
      %s3324 = sadd.s32 %s195, 2
      %s3325 = smul.u32 %s3324, 3
      %s3326 = smul.addr %s3325, 4
      %s3327 = scalar_lea.vmem %s178, %s3326
      %v3328 = vld [vmem:[%s3327] sm:$0xf]
      %v3329 = vld [vmem:[%s3327 + $0x4] sm:$0xf]
      %v3330 = vld [vmem:[%s3327 + $0x8] sm:$0x1]
      %v3331 = vld [vmem:[%s3327 + $0xc] sm:$0xf]
      %v3332 = vld [vmem:[%s3327 + $0x10] sm:$0xf]
      %v3333 = vld [vmem:[%s3327 + $0x14] sm:$0x1]
      %v3334 = vld [vmem:[%s3327 + $0x18] sm:$0xf]
      %v3335 = vld [vmem:[%s3327 + $0x1c] sm:$0xf]
      %v3336 = vld [vmem:[%s3327 + $0x20] sm:$0x1]
      %v3337 = vld [vmem:[%s3327 + $0x24] sm:$0xf]
      %v3338 = vld [vmem:[%s3327 + $0x28] sm:$0xf]
      %v3339 = vld [vmem:[%s3327 + $0x2c] sm:$0x1]
      %v3340 = vld [vmem:[%s3327 + $0x30] sm:$0xf]
      %v3341 = vld [vmem:[%s3327 + $0x34] sm:$0xf]
      %v3342 = vld [vmem:[%s3327 + $0x38] sm:$0x1]
      %v3343 = vld [vmem:[%s3327 + $0x3c] sm:$0xf]
      %v3344 = vld [vmem:[%s3327 + $0x40] sm:$0xf]
      %v3345 = vld [vmem:[%s3327 + $0x44] sm:$0x1]
      %v3346 = vld [vmem:[%s3327 + $0x48] sm:$0xf]
      %v3347 = vld [vmem:[%s3327 + $0x4c] sm:$0xf]
      %v3348 = vld [vmem:[%s3327 + $0x50] sm:$0x1]
      %v3349 = vld [vmem:[%s3327 + $0x54] sm:$0xf]
      %v3350 = vld [vmem:[%s3327 + $0x58] sm:$0xf]
      %v3351 = vld [vmem:[%s3327 + $0x5c] sm:$0x1]
      %v3352 = vld [vmem:[%s3327 + $0x60] sm:$0xf]
      %v3353 = vld [vmem:[%s3327 + $0x64] sm:$0xf]
      %v3354 = vld [vmem:[%s3327 + $0x68] sm:$0x1]
      %v3355 = vld [vmem:[%s3327 + $0x6c] sm:$0xf]
      %v3356 = vld [vmem:[%s3327 + $0x70] sm:$0xf]
      %v3357 = vld [vmem:[%s3327 + $0x74] sm:$0x1]
      %v3358 = vld [vmem:[%s3327 + $0x78] sm:$0xf]
      %v3359 = vld [vmem:[%s3327 + $0x7c] sm:$0xf]
      %v3360 = vld [vmem:[%s3327 + $0x80] sm:$0x1]
      %v3361 = vld [vmem:[%s3327 + $0x84] sm:$0xf]
      %v3362 = vld [vmem:[%s3327 + $0x88] sm:$0xf]
      %v3363 = vld [vmem:[%s3327 + $0x8c] sm:$0x1]
      %v3364 = vld [vmem:[%s3327 + $0x90] sm:$0xf]
      %v3365 = vld [vmem:[%s3327 + $0x94] sm:$0xf]
      %v3366 = vld [vmem:[%s3327 + $0x98] sm:$0x1]
      %v3367 = vld [vmem:[%s3327 + $0x9c] sm:$0xf]
      %v3368 = vld [vmem:[%s3327 + $0xa0] sm:$0xf]
      %v3369 = vld [vmem:[%s3327 + $0xa4] sm:$0x1]
      %v3370 = vld [vmem:[%s3327 + $0xa8] sm:$0xf]
      %v3371 = vld [vmem:[%s3327 + $0xac] sm:$0xf]
      %v3372 = vld [vmem:[%s3327 + $0xb0] sm:$0x1]
      %v3373 = vld [vmem:[%s3327 + $0xb4] sm:$0xf]
      %v3374 = vld [vmem:[%s3327 + $0xb8] sm:$0xf]
      %v3375 = vld [vmem:[%s3327 + $0xbc] sm:$0x1]
      %s3376 = scalar_lea.vmem %s1, 384
      %v3377 = vld [vmem:[%s3376] sm:$0xf]
      %v3378 = vld [vmem:[%s3376 + $0x4] sm:$0xf]
      %v3379 = vld [vmem:[%s3376 + $0x8] sm:$0xf]
      %v3380 = vld [vmem:[%s3376 + $0xc] sm:$0xf]
      %v3381 = vld [vmem:[%s3376 + $0x10] sm:$0xf]
      %v3382 = vld [vmem:[%s3376 + $0x14] sm:$0xf]
      %v3383 = vld [vmem:[%s3376 + $0x18] sm:$0xf]
      %v3384 = vld [vmem:[%s3376 + $0x1c] sm:$0xf]
      %v3385 = vld [vmem:[%s3376 + $0x20] sm:$0xf]
      %v3386 = vld [vmem:[%s3376 + $0x24] sm:$0xf]
      %v3387 = vld [vmem:[%s3376 + $0x28] sm:$0xf]
      %v3388 = vld [vmem:[%s3376 + $0x2c] sm:$0xf]
      %v3389 = vld [vmem:[%s3376 + $0x30] sm:$0xf]
      %v3390 = vld [vmem:[%s3376 + $0x34] sm:$0xf]
      %v3391 = vld [vmem:[%s3376 + $0x38] sm:$0xf]
      %v3392 = vld [vmem:[%s3376 + $0x3c] sm:$0xf]
      %v3394 = vshrl.u32 %v3328, 16
      %v3396 = vrot.slane %v3394, 4
      %v3397 = vshll.u32 %v3328, 16
      %v3399 = vrot.slane %v3397, 5
      %v3400 = vor.u32 %v3396, %v3399
      %v3401 = vrot.slane %v3400, 4
      %v3403 = vshll.u32 %v3329, 16
      %v3405 = vrot.slane %v3403, 5
      %v3406 = vsel %vm265, %v3401, %v3405
      %v3407 = vshrl.u32 %v3329, 16
      %v3409 = vrot.slane %v3407, 4
      %v3410 = vor.u32 %v3409, %v3405
      %v3411 = vrot.slane %v3410, 4
      %v3413 = vshll.u32 %v3330, 16
      %v3415 = vrot.slane %v3413, 5
      %v3416 = vsel %vm265, %v3411, %v3415
      %v3418 = vshrl.u32 %v3331, 16
      %v3420 = vrot.slane %v3418, 4
      %v3421 = vshll.u32 %v3331, 16
      %v3423 = vrot.slane %v3421, 5
      %v3424 = vor.u32 %v3420, %v3423
      %v3425 = vrot.slane %v3424, 4
      %v3427 = vshll.u32 %v3332, 16
      %v3429 = vrot.slane %v3427, 5
      %v3430 = vsel %vm265, %v3425, %v3429
      %v3431 = vshrl.u32 %v3332, 16
      %v3433 = vrot.slane %v3431, 4
      %v3434 = vor.u32 %v3433, %v3429
      %v3435 = vrot.slane %v3434, 4
      %v3437 = vshll.u32 %v3333, 16
      %v3439 = vrot.slane %v3437, 5
      %v3440 = vsel %vm265, %v3435, %v3439
      %v3442 = vshrl.u32 %v3334, 16
      %v3444 = vrot.slane %v3442, 4
      %v3445 = vshll.u32 %v3334, 16
      %v3447 = vrot.slane %v3445, 5
      %v3448 = vor.u32 %v3444, %v3447
      %v3449 = vrot.slane %v3448, 4
      %v3451 = vshll.u32 %v3335, 16
      %v3453 = vrot.slane %v3451, 5
      %v3454 = vsel %vm265, %v3449, %v3453
      %v3455 = vshrl.u32 %v3335, 16
      %v3457 = vrot.slane %v3455, 4
      %v3458 = vor.u32 %v3457, %v3453
      %v3459 = vrot.slane %v3458, 4
      %v3461 = vshll.u32 %v3336, 16
      %v3463 = vrot.slane %v3461, 5
      %v3464 = vsel %vm265, %v3459, %v3463
      %v3466 = vshrl.u32 %v3337, 16
      %v3468 = vrot.slane %v3466, 4
      %v3469 = vshll.u32 %v3337, 16
      %v3471 = vrot.slane %v3469, 5
      %v3472 = vor.u32 %v3468, %v3471
      %v3473 = vrot.slane %v3472, 4
      %v3475 = vshll.u32 %v3338, 16
      %v3477 = vrot.slane %v3475, 5
      %v3478 = vsel %vm265, %v3473, %v3477
      %v3479 = vshrl.u32 %v3338, 16
      %v3481 = vrot.slane %v3479, 4
      %v3482 = vor.u32 %v3481, %v3477
      %v3483 = vrot.slane %v3482, 4
      %v3485 = vshll.u32 %v3339, 16
      %v3487 = vrot.slane %v3485, 5
      %v3488 = vsel %vm265, %v3483, %v3487
      %v3490 = vshrl.u32 %v3340, 16
      %v3492 = vrot.slane %v3490, 4
      %v3493 = vshll.u32 %v3340, 16
      %v3495 = vrot.slane %v3493, 5
      %v3496 = vor.u32 %v3492, %v3495
      %v3497 = vrot.slane %v3496, 4
      %v3499 = vshll.u32 %v3341, 16
      %v3501 = vrot.slane %v3499, 5
      %v3502 = vsel %vm265, %v3497, %v3501
      %v3503 = vshrl.u32 %v3341, 16
      %v3505 = vrot.slane %v3503, 4
      %v3506 = vor.u32 %v3505, %v3501
      %v3507 = vrot.slane %v3506, 4
      %v3509 = vshll.u32 %v3342, 16
      %v3511 = vrot.slane %v3509, 5
      %v3512 = vsel %vm265, %v3507, %v3511
      %v3514 = vshrl.u32 %v3343, 16
      %v3516 = vrot.slane %v3514, 4
      %v3517 = vshll.u32 %v3343, 16
      %v3519 = vrot.slane %v3517, 5
      %v3520 = vor.u32 %v3516, %v3519
      %v3521 = vrot.slane %v3520, 4
      %v3523 = vshll.u32 %v3344, 16
      %v3525 = vrot.slane %v3523, 5
      %v3526 = vsel %vm265, %v3521, %v3525
      %v3527 = vshrl.u32 %v3344, 16
      %v3529 = vrot.slane %v3527, 4
      %v3530 = vor.u32 %v3529, %v3525
      %v3531 = vrot.slane %v3530, 4
      %v3533 = vshll.u32 %v3345, 16
      %v3535 = vrot.slane %v3533, 5
      %v3536 = vsel %vm265, %v3531, %v3535
      %v3538 = vshrl.u32 %v3346, 16
      %v3540 = vrot.slane %v3538, 4
      %v3541 = vshll.u32 %v3346, 16
      %v3543 = vrot.slane %v3541, 5
      %v3544 = vor.u32 %v3540, %v3543
      %v3545 = vrot.slane %v3544, 4
      %v3547 = vshll.u32 %v3347, 16
      %v3549 = vrot.slane %v3547, 5
      %v3550 = vsel %vm265, %v3545, %v3549
      %v3551 = vshrl.u32 %v3347, 16
      %v3553 = vrot.slane %v3551, 4
      %v3554 = vor.u32 %v3553, %v3549
      %v3555 = vrot.slane %v3554, 4
      %v3557 = vshll.u32 %v3348, 16
      %v3559 = vrot.slane %v3557, 5
      %v3560 = vsel %vm265, %v3555, %v3559
      %v3562 = vshrl.u32 %v3349, 16
      %v3564 = vrot.slane %v3562, 4
      %v3565 = vshll.u32 %v3349, 16
      %v3567 = vrot.slane %v3565, 5
      %v3568 = vor.u32 %v3564, %v3567
      %v3569 = vrot.slane %v3568, 4
      %v3571 = vshll.u32 %v3350, 16
      %v3573 = vrot.slane %v3571, 5
      %v3574 = vsel %vm265, %v3569, %v3573
      %v3575 = vshrl.u32 %v3350, 16
      %v3577 = vrot.slane %v3575, 4
      %v3578 = vor.u32 %v3577, %v3573
      %v3579 = vrot.slane %v3578, 4
      %v3581 = vshll.u32 %v3351, 16
      %v3583 = vrot.slane %v3581, 5
      %v3584 = vsel %vm265, %v3579, %v3583
      %v3586 = vshrl.u32 %v3352, 16
      %v3588 = vrot.slane %v3586, 4
      %v3589 = vshll.u32 %v3352, 16
      %v3591 = vrot.slane %v3589, 5
      %v3592 = vor.u32 %v3588, %v3591
      %v3593 = vrot.slane %v3592, 4
      %v3595 = vshll.u32 %v3353, 16
      %v3597 = vrot.slane %v3595, 5
      %v3598 = vsel %vm265, %v3593, %v3597
      %v3599 = vshrl.u32 %v3353, 16
      %v3601 = vrot.slane %v3599, 4
      %v3602 = vor.u32 %v3601, %v3597
      %v3603 = vrot.slane %v3602, 4
      %v3605 = vshll.u32 %v3354, 16
      %v3607 = vrot.slane %v3605, 5
      %v3608 = vsel %vm265, %v3603, %v3607
      %v3610 = vshrl.u32 %v3355, 16
      %v3612 = vrot.slane %v3610, 4
      %v3613 = vshll.u32 %v3355, 16
      %v3615 = vrot.slane %v3613, 5
      %v3616 = vor.u32 %v3612, %v3615
      %v3617 = vrot.slane %v3616, 4
      %v3619 = vshll.u32 %v3356, 16
      %v3621 = vrot.slane %v3619, 5
      %v3622 = vsel %vm265, %v3617, %v3621
      %v3623 = vshrl.u32 %v3356, 16
      %v3625 = vrot.slane %v3623, 4
      %v3626 = vor.u32 %v3625, %v3621
      %v3627 = vrot.slane %v3626, 4
      %v3629 = vshll.u32 %v3357, 16
      %v3631 = vrot.slane %v3629, 5
      %v3632 = vsel %vm265, %v3627, %v3631
      %v3634 = vshrl.u32 %v3358, 16
      %v3636 = vrot.slane %v3634, 4
      %v3637 = vshll.u32 %v3358, 16
      %v3639 = vrot.slane %v3637, 5
      %v3640 = vor.u32 %v3636, %v3639
      %v3641 = vrot.slane %v3640, 4
      %v3643 = vshll.u32 %v3359, 16
      %v3645 = vrot.slane %v3643, 5
      %v3646 = vsel %vm265, %v3641, %v3645
      %v3647 = vshrl.u32 %v3359, 16
      %v3649 = vrot.slane %v3647, 4
      %v3650 = vor.u32 %v3649, %v3645
      %v3651 = vrot.slane %v3650, 4
      %v3653 = vshll.u32 %v3360, 16
      %v3655 = vrot.slane %v3653, 5
      %v3656 = vsel %vm265, %v3651, %v3655
      %v3658 = vshrl.u32 %v3361, 16
      %v3660 = vrot.slane %v3658, 4
      %v3661 = vshll.u32 %v3361, 16
      %v3663 = vrot.slane %v3661, 5
      %v3664 = vor.u32 %v3660, %v3663
      %v3665 = vrot.slane %v3664, 4
      %v3667 = vshll.u32 %v3362, 16
      %v3669 = vrot.slane %v3667, 5
      %v3670 = vsel %vm265, %v3665, %v3669
      %v3671 = vshrl.u32 %v3362, 16
      %v3673 = vrot.slane %v3671, 4
      %v3674 = vor.u32 %v3673, %v3669
      %v3675 = vrot.slane %v3674, 4
      %v3677 = vshll.u32 %v3363, 16
      %v3679 = vrot.slane %v3677, 5
      %v3680 = vsel %vm265, %v3675, %v3679
      %v3682 = vshrl.u32 %v3364, 16
      %v3684 = vrot.slane %v3682, 4
      %v3685 = vshll.u32 %v3364, 16
      %v3687 = vrot.slane %v3685, 5
      %v3688 = vor.u32 %v3684, %v3687
      %v3689 = vrot.slane %v3688, 4
      %v3691 = vshll.u32 %v3365, 16
      %v3693 = vrot.slane %v3691, 5
      %v3694 = vsel %vm265, %v3689, %v3693
      %v3695 = vshrl.u32 %v3365, 16
      %v3697 = vrot.slane %v3695, 4
      %v3698 = vor.u32 %v3697, %v3693
      %v3699 = vrot.slane %v3698, 4
      %v3701 = vshll.u32 %v3366, 16
      %v3703 = vrot.slane %v3701, 5
      %v3704 = vsel %vm265, %v3699, %v3703
      %v3706 = vshrl.u32 %v3367, 16
      %v3708 = vrot.slane %v3706, 4
      %v3709 = vshll.u32 %v3367, 16
      %v3711 = vrot.slane %v3709, 5
      %v3712 = vor.u32 %v3708, %v3711
      %v3713 = vrot.slane %v3712, 4
      %v3715 = vshll.u32 %v3368, 16
      %v3717 = vrot.slane %v3715, 5
      %v3718 = vsel %vm265, %v3713, %v3717
      %v3719 = vshrl.u32 %v3368, 16
      %v3721 = vrot.slane %v3719, 4
      %v3722 = vor.u32 %v3721, %v3717
      %v3723 = vrot.slane %v3722, 4
      %v3725 = vshll.u32 %v3369, 16
      %v3727 = vrot.slane %v3725, 5
      %v3728 = vsel %vm265, %v3723, %v3727
      %v3730 = vshrl.u32 %v3370, 16
      %v3732 = vrot.slane %v3730, 4
      %v3733 = vshll.u32 %v3370, 16
      %v3735 = vrot.slane %v3733, 5
      %v3736 = vor.u32 %v3732, %v3735
      %v3737 = vrot.slane %v3736, 4
      %v3739 = vshll.u32 %v3371, 16
      %v3741 = vrot.slane %v3739, 5
      %v3742 = vsel %vm265, %v3737, %v3741
      %v3743 = vshrl.u32 %v3371, 16
      %v3745 = vrot.slane %v3743, 4
      %v3746 = vor.u32 %v3745, %v3741
      %v3747 = vrot.slane %v3746, 4
      %v3749 = vshll.u32 %v3372, 16
      %v3751 = vrot.slane %v3749, 5
      %v3752 = vsel %vm265, %v3747, %v3751
      %v3754 = vshrl.u32 %v3373, 16
      %v3756 = vrot.slane %v3754, 4
      %v3757 = vshll.u32 %v3373, 16
      %v3759 = vrot.slane %v3757, 5
      %v3760 = vor.u32 %v3756, %v3759
      %v3761 = vrot.slane %v3760, 4
      %v3763 = vshll.u32 %v3374, 16
      %v3765 = vrot.slane %v3763, 5
      %v3766 = vsel %vm265, %v3761, %v3765
      %v3767 = vshrl.u32 %v3374, 16
      %v3769 = vrot.slane %v3767, 4
      %v3770 = vor.u32 %v3769, %v3765
      %v3771 = vrot.slane %v3770, 4
      %v3773 = vshll.u32 %v3375, 16
      %v3775 = vrot.slane %v3773, 5
      %v3776 = vsel %vm265, %v3771, %v3775
      %s3777 = scalar_lea.vmem %s1, 448
      %v3778 = vld [vmem:[%s3777] sm:$0xf]
      %v3779 = vld [vmem:[%s3777 + $0x4] sm:$0xf]
      %v3780 = vld [vmem:[%s3777 + $0x8] sm:$0xf]
      %v3781 = vld [vmem:[%s3777 + $0xc] sm:$0xf]
      %v3782 = vld [vmem:[%s3777 + $0x10] sm:$0xf]
      %v3783 = vld [vmem:[%s3777 + $0x14] sm:$0xf]
      %v3784 = vld [vmem:[%s3777 + $0x18] sm:$0xf]
      %v3785 = vld [vmem:[%s3777 + $0x1c] sm:$0xf]
      %v3786 = vld [vmem:[%s3777 + $0x20] sm:$0xf]
      %v3787 = vld [vmem:[%s3777 + $0x24] sm:$0xf]
      %v3788 = vld [vmem:[%s3777 + $0x28] sm:$0xf]
      %v3789 = vld [vmem:[%s3777 + $0x2c] sm:$0xf]
      %v3790 = vld [vmem:[%s3777 + $0x30] sm:$0xf]
      %v3791 = vld [vmem:[%s3777 + $0x34] sm:$0xf]
      %v3792 = vld [vmem:[%s3777 + $0x38] sm:$0xf]
      %v3793 = vld [vmem:[%s3777 + $0x3c] sm:$0xf]
      %v3794 = vunpack.c.l.b16 %v3406
      %v3795 = vunpack.c.l.b16 %v3416
      %v3796 = vunpack.c.l.b16 %v3430
      %v3797 = vunpack.c.l.b16 %v3440
      %v3798 = vunpack.c.l.b16 %v3454
      %v3799 = vunpack.c.l.b16 %v3464
      %v3800 = vunpack.c.l.b16 %v3478
      %v3801 = vunpack.c.l.b16 %v3488
      %v3802 = vunpack.c.l.b16 %v3502
      %v3803 = vunpack.c.l.b16 %v3512
      %v3804 = vunpack.c.l.b16 %v3526
      %v3805 = vunpack.c.l.b16 %v3536
      %v3806 = vunpack.c.l.b16 %v3550
      %v3807 = vunpack.c.l.b16 %v3560
      %v3808 = vunpack.c.l.b16 %v3574
      %v3809 = vunpack.c.l.b16 %v3584
      %v3810 = vunpack.c.l.b16 %v3598
      %v3811 = vunpack.c.l.b16 %v3608
      %v3812 = vunpack.c.l.b16 %v3622
      %v3813 = vunpack.c.l.b16 %v3632
      %v3814 = vunpack.c.l.b16 %v3646
      %v3815 = vunpack.c.l.b16 %v3656
      %v3816 = vunpack.c.l.b16 %v3670
      %v3817 = vunpack.c.l.b16 %v3680
      %v3818 = vunpack.c.l.b16 %v3694
      %v3819 = vunpack.c.l.b16 %v3704
      %v3820 = vunpack.c.l.b16 %v3718
      %v3821 = vunpack.c.l.b16 %v3728
      %v3822 = vunpack.c.l.b16 %v3742
      %v3823 = vunpack.c.l.b16 %v3752
      %v3824 = vunpack.c.l.b16 %v3766
      %v3825 = vunpack.c.l.b16 %v3776
      %v3826 = vpack.c.b16 %v3795, %v3794
      %v3827 = vpack.c.b16 %v3797, %v3796
      %v3828 = vpack.c.b16 %v3799, %v3798
      %v3829 = vpack.c.b16 %v3801, %v3800
      %v3830 = vpack.c.b16 %v3803, %v3802
      %v3831 = vpack.c.b16 %v3805, %v3804
      %v3832 = vpack.c.b16 %v3807, %v3806
      %v3833 = vpack.c.b16 %v3809, %v3808
      %v3834 = vpack.c.b16 %v3811, %v3810
      %v3835 = vpack.c.b16 %v3813, %v3812
      %v3836 = vpack.c.b16 %v3815, %v3814
      %v3837 = vpack.c.b16 %v3817, %v3816
      %v3838 = vpack.c.b16 %v3819, %v3818
      %v3839 = vpack.c.b16 %v3821, %v3820
      %v3840 = vpack.c.b16 %v3823, %v3822
      %v3841 = vpack.c.b16 %v3825, %v3824
      %v3874 = vunpack.c.l.b16 %v3778
      %v3875 = vunpack.c.l.b16 %v3779
      %v3876 = vunpack.c.l.b16 %v3780
      %v3877 = vunpack.c.l.b16 %v3781
      %v3878 = vunpack.c.l.b16 %v3782
      %v3879 = vunpack.c.l.b16 %v3783
      %v3880 = vunpack.c.l.b16 %v3784
      %v3881 = vunpack.c.l.b16 %v3785
      %v3882 = vunpack.c.l.b16 %v3786
      %v3883 = vunpack.c.l.b16 %v3787
      %v3884 = vunpack.c.l.b16 %v3788
      %v3885 = vunpack.c.l.b16 %v3789
      %v3886 = vunpack.c.l.b16 %v3790
      %v3887 = vunpack.c.l.b16 %v3791
      %v3888 = vunpack.c.l.b16 %v3792
      %v3889 = vunpack.c.l.b16 %v3793
      %v3890 = vpack.c.b16 %v3875, %v3874
      %v3891 = vpack.c.b16 %v3877, %v3876
      %v3892 = vpack.c.b16 %v3879, %v3878
      %v3893 = vpack.c.b16 %v3881, %v3880
      %v3894 = vpack.c.b16 %v3883, %v3882
      %v3895 = vpack.c.b16 %v3885, %v3884
      %v3896 = vpack.c.b16 %v3887, %v3886
      %v3897 = vpack.c.b16 %v3889, %v3888
      %3906 = vmatprep.subr.bf16.mxu0 0
      %3907 = vmatpush1.bf16.msra.mxu0 %v3890
      %3908 = vmatprep.subr.bf16.mxu0 0
      %3909 = vmatpush1.bf16.msra.mxu0 %v3891
      %3910 = vmatprep.subr.bf16.mxu0 0
      %3911 = vmatpush1.bf16.msra.mxu0 %v3892
      %3912 = vmatprep.subr.bf16.mxu0 0
      %3913 = vmatpush1.bf16.msra.mxu0 %v3893
      %3914 = vmatprep.subr.bf16.mxu0 0
      %3915 = vmatpush1.bf16.msra.mxu0 %v3894
      %3916 = vmatprep.subr.bf16.mxu0 0
      %3917 = vmatpush1.bf16.msra.mxu0 %v3895
      %3918 = vmatprep.subr.bf16.mxu0 0
      %3919 = vmatpush1.bf16.msra.mxu0 %v3896
      %3920 = vmatprep.subr.bf16.mxu0 0
      %3921 = vmatpush1.bf16.msra.mxu0 %v3897
      %3922 = vmatprep.subr.bf16.mxu0 0
      %3923 = vmatpush1.bf16.msra.mxu0 0
      %3924 = vmatprep.subr.bf16.mxu0 0
      %3925 = vmatpush1.bf16.msra.mxu0 0
      %3926 = vmatprep.subr.bf16.mxu0 0
      %3927 = vmatpush1.bf16.msra.mxu0 0
      %3928 = vmatprep.subr.bf16.mxu0 0
      %3929 = vmatpush1.bf16.msra.mxu0 0
      %3930 = vmatprep.subr.bf16.mxu0 0
      %3931 = vmatpush1.bf16.msra.mxu0 0
      %3932 = vmatprep.subr.bf16.mxu0 0
      %3933 = vmatpush1.bf16.msra.mxu0 0
      %3934 = vmatprep.subr.bf16.mxu0 0
      %3935 = vmatpush1.bf16.msra.mxu0 0
      %3936 = vmatprep.subr.bf16.mxu0 0
      %3937 = vmatpush1.bf16.msra.mxu0 0
      %3938 = vmatprep.mubr.bf16.mxu0 0
      %3939 = vmatmul.mubr.bf16.gmra.mrb[0].mxu0 %v3826
      %v3940 = vpop.f32.mrb[0].mxu0
      %v3941 = vadd.f32 0.0, %v3940
      %v3942 = vpop.f32.mrb[0].mxu0
      %v3943 = vpop.f32.mrb[0].mxu0
      %v3944 = vadd.f32 0.0, %v3943
      %v3945 = vpop.f32.mrb[0].mxu0
      %3946 = vmatprep.mubr.bf16.mxu0 0
      %3947 = vmatmul.mubr.bf16.gmra.mrb[0].mxu0 %v3827
      %v3948 = vpop.f32.mrb[0].mxu0
      %v3949 = vadd.f32 0.0, %v3948
      %v3950 = vpop.f32.mrb[0].mxu0
      %v3951 = vpop.f32.mrb[0].mxu0
      %v3952 = vadd.f32 0.0, %v3951
      %v3953 = vpop.f32.mrb[0].mxu0
      %3954 = vmatprep.mubr.bf16.mxu0 0
      %3955 = vmatmul.mubr.bf16.gmra.mrb[0].mxu0 %v3828
      %v3956 = vpop.f32.mrb[0].mxu0
      %v3957 = vadd.f32 0.0, %v3956
      %v3958 = vpop.f32.mrb[0].mxu0
      %v3959 = vpop.f32.mrb[0].mxu0
      %v3960 = vadd.f32 0.0, %v3959
      %v3961 = vpop.f32.mrb[0].mxu0
      %3962 = vmatprep.mubr.bf16.mxu0 0
      %3963 = vmatmul.mubr.bf16.gmra.mrb[0].mxu0 %v3829
      %v3964 = vpop.f32.mrb[0].mxu0
      %v3965 = vadd.f32 0.0, %v3964
      %v3966 = vpop.f32.mrb[0].mxu0
      %v3967 = vpop.f32.mrb[0].mxu0
      %v3968 = vadd.f32 0.0, %v3967
      %v3969 = vpop.f32.mrb[0].mxu0
      %3970 = vmatprep.mubr.bf16.mxu0 0
      %3971 = vmatmul.mubr.bf16.gmra.mrb[0].mxu0 %v3830
      %v3972 = vpop.f32.mrb[0].mxu0
      %v3973 = vadd.f32 0.0, %v3972
      %v3974 = vpop.f32.mrb[0].mxu0
      %v3975 = vpop.f32.mrb[0].mxu0
      %v3976 = vadd.f32 0.0, %v3975
      %v3977 = vpop.f32.mrb[0].mxu0
      %3978 = vmatprep.mubr.bf16.mxu0 0
      %3979 = vmatmul.mubr.bf16.gmra.mrb[0].mxu0 %v3831
      %v3980 = vpop.f32.mrb[0].mxu0
      %v3981 = vadd.f32 0.0, %v3980
      %v3982 = vpop.f32.mrb[0].mxu0
      %v3983 = vpop.f32.mrb[0].mxu0
      %v3984 = vadd.f32 0.0, %v3983
      %v3985 = vpop.f32.mrb[0].mxu0
      %3986 = vmatprep.mubr.bf16.mxu0 0
      %3987 = vmatmul.mubr.bf16.gmra.mrb[0].mxu0 %v3832
      %v3988 = vpop.f32.mrb[0].mxu0
      %v3989 = vadd.f32 0.0, %v3988
      %v3990 = vpop.f32.mrb[0].mxu0
      %v3991 = vpop.f32.mrb[0].mxu0
      %v3992 = vadd.f32 0.0, %v3991
      %v3993 = vpop.f32.mrb[0].mxu0
      %3994 = vmatprep.mubr.bf16.mxu0 0
      %3995 = vmatmul.mubr.bf16.gmra.mrb[0].mxu0 %v3833
      %v3996 = vpop.f32.mrb[0].mxu0
      %v3997 = vadd.f32 0.0, %v3996
      %v3998 = vpop.f32.mrb[0].mxu0
      %v3999 = vpop.f32.mrb[0].mxu0
      %v4000 = vadd.f32 0.0, %v3999
      %v4001 = vpop.f32.mrb[0].mxu0
      %4002 = vmatprep.mubr.bf16.mxu0 0
      %4003 = vmatmul.mubr.bf16.gmra.mrb[0].mxu0 %v3834
      %v4004 = vpop.f32.mrb[0].mxu0
      %v4005 = vadd.f32 0.0, %v4004
      %v4006 = vpop.f32.mrb[0].mxu0
      %v4007 = vpop.f32.mrb[0].mxu0
      %v4008 = vadd.f32 0.0, %v4007
      %v4009 = vpop.f32.mrb[0].mxu0
      %4010 = vmatprep.mubr.bf16.mxu0 0
      %4011 = vmatmul.mubr.bf16.gmra.mrb[0].mxu0 %v3835
      %v4012 = vpop.f32.mrb[0].mxu0
      %v4013 = vadd.f32 0.0, %v4012
      %v4014 = vpop.f32.mrb[0].mxu0
      %v4015 = vpop.f32.mrb[0].mxu0
      %v4016 = vadd.f32 0.0, %v4015
      %v4017 = vpop.f32.mrb[0].mxu0
      %4018 = vmatprep.mubr.bf16.mxu0 0
      %4019 = vmatmul.mubr.bf16.gmra.mrb[0].mxu0 %v3836
      %v4020 = vpop.f32.mrb[0].mxu0
      %v4021 = vadd.f32 0.0, %v4020
      %v4022 = vpop.f32.mrb[0].mxu0
      %v4023 = vpop.f32.mrb[0].mxu0
      %v4024 = vadd.f32 0.0, %v4023
      %v4025 = vpop.f32.mrb[0].mxu0
      %4026 = vmatprep.mubr.bf16.mxu0 0
      %4027 = vmatmul.mubr.bf16.gmra.mrb[0].mxu0 %v3837
      %v4028 = vpop.f32.mrb[0].mxu0
      %v4029 = vadd.f32 0.0, %v4028
      %v4030 = vpop.f32.mrb[0].mxu0
      %v4031 = vpop.f32.mrb[0].mxu0
      %v4032 = vadd.f32 0.0, %v4031
      %v4033 = vpop.f32.mrb[0].mxu0
      %4034 = vmatprep.mubr.bf16.mxu0 0
      %4035 = vmatmul.mubr.bf16.gmra.mrb[0].mxu0 %v3838
      %v4036 = vpop.f32.mrb[0].mxu0
      %v4037 = vadd.f32 0.0, %v4036
      %v4038 = vpop.f32.mrb[0].mxu0
      %v4039 = vpop.f32.mrb[0].mxu0
      %v4040 = vadd.f32 0.0, %v4039
      %v4041 = vpop.f32.mrb[0].mxu0
      %4042 = vmatprep.mubr.bf16.mxu0 0
      %4043 = vmatmul.mubr.bf16.gmra.mrb[0].mxu0 %v3839
      %v4044 = vpop.f32.mrb[0].mxu0
      %v4045 = vadd.f32 0.0, %v4044
      %v4046 = vpop.f32.mrb[0].mxu0
      %v4047 = vpop.f32.mrb[0].mxu0
      %v4048 = vadd.f32 0.0, %v4047
      %v4049 = vpop.f32.mrb[0].mxu0
      %4050 = vmatprep.mubr.bf16.mxu0 0
      %4051 = vmatmul.mubr.bf16.gmra.mrb[0].mxu0 %v3840
      %v4052 = vpop.f32.mrb[0].mxu0
      %v4053 = vadd.f32 0.0, %v4052
      %v4054 = vpop.f32.mrb[0].mxu0
      %v4055 = vpop.f32.mrb[0].mxu0
      %v4056 = vadd.f32 0.0, %v4055
      %v4057 = vpop.f32.mrb[0].mxu0
      %4058 = vmatprep.mubr.bf16.mxu0 0
      %4059 = vmatmul.mubr.bf16.gmra.mrb[0].mxu0 %v3841
      %v4060 = vpop.f32.mrb[0].mxu0
      %v4061 = vadd.f32 0.0, %v4060
      %v4062 = vpop.f32.mrb[0].mxu0
      %v4063 = vpop.f32.mrb[0].mxu0
      %v4064 = vadd.f32 0.0, %v4063
      %v4065 = vpop.f32.mrb[0].mxu0
      %4066 = vdwg.mxu0
      %v4099 = vunpack.c.l.b16 %v3328
      %v4100 = vunpack.c.l.b16 %v3329
      %v4101 = vunpack.c.l.b16 %v3331
      %v4102 = vunpack.c.l.b16 %v3332
      %v4103 = vunpack.c.l.b16 %v3334
      %v4104 = vunpack.c.l.b16 %v3335
      %v4105 = vunpack.c.l.b16 %v3337
      %v4106 = vunpack.c.l.b16 %v3338
      %v4107 = vunpack.c.l.b16 %v3340
      %v4108 = vunpack.c.l.b16 %v3341
      %v4109 = vunpack.c.l.b16 %v3343
      %v4110 = vunpack.c.l.b16 %v3344
      %v4111 = vunpack.c.l.b16 %v3346
      %v4112 = vunpack.c.l.b16 %v3347
      %v4113 = vunpack.c.l.b16 %v3349
      %v4114 = vunpack.c.l.b16 %v3350
      %v4115 = vunpack.c.l.b16 %v3352
      %v4116 = vunpack.c.l.b16 %v3353
      %v4117 = vunpack.c.l.b16 %v3355
      %v4118 = vunpack.c.l.b16 %v3356
      %v4119 = vunpack.c.l.b16 %v3358
      %v4120 = vunpack.c.l.b16 %v3359
      %v4121 = vunpack.c.l.b16 %v3361
      %v4122 = vunpack.c.l.b16 %v3362
      %v4123 = vunpack.c.l.b16 %v3364
      %v4124 = vunpack.c.l.b16 %v3365
      %v4125 = vunpack.c.l.b16 %v3367
      %v4126 = vunpack.c.l.b16 %v3368
      %v4127 = vunpack.c.l.b16 %v3370
      %v4128 = vunpack.c.l.b16 %v3371
      %v4129 = vunpack.c.l.b16 %v3373
      %v4130 = vunpack.c.l.b16 %v3374
      %v4131 = vpack.c.b16 %v4100, %v4099
      %v4132 = vpack.c.b16 %v4102, %v4101
      %v4133 = vpack.c.b16 %v4104, %v4103
      %v4134 = vpack.c.b16 %v4106, %v4105
      %v4135 = vpack.c.b16 %v4108, %v4107
      %v4136 = vpack.c.b16 %v4110, %v4109
      %v4137 = vpack.c.b16 %v4112, %v4111
      %v4138 = vpack.c.b16 %v4114, %v4113
      %v4139 = vpack.c.b16 %v4116, %v4115
      %v4140 = vpack.c.b16 %v4118, %v4117
      %v4141 = vpack.c.b16 %v4120, %v4119
      %v4142 = vpack.c.b16 %v4122, %v4121
      %v4143 = vpack.c.b16 %v4124, %v4123
      %v4144 = vpack.c.b16 %v4126, %v4125
      %v4145 = vpack.c.b16 %v4128, %v4127
      %v4146 = vpack.c.b16 %v4130, %v4129
      %v4179 = vunpack.c.l.b16 %v3377
      %v4180 = vunpack.c.l.b16 %v3378
      %v4181 = vunpack.c.l.b16 %v3379
      %v4182 = vunpack.c.l.b16 %v3380
      %v4183 = vunpack.c.l.b16 %v3381
      %v4184 = vunpack.c.l.b16 %v3382
      %v4185 = vunpack.c.l.b16 %v3383
      %v4186 = vunpack.c.l.b16 %v3384
      %v4187 = vunpack.c.l.b16 %v3385
      %v4188 = vunpack.c.l.b16 %v3386
      %v4189 = vunpack.c.l.b16 %v3387
      %v4190 = vunpack.c.l.b16 %v3388
      %v4191 = vunpack.c.l.b16 %v3389
      %v4192 = vunpack.c.l.b16 %v3390
      %v4193 = vunpack.c.l.b16 %v3391
      %v4194 = vunpack.c.l.b16 %v3392
      %v4195 = vpack.c.b16 %v4180, %v4179
      %v4196 = vpack.c.b16 %v4182, %v4181
      %v4197 = vpack.c.b16 %v4184, %v4183
      %v4198 = vpack.c.b16 %v4186, %v4185
      %v4199 = vpack.c.b16 %v4188, %v4187
      %v4200 = vpack.c.b16 %v4190, %v4189
      %v4201 = vpack.c.b16 %v4192, %v4191
      %v4202 = vpack.c.b16 %v4194, %v4193
      %4211 = vmatprep.subr.bf16.mxu0 0
      %4212 = vmatpush1.bf16.msra.mxu0 %v4195
      %4213 = vmatprep.subr.bf16.mxu0 0
      %4214 = vmatpush1.bf16.msra.mxu0 %v4196
      %4215 = vmatprep.subr.bf16.mxu0 0
      %4216 = vmatpush1.bf16.msra.mxu0 %v4197
      %4217 = vmatprep.subr.bf16.mxu0 0
      %4218 = vmatpush1.bf16.msra.mxu0 %v4198
      %4219 = vmatprep.subr.bf16.mxu0 0
      %4220 = vmatpush1.bf16.msra.mxu0 %v4199
      %4221 = vmatprep.subr.bf16.mxu0 0
      %4222 = vmatpush1.bf16.msra.mxu0 %v4200
      %4223 = vmatprep.subr.bf16.mxu0 0
      %4224 = vmatpush1.bf16.msra.mxu0 %v4201
      %4225 = vmatprep.subr.bf16.mxu0 0
      %4226 = vmatpush1.bf16.msra.mxu0 %v4202
      %4227 = vmatprep.subr.bf16.mxu0 0
      %4228 = vmatpush1.bf16.msra.mxu0 0
      %4229 = vmatprep.subr.bf16.mxu0 0
      %4230 = vmatpush1.bf16.msra.mxu0 0
      %4231 = vmatprep.subr.bf16.mxu0 0
      %4232 = vmatpush1.bf16.msra.mxu0 0
      %4233 = vmatprep.subr.bf16.mxu0 0
      %4234 = vmatpush1.bf16.msra.mxu0 0
      %4235 = vmatprep.subr.bf16.mxu0 0
      %4236 = vmatpush1.bf16.msra.mxu0 0
      %4237 = vmatprep.subr.bf16.mxu0 0
      %4238 = vmatpush1.bf16.msra.mxu0 0
      %4239 = vmatprep.subr.bf16.mxu0 0
      %4240 = vmatpush1.bf16.msra.mxu0 0
      %4241 = vmatprep.subr.bf16.mxu0 0
      %4242 = vmatpush1.bf16.msra.mxu0 0
      %4243 = vmatprep.mubr.bf16.mxu0 0
      %4244 = vmatmul.mubr.bf16.gmra.mrb[0].mxu0 %v4131
      %v4245 = vpop.f32.mrb[0].mxu0
      %v4246 = vadd.f32 %v3941, %v4245
      %v4247 = vpop.f32.mrb[0].mxu0
      %v4248 = vpop.f32.mrb[0].mxu0
      %v4249 = vadd.f32 %v3944, %v4248
      %v4250 = vpop.f32.mrb[0].mxu0
      %4251 = vmatprep.mubr.bf16.mxu0 0
      %4252 = vmatmul.mubr.bf16.gmra.mrb[0].mxu0 %v4132
      %v4253 = vpop.f32.mrb[0].mxu0
      %v4254 = vadd.f32 %v3949, %v4253
      %v4255 = vpop.f32.mrb[0].mxu0
      %v4256 = vpop.f32.mrb[0].mxu0
      %v4257 = vadd.f32 %v3952, %v4256
      %v4258 = vpop.f32.mrb[0].mxu0
      %4259 = vmatprep.mubr.bf16.mxu0 0
      %4260 = vmatmul.mubr.bf16.gmra.mrb[0].mxu0 %v4133
      %v4261 = vpop.f32.mrb[0].mxu0
      %v4262 = vadd.f32 %v3957, %v4261
      %v4263 = vpop.f32.mrb[0].mxu0
      %v4264 = vpop.f32.mrb[0].mxu0
      %v4265 = vadd.f32 %v3960, %v4264
      %v4266 = vpop.f32.mrb[0].mxu0
      %4267 = vmatprep.mubr.bf16.mxu0 0
      %4268 = vmatmul.mubr.bf16.gmra.mrb[0].mxu0 %v4134
      %v4269 = vpop.f32.mrb[0].mxu0
      %v4270 = vadd.f32 %v3965, %v4269
      %v4271 = vpop.f32.mrb[0].mxu0
      %v4272 = vpop.f32.mrb[0].mxu0
      %v4273 = vadd.f32 %v3968, %v4272
      %v4274 = vpop.f32.mrb[0].mxu0
      %4275 = vmatprep.mubr.bf16.mxu0 0
      %4276 = vmatmul.mubr.bf16.gmra.mrb[0].mxu0 %v4135
      %v4277 = vpop.f32.mrb[0].mxu0
      %v4278 = vadd.f32 %v3973, %v4277
      %v4279 = vpop.f32.mrb[0].mxu0
      %v4280 = vpop.f32.mrb[0].mxu0
      %v4281 = vadd.f32 %v3976, %v4280
      %v4282 = vpop.f32.mrb[0].mxu0
      %4283 = vmatprep.mubr.bf16.mxu0 0
      %4284 = vmatmul.mubr.bf16.gmra.mrb[0].mxu0 %v4136
      %v4285 = vpop.f32.mrb[0].mxu0
      %v4286 = vadd.f32 %v3981, %v4285
      %v4287 = vpop.f32.mrb[0].mxu0
      %v4288 = vpop.f32.mrb[0].mxu0
      %v4289 = vadd.f32 %v3984, %v4288
      %v4290 = vpop.f32.mrb[0].mxu0
      %4291 = vmatprep.mubr.bf16.mxu0 0
      %4292 = vmatmul.mubr.bf16.gmra.mrb[0].mxu0 %v4137
      %v4293 = vpop.f32.mrb[0].mxu0
      %v4294 = vadd.f32 %v3989, %v4293
      %v4295 = vpop.f32.mrb[0].mxu0
      %v4296 = vpop.f32.mrb[0].mxu0
      %v4297 = vadd.f32 %v3992, %v4296
      %v4298 = vpop.f32.mrb[0].mxu0
      %4299 = vmatprep.mubr.bf16.mxu0 0
      %4300 = vmatmul.mubr.bf16.gmra.mrb[0].mxu0 %v4138
      %v4301 = vpop.f32.mrb[0].mxu0
      %v4302 = vadd.f32 %v3997, %v4301
      %v4303 = vpop.f32.mrb[0].mxu0
      %v4304 = vpop.f32.mrb[0].mxu0
      %v4305 = vadd.f32 %v4000, %v4304
      %v4306 = vpop.f32.mrb[0].mxu0
      %4307 = vmatprep.mubr.bf16.mxu0 0
      %4308 = vmatmul.mubr.bf16.gmra.mrb[0].mxu0 %v4139
      %v4309 = vpop.f32.mrb[0].mxu0
      %v4310 = vadd.f32 %v4005, %v4309
      %v4311 = vpop.f32.mrb[0].mxu0
      %v4312 = vpop.f32.mrb[0].mxu0
      %v4313 = vadd.f32 %v4008, %v4312
      %v4314 = vpop.f32.mrb[0].mxu0
      %4315 = vmatprep.mubr.bf16.mxu0 0
      %4316 = vmatmul.mubr.bf16.gmra.mrb[0].mxu0 %v4140
      %v4317 = vpop.f32.mrb[0].mxu0
      %v4318 = vadd.f32 %v4013, %v4317
      %v4319 = vpop.f32.mrb[0].mxu0
      %v4320 = vpop.f32.mrb[0].mxu0
      %v4321 = vadd.f32 %v4016, %v4320
      %v4322 = vpop.f32.mrb[0].mxu0
      %4323 = vmatprep.mubr.bf16.mxu0 0
      %4324 = vmatmul.mubr.bf16.gmra.mrb[0].mxu0 %v4141
      %v4325 = vpop.f32.mrb[0].mxu0
      %v4326 = vadd.f32 %v4021, %v4325
      %v4327 = vpop.f32.mrb[0].mxu0
      %v4328 = vpop.f32.mrb[0].mxu0
      %v4329 = vadd.f32 %v4024, %v4328
      %v4330 = vpop.f32.mrb[0].mxu0
      %4331 = vmatprep.mubr.bf16.mxu0 0
      %4332 = vmatmul.mubr.bf16.gmra.mrb[0].mxu0 %v4142
      %v4333 = vpop.f32.mrb[0].mxu0
      %v4334 = vadd.f32 %v4029, %v4333
      %v4335 = vpop.f32.mrb[0].mxu0
      %v4336 = vpop.f32.mrb[0].mxu0
      %v4337 = vadd.f32 %v4032, %v4336
      %v4338 = vpop.f32.mrb[0].mxu0
      %4339 = vmatprep.mubr.bf16.mxu0 0
      %4340 = vmatmul.mubr.bf16.gmra.mrb[0].mxu0 %v4143
      %v4341 = vpop.f32.mrb[0].mxu0
      %v4342 = vadd.f32 %v4037, %v4341
      %v4343 = vpop.f32.mrb[0].mxu0
      %v4344 = vpop.f32.mrb[0].mxu0
      %v4345 = vadd.f32 %v4040, %v4344
      %v4346 = vpop.f32.mrb[0].mxu0
      %4347 = vmatprep.mubr.bf16.mxu0 0
      %4348 = vmatmul.mubr.bf16.gmra.mrb[0].mxu0 %v4144
      %v4349 = vpop.f32.mrb[0].mxu0
      %v4350 = vadd.f32 %v4045, %v4349
      %v4351 = vpop.f32.mrb[0].mxu0
      %v4352 = vpop.f32.mrb[0].mxu0
      %v4353 = vadd.f32 %v4048, %v4352
      %v4354 = vpop.f32.mrb[0].mxu0
      %4355 = vmatprep.mubr.bf16.mxu0 0
      %4356 = vmatmul.mubr.bf16.gmra.mrb[0].mxu0 %v4145
      %v4357 = vpop.f32.mrb[0].mxu0
      %v4358 = vadd.f32 %v4053, %v4357
      %v4359 = vpop.f32.mrb[0].mxu0
      %v4360 = vpop.f32.mrb[0].mxu0
      %v4361 = vadd.f32 %v4056, %v4360
      %v4362 = vpop.f32.mrb[0].mxu0
      %4363 = vmatprep.mubr.bf16.mxu0 0
      %4364 = vmatmul.mubr.bf16.gmra.mrb[0].mxu0 %v4146
      %v4365 = vpop.f32.mrb[0].mxu0
      %v4366 = vadd.f32 %v4061, %v4365
      %v4367 = vpop.f32.mrb[0].mxu0
      %v4368 = vpop.f32.mrb[0].mxu0
      %v4369 = vadd.f32 %v4064, %v4368
      %v4370 = vpop.f32.mrb[0].mxu0
      %4371 = vdwg.mxu0
      %v4388 = vrot.slane %v3328, 5
      %v4389 = vrot.slane %v4388, 4
      %v4390 = vrot.slane %v3329, 5
      %v4391 = vsel %vm1263, %v4389, %v4390
      %v4392 = vrot.slane %v4390, 4
      %v4393 = vrot.slane %v3330, 5
      %v4394 = vsel %vm1263, %v4392, %v4393
      %v4395 = vrot.slane %v3331, 5
      %v4396 = vrot.slane %v4395, 4
      %v4397 = vrot.slane %v3332, 5
      %v4398 = vsel %vm1263, %v4396, %v4397
      %v4399 = vrot.slane %v4397, 4
      %v4400 = vrot.slane %v3333, 5
      %v4401 = vsel %vm1263, %v4399, %v4400
      %v4402 = vrot.slane %v3334, 5
      %v4403 = vrot.slane %v4402, 4
      %v4404 = vrot.slane %v3335, 5
      %v4405 = vsel %vm1263, %v4403, %v4404
      %v4406 = vrot.slane %v4404, 4
      %v4407 = vrot.slane %v3336, 5
      %v4408 = vsel %vm1263, %v4406, %v4407
      %v4409 = vrot.slane %v3337, 5
      %v4410 = vrot.slane %v4409, 4
      %v4411 = vrot.slane %v3338, 5
      %v4412 = vsel %vm1263, %v4410, %v4411
      %v4413 = vrot.slane %v4411, 4
      %v4414 = vrot.slane %v3339, 5
      %v4415 = vsel %vm1263, %v4413, %v4414
      %v4416 = vrot.slane %v3340, 5
      %v4417 = vrot.slane %v4416, 4
      %v4418 = vrot.slane %v3341, 5
      %v4419 = vsel %vm1263, %v4417, %v4418
      %v4420 = vrot.slane %v4418, 4
      %v4421 = vrot.slane %v3342, 5
      %v4422 = vsel %vm1263, %v4420, %v4421
      %v4423 = vrot.slane %v3343, 5
      %v4424 = vrot.slane %v4423, 4
      %v4425 = vrot.slane %v3344, 5
      %v4426 = vsel %vm1263, %v4424, %v4425
      %v4427 = vrot.slane %v4425, 4
      %v4428 = vrot.slane %v3345, 5
      %v4429 = vsel %vm1263, %v4427, %v4428
      %v4430 = vrot.slane %v3346, 5
      %v4431 = vrot.slane %v4430, 4
      %v4432 = vrot.slane %v3347, 5
      %v4433 = vsel %vm1263, %v4431, %v4432
      %v4434 = vrot.slane %v4432, 4
      %v4435 = vrot.slane %v3348, 5
      %v4436 = vsel %vm1263, %v4434, %v4435
      %v4437 = vrot.slane %v3349, 5
      %v4438 = vrot.slane %v4437, 4
      %v4439 = vrot.slane %v3350, 5
      %v4440 = vsel %vm1263, %v4438, %v4439
      %v4441 = vrot.slane %v4439, 4
      %v4442 = vrot.slane %v3351, 5
      %v4443 = vsel %vm1263, %v4441, %v4442
      %v4444 = vrot.slane %v3352, 5
      %v4445 = vrot.slane %v4444, 4
      %v4446 = vrot.slane %v3353, 5
      %v4447 = vsel %vm1263, %v4445, %v4446
      %v4448 = vrot.slane %v4446, 4
      %v4449 = vrot.slane %v3354, 5
      %v4450 = vsel %vm1263, %v4448, %v4449
      %v4451 = vrot.slane %v3355, 5
      %v4452 = vrot.slane %v4451, 4
      %v4453 = vrot.slane %v3356, 5
      %v4454 = vsel %vm1263, %v4452, %v4453
      %v4455 = vrot.slane %v4453, 4
      %v4456 = vrot.slane %v3357, 5
      %v4457 = vsel %vm1263, %v4455, %v4456
      %v4458 = vrot.slane %v3358, 5
      %v4459 = vrot.slane %v4458, 4
      %v4460 = vrot.slane %v3359, 5
      %v4461 = vsel %vm1263, %v4459, %v4460
      %v4462 = vrot.slane %v4460, 4
      %v4463 = vrot.slane %v3360, 5
      %v4464 = vsel %vm1263, %v4462, %v4463
      %v4465 = vrot.slane %v3361, 5
      %v4466 = vrot.slane %v4465, 4
      %v4467 = vrot.slane %v3362, 5
      %v4468 = vsel %vm1263, %v4466, %v4467
      %v4469 = vrot.slane %v4467, 4
      %v4470 = vrot.slane %v3363, 5
      %v4471 = vsel %vm1263, %v4469, %v4470
      %v4472 = vrot.slane %v3364, 5
      %v4473 = vrot.slane %v4472, 4
      %v4474 = vrot.slane %v3365, 5
      %v4475 = vsel %vm1263, %v4473, %v4474
      %v4476 = vrot.slane %v4474, 4
      %v4477 = vrot.slane %v3366, 5
      %v4478 = vsel %vm1263, %v4476, %v4477
      %v4479 = vrot.slane %v3367, 5
      %v4480 = vrot.slane %v4479, 4
      %v4481 = vrot.slane %v3368, 5
      %v4482 = vsel %vm1263, %v4480, %v4481
      %v4483 = vrot.slane %v4481, 4
      %v4484 = vrot.slane %v3369, 5
      %v4485 = vsel %vm1263, %v4483, %v4484
      %v4486 = vrot.slane %v3370, 5
      %v4487 = vrot.slane %v4486, 4
      %v4488 = vrot.slane %v3371, 5
      %v4489 = vsel %vm1263, %v4487, %v4488
      %v4490 = vrot.slane %v4488, 4
      %v4491 = vrot.slane %v3372, 5
      %v4492 = vsel %vm1263, %v4490, %v4491
      %v4493 = vrot.slane %v3373, 5
      %v4494 = vrot.slane %v4493, 4
      %v4495 = vrot.slane %v3374, 5
      %v4496 = vsel %vm1263, %v4494, %v4495
      %v4497 = vrot.slane %v4495, 4
      %v4498 = vrot.slane %v3375, 5
      %v4499 = vsel %vm1263, %v4497, %v4498
      %s4500 = scalar_lea.vmem %s1, 512
      %v4501 = vld [vmem:[%s4500] sm:$0xf]
      %v4502 = vld [vmem:[%s4500 + $0x4] sm:$0xf]
      %v4503 = vld [vmem:[%s4500 + $0x8] sm:$0xf]
      %v4504 = vld [vmem:[%s4500 + $0xc] sm:$0xf]
      %v4505 = vld [vmem:[%s4500 + $0x10] sm:$0xf]
      %v4506 = vld [vmem:[%s4500 + $0x14] sm:$0xf]
      %v4507 = vld [vmem:[%s4500 + $0x18] sm:$0xf]
      %v4508 = vld [vmem:[%s4500 + $0x1c] sm:$0xf]
      %v4509 = vld [vmem:[%s4500 + $0x20] sm:$0xf]
      %v4510 = vld [vmem:[%s4500 + $0x24] sm:$0xf]
      %v4511 = vld [vmem:[%s4500 + $0x28] sm:$0xf]
      %v4512 = vld [vmem:[%s4500 + $0x2c] sm:$0xf]
      %v4513 = vld [vmem:[%s4500 + $0x30] sm:$0xf]
      %v4514 = vld [vmem:[%s4500 + $0x34] sm:$0xf]
      %v4515 = vld [vmem:[%s4500 + $0x38] sm:$0xf]
      %v4516 = vld [vmem:[%s4500 + $0x3c] sm:$0xf]
      %v4517 = vunpack.c.l.b16 %v4391
      %v4518 = vunpack.c.l.b16 %v4394
      %v4519 = vunpack.c.l.b16 %v4398
      %v4520 = vunpack.c.l.b16 %v4401
      %v4521 = vunpack.c.l.b16 %v4405
      %v4522 = vunpack.c.l.b16 %v4408
      %v4523 = vunpack.c.l.b16 %v4412
      %v4524 = vunpack.c.l.b16 %v4415
      %v4525 = vunpack.c.l.b16 %v4419
      %v4526 = vunpack.c.l.b16 %v4422
      %v4527 = vunpack.c.l.b16 %v4426
      %v4528 = vunpack.c.l.b16 %v4429
      %v4529 = vunpack.c.l.b16 %v4433
      %v4530 = vunpack.c.l.b16 %v4436
      %v4531 = vunpack.c.l.b16 %v4440
      %v4532 = vunpack.c.l.b16 %v4443
      %v4533 = vunpack.c.l.b16 %v4447
      %v4534 = vunpack.c.l.b16 %v4450
      %v4535 = vunpack.c.l.b16 %v4454
      %v4536 = vunpack.c.l.b16 %v4457
      %v4537 = vunpack.c.l.b16 %v4461
      %v4538 = vunpack.c.l.b16 %v4464
      %v4539 = vunpack.c.l.b16 %v4468
      %v4540 = vunpack.c.l.b16 %v4471
      %v4541 = vunpack.c.l.b16 %v4475
      %v4542 = vunpack.c.l.b16 %v4478
      %v4543 = vunpack.c.l.b16 %v4482
      %v4544 = vunpack.c.l.b16 %v4485
      %v4545 = vunpack.c.l.b16 %v4489
      %v4546 = vunpack.c.l.b16 %v4492
      %v4547 = vunpack.c.l.b16 %v4496
      %v4548 = vunpack.c.l.b16 %v4499
      %v4549 = vpack.c.b16 %v4518, %v4517
      %v4550 = vpack.c.b16 %v4520, %v4519
      %v4551 = vpack.c.b16 %v4522, %v4521
      %v4552 = vpack.c.b16 %v4524, %v4523
      %v4553 = vpack.c.b16 %v4526, %v4525
      %v4554 = vpack.c.b16 %v4528, %v4527
      %v4555 = vpack.c.b16 %v4530, %v4529
      %v4556 = vpack.c.b16 %v4532, %v4531
      %v4557 = vpack.c.b16 %v4534, %v4533
      %v4558 = vpack.c.b16 %v4536, %v4535
      %v4559 = vpack.c.b16 %v4538, %v4537
      %v4560 = vpack.c.b16 %v4540, %v4539
      %v4561 = vpack.c.b16 %v4542, %v4541
      %v4562 = vpack.c.b16 %v4544, %v4543
      %v4563 = vpack.c.b16 %v4546, %v4545
      %v4564 = vpack.c.b16 %v4548, %v4547
      %v4597 = vunpack.c.l.b16 %v4501
      %v4598 = vunpack.c.l.b16 %v4502
      %v4599 = vunpack.c.l.b16 %v4503
      %v4600 = vunpack.c.l.b16 %v4504
      %v4601 = vunpack.c.l.b16 %v4505
      %v4602 = vunpack.c.l.b16 %v4506
      %v4603 = vunpack.c.l.b16 %v4507
      %v4604 = vunpack.c.l.b16 %v4508
      %v4605 = vunpack.c.l.b16 %v4509
      %v4606 = vunpack.c.l.b16 %v4510
      %v4607 = vunpack.c.l.b16 %v4511
      %v4608 = vunpack.c.l.b16 %v4512
      %v4609 = vunpack.c.l.b16 %v4513
      %v4610 = vunpack.c.l.b16 %v4514
      %v4611 = vunpack.c.l.b16 %v4515
      %v4612 = vunpack.c.l.b16 %v4516
      %v4613 = vpack.c.b16 %v4598, %v4597
      %v4614 = vpack.c.b16 %v4600, %v4599
      %v4615 = vpack.c.b16 %v4602, %v4601
      %v4616 = vpack.c.b16 %v4604, %v4603
      %v4617 = vpack.c.b16 %v4606, %v4605
      %v4618 = vpack.c.b16 %v4608, %v4607
      %v4619 = vpack.c.b16 %v4610, %v4609
      %v4620 = vpack.c.b16 %v4612, %v4611
      %4629 = vmatprep.subr.bf16.mxu0 0
      %4630 = vmatpush1.bf16.msra.mxu0 %v4613
      %4631 = vmatprep.subr.bf16.mxu0 0
      %4632 = vmatpush1.bf16.msra.mxu0 %v4614
      %4633 = vmatprep.subr.bf16.mxu0 0
      %4634 = vmatpush1.bf16.msra.mxu0 %v4615
      %4635 = vmatprep.subr.bf16.mxu0 0
      %4636 = vmatpush1.bf16.msra.mxu0 %v4616
      %4637 = vmatprep.subr.bf16.mxu0 0
      %4638 = vmatpush1.bf16.msra.mxu0 %v4617
      %4639 = vmatprep.subr.bf16.mxu0 0
      %4640 = vmatpush1.bf16.msra.mxu0 %v4618
      %4641 = vmatprep.subr.bf16.mxu0 0
      %4642 = vmatpush1.bf16.msra.mxu0 %v4619
      %4643 = vmatprep.subr.bf16.mxu0 0
      %4644 = vmatpush1.bf16.msra.mxu0 %v4620
      %4645 = vmatprep.subr.bf16.mxu0 0
      %4646 = vmatpush1.bf16.msra.mxu0 0
      %4647 = vmatprep.subr.bf16.mxu0 0
      %4648 = vmatpush1.bf16.msra.mxu0 0
      %4649 = vmatprep.subr.bf16.mxu0 0
      %4650 = vmatpush1.bf16.msra.mxu0 0
      %4651 = vmatprep.subr.bf16.mxu0 0
      %4652 = vmatpush1.bf16.msra.mxu0 0
      %4653 = vmatprep.subr.bf16.mxu0 0
      %4654 = vmatpush1.bf16.msra.mxu0 0
      %4655 = vmatprep.subr.bf16.mxu0 0
      %4656 = vmatpush1.bf16.msra.mxu0 0
      %4657 = vmatprep.subr.bf16.mxu0 0
      %4658 = vmatpush1.bf16.msra.mxu0 0
      %4659 = vmatprep.subr.bf16.mxu0 0
      %4660 = vmatpush1.bf16.msra.mxu0 0
      %4661 = vmatprep.mubr.bf16.mxu0 0
      %4662 = vmatmul.mubr.bf16.gmra.mrb[0].mxu0 %v4549
      %v4663 = vpop.f32.mrb[0].mxu0
      %v4664 = vadd.f32 0.0, %v4663
      %v4665 = vpop.f32.mrb[0].mxu0
      %v4666 = vpop.f32.mrb[0].mxu0
      %v4667 = vadd.f32 0.0, %v4666
      %v4668 = vpop.f32.mrb[0].mxu0
      %4669 = vmatprep.mubr.bf16.mxu0 0
      %4670 = vmatmul.mubr.bf16.gmra.mrb[0].mxu0 %v4550
      %v4671 = vpop.f32.mrb[0].mxu0
      %v4672 = vadd.f32 0.0, %v4671
      %v4673 = vpop.f32.mrb[0].mxu0
      %v4674 = vpop.f32.mrb[0].mxu0
      %v4675 = vadd.f32 0.0, %v4674
      %v4676 = vpop.f32.mrb[0].mxu0
      %4677 = vmatprep.mubr.bf16.mxu0 0
      %4678 = vmatmul.mubr.bf16.gmra.mrb[0].mxu0 %v4551
      %v4679 = vpop.f32.mrb[0].mxu0
      %v4680 = vadd.f32 0.0, %v4679
      %v4681 = vpop.f32.mrb[0].mxu0
      %v4682 = vpop.f32.mrb[0].mxu0
      %v4683 = vadd.f32 0.0, %v4682
      %v4684 = vpop.f32.mrb[0].mxu0
      %4685 = vmatprep.mubr.bf16.mxu0 0
      %4686 = vmatmul.mubr.bf16.gmra.mrb[0].mxu0 %v4552
      %v4687 = vpop.f32.mrb[0].mxu0
      %v4688 = vadd.f32 0.0, %v4687
      %v4689 = vpop.f32.mrb[0].mxu0
      %v4690 = vpop.f32.mrb[0].mxu0
      %v4691 = vadd.f32 0.0, %v4690
      %v4692 = vpop.f32.mrb[0].mxu0
      %4693 = vmatprep.mubr.bf16.mxu0 0
      %4694 = vmatmul.mubr.bf16.gmra.mrb[0].mxu0 %v4553
      %v4695 = vpop.f32.mrb[0].mxu0
      %v4696 = vadd.f32 0.0, %v4695
      %v4697 = vpop.f32.mrb[0].mxu0
      %v4698 = vpop.f32.mrb[0].mxu0
      %v4699 = vadd.f32 0.0, %v4698
      %v4700 = vpop.f32.mrb[0].mxu0
      %4701 = vmatprep.mubr.bf16.mxu0 0
      %4702 = vmatmul.mubr.bf16.gmra.mrb[0].mxu0 %v4554
      %v4703 = vpop.f32.mrb[0].mxu0
      %v4704 = vadd.f32 0.0, %v4703
      %v4705 = vpop.f32.mrb[0].mxu0
      %v4706 = vpop.f32.mrb[0].mxu0
      %v4707 = vadd.f32 0.0, %v4706
      %v4708 = vpop.f32.mrb[0].mxu0
      %4709 = vmatprep.mubr.bf16.mxu0 0
      %4710 = vmatmul.mubr.bf16.gmra.mrb[0].mxu0 %v4555
      %v4711 = vpop.f32.mrb[0].mxu0
      %v4712 = vadd.f32 0.0, %v4711
      %v4713 = vpop.f32.mrb[0].mxu0
      %v4714 = vpop.f32.mrb[0].mxu0
      %v4715 = vadd.f32 0.0, %v4714
      %v4716 = vpop.f32.mrb[0].mxu0
      %4717 = vmatprep.mubr.bf16.mxu0 0
      %4718 = vmatmul.mubr.bf16.gmra.mrb[0].mxu0 %v4556
      %v4719 = vpop.f32.mrb[0].mxu0
      %v4720 = vadd.f32 0.0, %v4719
      %v4721 = vpop.f32.mrb[0].mxu0
      %v4722 = vpop.f32.mrb[0].mxu0
      %v4723 = vadd.f32 0.0, %v4722
      %v4724 = vpop.f32.mrb[0].mxu0
      %4725 = vmatprep.mubr.bf16.mxu0 0
      %4726 = vmatmul.mubr.bf16.gmra.mrb[0].mxu0 %v4557
      %v4727 = vpop.f32.mrb[0].mxu0
      %v4728 = vadd.f32 0.0, %v4727
      %v4729 = vpop.f32.mrb[0].mxu0
      %v4730 = vpop.f32.mrb[0].mxu0
      %v4731 = vadd.f32 0.0, %v4730
      %v4732 = vpop.f32.mrb[0].mxu0
      %4733 = vmatprep.mubr.bf16.mxu0 0
      %4734 = vmatmul.mubr.bf16.gmra.mrb[0].mxu0 %v4558
      %v4735 = vpop.f32.mrb[0].mxu0
      %v4736 = vadd.f32 0.0, %v4735
      %v4737 = vpop.f32.mrb[0].mxu0
      %v4738 = vpop.f32.mrb[0].mxu0
      %v4739 = vadd.f32 0.0, %v4738
      %v4740 = vpop.f32.mrb[0].mxu0
      %4741 = vmatprep.mubr.bf16.mxu0 0
      %4742 = vmatmul.mubr.bf16.gmra.mrb[0].mxu0 %v4559
      %v4743 = vpop.f32.mrb[0].mxu0
      %v4744 = vadd.f32 0.0, %v4743
      %v4745 = vpop.f32.mrb[0].mxu0
      %v4746 = vpop.f32.mrb[0].mxu0
      %v4747 = vadd.f32 0.0, %v4746
      %v4748 = vpop.f32.mrb[0].mxu0
      %4749 = vmatprep.mubr.bf16.mxu0 0
      %4750 = vmatmul.mubr.bf16.gmra.mrb[0].mxu0 %v4560
      %v4751 = vpop.f32.mrb[0].mxu0
      %v4752 = vadd.f32 0.0, %v4751
      %v4753 = vpop.f32.mrb[0].mxu0
      %v4754 = vpop.f32.mrb[0].mxu0
      %v4755 = vadd.f32 0.0, %v4754
      %v4756 = vpop.f32.mrb[0].mxu0
      %4757 = vmatprep.mubr.bf16.mxu0 0
      %4758 = vmatmul.mubr.bf16.gmra.mrb[0].mxu0 %v4561
      %v4759 = vpop.f32.mrb[0].mxu0
      %v4760 = vadd.f32 0.0, %v4759
      %v4761 = vpop.f32.mrb[0].mxu0
      %v4762 = vpop.f32.mrb[0].mxu0
      %v4763 = vadd.f32 0.0, %v4762
      %v4764 = vpop.f32.mrb[0].mxu0
      %4765 = vmatprep.mubr.bf16.mxu0 0
      %4766 = vmatmul.mubr.bf16.gmra.mrb[0].mxu0 %v4562
      %v4767 = vpop.f32.mrb[0].mxu0
      %v4768 = vadd.f32 0.0, %v4767
      %v4769 = vpop.f32.mrb[0].mxu0
      %v4770 = vpop.f32.mrb[0].mxu0
      %v4771 = vadd.f32 0.0, %v4770
      %v4772 = vpop.f32.mrb[0].mxu0
      %4773 = vmatprep.mubr.bf16.mxu0 0
      %4774 = vmatmul.mubr.bf16.gmra.mrb[0].mxu0 %v4563
      %v4775 = vpop.f32.mrb[0].mxu0
      %v4776 = vadd.f32 0.0, %v4775
      %v4777 = vpop.f32.mrb[0].mxu0
      %v4778 = vpop.f32.mrb[0].mxu0
      %v4779 = vadd.f32 0.0, %v4778
      %v4780 = vpop.f32.mrb[0].mxu0
      %4781 = vmatprep.mubr.bf16.mxu0 0
      %4782 = vmatmul.mubr.bf16.gmra.mrb[0].mxu0 %v4564
      %v4783 = vpop.f32.mrb[0].mxu0
      %v4784 = vadd.f32 0.0, %v4783
      %v4785 = vpop.f32.mrb[0].mxu0
      %v4786 = vpop.f32.mrb[0].mxu0
      %v4787 = vadd.f32 0.0, %v4786
      %v4788 = vpop.f32.mrb[0].mxu0
      %4789 = vdwg.mxu0
      %v4790 = vadd.f32 %v4246, %v4664
      %v4791 = vadd.f32 %v4249, %v4667
      %v4792 = vadd.f32 %v4254, %v4672
      %v4793 = vadd.f32 %v4257, %v4675
      %v4794 = vadd.f32 %v4262, %v4680
      %v4795 = vadd.f32 %v4265, %v4683
      %v4796 = vadd.f32 %v4270, %v4688
      %v4797 = vadd.f32 %v4273, %v4691
      %v4798 = vadd.f32 %v4278, %v4696
      %v4799 = vadd.f32 %v4281, %v4699
      %v4800 = vadd.f32 %v4286, %v4704
      %v4801 = vadd.f32 %v4289, %v4707
      %v4802 = vadd.f32 %v4294, %v4712
      %v4803 = vadd.f32 %v4297, %v4715
      %v4804 = vadd.f32 %v4302, %v4720
      %v4805 = vadd.f32 %v4305, %v4723
      %v4806 = vadd.f32 %v4310, %v4728
      %v4807 = vadd.f32 %v4313, %v4731
      %v4808 = vadd.f32 %v4318, %v4736
      %v4809 = vadd.f32 %v4321, %v4739
      %v4810 = vadd.f32 %v4326, %v4744
      %v4811 = vadd.f32 %v4329, %v4747
      %v4812 = vadd.f32 %v4334, %v4752
      %v4813 = vadd.f32 %v4337, %v4755
      %v4814 = vadd.f32 %v4342, %v4760
      %v4815 = vadd.f32 %v4345, %v4763
      %v4816 = vadd.f32 %v4350, %v4768
      %v4817 = vadd.f32 %v4353, %v4771
      %v4818 = vadd.f32 %v4358, %v4776
      %v4819 = vadd.f32 %v4361, %v4779
      %v4820 = vadd.f32 %v4366, %v4784
      %v4821 = vadd.f32 %v4369, %v4787
      %v4822 = vld [vmem:[#allocation2] sm:$0xff]
      %v4823 = vld [vmem:[#allocation2 + $0x8] sm:$0xff]
      %v4824 = vld [vmem:[#allocation2 + $0x10] sm:$0xff]
      %v4825 = vld [vmem:[#allocation2 + $0x18] sm:$0xff]
      %v4826 = vld [vmem:[#allocation2 + $0x20] sm:$0xff]
      %v4827 = vld [vmem:[#allocation2 + $0x28] sm:$0xff]
      %v4828 = vld [vmem:[#allocation2 + $0x30] sm:$0xff]
      %v4829 = vld [vmem:[#allocation2 + $0x38] sm:$0xff]
      %v4830 = vld [vmem:[#allocation2 + $0x40] sm:$0xff]
      %v4831 = vld [vmem:[#allocation2 + $0x48] sm:$0xff]
      %v4832 = vld [vmem:[#allocation2 + $0x50] sm:$0xff]
      %v4833 = vld [vmem:[#allocation2 + $0x58] sm:$0xff]
      %v4834 = vld [vmem:[#allocation2 + $0x60] sm:$0xff]
      %v4835 = vld [vmem:[#allocation2 + $0x68] sm:$0xff]
      %v4836 = vld [vmem:[#allocation2 + $0x70] sm:$0xff]
      %v4837 = vld [vmem:[#allocation2 + $0x78] sm:$0xff]
      %v4838 = vld [vmem:[#allocation2 + $0x80] sm:$0xff]
      %v4839 = vld [vmem:[#allocation2 + $0x88] sm:$0xff]
      %v4840 = vld [vmem:[#allocation2 + $0x90] sm:$0xff]
      %v4841 = vld [vmem:[#allocation2 + $0x98] sm:$0xff]
      %v4842 = vld [vmem:[#allocation2 + $0xa0] sm:$0xff]
      %v4843 = vld [vmem:[#allocation2 + $0xa8] sm:$0xff]
      %v4844 = vld [vmem:[#allocation2 + $0xb0] sm:$0xff]
      %v4845 = vld [vmem:[#allocation2 + $0xb8] sm:$0xff]
      %v4846 = vld [vmem:[#allocation2 + $0xc0] sm:$0xff]
      %v4847 = vld [vmem:[#allocation2 + $0xc8] sm:$0xff]
      %v4848 = vld [vmem:[#allocation2 + $0xd0] sm:$0xff]
      %v4849 = vld [vmem:[#allocation2 + $0xd8] sm:$0xff]
      %v4850 = vld [vmem:[#allocation2 + $0xe0] sm:$0xff]
      %v4851 = vld [vmem:[#allocation2 + $0xe8] sm:$0xff]
      %v4852 = vld [vmem:[#allocation2 + $0xf0] sm:$0xff]
      %v4853 = vld [vmem:[#allocation2 + $0xf8] sm:$0xff]
      %v4854 = vadd.f32 %v4822, %v4790
      %v4855 = vadd.f32 %v4823, %v4791
      %v4856 = vadd.f32 %v4824, %v4792
      %v4857 = vadd.f32 %v4825, %v4793
      %v4858 = vadd.f32 %v4826, %v4794
      %v4859 = vadd.f32 %v4827, %v4795
      %v4860 = vadd.f32 %v4828, %v4796
      %v4861 = vadd.f32 %v4829, %v4797
      %v4862 = vadd.f32 %v4830, %v4798
      %v4863 = vadd.f32 %v4831, %v4799
      %v4864 = vadd.f32 %v4832, %v4800
      %v4865 = vadd.f32 %v4833, %v4801
      %v4866 = vadd.f32 %v4834, %v4802
      %v4867 = vadd.f32 %v4835, %v4803
      %v4868 = vadd.f32 %v4836, %v4804
      %v4869 = vadd.f32 %v4837, %v4805
      %v4870 = vadd.f32 %v4838, %v4806
      %v4871 = vadd.f32 %v4839, %v4807
      %v4872 = vadd.f32 %v4840, %v4808
      %v4873 = vadd.f32 %v4841, %v4809
      %v4874 = vadd.f32 %v4842, %v4810
      %v4875 = vadd.f32 %v4843, %v4811
      %v4876 = vadd.f32 %v4844, %v4812
      %v4877 = vadd.f32 %v4845, %v4813
      %v4878 = vadd.f32 %v4846, %v4814
      %v4879 = vadd.f32 %v4847, %v4815
      %v4880 = vadd.f32 %v4848, %v4816
      %v4881 = vadd.f32 %v4849, %v4817
      %v4882 = vadd.f32 %v4850, %v4818
      %v4883 = vadd.f32 %v4851, %v4819
      %v4884 = vadd.f32 %v4852, %v4820
      %v4885 = vadd.f32 %v4853, %v4821
      %4886 = vst [vmem:[#allocation2] sm:$0xff] %v4854
      %4887 = vst [vmem:[#allocation2 + $0x8] sm:$0xff] %v4855
      %4888 = vst [vmem:[#allocation2 + $0x10] sm:$0xff] %v4856
      %4889 = vst [vmem:[#allocation2 + $0x18] sm:$0xff] %v4857
      %4890 = vst [vmem:[#allocation2 + $0x20] sm:$0xff] %v4858
      %4891 = vst [vmem:[#allocation2 + $0x28] sm:$0xff] %v4859
      %4892 = vst [vmem:[#allocation2 + $0x30] sm:$0xff] %v4860
      %4893 = vst [vmem:[#allocation2 + $0x38] sm:$0xff] %v4861
      %4894 = vst [vmem:[#allocation2 + $0x40] sm:$0xff] %v4862
      %4895 = vst [vmem:[#allocation2 + $0x48] sm:$0xff] %v4863
      %4896 = vst [vmem:[#allocation2 + $0x50] sm:$0xff] %v4864
      %4897 = vst [vmem:[#allocation2 + $0x58] sm:$0xff] %v4865
      %4898 = vst [vmem:[#allocation2 + $0x60] sm:$0xff] %v4866
      %4899 = vst [vmem:[#allocation2 + $0x68] sm:$0xff] %v4867
      %4900 = vst [vmem:[#allocation2 + $0x70] sm:$0xff] %v4868
      %4901 = vst [vmem:[#allocation2 + $0x78] sm:$0xff] %v4869
      %4902 = vst [vmem:[#allocation2 + $0x80] sm:$0xff] %v4870
      %4903 = vst [vmem:[#allocation2 + $0x88] sm:$0xff] %v4871
      %4904 = vst [vmem:[#allocation2 + $0x90] sm:$0xff] %v4872
      %4905 = vst [vmem:[#allocation2 + $0x98] sm:$0xff] %v4873
      %4906 = vst [vmem:[#allocation2 + $0xa0] sm:$0xff] %v4874
      %4907 = vst [vmem:[#allocation2 + $0xa8] sm:$0xff] %v4875
      %4908 = vst [vmem:[#allocation2 + $0xb0] sm:$0xff] %v4876
      %4909 = vst [vmem:[#allocation2 + $0xb8] sm:$0xff] %v4877
      %4910 = vst [vmem:[#allocation2 + $0xc0] sm:$0xff] %v4878
      %4911 = vst [vmem:[#allocation2 + $0xc8] sm:$0xff] %v4879
      %4912 = vst [vmem:[#allocation2 + $0xd0] sm:$0xff] %v4880
      %4913 = vst [vmem:[#allocation2 + $0xd8] sm:$0xff] %v4881
      %4914 = vst [vmem:[#allocation2 + $0xe0] sm:$0xff] %v4882
      %4915 = vst [vmem:[#allocation2 + $0xe8] sm:$0xff] %v4883
      %4916 = vst [vmem:[#allocation2 + $0xf0] sm:$0xff] %v4884
      %4917 = vst [vmem:[#allocation2 + $0xf8] sm:$0xff] %v4885
      %v4918 = vld [vmem:[#allocation2] sm:$0xff]
      %v4919 = vld [vmem:[#allocation2 + $0x8] sm:$0xff]
      %v4920 = vld [vmem:[#allocation2 + $0x10] sm:$0xff]
      %v4921 = vld [vmem:[#allocation2 + $0x18] sm:$0xff]
      %v4922 = vld [vmem:[#allocation2 + $0x20] sm:$0xff]
      %v4923 = vld [vmem:[#allocation2 + $0x28] sm:$0xff]
      %v4924 = vld [vmem:[#allocation2 + $0x30] sm:$0xff]
      %v4925 = vld [vmem:[#allocation2 + $0x38] sm:$0xff]
      %v4926 = vld [vmem:[#allocation2 + $0x40] sm:$0xff]
      %v4927 = vld [vmem:[#allocation2 + $0x48] sm:$0xff]
      %v4928 = vld [vmem:[#allocation2 + $0x50] sm:$0xff]
      %v4929 = vld [vmem:[#allocation2 + $0x58] sm:$0xff]
      %v4930 = vld [vmem:[#allocation2 + $0x60] sm:$0xff]
      %v4931 = vld [vmem:[#allocation2 + $0x68] sm:$0xff]
      %v4932 = vld [vmem:[#allocation2 + $0x70] sm:$0xff]
      %v4933 = vld [vmem:[#allocation2 + $0x78] sm:$0xff]
      %v4934 = vld [vmem:[#allocation2 + $0x80] sm:$0xff]
      %v4935 = vld [vmem:[#allocation2 + $0x88] sm:$0xff]
      %v4936 = vld [vmem:[#allocation2 + $0x90] sm:$0xff]
      %v4937 = vld [vmem:[#allocation2 + $0x98] sm:$0xff]
      %v4938 = vld [vmem:[#allocation2 + $0xa0] sm:$0xff]
      %v4939 = vld [vmem:[#allocation2 + $0xa8] sm:$0xff]
      %v4940 = vld [vmem:[#allocation2 + $0xb0] sm:$0xff]
      %v4941 = vld [vmem:[#allocation2 + $0xb8] sm:$0xff]
      %v4942 = vld [vmem:[#allocation2 + $0xc0] sm:$0xff]
      %v4943 = vld [vmem:[#allocation2 + $0xc8] sm:$0xff]
      %v4944 = vld [vmem:[#allocation2 + $0xd0] sm:$0xff]
      %v4945 = vld [vmem:[#allocation2 + $0xd8] sm:$0xff]
      %v4946 = vld [vmem:[#allocation2 + $0xe0] sm:$0xff]
      %v4947 = vld [vmem:[#allocation2 + $0xe8] sm:$0xff]
      %v4948 = vld [vmem:[#allocation2 + $0xf0] sm:$0xff]
      %v4949 = vld [vmem:[#allocation2 + $0xf8] sm:$0xff]
      %v4950 = vpack.c.bf16 %v4919, %v4918
      %v4951 = vpack.c.bf16 %v4921, %v4920
      %v4952 = vpack.c.bf16 %v4923, %v4922
      %v4953 = vpack.c.bf16 %v4925, %v4924
      %v4954 = vpack.c.bf16 %v4927, %v4926
      %v4955 = vpack.c.bf16 %v4929, %v4928
      %v4956 = vpack.c.bf16 %v4931, %v4930
      %v4957 = vpack.c.bf16 %v4933, %v4932
      %v4958 = vpack.c.bf16 %v4935, %v4934
      %v4959 = vpack.c.bf16 %v4937, %v4936
      %v4960 = vpack.c.bf16 %v4939, %v4938
      %v4961 = vpack.c.bf16 %v4941, %v4940
      %v4962 = vpack.c.bf16 %v4943, %v4942
      %v4963 = vpack.c.bf16 %v4945, %v4944
      %v4964 = vpack.c.bf16 %v4947, %v4946
      %v4965 = vpack.c.bf16 %v4949, %v4948
      %v4982 = vunpack.c.l.b16 %v4950
      %v4983 = vunpack.c.h.b16 %v4950
      %v4984 = vunpack.c.l.b16 %v4951
      %v4985 = vunpack.c.h.b16 %v4951
      %v4986 = vunpack.c.l.b16 %v4952
      %v4987 = vunpack.c.h.b16 %v4952
      %v4988 = vunpack.c.l.b16 %v4953
      %v4989 = vunpack.c.h.b16 %v4953
      %v4990 = vunpack.c.l.b16 %v4954
      %v4991 = vunpack.c.h.b16 %v4954
      %v4992 = vunpack.c.l.b16 %v4955
      %v4993 = vunpack.c.h.b16 %v4955
      %v4994 = vunpack.c.l.b16 %v4956
      %v4995 = vunpack.c.h.b16 %v4956
      %v4996 = vunpack.c.l.b16 %v4957
      %v4997 = vunpack.c.h.b16 %v4957
      %v4998 = vunpack.c.l.b16 %v4958
      %v4999 = vunpack.c.h.b16 %v4958
      %v5000 = vunpack.c.l.b16 %v4959
      %v5001 = vunpack.c.h.b16 %v4959
      %v5002 = vunpack.c.l.b16 %v4960
      %v5003 = vunpack.c.h.b16 %v4960
      %v5004 = vunpack.c.l.b16 %v4961
      %v5005 = vunpack.c.h.b16 %v4961
      %v5006 = vunpack.c.l.b16 %v4962
      %v5007 = vunpack.c.h.b16 %v4962
      %v5008 = vunpack.c.l.b16 %v4963
      %v5009 = vunpack.c.h.b16 %v4963
      %v5010 = vunpack.c.l.b16 %v4964
      %v5011 = vunpack.c.h.b16 %v4964
      %v5012 = vunpack.c.l.b16 %v4965
      %v5013 = vunpack.c.h.b16 %v4965
      %v5014 = vpack.c.b16 %v4982, %v4982
      %v5015 = vpack.c.b16 %v4983, %v4983
      %v5016 = vpack.c.b16 %v4984, %v4984
      %v5017 = vpack.c.b16 %v4985, %v4985
      %v5018 = vpack.c.b16 %v4986, %v4986
      %v5019 = vpack.c.b16 %v4987, %v4987
      %v5020 = vpack.c.b16 %v4988, %v4988
      %v5021 = vpack.c.b16 %v4989, %v4989
      %v5022 = vpack.c.b16 %v4990, %v4990
      %v5023 = vpack.c.b16 %v4991, %v4991
      %v5024 = vpack.c.b16 %v4992, %v4992
      %v5025 = vpack.c.b16 %v4993, %v4993
      %v5026 = vpack.c.b16 %v4994, %v4994
      %v5027 = vpack.c.b16 %v4995, %v4995
      %v5028 = vpack.c.b16 %v4996, %v4996
      %v5029 = vpack.c.b16 %v4997, %v4997
      %v5030 = vpack.c.b16 %v4998, %v4998
      %v5031 = vpack.c.b16 %v4999, %v4999
      %v5032 = vpack.c.b16 %v5000, %v5000
      %v5033 = vpack.c.b16 %v5001, %v5001
      %v5034 = vpack.c.b16 %v5002, %v5002
      %v5035 = vpack.c.b16 %v5003, %v5003
      %v5036 = vpack.c.b16 %v5004, %v5004
      %v5037 = vpack.c.b16 %v5005, %v5005
      %v5038 = vpack.c.b16 %v5006, %v5006
      %v5039 = vpack.c.b16 %v5007, %v5007
      %v5040 = vpack.c.b16 %v5008, %v5008
      %v5041 = vpack.c.b16 %v5009, %v5009
      %v5042 = vpack.c.b16 %v5010, %v5010
      %v5043 = vpack.c.b16 %v5011, %v5011
      %v5044 = vpack.c.b16 %v5012, %v5012
      %v5045 = vpack.c.b16 %v5013, %v5013
      %5078 = vst [vmem:[%s184] sm:$0xf] %v5014
      %5079 = vst [vmem:[%s184 + $0x4] sm:$0xf] %v5015
      %5080 = vst [vmem:[%s184 + $0x8] sm:$0xf] %v5016
      %5081 = vst [vmem:[%s184 + $0xc] sm:$0xf] %v5017
      %5082 = vst [vmem:[%s184 + $0x10] sm:$0xf] %v5018
      %5083 = vst [vmem:[%s184 + $0x14] sm:$0xf] %v5019
      %5084 = vst [vmem:[%s184 + $0x18] sm:$0xf] %v5020
      %5085 = vst [vmem:[%s184 + $0x1c] sm:$0xf] %v5021
      %5086 = vst [vmem:[%s184 + $0x20] sm:$0xf] %v5022
      %5087 = vst [vmem:[%s184 + $0x24] sm:$0xf] %v5023
      %5088 = vst [vmem:[%s184 + $0x28] sm:$0xf] %v5024
      %5089 = vst [vmem:[%s184 + $0x2c] sm:$0xf] %v5025
      %5090 = vst [vmem:[%s184 + $0x30] sm:$0xf] %v5026
      %5091 = vst [vmem:[%s184 + $0x34] sm:$0xf] %v5027
      %5092 = vst [vmem:[%s184 + $0x38] sm:$0xf] %v5028
      %5093 = vst [vmem:[%s184 + $0x3c] sm:$0xf] %v5029
      %5094 = vst [vmem:[%s184 + $0x40] sm:$0xf] %v5030
      %5095 = vst [vmem:[%s184 + $0x44] sm:$0xf] %v5031
      %5096 = vst [vmem:[%s184 + $0x48] sm:$0xf] %v5032
      %5097 = vst [vmem:[%s184 + $0x4c] sm:$0xf] %v5033
      %5098 = vst [vmem:[%s184 + $0x50] sm:$0xf] %v5034
      %5099 = vst [vmem:[%s184 + $0x54] sm:$0xf] %v5035
      %5100 = vst [vmem:[%s184 + $0x58] sm:$0xf] %v5036
      %5101 = vst [vmem:[%s184 + $0x5c] sm:$0xf] %v5037
      %5102 = vst [vmem:[%s184 + $0x60] sm:$0xf] %v5038
      %5103 = vst [vmem:[%s184 + $0x64] sm:$0xf] %v5039
      %5104 = vst [vmem:[%s184 + $0x68] sm:$0xf] %v5040
      %5105 = vst [vmem:[%s184 + $0x6c] sm:$0xf] %v5041
      %5106 = vst [vmem:[%s184 + $0x70] sm:$0xf] %v5042
      %5107 = vst [vmem:[%s184 + $0x74] sm:$0xf] %v5043
      %5108 = vst [vmem:[%s184 + $0x78] sm:$0xf] %v5044
      %5109 = vst [vmem:[%s184 + $0x7c] sm:$0xf] %v5045
      %v5110 = vld [vmem:[%s3] sm:$0x1]
      %v5111 = vadd.f32 %v4918, %v4919
      %v5112 = vadd.f32 %v5111, %v4920
      %v5113 = vadd.f32 %v5112, %v4921
      %v5114 = vadd.f32 %v5113, %v4922
      %v5115 = vadd.f32 %v5114, %v4923
      %v5116 = vadd.f32 %v5115, %v4924
      %v5117 = vadd.f32 %v5116, %v4925
      %v5118 = vadd.f32 %v5117, %v4926
      %v5119 = vadd.f32 %v5118, %v4927
      %v5120 = vadd.f32 %v5119, %v4928
      %v5121 = vadd.f32 %v5120, %v4929
      %v5122 = vadd.f32 %v5121, %v4930
      %v5123 = vadd.f32 %v5122, %v4931
      %v5124 = vadd.f32 %v5123, %v4932
      %v5125 = vadd.f32 %v5124, %v4933
      %v5126 = vadd.f32 %v5125, %v4934
      %v5127 = vadd.f32 %v5126, %v4935
      %v5128 = vadd.f32 %v5127, %v4936
      %v5129 = vadd.f32 %v5128, %v4937
      %v5130 = vadd.f32 %v5129, %v4938
      %v5131 = vadd.f32 %v5130, %v4939
      %v5132 = vadd.f32 %v5131, %v4940
      %v5133 = vadd.f32 %v5132, %v4941
      %v5134 = vadd.f32 %v5133, %v4942
      %v5135 = vadd.f32 %v5134, %v4943
      %v5136 = vadd.f32 %v5135, %v4944
      %v5137 = vadd.f32 %v5136, %v4945
      %v5138 = vadd.f32 %v5137, %v4946
      %v5139 = vadd.f32 %v5138, %v4947
      %v5140 = vadd.f32 %v5139, %v4948
      %v5141 = vadd.f32 %v5140, %v4949
      %v5142 = vrot.slane %v5141, 4
      %v5143 = vadd.f32 %v5141, %v5142
      %v5144 = vrot.slane %v5143, 2
      %v5145 = vadd.f32 %v5143, %v5144
      %v5146 = vrot.slane %v5145, 1
      %v5147 = vadd.f32 %v5145, %v5146
      %v5148 = vadd.f32 %v5110, %v5147
      %5149 = vst [vmem:[%s3] sm:$0x1] %v5148
      %v5150 = vld [vmem:[%s3 + $0x1] sm:$0x1]
      %v5151 = vmul.f32 %v4918, %v4918
      %v5152 = vmul.f32 %v4919, %v4919
      %v5153 = vmul.f32 %v4920, %v4920
      %v5154 = vmul.f32 %v4921, %v4921
      %v5155 = vmul.f32 %v4922, %v4922
      %v5156 = vmul.f32 %v4923, %v4923
      %v5157 = vmul.f32 %v4924, %v4924
      %v5158 = vmul.f32 %v4925, %v4925
      %v5159 = vmul.f32 %v4926, %v4926
      %v5160 = vmul.f32 %v4927, %v4927
      %v5161 = vmul.f32 %v4928, %v4928
      %v5162 = vmul.f32 %v4929, %v4929
      %v5163 = vmul.f32 %v4930, %v4930
      %v5164 = vmul.f32 %v4931, %v4931
      %v5165 = vmul.f32 %v4932, %v4932
      %v5166 = vmul.f32 %v4933, %v4933
      %v5167 = vmul.f32 %v4934, %v4934
      %v5168 = vmul.f32 %v4935, %v4935
      %v5169 = vmul.f32 %v4936, %v4936
      %v5170 = vmul.f32 %v4937, %v4937
      %v5171 = vmul.f32 %v4938, %v4938
      %v5172 = vmul.f32 %v4939, %v4939
      %v5173 = vmul.f32 %v4940, %v4940
      %v5174 = vmul.f32 %v4941, %v4941
      %v5175 = vmul.f32 %v4942, %v4942
      %v5176 = vmul.f32 %v4943, %v4943
      %v5177 = vmul.f32 %v4944, %v4944
      %v5178 = vmul.f32 %v4945, %v4945
      %v5179 = vmul.f32 %v4946, %v4946
      %v5180 = vmul.f32 %v4947, %v4947
      %v5181 = vmul.f32 %v4948, %v4948
      %v5182 = vmul.f32 %v4949, %v4949
      %v5183 = vadd.f32 %v5151, %v5152
      %v5184 = vadd.f32 %v5183, %v5153
      %v5185 = vadd.f32 %v5184, %v5154
      %v5186 = vadd.f32 %v5185, %v5155
      %v5187 = vadd.f32 %v5186, %v5156
      %v5188 = vadd.f32 %v5187, %v5157
      %v5189 = vadd.f32 %v5188, %v5158
      %v5190 = vadd.f32 %v5189, %v5159
      %v5191 = vadd.f32 %v5190, %v5160
      %v5192 = vadd.f32 %v5191, %v5161
      %v5193 = vadd.f32 %v5192, %v5162
      %v5194 = vadd.f32 %v5193, %v5163
      %v5195 = vadd.f32 %v5194, %v5164
      %v5196 = vadd.f32 %v5195, %v5165
      %v5197 = vadd.f32 %v5196, %v5166
      %v5198 = vadd.f32 %v5197, %v5167
      %v5199 = vadd.f32 %v5198, %v5168
      %v5200 = vadd.f32 %v5199, %v5169
      %v5201 = vadd.f32 %v5200, %v5170
      %v5202 = vadd.f32 %v5201, %v5171
      %v5203 = vadd.f32 %v5202, %v5172
      %v5204 = vadd.f32 %v5203, %v5173
      %v5205 = vadd.f32 %v5204, %v5174
      %v5206 = vadd.f32 %v5205, %v5175
      %v5207 = vadd.f32 %v5206, %v5176
      %v5208 = vadd.f32 %v5207, %v5177
      %v5209 = vadd.f32 %v5208, %v5178
      %v5210 = vadd.f32 %v5209, %v5179
      %v5211 = vadd.f32 %v5210, %v5180
      %v5212 = vadd.f32 %v5211, %v5181
      %v5213 = vadd.f32 %v5212, %v5182
      %v5214 = vrot.slane %v5213, 4
      %v5215 = vadd.f32 %v5213, %v5214
      %v5216 = vrot.slane %v5215, 2
      %v5217 = vadd.f32 %v5215, %v5216
      %v5218 = vrot.slane %v5217, 1
      %v5219 = vadd.f32 %v5217, %v5218
      %v5220 = vadd.f32 %v5150, %v5219
      %5221 = vst [vmem:[%s3 + $0x1] sm:$0x1] %v5220
      %s5222 = sadd.s32 %s19, %s20
      %s5223 = smul.u32 32, %s5222
      %p5224 = scmp.lt.s32.totalorder %s5223, 63
      %s5225 = scalar_select %p5224, %s5223, 63
      %s5226 = smul.addr %s5225, 4
      %s5227 = scalar_lea.vmem %s2, %s5226
      // Predicated region
      $region33: #{_lambda_.7} parent=27 // pred_check
        %p5228 = pneg %p94
      $region34: #{_lambda_.7} parent=27 // pred_check_branch
        %5230 = sbr.rel (%p5228) target = $region36
      $region35: #{_lambda_.7} parent=27 // pred_region
        %s5231 = sadd.s32 %s19, %s20
        %s5232 = smul.u32 32, %s5231
      $region36: #{_lambda_.7} parent=27 // pred_fallthru
        _
      // Predicated region
      $region37: #{_lambda_.7} parent=27 // pred_check
        %p5233 = pneg %p115
      $region38: #{_lambda_.7} parent=27 // pred_check_branch
        %5235 = sbr.rel (%p5233) target = $region40
      $region39: #{_lambda_.7} parent=27 // pred_region
        _
      $region40: #{_lambda_.7} parent=27 // pred_fallthru
        _
      // Predicated region
      $region41: #{_lambda_.7} parent=27 // pred_check
        %p5236 = pneg %p115
      $region42: #{_lambda_.7} parent=27 // pred_check_branch
        %5238 = sbr.rel (%p5236) target = $region44
      $region43: #{_lambda_.7} parent=27 // pred_region
        _
      $region44: #{_lambda_.7} parent=27 // pred_fallthru
        _
    $region28: #{_lambda_.7} parent=5 // pred_fallthru
      _
    %p5239 = scmp.le.s32.totalorder 2, %s10
    // Predicated region
    $region45: #{_lambda_.7} parent=5 // pred_check
      %p5240 = pneg %p5239
    $region46: #{_lambda_.7} parent=5 // pred_check_branch
      %5242 = sbr.rel (%p5240) target = $region48
    $region47: #{_lambda_.7} parent=5 // pred_region
      %s5243 = ssub.s32 %s10, 2
      // Predicated region
      $region49: #{_lambda_.7} parent=47 // pred_check
        %p5244 = pneg %p100
      $region50: #{_lambda_.7} parent=47 // pred_check_branch
        %5246 = sbr.rel (%p5244) target = $region52
      $region51: #{_lambda_.7} parent=47 // pred_region
        %s5247 = sadd.s32 %s21, %s22
        %s5248 = smul.u32 32, %s5247
        %p5249 = scmp.lt.s32.totalorder %s5248, 63
        %s5250 = scalar_select %p5249, %s5248, 63
        %s5251 = smul.addr %s5250, 4
        %s5252 = scalar_lea.vmem %s2, %s5251
      $region52: #{_lambda_.7} parent=47 // pred_fallthru
        _
    $region48: #{_lambda_.7} parent=5 // pred_fallthru
      _
  $region6: #{_lambda_.7} parent=0 // loop_footer
    %s14 = sadd.s32 1, %s10
  $region7: #{_lambda_.7} parent=0 // loop_footer_branch
    %9 = sbr.rel target = $region3
  $region8: #{_lambda_.7} parent=0 // loop_exit
    _

</llo_original>
